<compile_context>
chip_gen: v7x
topology: tpu7x:2x2x1
jax: 0.10.0
libtpu: 0.0.40
codegen_flags: <defaults>
</compile_context>

<pallas_src>
import jax
import jax.numpy as jnp
from jax.experimental import pallas as pl
from jax.experimental.pallas import tpu as pltpu

LANE = 128
BF16_SUBLANE = 16  # bf16 packs 16 rows per vreg sublane group


def _round_up(x, m):
    return (x + m - 1) // m * m


def _mlp_kernel(x_ref,
                w1_ref, b1_ref,
                w2_ref, b2_ref,
                w3_ref, b3_ref,
                w4_ref, b4_ref,
                w5_ref, b5_ref,
                o_ref):
    """Fused 5-layer MLP forward for one batch tile (weights VMEM-resident)."""
    # TODO(synk): training-mode dropout (pltpu.prng_random_bits mask) not emitted.
    h = x_ref[...]  # already bfloat16 (padded in the wrapper)

    # fc1 + relu
    h = jnp.dot(h, w1_ref[...], preferred_element_type=jnp.float32) + b1_ref[...]
    h = jnp.maximum(h, 0.0).astype(jnp.bfloat16)

    # fc2 + relu   (dropout is identity at inference)
    h = jnp.dot(h, w2_ref[...], preferred_element_type=jnp.float32) + b2_ref[...]
    h = jnp.maximum(h, 0.0).astype(jnp.bfloat16)

    # fc3 + relu
    h = jnp.dot(h, w3_ref[...], preferred_element_type=jnp.float32) + b3_ref[...]
    h = jnp.maximum(h, 0.0).astype(jnp.bfloat16)

    # fc4 + relu
    h = jnp.dot(h, w4_ref[...], preferred_element_type=jnp.float32) + b4_ref[...]
    h = jnp.maximum(h, 0.0).astype(jnp.bfloat16)

    # fc5 (no activation); lane-dense 128-wide store
    out = jnp.dot(h, w5_ref[...], preferred_element_type=jnp.float32) + b5_ref[...]
    o_ref[...] = out.astype(o_ref.dtype)


def prepare_params(params):
    """Pad to lane-aligned shapes, cast W to bf16, bias as (1, N) f32.

    Call ONCE per model (serving path keeps the results resident); do not
    re-derive per forward call.
    """
    prepped = []
    n = len(params)
    for i, (w, b) in enumerate(params):
        fan_in, fan_out = w.shape
        in_pad = _round_up(fan_in, LANE) if i == 0 else fan_in
        out_pad = _round_up(fan_out, LANE) if i == n - 1 else fan_out
        w_p = jnp.pad(w, ((0, in_pad - fan_in), (0, out_pad - fan_out)))
        b_p = jnp.pad(b, (0, out_pad - fan_out))
        prepped.append((w_p.astype(jnp.bfloat16),
                        b_p.reshape(1, -1).astype(jnp.float32)))
    return prepped


def net_forward(x, prepped, out_dim, *, max_batch_tile=512):
    """x: (B, 600) f32.  prepped: output of prepare_params.  Returns (B, out_dim) f32."""
    B, D = x.shape
    d_pad = prepped[0][0].shape[0]        # 640
    out_pad = prepped[-1][0].shape[1]     # 128

    # Batch padding: multiple of the bf16 sublane packing (16), then of the tile.
    b_pad = _round_up(B, BF16_SUBLANE)
    tb = min(max_batch_tile, b_pad)
    # v7x megacore: guarantee >= 2 grid steps when the batch is large enough
    # that per-tile compute dominates the per-core weight re-stream.
    if b_pad >= 512 and b_pad // tb < 2:
        tb = _round_up(pl.cdiv(b_pad, 2), BF16_SUBLANE)
    b_pad = _round_up(b_pad, tb)

    # Pad + cast in one shot: halves the per-step x DMA vs f32.
    x_p = jnp.zeros((b_pad, d_pad), jnp.bfloat16).at[:B, :D].set(
        x.astype(jnp.bfloat16))

    flat_args = [x_p]
    in_specs = [pl.BlockSpec((tb, d_pad), lambda i: (i, 0))]
    for w, b in prepped:
        flat_args += [w, b]
        # Constant index_map -> DMA'd once, VMEM-resident; Buffered(1) avoids
        # allocating a useless second buffer for these constant blocks.
        in_specs += [
            pl.BlockSpec(w.shape, lambda i: (0, 0), pipeline_mode=pl.Buffered(1)),
            pl.BlockSpec(b.shape, lambda i: (0, 0), pipeline_mode=pl.Buffered(1)),
        ]

    out = pl.pallas_call(
        _mlp_kernel,
        out_shape=jax.ShapeDtypeStruct((b_pad, out_pad), jnp.float32),
        grid=(b_pad // tb,),
        in_specs=in_specs,
        out_specs=pl.BlockSpec((tb, out_pad), lambda i: (i, 0)),
        compiler_params=pltpu.CompilerParams(
            # v7x: the two TensorCores split the batch tiles.
            dimension_semantics=("parallel",),
            # Explicit limit: single-buffered weights (~4.8 MB bf16) + x/out
            # tiles + (tb,1024) intermediates fit with margin; keeps v5e
            # (16 MiB default scoped VMEM) safe and leaves headroom on v7x.
            vmem_limit_bytes=32 << 20,
        ),
    )(*flat_args)

    return out[:B, :out_dim]


def init_params(key, ac_length=600):
    """Deterministic synthetic init matching nn.Linear shapes (W stored (in, out))."""
    dims = [(ac_length, 1024), (1024, 1024), (1024, 512), (512, 256), (256, 88)]
    params = []
    for (fan_in, fan_out) in dims:
        key, kw, kb = jax.random.split(key, 3)
        # PyTorch default Linear init: U(-1/sqrt(fan_in), 1/sqrt(fan_in))
        bound = 1.0 / jnp.sqrt(jnp.float32(fan_in))
        w = jax.random.uniform(kw, (fan_in, fan_out), jnp.float32, -bound, bound)
        b = jax.random.uniform(kb, (fan_out,), jnp.float32, -bound, bound)
        params.append((w, b))
    return params


def reference_forward(x, params):
    """Mirrors the kernel math: bf16 operands into each dot, f32 accumulate."""
    h = x
    for i, (w, b) in enumerate(params):
        h = jnp.dot(h.astype(jnp.bfloat16), w.astype(jnp.bfloat16),
                    preferred_element_type=jnp.float32) + b
        if i < len(params) - 1:
            h = jnp.maximum(h, 0.0)
    return h


if __name__ == "__main__":
    key = jax.random.PRNGKey(0)
    kx, kp = jax.random.split(key)

    batch, ac_length = 4, 600
    x = jax.random.normal(kx, (batch, ac_length), jnp.float32)
    params = init_params(kp, ac_length)
    out_dim = params[-1][0].shape[1]

    # Hoisted: prepare (pad / transpose / bf16-cast) weights exactly once.
    prepped = prepare_params(params)
    prepped = jax.tree_util.tree_map(jax.block_until_ready, prepped)

    out = net_forward(x, prepped, out_dim)
    out = jax.block_until_ready(out)

    ref = reference_forward(x, params)
    assert out.shape == (batch, 88), out.shape
    assert jnp.allclose(out, ref, atol=2e-2, rtol=2e-2), \
        float(jnp.max(jnp.abs(out - ref)))

    print("KERNEL_OK")
</pallas_src>

<mosaic_0001>
module attributes {stable_mosaic.version = 11 : i64} {
  func.func @_mlp_kernel(%arg0: i32, %arg1: memref<16x640xbf16, #tpu.memory_space<vmem>>, %arg2: memref<640x1024xbf16, #tpu.memory_space<vmem>>, %arg3: memref<1x1024xf32, #tpu.memory_space<vmem>>, %arg4: memref<1024x1024xbf16, #tpu.memory_space<vmem>>, %arg5: memref<1x1024xf32, #tpu.memory_space<vmem>>, %arg6: memref<1024x512xbf16, #tpu.memory_space<vmem>>, %arg7: memref<1x512xf32, #tpu.memory_space<vmem>>, %arg8: memref<512x256xbf16, #tpu.memory_space<vmem>>, %arg9: memref<1x256xf32, #tpu.memory_space<vmem>>, %arg10: memref<256x128xbf16, #tpu.memory_space<vmem>>, %arg11: memref<1x128xf32, #tpu.memory_space<vmem>>, %arg12: memref<16x128xf32, #tpu.memory_space<vmem>>) attributes {dimension_semantics = [#tpu.dimension_semantics<parallel>], iteration_bounds = array<i64: 1>, scalar_prefetch = 0 : i64, scratch_operands = 0 : i64, tpu.core_type = #tpu.core_type<tc>, window_params = [{transform_indices = @transform_0, window_bounds = array<i64: 16, 640>}, {pipeline_mode = #tpu.pipeline_mode<synchronous>, transform_indices = @transform_1, window_bounds = array<i64: 640, 1024>}, {pipeline_mode = #tpu.pipeline_mode<synchronous>, transform_indices = @transform_2, window_bounds = array<i64: 1, 1024>}, {pipeline_mode = #tpu.pipeline_mode<synchronous>, transform_indices = @transform_3, window_bounds = array<i64: 1024, 1024>}, {pipeline_mode = #tpu.pipeline_mode<synchronous>, transform_indices = @transform_4, window_bounds = array<i64: 1, 1024>}, {pipeline_mode = #tpu.pipeline_mode<synchronous>, transform_indices = @transform_5, window_bounds = array<i64: 1024, 512>}, {pipeline_mode = #tpu.pipeline_mode<synchronous>, transform_indices = @transform_6, window_bounds = array<i64: 1, 512>}, {pipeline_mode = #tpu.pipeline_mode<synchronous>, transform_indices = @transform_7, window_bounds = array<i64: 512, 256>}, {pipeline_mode = #tpu.pipeline_mode<synchronous>, transform_indices = @transform_8, window_bounds = array<i64: 1, 256>}, {pipeline_mode = #tpu.pipeline_mode<synchronous>, transform_indices = @transform_9, window_bounds = array<i64: 256, 128>}, {pipeline_mode = #tpu.pipeline_mode<synchronous>, transform_indices = @transform_10, window_bounds = array<i64: 1, 128>}, {transform_indices = @transform_11, window_bounds = array<i64: 16, 128>}]} {
    %c0 = arith.constant 0 : index
    %c0_0 = arith.constant 0 : index
    %0 = vector.load %arg1[%c0, %c0_0] : memref<16x640xbf16, #tpu.memory_space<vmem>>, vector<16x640xbf16>
    %c0_1 = arith.constant 0 : index
    %c0_2 = arith.constant 0 : index
    %1 = vector.load %arg2[%c0_1, %c0_2] : memref<640x1024xbf16, #tpu.memory_space<vmem>>, vector<640x1024xbf16>
    %cst = arith.constant dense<0.000000e+00> : vector<16x1024xf32>
    %2 = tpu.matmul %0, %1, %cst {dimension_numbers = #tpu.dot_dimension_numbers<[1], [0], [0], [1], [0, 0, 1, 1], [], []>} : vector<16x640xbf16>, vector<640x1024xbf16>, vector<16x1024xf32> -> vector<16x1024xf32>
    %c0_3 = arith.constant 0 : index
    %c0_4 = arith.constant 0 : index
    %3 = vector.load %arg3[%c0_3, %c0_4] : memref<1x1024xf32, #tpu.memory_space<vmem>>, vector<1x1024xf32>
    %4 = vector.broadcast %3 : vector<1x1024xf32> to vector<16x1024xf32>
    %5 = arith.addf %2, %4 : vector<16x1024xf32>
    %cst_5 = arith.constant 0.000000e+00 : f32
    %6 = vector.broadcast %cst_5 : f32 to vector<16x1024xf32>
    %7 = arith.maximumf %5, %6 : vector<16x1024xf32>
    %8 = arith.truncf %7 : vector<16x1024xf32> to vector<16x1024xbf16>
    %c0_6 = arith.constant 0 : index
    %c0_7 = arith.constant 0 : index
    %9 = vector.load %arg4[%c0_6, %c0_7] : memref<1024x1024xbf16, #tpu.memory_space<vmem>>, vector<1024x1024xbf16>
    %cst_8 = arith.constant dense<0.000000e+00> : vector<16x1024xf32>
    %10 = tpu.matmul %8, %9, %cst_8 {dimension_numbers = #tpu.dot_dimension_numbers<[1], [0], [0], [1], [0, 0, 1, 1], [], []>} : vector<16x1024xbf16>, vector<1024x1024xbf16>, vector<16x1024xf32> -> vector<16x1024xf32>
    %c0_9 = arith.constant 0 : index
    %c0_10 = arith.constant 0 : index
    %11 = vector.load %arg5[%c0_9, %c0_10] : memref<1x1024xf32, #tpu.memory_space<vmem>>, vector<1x1024xf32>
    %12 = vector.broadcast %11 : vector<1x1024xf32> to vector<16x1024xf32>
    %13 = arith.addf %10, %12 : vector<16x1024xf32>
    %cst_11 = arith.constant 0.000000e+00 : f32
    %14 = vector.broadcast %cst_11 : f32 to vector<16x1024xf32>
    %15 = arith.maximumf %13, %14 : vector<16x1024xf32>
    %16 = arith.truncf %15 : vector<16x1024xf32> to vector<16x1024xbf16>
    %c0_12 = arith.constant 0 : index
    %c0_13 = arith.constant 0 : index
    %17 = vector.load %arg6[%c0_12, %c0_13] : memref<1024x512xbf16, #tpu.memory_space<vmem>>, vector<1024x512xbf16>
    %cst_14 = arith.constant dense<0.000000e+00> : vector<16x512xf32>
    %18 = tpu.matmul %16, %17, %cst_14 {dimension_numbers = #tpu.dot_dimension_numbers<[1], [0], [0], [1], [0, 0, 1, 1], [], []>} : vector<16x1024xbf16>, vector<1024x512xbf16>, vector<16x512xf32> -> vector<16x512xf32>
    %c0_15 = arith.constant 0 : index
    %c0_16 = arith.constant 0 : index
    %19 = vector.load %arg7[%c0_15, %c0_16] : memref<1x512xf32, #tpu.memory_space<vmem>>, vector<1x512xf32>
    %20 = vector.broadcast %19 : vector<1x512xf32> to vector<16x512xf32>
    %21 = arith.addf %18, %20 : vector<16x512xf32>
    %cst_17 = arith.constant 0.000000e+00 : f32
    %22 = vector.broadcast %cst_17 : f32 to vector<16x512xf32>
    %23 = arith.maximumf %21, %22 : vector<16x512xf32>
    %24 = arith.truncf %23 : vector<16x512xf32> to vector<16x512xbf16>
    %c0_18 = arith.constant 0 : index
    %c0_19 = arith.constant 0 : index
    %25 = vector.load %arg8[%c0_18, %c0_19] : memref<512x256xbf16, #tpu.memory_space<vmem>>, vector<512x256xbf16>
    %cst_20 = arith.constant dense<0.000000e+00> : vector<16x256xf32>
    %26 = tpu.matmul %24, %25, %cst_20 {dimension_numbers = #tpu.dot_dimension_numbers<[1], [0], [0], [1], [0, 0, 1, 1], [], []>} : vector<16x512xbf16>, vector<512x256xbf16>, vector<16x256xf32> -> vector<16x256xf32>
    %c0_21 = arith.constant 0 : index
    %c0_22 = arith.constant 0 : index
    %27 = vector.load %arg9[%c0_21, %c0_22] : memref<1x256xf32, #tpu.memory_space<vmem>>, vector<1x256xf32>
    %28 = vector.broadcast %27 : vector<1x256xf32> to vector<16x256xf32>
    %29 = arith.addf %26, %28 : vector<16x256xf32>
    %cst_23 = arith.constant 0.000000e+00 : f32
    %30 = vector.broadcast %cst_23 : f32 to vector<16x256xf32>
    %31 = arith.maximumf %29, %30 : vector<16x256xf32>
    %32 = arith.truncf %31 : vector<16x256xf32> to vector<16x256xbf16>
    %c0_24 = arith.constant 0 : index
    %c0_25 = arith.constant 0 : index
    %33 = vector.load %arg10[%c0_24, %c0_25] : memref<256x128xbf16, #tpu.memory_space<vmem>>, vector<256x128xbf16>
    %cst_26 = arith.constant dense<0.000000e+00> : vector<16x128xf32>
    %34 = tpu.matmul %32, %33, %cst_26 {dimension_numbers = #tpu.dot_dimension_numbers<[1], [0], [0], [1], [0, 0, 1, 1], [], []>} : vector<16x256xbf16>, vector<256x128xbf16>, vector<16x128xf32> -> vector<16x128xf32>
    %c0_27 = arith.constant 0 : index
    %c0_28 = arith.constant 0 : index
    %35 = vector.load %arg11[%c0_27, %c0_28] : memref<1x128xf32, #tpu.memory_space<vmem>>, vector<1x128xf32>
    %36 = vector.broadcast %35 : vector<1x128xf32> to vector<16x128xf32>
    %37 = arith.addf %34, %36 : vector<16x128xf32>
    %c0_29 = arith.constant 0 : index
    %c0_30 = arith.constant 0 : index
    %38 = vector.load %arg12[%c0_29, %c0_30] : memref<16x128xf32, #tpu.memory_space<vmem>>, vector<16x128xf32>
    tpu.vector_store %arg12[%c0_29, %c0_30], %37 {strides = array<i32>} : memref<16x128xf32, #tpu.memory_space<vmem>>, vector<16x128xf32>,
    return
  }
  func.func @transform_0(%arg0: i32) -> (i32, i32) {
    %c0_i32 = arith.constant 0 : i32
    %c0_i32_0 = arith.constant 0 : i32
    return %arg0, %c0_i32 : i32, i32
  }
  func.func @transform_1(%arg0: i32) -> (i32, i32) {
    %c0_i32 = arith.constant 0 : i32
    %c0_i32_0 = arith.constant 0 : i32
    %c0_i32_1 = arith.constant 0 : i32
    return %c0_i32, %c0_i32_0 : i32, i32
  }
  func.func @transform_2(%arg0: i32) -> (i32, i32) {
    %c0_i32 = arith.constant 0 : i32
    %c0_i32_0 = arith.constant 0 : i32
    %c0_i32_1 = arith.constant 0 : i32
    return %c0_i32, %c0_i32_0 : i32, i32
  }
  func.func @transform_3(%arg0: i32) -> (i32, i32) {
    %c0_i32 = arith.constant 0 : i32
    %c0_i32_0 = arith.constant 0 : i32
    %c0_i32_1 = arith.constant 0 : i32
    return %c0_i32, %c0_i32_0 : i32, i32
  }
  func.func @transform_4(%arg0: i32) -> (i32, i32) {
    %c0_i32 = arith.constant 0 : i32
    %c0_i32_0 = arith.constant 0 : i32
    %c0_i32_1 = arith.constant 0 : i32
    return %c0_i32, %c0_i32_0 : i32, i32
  }
  func.func @transform_5(%arg0: i32) -> (i32, i32) {
    %c0_i32 = arith.constant 0 : i32
    %c0_i32_0 = arith.constant 0 : i32
    %c0_i32_1 = arith.constant 0 : i32
    return %c0_i32, %c0_i32_0 : i32, i32
  }
  func.func @transform_6(%arg0: i32) -> (i32, i32) {
    %c0_i32 = arith.constant 0 : i32
    %c0_i32_0 = arith.constant 0 : i32
    %c0_i32_1 = arith.constant 0 : i32
    return %c0_i32, %c0_i32_0 : i32, i32
  }
  func.func @transform_7(%arg0: i32) -> (i32, i32) {
    %c0_i32 = arith.constant 0 : i32
    %c0_i32_0 = arith.constant 0 : i32
    %c0_i32_1 = arith.constant 0 : i32
    return %c0_i32, %c0_i32_0 : i32, i32
  }
  func.func @transform_8(%arg0: i32) -> (i32, i32) {
    %c0_i32 = arith.constant 0 : i32
    %c0_i32_0 = arith.constant 0 : i32
    %c0_i32_1 = arith.constant 0 : i32
    return %c0_i32, %c0_i32_0 : i32, i32
  }
  func.func @transform_9(%arg0: i32) -> (i32, i32) {
    %c0_i32 = arith.constant 0 : i32
    %c0_i32_0 = arith.constant 0 : i32
    %c0_i32_1 = arith.constant 0 : i32
    return %c0_i32, %c0_i32_0 : i32, i32
  }
  func.func @transform_10(%arg0: i32) -> (i32, i32) {
    %c0_i32 = arith.constant 0 : i32
    %c0_i32_0 = arith.constant 0 : i32
    %c0_i32_1 = arith.constant 0 : i32
    return %c0_i32, %c0_i32_0 : i32, i32
  }
  func.func @transform_11(%arg0: i32) -> (i32, i32) {
    %c0_i32 = arith.constant 0 : i32
    %c0_i32_0 = arith.constant 0 : i32
    return %arg0, %c0_i32 : i32, i32
  }
}

</mosaic_0001>

<llo_original>
// kernel: tpu_custom_call.1
$region0: #{tpu_custom_call.1}
  #allocation0 [shape = 'u32[]', space=smem, size = 0x4, offset = 0x4, fixed_abs, tag = 'smem constant byte address 0x4 - core index']
  #allocation1 [shape = 'u32[144,128]{1,0:T(1,128)}', space=vmem, size = 0x12000, scoped, tag = 'internal scratch']
  %s0 = inlined_call_operand.hbm [shape: bf16[16,640], index: 0, kind: input, shape index: {}]
  %s1 = inlined_call_operand.hbm [shape: bf16[640,1024], index: 1, kind: input, shape index: {}]
  %s2 = inlined_call_operand.hbm [shape: f32[1,1024], index: 2, kind: input, shape index: {}]
  %s3 = inlined_call_operand.hbm [shape: bf16[1024,1024], index: 3, kind: input, shape index: {}]
  %s4 = inlined_call_operand.hbm [shape: f32[1,1024], index: 4, kind: input, shape index: {}]
  %s5 = inlined_call_operand.hbm [shape: bf16[1024,512], index: 5, kind: input, shape index: {}]
  %s6 = inlined_call_operand.hbm [shape: f32[1,512], index: 6, kind: input, shape index: {}]
  %s7 = inlined_call_operand.hbm [shape: bf16[512,256], index: 7, kind: input, shape index: {}]
  %s8 = inlined_call_operand.hbm [shape: f32[1,256], index: 8, kind: input, shape index: {}]
  %s9 = inlined_call_operand.hbm [shape: bf16[256,128], index: 9, kind: input, shape index: {}]
  %s10 = inlined_call_operand.hbm [shape: f32[1,128], index: 10, kind: input, shape index: {}]
  %s11 = inlined_call_operand.hbm [shape: f32[16,128], index: 11, kind: output, shape index: {}]
  %s12 = sld [smem:[#allocation0]]
  $region98: #{tpu_custom_call.1} parent=0
    _
  %s14 = ssub.s32 1, %s12
  %s15 = scalar_select 0, %s14, %s12
  $region1: #{tpu_custom_call.1} parent=0
    #allocation2 [shape = 'u8[20480]{0}', space=vmem, size = 0x5000, scoped, tag = 'input window, operand 0, single buffered']
    #allocation3 [shape = 's32[1]{0}', space=sflag, size = 0x4, scoped, tag = 'scoped memory for tpu_custom_call.1']
    #allocation4 [shape = 's32[1]{0}', space=sflag, size = 0x4, scoped, tag = 'scoped memory for tpu_custom_call.1']
    #allocation5 [shape = 'u8[1310720]{0}', space=vmem, size = 0x140000, scoped, tag = 'input window, operand 1, single buffered']
    #allocation6 [shape = 's32[1]{0}', space=sflag, size = 0x4, scoped, tag = 'scoped memory for tpu_custom_call.1']
    #allocation7 [shape = 'u8[4096]{0}', space=vmem, size = 0x1000, scoped, tag = 'input window, operand 2, single buffered']
    #allocation8 [shape = 'u8[2097152]{0}', space=vmem, size = 0x200000, scoped, tag = 'input window, operand 3, single buffered']
    #allocation9 [shape = 's32[1]{0}', space=sflag, size = 0x4, scoped, tag = 'scoped memory for tpu_custom_call.1']
    #allocation10 [shape = 'u8[4096]{0}', space=vmem, size = 0x1000, scoped, tag = 'input window, operand 4, single buffered']
    #allocation11 [shape = 'u8[1048576]{0}', space=vmem, size = 0x100000, scoped, tag = 'input window, operand 5, single buffered']
    #allocation12 [shape = 's32[1]{0}', space=sflag, size = 0x4, scoped, tag = 'scoped memory for tpu_custom_call.1']
    #allocation13 [shape = 'u8[2048]{0}', space=vmem, size = 0x800, scoped, tag = 'input window, operand 6, single buffered']
    #allocation14 [shape = 'u8[262144]{0}', space=vmem, size = 0x40000, scoped, tag = 'input window, operand 7, single buffered']
    #allocation15 [shape = 's32[1]{0}', space=sflag, size = 0x4, scoped, tag = 'scoped memory for tpu_custom_call.1']
    #allocation16 [shape = 'u8[1024]{0}', space=vmem, size = 0x400, scoped, tag = 'input window, operand 8, single buffered']
    #allocation17 [shape = 'u8[65536]{0}', space=vmem, size = 0x10000, scoped, tag = 'input window, operand 9, single buffered']
    #allocation18 [shape = 's32[1]{0}', space=sflag, size = 0x4, scoped, tag = 'scoped memory for tpu_custom_call.1']
    #allocation19 [shape = 'u8[512]{0}', space=vmem, size = 0x400, scoped, tag = 'input window, operand 10, single buffered']
    #allocation20 [shape = 'u8[8192]{0}', space=vmem, size = 0x2000, scoped, tag = 'output window, operand 0, single buffered']
    %16 = vsyncpa [#allocation3], 0
    %17 = vsyncpa [#allocation6], 0
    %18 = vsyncpa [#allocation9], 0
    %19 = vsyncpa [#allocation12], 0
    %20 = vsyncpa [#allocation15], 0
    %21 = vsyncpa [#allocation18], 0
    %22 = vsyncpa [#allocation4], 0
    // Predicated region
    $region2: #{tpu_custom_call.1} parent=1 // pred_check
      _
    $region3: #{tpu_custom_call.1} parent=1 // pred_check_branch
      %24 = sbr.rel (0) target = $region5
    $region4: #{tpu_custom_call.1} parent=1 // pred_region
      %s26 = ssub.s32 640, 640
      %27 = vsyncadd [#allocation3], %s26
      %s28 = sshll.u32 [#allocation2], 4
      %s29 = int_to_ptr.vmem [resolvable:$true] %s28
      %34 = dma.hbm_to_vmem [thread:$0]  %s0, 640, %s29, [#allocation3], 320, 320, 20
    $region5: #{tpu_custom_call.1} parent=1 // pred_fallthru
      _
    // Predicated region
    $region6: #{tpu_custom_call.1} parent=1 // pred_check
      _
    $region7: #{tpu_custom_call.1} parent=1 // pred_check_branch
      %36 = sbr.rel (0) target = $region9
    $region8: #{tpu_custom_call.1} parent=1 // pred_region
      %s38 = ssub.s32 40960, 40960
      %39 = vsyncadd [#allocation6], %s38
      %s40 = sshll.u32 [#allocation5], 4
      %s41 = int_to_ptr.vmem [resolvable:$true] %s40
      %46 = dma.hbm_to_vmem [thread:$0]  %s1, 40960, %s41, [#allocation6], 512, 512, 32
    $region9: #{tpu_custom_call.1} parent=1 // pred_fallthru
      _
    // Predicated region
    $region10: #{tpu_custom_call.1} parent=1 // pred_check
      _
    $region11: #{tpu_custom_call.1} parent=1 // pred_check_branch
      %48 = sbr.rel (0) target = $region13
    $region12: #{tpu_custom_call.1} parent=1 // pred_region
      %s50 = ssub.s32 128, 128
      %51 = vsyncadd [#allocation6], %s50
      %s53 = sshll.u32 [#allocation7], 4
      %s54 = int_to_ptr.vmem [resolvable:$true] %s53
      %56 = dma.hbm_to_vmem [thread:$0]  %s2, 128, %s54, [#allocation6]
    $region13: #{tpu_custom_call.1} parent=1 // pred_fallthru
      _
    // Predicated region
    $region14: #{tpu_custom_call.1} parent=1 // pred_check
      _
    $region15: #{tpu_custom_call.1} parent=1 // pred_check_branch
      %58 = sbr.rel (0) target = $region17
    $region16: #{tpu_custom_call.1} parent=1 // pred_region
      %s60 = ssub.s32 65536, 65536
      %61 = vsyncadd [#allocation9], %s60
      %s62 = sshll.u32 [#allocation8], 4
      %s63 = int_to_ptr.vmem [resolvable:$true] %s62
      %68 = dma.hbm_to_vmem [thread:$0]  %s3, 65536, %s63, [#allocation9], 512, 512, 32
    $region17: #{tpu_custom_call.1} parent=1 // pred_fallthru
      _
    // Predicated region
    $region18: #{tpu_custom_call.1} parent=1 // pred_check
      _
    $region19: #{tpu_custom_call.1} parent=1 // pred_check_branch
      %70 = sbr.rel (0) target = $region21
    $region20: #{tpu_custom_call.1} parent=1 // pred_region
      %s72 = ssub.s32 128, 128
      %73 = vsyncadd [#allocation9], %s72
      %s75 = sshll.u32 [#allocation10], 4
      %s76 = int_to_ptr.vmem [resolvable:$true] %s75
      %78 = dma.hbm_to_vmem [thread:$0]  %s4, 128, %s76, [#allocation9]
    $region21: #{tpu_custom_call.1} parent=1 // pred_fallthru
      _
    // Predicated region
    $region22: #{tpu_custom_call.1} parent=1 // pred_check
      _
    $region23: #{tpu_custom_call.1} parent=1 // pred_check_branch
      %80 = sbr.rel (0) target = $region25
    $region24: #{tpu_custom_call.1} parent=1 // pred_region
      %s82 = ssub.s32 32768, 32768
      %83 = vsyncadd [#allocation12], %s82
      %s84 = sshll.u32 [#allocation11], 4
      %s85 = int_to_ptr.vmem [resolvable:$true] %s84
      %90 = dma.hbm_to_vmem [thread:$0]  %s5, 32768, %s85, [#allocation12], 256, 256, 16
    $region25: #{tpu_custom_call.1} parent=1 // pred_fallthru
      _
    // Predicated region
    $region26: #{tpu_custom_call.1} parent=1 // pred_check
      _
    $region27: #{tpu_custom_call.1} parent=1 // pred_check_branch
      %92 = sbr.rel (0) target = $region29
    $region28: #{tpu_custom_call.1} parent=1 // pred_region
      %s94 = ssub.s32 64, 64
      %95 = vsyncadd [#allocation12], %s94
      %s97 = sshll.u32 [#allocation13], 4
      %s98 = int_to_ptr.vmem [resolvable:$true] %s97
      %100 = dma.hbm_to_vmem [thread:$0]  %s6, 64, %s98, [#allocation12]
    $region29: #{tpu_custom_call.1} parent=1 // pred_fallthru
      _
    // Predicated region
    $region30: #{tpu_custom_call.1} parent=1 // pred_check
      _
    $region31: #{tpu_custom_call.1} parent=1 // pred_check_branch
      %102 = sbr.rel (0) target = $region33
    $region32: #{tpu_custom_call.1} parent=1 // pred_region
      %s104 = ssub.s32 8192, 8192
      %105 = vsyncadd [#allocation15], %s104
      %s106 = sshll.u32 [#allocation14], 4
      %s107 = int_to_ptr.vmem [resolvable:$true] %s106
      %112 = dma.hbm_to_vmem [thread:$0]  %s7, 8192, %s107, [#allocation15], 128, 128, 8
    $region33: #{tpu_custom_call.1} parent=1 // pred_fallthru
      _
    // Predicated region
    $region34: #{tpu_custom_call.1} parent=1 // pred_check
      _
    $region35: #{tpu_custom_call.1} parent=1 // pred_check_branch
      %114 = sbr.rel (0) target = $region37
    $region36: #{tpu_custom_call.1} parent=1 // pred_region
      %s116 = ssub.s32 32, 32
      %117 = vsyncadd [#allocation15], %s116
      %s119 = sshll.u32 [#allocation16], 4
      %s120 = int_to_ptr.vmem [resolvable:$true] %s119
      %122 = dma.hbm_to_vmem [thread:$0]  %s8, 32, %s120, [#allocation15]
    $region37: #{tpu_custom_call.1} parent=1 // pred_fallthru
      _
    // Predicated region
    $region38: #{tpu_custom_call.1} parent=1 // pred_check
      _
    $region39: #{tpu_custom_call.1} parent=1 // pred_check_branch
      %124 = sbr.rel (0) target = $region41
    $region40: #{tpu_custom_call.1} parent=1 // pred_region
      %s126 = ssub.s32 2048, 2048
      %127 = vsyncadd [#allocation18], %s126
      %s128 = sshll.u32 [#allocation17], 4
      %s129 = int_to_ptr.vmem [resolvable:$true] %s128
      %134 = dma.hbm_to_vmem [thread:$0]  %s9, 2048, %s129, [#allocation18], 64, 64, 4
    $region41: #{tpu_custom_call.1} parent=1 // pred_fallthru
      _
    // Predicated region
    $region42: #{tpu_custom_call.1} parent=1 // pred_check
      _
    $region43: #{tpu_custom_call.1} parent=1 // pred_check_branch
      %136 = sbr.rel (0) target = $region45
    $region44: #{tpu_custom_call.1} parent=1 // pred_region
      %s138 = ssub.s32 16, 16
      %139 = vsyncadd [#allocation18], %s138
      %s141 = sshll.u32 [#allocation19], 4
      %s142 = int_to_ptr.vmem [resolvable:$true] %s141
      %144 = dma.hbm_to_vmem [thread:$0]  %s10, 16, %s142, [#allocation18]
    $region45: #{tpu_custom_call.1} parent=1 // pred_fallthru
      _
    // Predicated region
    $region46: #{tpu_custom_call.1} parent=1 // pred_check
      _
    $region47: #{tpu_custom_call.1} parent=1 // pred_check_branch
      %146 = sbr.rel (0) target = $region49
    $region48: #{tpu_custom_call.1} parent=1 // pred_region
      %147 = dma.done [#allocation3], 640
    $region49: #{tpu_custom_call.1} parent=1 // pred_fallthru
      _
    // Predicated region
    $region50: #{tpu_custom_call.1} parent=1 // pred_check
      _
    $region51: #{tpu_custom_call.1} parent=1 // pred_check_branch
      %149 = sbr.rel (0) target = $region53
    $region52: #{tpu_custom_call.1} parent=1 // pred_region
      %150 = dma.done [#allocation6], 40960
    $region53: #{tpu_custom_call.1} parent=1 // pred_fallthru
      _
    // Predicated region
    $region54: #{tpu_custom_call.1} parent=1 // pred_check
      _
    $region55: #{tpu_custom_call.1} parent=1 // pred_check_branch
      %152 = sbr.rel (0) target = $region57
    $region56: #{tpu_custom_call.1} parent=1 // pred_region
      %153 = dma.done [#allocation6], 128
    $region57: #{tpu_custom_call.1} parent=1 // pred_fallthru
      _
    // Predicated region
    $region58: #{tpu_custom_call.1} parent=1 // pred_check
      _
    $region59: #{tpu_custom_call.1} parent=1 // pred_check_branch
      %155 = sbr.rel (0) target = $region61
    $region60: #{tpu_custom_call.1} parent=1 // pred_region
      %156 = dma.done [#allocation9], 65536
    $region61: #{tpu_custom_call.1} parent=1 // pred_fallthru
      _
    // Predicated region
    $region62: #{tpu_custom_call.1} parent=1 // pred_check
      _
    $region63: #{tpu_custom_call.1} parent=1 // pred_check_branch
      %158 = sbr.rel (0) target = $region65
    $region64: #{tpu_custom_call.1} parent=1 // pred_region
      %159 = dma.done [#allocation9], 128
    $region65: #{tpu_custom_call.1} parent=1 // pred_fallthru
      _
    // Predicated region
    $region66: #{tpu_custom_call.1} parent=1 // pred_check
      _
    $region67: #{tpu_custom_call.1} parent=1 // pred_check_branch
      %161 = sbr.rel (0) target = $region69
    $region68: #{tpu_custom_call.1} parent=1 // pred_region
      %162 = dma.done [#allocation12], 32768
    $region69: #{tpu_custom_call.1} parent=1 // pred_fallthru
      _
    // Predicated region
    $region70: #{tpu_custom_call.1} parent=1 // pred_check
      _
    $region71: #{tpu_custom_call.1} parent=1 // pred_check_branch
      %164 = sbr.rel (0) target = $region73
    $region72: #{tpu_custom_call.1} parent=1 // pred_region
      %165 = dma.done [#allocation12], 64
    $region73: #{tpu_custom_call.1} parent=1 // pred_fallthru
      _
    // Predicated region
    $region74: #{tpu_custom_call.1} parent=1 // pred_check
      _
    $region75: #{tpu_custom_call.1} parent=1 // pred_check_branch
      %167 = sbr.rel (0) target = $region77
    $region76: #{tpu_custom_call.1} parent=1 // pred_region
      %168 = dma.done [#allocation15], 8192
    $region77: #{tpu_custom_call.1} parent=1 // pred_fallthru
      _
    // Predicated region
    $region78: #{tpu_custom_call.1} parent=1 // pred_check
      _
    $region79: #{tpu_custom_call.1} parent=1 // pred_check_branch
      %170 = sbr.rel (0) target = $region81
    $region80: #{tpu_custom_call.1} parent=1 // pred_region
      %171 = dma.done [#allocation15], 32
    $region81: #{tpu_custom_call.1} parent=1 // pred_fallthru
      _
    // Predicated region
    $region82: #{tpu_custom_call.1} parent=1 // pred_check
      _
    $region83: #{tpu_custom_call.1} parent=1 // pred_check_branch
      %173 = sbr.rel (0) target = $region85
    $region84: #{tpu_custom_call.1} parent=1 // pred_region
      %174 = dma.done [#allocation18], 2048
    $region85: #{tpu_custom_call.1} parent=1 // pred_fallthru
      _
    // Predicated region
    $region86: #{tpu_custom_call.1} parent=1 // pred_check
      _
    $region87: #{tpu_custom_call.1} parent=1 // pred_check_branch
      %176 = sbr.rel (0) target = $region89
    $region88: #{tpu_custom_call.1} parent=1 // pred_region
      %177 = dma.done [#allocation18], 16
    $region89: #{tpu_custom_call.1} parent=1 // pred_fallthru
      _
    %v179 = vld [vmem:[#allocation2] sm:$0xff]
    %v180 = vld [vmem:[#allocation2 + $0x8] sm:$0xff]
    %v181 = vld [vmem:[#allocation2 + $0x10] sm:$0xf]
    %v182 = vld [vmem:[#allocation2 + $0x14] sm:$0xff]
    %v183 = vld [vmem:[#allocation2 + $0x1c] sm:$0xff]
    %v184 = vld [vmem:[#allocation2 + $0x24] sm:$0xf]
    %v185 = vld [vmem:[#allocation5] sm:$0xff]
    %v186 = vld [vmem:[#allocation5 + $0x8] sm:$0xff]
    %v187 = vld [vmem:[#allocation5 + $0x10] sm:$0xff]
    %v188 = vld [vmem:[#allocation5 + $0x18] sm:$0xff]
    %v189 = vld [vmem:[#allocation5 + $0x20] sm:$0xff]
    %v190 = vld [vmem:[#allocation5 + $0x28] sm:$0xff]
    %v191 = vld [vmem:[#allocation5 + $0x30] sm:$0xff]
    %v192 = vld [vmem:[#allocation5 + $0x38] sm:$0xff]
    %v193 = vld [vmem:[#allocation5 + $0x40] sm:$0xff]
    %v194 = vld [vmem:[#allocation5 + $0x48] sm:$0xff]
    %v195 = vld [vmem:[#allocation5 + $0x50] sm:$0xff]
    %v196 = vld [vmem:[#allocation5 + $0x58] sm:$0xff]
    %v197 = vld [vmem:[#allocation5 + $0x60] sm:$0xff]
    %v198 = vld [vmem:[#allocation5 + $0x68] sm:$0xff]
    %v199 = vld [vmem:[#allocation5 + $0x70] sm:$0xff]
    %v200 = vld [vmem:[#allocation5 + $0x78] sm:$0xff]
    %v201 = vld [vmem:[#allocation5 + $0x80] sm:$0xff]
    %v202 = vld [vmem:[#allocation5 + $0x88] sm:$0xff]
    %v203 = vld [vmem:[#allocation5 + $0x90] sm:$0xff]
    %v204 = vld [vmem:[#allocation5 + $0x98] sm:$0xff]
    %v205 = vld [vmem:[#allocation5 + $0xa0] sm:$0xff]
    %v206 = vld [vmem:[#allocation5 + $0xa8] sm:$0xff]
    %v207 = vld [vmem:[#allocation5 + $0xb0] sm:$0xff]
    %v208 = vld [vmem:[#allocation5 + $0xb8] sm:$0xff]
    %v209 = vld [vmem:[#allocation5 + $0xc0] sm:$0xff]
    %v210 = vld [vmem:[#allocation5 + $0xc8] sm:$0xff]
    %v211 = vld [vmem:[#allocation5 + $0xd0] sm:$0xff]
    %v212 = vld [vmem:[#allocation5 + $0xd8] sm:$0xff]
    %v213 = vld [vmem:[#allocation5 + $0xe0] sm:$0xff]
    %v214 = vld [vmem:[#allocation5 + $0xe8] sm:$0xff]
    %v215 = vld [vmem:[#allocation5 + $0xf0] sm:$0xff]
    %v216 = vld [vmem:[#allocation5 + $0xf8] sm:$0xff]
    %v217 = vld [vmem:[#allocation5 + $0x100] sm:$0xff]
    %v218 = vld [vmem:[#allocation5 + $0x108] sm:$0xff]
    %v219 = vld [vmem:[#allocation5 + $0x110] sm:$0xff]
    %v220 = vld [vmem:[#allocation5 + $0x118] sm:$0xff]
    %v221 = vld [vmem:[#allocation5 + $0x120] sm:$0xff]
    %v222 = vld [vmem:[#allocation5 + $0x128] sm:$0xff]
    %v223 = vld [vmem:[#allocation5 + $0x130] sm:$0xff]
    %v224 = vld [vmem:[#allocation5 + $0x138] sm:$0xff]
    %v225 = vld [vmem:[#allocation5 + $0x140] sm:$0xff]
    %v226 = vld [vmem:[#allocation5 + $0x148] sm:$0xff]
    %v227 = vld [vmem:[#allocation5 + $0x150] sm:$0xff]
    %v228 = vld [vmem:[#allocation5 + $0x158] sm:$0xff]
    %v229 = vld [vmem:[#allocation5 + $0x160] sm:$0xff]
    %v230 = vld [vmem:[#allocation5 + $0x168] sm:$0xff]
    %v231 = vld [vmem:[#allocation5 + $0x170] sm:$0xff]
    %v232 = vld [vmem:[#allocation5 + $0x178] sm:$0xff]
    %v233 = vld [vmem:[#allocation5 + $0x180] sm:$0xff]
    %v234 = vld [vmem:[#allocation5 + $0x188] sm:$0xff]
    %v235 = vld [vmem:[#allocation5 + $0x190] sm:$0xff]
    %v236 = vld [vmem:[#allocation5 + $0x198] sm:$0xff]
    %v237 = vld [vmem:[#allocation5 + $0x1a0] sm:$0xff]
    %v238 = vld [vmem:[#allocation5 + $0x1a8] sm:$0xff]
    %v239 = vld [vmem:[#allocation5 + $0x1b0] sm:$0xff]
    %v240 = vld [vmem:[#allocation5 + $0x1b8] sm:$0xff]
    %v241 = vld [vmem:[#allocation5 + $0x1c0] sm:$0xff]
    %v242 = vld [vmem:[#allocation5 + $0x1c8] sm:$0xff]
    %v243 = vld [vmem:[#allocation5 + $0x1d0] sm:$0xff]
    %v244 = vld [vmem:[#allocation5 + $0x1d8] sm:$0xff]
    %v245 = vld [vmem:[#allocation5 + $0x1e0] sm:$0xff]
    %v246 = vld [vmem:[#allocation5 + $0x1e8] sm:$0xff]
    %v247 = vld [vmem:[#allocation5 + $0x1f0] sm:$0xff]
    %v248 = vld [vmem:[#allocation5 + $0x1f8] sm:$0xff]
    %v249 = vld [vmem:[#allocation5 + $0x200] sm:$0xff]
    %v250 = vld [vmem:[#allocation5 + $0x208] sm:$0xff]
    %v251 = vld [vmem:[#allocation5 + $0x210] sm:$0xff]
    %v252 = vld [vmem:[#allocation5 + $0x218] sm:$0xff]
    %v253 = vld [vmem:[#allocation5 + $0x220] sm:$0xff]
    %v254 = vld [vmem:[#allocation5 + $0x228] sm:$0xff]
    %v255 = vld [vmem:[#allocation5 + $0x230] sm:$0xff]
    %v256 = vld [vmem:[#allocation5 + $0x238] sm:$0xff]
    %v257 = vld [vmem:[#allocation5 + $0x240] sm:$0xff]
    %v258 = vld [vmem:[#allocation5 + $0x248] sm:$0xff]
    %v259 = vld [vmem:[#allocation5 + $0x250] sm:$0xff]
    %v260 = vld [vmem:[#allocation5 + $0x258] sm:$0xff]
    %v261 = vld [vmem:[#allocation5 + $0x260] sm:$0xff]
    %v262 = vld [vmem:[#allocation5 + $0x268] sm:$0xff]
    %v263 = vld [vmem:[#allocation5 + $0x270] sm:$0xff]
    %v264 = vld [vmem:[#allocation5 + $0x278] sm:$0xff]
    %v265 = vld [vmem:[#allocation5 + $0x280] sm:$0xff]
    %v266 = vld [vmem:[#allocation5 + $0x288] sm:$0xff]
    %v267 = vld [vmem:[#allocation5 + $0x290] sm:$0xff]
    %v268 = vld [vmem:[#allocation5 + $0x298] sm:$0xff]
    %v269 = vld [vmem:[#allocation5 + $0x2a0] sm:$0xff]
    %v270 = vld [vmem:[#allocation5 + $0x2a8] sm:$0xff]
    %v271 = vld [vmem:[#allocation5 + $0x2b0] sm:$0xff]
    %v272 = vld [vmem:[#allocation5 + $0x2b8] sm:$0xff]
    %v273 = vld [vmem:[#allocation5 + $0x2c0] sm:$0xff]
    %v274 = vld [vmem:[#allocation5 + $0x2c8] sm:$0xff]
    %v275 = vld [vmem:[#allocation5 + $0x2d0] sm:$0xff]
    %v276 = vld [vmem:[#allocation5 + $0x2d8] sm:$0xff]
    %v277 = vld [vmem:[#allocation5 + $0x2e0] sm:$0xff]
    %v278 = vld [vmem:[#allocation5 + $0x2e8] sm:$0xff]
    %v279 = vld [vmem:[#allocation5 + $0x2f0] sm:$0xff]
    %v280 = vld [vmem:[#allocation5 + $0x2f8] sm:$0xff]
    %v281 = vld [vmem:[#allocation5 + $0x300] sm:$0xff]
    %v282 = vld [vmem:[#allocation5 + $0x308] sm:$0xff]
    %v283 = vld [vmem:[#allocation5 + $0x310] sm:$0xff]
    %v284 = vld [vmem:[#allocation5 + $0x318] sm:$0xff]
    %v285 = vld [vmem:[#allocation5 + $0x320] sm:$0xff]
    %v286 = vld [vmem:[#allocation5 + $0x328] sm:$0xff]
    %v287 = vld [vmem:[#allocation5 + $0x330] sm:$0xff]
    %v288 = vld [vmem:[#allocation5 + $0x338] sm:$0xff]
    %v289 = vld [vmem:[#allocation5 + $0x340] sm:$0xff]
    %v290 = vld [vmem:[#allocation5 + $0x348] sm:$0xff]
    %v291 = vld [vmem:[#allocation5 + $0x350] sm:$0xff]
    %v292 = vld [vmem:[#allocation5 + $0x358] sm:$0xff]
    %v293 = vld [vmem:[#allocation5 + $0x360] sm:$0xff]
    %v294 = vld [vmem:[#allocation5 + $0x368] sm:$0xff]
    %v295 = vld [vmem:[#allocation5 + $0x370] sm:$0xff]
    %v296 = vld [vmem:[#allocation5 + $0x378] sm:$0xff]
    %v297 = vld [vmem:[#allocation5 + $0x380] sm:$0xff]
    %v298 = vld [vmem:[#allocation5 + $0x388] sm:$0xff]
    %v299 = vld [vmem:[#allocation5 + $0x390] sm:$0xff]
    %v300 = vld [vmem:[#allocation5 + $0x398] sm:$0xff]
    %v301 = vld [vmem:[#allocation5 + $0x3a0] sm:$0xff]
    %v302 = vld [vmem:[#allocation5 + $0x3a8] sm:$0xff]
    %v303 = vld [vmem:[#allocation5 + $0x3b0] sm:$0xff]
    %v304 = vld [vmem:[#allocation5 + $0x3b8] sm:$0xff]
    %v305 = vld [vmem:[#allocation5 + $0x3c0] sm:$0xff]
    %v306 = vld [vmem:[#allocation5 + $0x3c8] sm:$0xff]
    %v307 = vld [vmem:[#allocation5 + $0x3d0] sm:$0xff]
    %v308 = vld [vmem:[#allocation5 + $0x3d8] sm:$0xff]
    %v309 = vld [vmem:[#allocation5 + $0x3e0] sm:$0xff]
    %v310 = vld [vmem:[#allocation5 + $0x3e8] sm:$0xff]
    %v311 = vld [vmem:[#allocation5 + $0x3f0] sm:$0xff]
    %v312 = vld [vmem:[#allocation5 + $0x3f8] sm:$0xff]
    %v313 = vld [vmem:[#allocation5 + $0x400] sm:$0xff]
    %v314 = vld [vmem:[#allocation5 + $0x408] sm:$0xff]
    %v315 = vld [vmem:[#allocation5 + $0x410] sm:$0xff]
    %v316 = vld [vmem:[#allocation5 + $0x418] sm:$0xff]
    %v317 = vld [vmem:[#allocation5 + $0x420] sm:$0xff]
    %v318 = vld [vmem:[#allocation5 + $0x428] sm:$0xff]
    %v319 = vld [vmem:[#allocation5 + $0x430] sm:$0xff]
    %v320 = vld [vmem:[#allocation5 + $0x438] sm:$0xff]
    %v321 = vld [vmem:[#allocation5 + $0x440] sm:$0xff]
    %v322 = vld [vmem:[#allocation5 + $0x448] sm:$0xff]
    %v323 = vld [vmem:[#allocation5 + $0x450] sm:$0xff]
    %v324 = vld [vmem:[#allocation5 + $0x458] sm:$0xff]
    %v325 = vld [vmem:[#allocation5 + $0x460] sm:$0xff]
    %v326 = vld [vmem:[#allocation5 + $0x468] sm:$0xff]
    %v327 = vld [vmem:[#allocation5 + $0x470] sm:$0xff]
    %v328 = vld [vmem:[#allocation5 + $0x478] sm:$0xff]
    %v329 = vld [vmem:[#allocation5 + $0x480] sm:$0xff]
    %v330 = vld [vmem:[#allocation5 + $0x488] sm:$0xff]
    %v331 = vld [vmem:[#allocation5 + $0x490] sm:$0xff]
    %v332 = vld [vmem:[#allocation5 + $0x498] sm:$0xff]
    %v333 = vld [vmem:[#allocation5 + $0x4a0] sm:$0xff]
    %v334 = vld [vmem:[#allocation5 + $0x4a8] sm:$0xff]
    %v335 = vld [vmem:[#allocation5 + $0x4b0] sm:$0xff]
    %v336 = vld [vmem:[#allocation5 + $0x4b8] sm:$0xff]
    %v337 = vld [vmem:[#allocation5 + $0x4c0] sm:$0xff]
    %v338 = vld [vmem:[#allocation5 + $0x4c8] sm:$0xff]
    %v339 = vld [vmem:[#allocation5 + $0x4d0] sm:$0xff]
    %v340 = vld [vmem:[#allocation5 + $0x4d8] sm:$0xff]
    %v341 = vld [vmem:[#allocation5 + $0x4e0] sm:$0xff]
    %v342 = vld [vmem:[#allocation5 + $0x4e8] sm:$0xff]
    %v343 = vld [vmem:[#allocation5 + $0x4f0] sm:$0xff]
    %v344 = vld [vmem:[#allocation5 + $0x4f8] sm:$0xff]
    %v345 = vld [vmem:[#allocation5 + $0x500] sm:$0xff]
    %v346 = vld [vmem:[#allocation5 + $0x508] sm:$0xff]
    %v347 = vld [vmem:[#allocation5 + $0x510] sm:$0xff]
    %v348 = vld [vmem:[#allocation5 + $0x518] sm:$0xff]
    %v349 = vld [vmem:[#allocation5 + $0x520] sm:$0xff]
    %v350 = vld [vmem:[#allocation5 + $0x528] sm:$0xff]
    %v351 = vld [vmem:[#allocation5 + $0x530] sm:$0xff]
    %v352 = vld [vmem:[#allocation5 + $0x538] sm:$0xff]
    %v353 = vld [vmem:[#allocation5 + $0x540] sm:$0xff]
    %v354 = vld [vmem:[#allocation5 + $0x548] sm:$0xff]
    %v355 = vld [vmem:[#allocation5 + $0x550] sm:$0xff]
    %v356 = vld [vmem:[#allocation5 + $0x558] sm:$0xff]
    %v357 = vld [vmem:[#allocation5 + $0x560] sm:$0xff]
    %v358 = vld [vmem:[#allocation5 + $0x568] sm:$0xff]
    %v359 = vld [vmem:[#allocation5 + $0x570] sm:$0xff]
    %v360 = vld [vmem:[#allocation5 + $0x578] sm:$0xff]
    %v361 = vld [vmem:[#allocation5 + $0x580] sm:$0xff]
    %v362 = vld [vmem:[#allocation5 + $0x588] sm:$0xff]
    %v363 = vld [vmem:[#allocation5 + $0x590] sm:$0xff]
    %v364 = vld [vmem:[#allocation5 + $0x598] sm:$0xff]
    %v365 = vld [vmem:[#allocation5 + $0x5a0] sm:$0xff]
    %v366 = vld [vmem:[#allocation5 + $0x5a8] sm:$0xff]
    %v367 = vld [vmem:[#allocation5 + $0x5b0] sm:$0xff]
    %v368 = vld [vmem:[#allocation5 + $0x5b8] sm:$0xff]
    %v369 = vld [vmem:[#allocation5 + $0x5c0] sm:$0xff]
    %v370 = vld [vmem:[#allocation5 + $0x5c8] sm:$0xff]
    %v371 = vld [vmem:[#allocation5 + $0x5d0] sm:$0xff]
    %v372 = vld [vmem:[#allocation5 + $0x5d8] sm:$0xff]
    %v373 = vld [vmem:[#allocation5 + $0x5e0] sm:$0xff]
    %v374 = vld [vmem:[#allocation5 + $0x5e8] sm:$0xff]
    %v375 = vld [vmem:[#allocation5 + $0x5f0] sm:$0xff]
    %v376 = vld [vmem:[#allocation5 + $0x5f8] sm:$0xff]
    %v377 = vld [vmem:[#allocation5 + $0x600] sm:$0xff]
    %v378 = vld [vmem:[#allocation5 + $0x608] sm:$0xff]
    %v379 = vld [vmem:[#allocation5 + $0x610] sm:$0xff]
    %v380 = vld [vmem:[#allocation5 + $0x618] sm:$0xff]
    %v381 = vld [vmem:[#allocation5 + $0x620] sm:$0xff]
    %v382 = vld [vmem:[#allocation5 + $0x628] sm:$0xff]
    %v383 = vld [vmem:[#allocation5 + $0x630] sm:$0xff]
    %v384 = vld [vmem:[#allocation5 + $0x638] sm:$0xff]
    %v385 = vld [vmem:[#allocation5 + $0x640] sm:$0xff]
    %v386 = vld [vmem:[#allocation5 + $0x648] sm:$0xff]
    %v387 = vld [vmem:[#allocation5 + $0x650] sm:$0xff]
    %v388 = vld [vmem:[#allocation5 + $0x658] sm:$0xff]
    %v389 = vld [vmem:[#allocation5 + $0x660] sm:$0xff]
    %v390 = vld [vmem:[#allocation5 + $0x668] sm:$0xff]
    %v391 = vld [vmem:[#allocation5 + $0x670] sm:$0xff]
    %v392 = vld [vmem:[#allocation5 + $0x678] sm:$0xff]
    %v393 = vld [vmem:[#allocation5 + $0x680] sm:$0xff]
    %v394 = vld [vmem:[#allocation5 + $0x688] sm:$0xff]
    %v395 = vld [vmem:[#allocation5 + $0x690] sm:$0xff]
    %v396 = vld [vmem:[#allocation5 + $0x698] sm:$0xff]
    %v397 = vld [vmem:[#allocation5 + $0x6a0] sm:$0xff]
    %v398 = vld [vmem:[#allocation5 + $0x6a8] sm:$0xff]
    %v399 = vld [vmem:[#allocation5 + $0x6b0] sm:$0xff]
    %v400 = vld [vmem:[#allocation5 + $0x6b8] sm:$0xff]
    %v401 = vld [vmem:[#allocation5 + $0x6c0] sm:$0xff]
    %v402 = vld [vmem:[#allocation5 + $0x6c8] sm:$0xff]
    %v403 = vld [vmem:[#allocation5 + $0x6d0] sm:$0xff]
    %v404 = vld [vmem:[#allocation5 + $0x6d8] sm:$0xff]
    %v405 = vld [vmem:[#allocation5 + $0x6e0] sm:$0xff]
    %v406 = vld [vmem:[#allocation5 + $0x6e8] sm:$0xff]
    %v407 = vld [vmem:[#allocation5 + $0x6f0] sm:$0xff]
    %v408 = vld [vmem:[#allocation5 + $0x6f8] sm:$0xff]
    %v409 = vld [vmem:[#allocation5 + $0x700] sm:$0xff]
    %v410 = vld [vmem:[#allocation5 + $0x708] sm:$0xff]
    %v411 = vld [vmem:[#allocation5 + $0x710] sm:$0xff]
    %v412 = vld [vmem:[#allocation5 + $0x718] sm:$0xff]
    %v413 = vld [vmem:[#allocation5 + $0x720] sm:$0xff]
    %v414 = vld [vmem:[#allocation5 + $0x728] sm:$0xff]
    %v415 = vld [vmem:[#allocation5 + $0x730] sm:$0xff]
    %v416 = vld [vmem:[#allocation5 + $0x738] sm:$0xff]
    %v417 = vld [vmem:[#allocation5 + $0x740] sm:$0xff]
    %v418 = vld [vmem:[#allocation5 + $0x748] sm:$0xff]
    %v419 = vld [vmem:[#allocation5 + $0x750] sm:$0xff]
    %v420 = vld [vmem:[#allocation5 + $0x758] sm:$0xff]
    %v421 = vld [vmem:[#allocation5 + $0x760] sm:$0xff]
    %v422 = vld [vmem:[#allocation5 + $0x768] sm:$0xff]
    %v423 = vld [vmem:[#allocation5 + $0x770] sm:$0xff]
    %v424 = vld [vmem:[#allocation5 + $0x778] sm:$0xff]
    %v425 = vld [vmem:[#allocation5 + $0x780] sm:$0xff]
    %v426 = vld [vmem:[#allocation5 + $0x788] sm:$0xff]
    %v427 = vld [vmem:[#allocation5 + $0x790] sm:$0xff]
    %v428 = vld [vmem:[#allocation5 + $0x798] sm:$0xff]
    %v429 = vld [vmem:[#allocation5 + $0x7a0] sm:$0xff]
    %v430 = vld [vmem:[#allocation5 + $0x7a8] sm:$0xff]
    %v431 = vld [vmem:[#allocation5 + $0x7b0] sm:$0xff]
    %v432 = vld [vmem:[#allocation5 + $0x7b8] sm:$0xff]
    %v433 = vld [vmem:[#allocation5 + $0x7c0] sm:$0xff]
    %v434 = vld [vmem:[#allocation5 + $0x7c8] sm:$0xff]
    %v435 = vld [vmem:[#allocation5 + $0x7d0] sm:$0xff]
    %v436 = vld [vmem:[#allocation5 + $0x7d8] sm:$0xff]
    %v437 = vld [vmem:[#allocation5 + $0x7e0] sm:$0xff]
    %v438 = vld [vmem:[#allocation5 + $0x7e8] sm:$0xff]
    %v439 = vld [vmem:[#allocation5 + $0x7f0] sm:$0xff]
    %v440 = vld [vmem:[#allocation5 + $0x7f8] sm:$0xff]
    %v441 = vld [vmem:[#allocation5 + $0x800] sm:$0xff]
    %v442 = vld [vmem:[#allocation5 + $0x808] sm:$0xff]
    %v443 = vld [vmem:[#allocation5 + $0x810] sm:$0xff]
    %v444 = vld [vmem:[#allocation5 + $0x818] sm:$0xff]
    %v445 = vld [vmem:[#allocation5 + $0x820] sm:$0xff]
    %v446 = vld [vmem:[#allocation5 + $0x828] sm:$0xff]
    %v447 = vld [vmem:[#allocation5 + $0x830] sm:$0xff]
    %v448 = vld [vmem:[#allocation5 + $0x838] sm:$0xff]
    %v449 = vld [vmem:[#allocation5 + $0x840] sm:$0xff]
    %v450 = vld [vmem:[#allocation5 + $0x848] sm:$0xff]
    %v451 = vld [vmem:[#allocation5 + $0x850] sm:$0xff]
    %v452 = vld [vmem:[#allocation5 + $0x858] sm:$0xff]
    %v453 = vld [vmem:[#allocation5 + $0x860] sm:$0xff]
    %v454 = vld [vmem:[#allocation5 + $0x868] sm:$0xff]
    %v455 = vld [vmem:[#allocation5 + $0x870] sm:$0xff]
    %v456 = vld [vmem:[#allocation5 + $0x878] sm:$0xff]
    %v457 = vld [vmem:[#allocation5 + $0x880] sm:$0xff]
    %v458 = vld [vmem:[#allocation5 + $0x888] sm:$0xff]
    %v459 = vld [vmem:[#allocation5 + $0x890] sm:$0xff]
    %v460 = vld [vmem:[#allocation5 + $0x898] sm:$0xff]
    %v461 = vld [vmem:[#allocation5 + $0x8a0] sm:$0xff]
    %v462 = vld [vmem:[#allocation5 + $0x8a8] sm:$0xff]
    %v463 = vld [vmem:[#allocation5 + $0x8b0] sm:$0xff]
    %v464 = vld [vmem:[#allocation5 + $0x8b8] sm:$0xff]
    %v465 = vld [vmem:[#allocation5 + $0x8c0] sm:$0xff]
    %v466 = vld [vmem:[#allocation5 + $0x8c8] sm:$0xff]
    %v467 = vld [vmem:[#allocation5 + $0x8d0] sm:$0xff]
    %v468 = vld [vmem:[#allocation5 + $0x8d8] sm:$0xff]
    %v469 = vld [vmem:[#allocation5 + $0x8e0] sm:$0xff]
    %v470 = vld [vmem:[#allocation5 + $0x8e8] sm:$0xff]
    %v471 = vld [vmem:[#allocation5 + $0x8f0] sm:$0xff]
    %v472 = vld [vmem:[#allocation5 + $0x8f8] sm:$0xff]
    %v473 = vld [vmem:[#allocation5 + $0x900] sm:$0xff]
    %v474 = vld [vmem:[#allocation5 + $0x908] sm:$0xff]
    %v475 = vld [vmem:[#allocation5 + $0x910] sm:$0xff]
    %v476 = vld [vmem:[#allocation5 + $0x918] sm:$0xff]
    %v477 = vld [vmem:[#allocation5 + $0x920] sm:$0xff]
    %v478 = vld [vmem:[#allocation5 + $0x928] sm:$0xff]
    %v479 = vld [vmem:[#allocation5 + $0x930] sm:$0xff]
    %v480 = vld [vmem:[#allocation5 + $0x938] sm:$0xff]
    %v481 = vld [vmem:[#allocation5 + $0x940] sm:$0xff]
    %v482 = vld [vmem:[#allocation5 + $0x948] sm:$0xff]
    %v483 = vld [vmem:[#allocation5 + $0x950] sm:$0xff]
    %v484 = vld [vmem:[#allocation5 + $0x958] sm:$0xff]
    %v485 = vld [vmem:[#allocation5 + $0x960] sm:$0xff]
    %v486 = vld [vmem:[#allocation5 + $0x968] sm:$0xff]
    %v487 = vld [vmem:[#allocation5 + $0x970] sm:$0xff]
    %v488 = vld [vmem:[#allocation5 + $0x978] sm:$0xff]
    %v489 = vld [vmem:[#allocation5 + $0x980] sm:$0xff]
    %v490 = vld [vmem:[#allocation5 + $0x988] sm:$0xff]
    %v491 = vld [vmem:[#allocation5 + $0x990] sm:$0xff]
    %v492 = vld [vmem:[#allocation5 + $0x998] sm:$0xff]
    %v493 = vld [vmem:[#allocation5 + $0x9a0] sm:$0xff]
    %v494 = vld [vmem:[#allocation5 + $0x9a8] sm:$0xff]
    %v495 = vld [vmem:[#allocation5 + $0x9b0] sm:$0xff]
    %v496 = vld [vmem:[#allocation5 + $0x9b8] sm:$0xff]
    %v497 = vld [vmem:[#allocation5 + $0x9c0] sm:$0xff]
    %v498 = vld [vmem:[#allocation5 + $0x9c8] sm:$0xff]
    %v499 = vld [vmem:[#allocation5 + $0x9d0] sm:$0xff]
    %v500 = vld [vmem:[#allocation5 + $0x9d8] sm:$0xff]
    %v501 = vld [vmem:[#allocation5 + $0x9e0] sm:$0xff]
    %v502 = vld [vmem:[#allocation5 + $0x9e8] sm:$0xff]
    %v503 = vld [vmem:[#allocation5 + $0x9f0] sm:$0xff]
    %v504 = vld [vmem:[#allocation5 + $0x9f8] sm:$0xff]
    %v505 = vld [vmem:[#allocation7] sm:$0xff]
    %v507 = vlaneseq
    %v508 = vshrl.u32 %v507, 7
    %v509 = vsub.s32 0, %v508
    %v510 = vrot.slane %v505, %v509
    %v511 = vlaneseq
    %v512 = vshrl.u32 %v511, 7
    %v513 = vsub.s32 1, %v512
    %v514 = vrot.slane %v505, %v513
    %v515 = vlaneseq
    %v516 = vshrl.u32 %v515, 7
    %v517 = vsub.s32 2, %v516
    %v518 = vrot.slane %v505, %v517
    %v519 = vlaneseq
    %v520 = vshrl.u32 %v519, 7
    %v521 = vsub.s32 3, %v520
    %v522 = vrot.slane %v505, %v521
    %v523 = vlaneseq
    %v524 = vshrl.u32 %v523, 7
    %v525 = vsub.s32 4, %v524
    %v526 = vrot.slane %v505, %v525
    %v527 = vlaneseq
    %v528 = vshrl.u32 %v527, 7
    %v529 = vsub.s32 5, %v528
    %v530 = vrot.slane %v505, %v529
    %v531 = vlaneseq
    %v532 = vshrl.u32 %v531, 7
    %v533 = vsub.s32 6, %v532
    %v534 = vrot.slane %v505, %v533
    %v535 = vlaneseq
    %v536 = vshrl.u32 %v535, 7
    %v537 = vsub.s32 7, %v536
    %v538 = vrot.slane %v505, %v537
    %v553 = vunpack.c.l.b16 %v179
    %v554 = vunpack.c.h.b16 %v179
    %v555 = vunpack.c.l.b16 %v180
    %v556 = vunpack.c.h.b16 %v180
    %v557 = vunpack.c.l.b16 %v181
    %v558 = vunpack.c.l.b16 %v182
    %v559 = vunpack.c.h.b16 %v182
    %v560 = vunpack.c.l.b16 %v183
    %v561 = vunpack.c.h.b16 %v183
    %v562 = vunpack.c.l.b16 %v184
    %v563 = vpack.c.b16 %v558, %v553
    %v564 = vpack.c.b16 %v559, %v554
    %v565 = vpack.c.b16 %v560, %v555
    %v566 = vpack.c.b16 %v561, %v556
    %v567 = vpack.c.b16 %v562, %v557
    %v893 = vunpack.c.l.b16 %v185
    %v894 = vunpack.c.h.b16 %v185
    %v895 = vunpack.c.l.b16 %v186
    %v896 = vunpack.c.h.b16 %v186
    %v897 = vunpack.c.l.b16 %v187
    %v898 = vunpack.c.h.b16 %v187
    %v899 = vunpack.c.l.b16 %v188
    %v900 = vunpack.c.h.b16 %v188
    %v901 = vunpack.c.l.b16 %v189
    %v902 = vunpack.c.h.b16 %v189
    %v903 = vunpack.c.l.b16 %v190
    %v904 = vunpack.c.h.b16 %v190
    %v905 = vunpack.c.l.b16 %v191
    %v906 = vunpack.c.h.b16 %v191
    %v907 = vunpack.c.l.b16 %v192
    %v908 = vunpack.c.h.b16 %v192
    %v909 = vunpack.c.l.b16 %v193
    %v910 = vunpack.c.h.b16 %v193
    %v911 = vunpack.c.l.b16 %v194
    %v912 = vunpack.c.h.b16 %v194
    %v913 = vunpack.c.l.b16 %v195
    %v914 = vunpack.c.h.b16 %v195
    %v915 = vunpack.c.l.b16 %v196
    %v916 = vunpack.c.h.b16 %v196
    %v917 = vunpack.c.l.b16 %v197
    %v918 = vunpack.c.h.b16 %v197
    %v919 = vunpack.c.l.b16 %v198
    %v920 = vunpack.c.h.b16 %v198
    %v921 = vunpack.c.l.b16 %v199
    %v922 = vunpack.c.h.b16 %v199
    %v923 = vunpack.c.l.b16 %v200
    %v924 = vunpack.c.h.b16 %v200
    %v925 = vunpack.c.l.b16 %v201
    %v926 = vunpack.c.h.b16 %v201
    %v927 = vunpack.c.l.b16 %v202
    %v928 = vunpack.c.h.b16 %v202
    %v929 = vunpack.c.l.b16 %v203
    %v930 = vunpack.c.h.b16 %v203
    %v931 = vunpack.c.l.b16 %v204
    %v932 = vunpack.c.h.b16 %v204
    %v933 = vunpack.c.l.b16 %v205
    %v934 = vunpack.c.h.b16 %v205
    %v935 = vunpack.c.l.b16 %v206
    %v936 = vunpack.c.h.b16 %v206
    %v937 = vunpack.c.l.b16 %v207
    %v938 = vunpack.c.h.b16 %v207
    %v939 = vunpack.c.l.b16 %v208
    %v940 = vunpack.c.h.b16 %v208
    %v941 = vunpack.c.l.b16 %v209
    %v942 = vunpack.c.h.b16 %v209
    %v943 = vunpack.c.l.b16 %v210
    %v944 = vunpack.c.h.b16 %v210
    %v945 = vunpack.c.l.b16 %v211
    %v946 = vunpack.c.h.b16 %v211
    %v947 = vunpack.c.l.b16 %v212
    %v948 = vunpack.c.h.b16 %v212
    %v949 = vunpack.c.l.b16 %v213
    %v950 = vunpack.c.h.b16 %v213
    %v951 = vunpack.c.l.b16 %v214
    %v952 = vunpack.c.h.b16 %v214
    %v953 = vunpack.c.l.b16 %v215
    %v954 = vunpack.c.h.b16 %v215
    %v955 = vunpack.c.l.b16 %v216
    %v956 = vunpack.c.h.b16 %v216
    %v957 = vunpack.c.l.b16 %v217
    %v958 = vunpack.c.h.b16 %v217
    %v959 = vunpack.c.l.b16 %v218
    %v960 = vunpack.c.h.b16 %v218
    %v961 = vunpack.c.l.b16 %v219
    %v962 = vunpack.c.h.b16 %v219
    %v963 = vunpack.c.l.b16 %v220
    %v964 = vunpack.c.h.b16 %v220
    %v965 = vunpack.c.l.b16 %v221
    %v966 = vunpack.c.h.b16 %v221
    %v967 = vunpack.c.l.b16 %v222
    %v968 = vunpack.c.h.b16 %v222
    %v969 = vunpack.c.l.b16 %v223
    %v970 = vunpack.c.h.b16 %v223
    %v971 = vunpack.c.l.b16 %v224
    %v972 = vunpack.c.h.b16 %v224
    %v973 = vunpack.c.l.b16 %v225
    %v974 = vunpack.c.h.b16 %v225
    %v975 = vunpack.c.l.b16 %v226
    %v976 = vunpack.c.h.b16 %v226
    %v977 = vunpack.c.l.b16 %v227
    %v978 = vunpack.c.h.b16 %v227
    %v979 = vunpack.c.l.b16 %v228
    %v980 = vunpack.c.h.b16 %v228
    %v981 = vunpack.c.l.b16 %v229
    %v982 = vunpack.c.h.b16 %v229
    %v983 = vunpack.c.l.b16 %v230
    %v984 = vunpack.c.h.b16 %v230
    %v985 = vunpack.c.l.b16 %v231
    %v986 = vunpack.c.h.b16 %v231
    %v987 = vunpack.c.l.b16 %v232
    %v988 = vunpack.c.h.b16 %v232
    %v989 = vunpack.c.l.b16 %v233
    %v990 = vunpack.c.h.b16 %v233
    %v991 = vunpack.c.l.b16 %v234
    %v992 = vunpack.c.h.b16 %v234
    %v993 = vunpack.c.l.b16 %v235
    %v994 = vunpack.c.h.b16 %v235
    %v995 = vunpack.c.l.b16 %v236
    %v996 = vunpack.c.h.b16 %v236
    %v997 = vunpack.c.l.b16 %v237
    %v998 = vunpack.c.h.b16 %v237
    %v999 = vunpack.c.l.b16 %v238
    %v1000 = vunpack.c.h.b16 %v238
    %v1001 = vunpack.c.l.b16 %v239
    %v1002 = vunpack.c.h.b16 %v239
    %v1003 = vunpack.c.l.b16 %v240
    %v1004 = vunpack.c.h.b16 %v240
    %v1005 = vunpack.c.l.b16 %v241
    %v1006 = vunpack.c.h.b16 %v241
    %v1007 = vunpack.c.l.b16 %v242
    %v1008 = vunpack.c.h.b16 %v242
    %v1009 = vunpack.c.l.b16 %v243
    %v1010 = vunpack.c.h.b16 %v243
    %v1011 = vunpack.c.l.b16 %v244
    %v1012 = vunpack.c.h.b16 %v244
    %v1013 = vunpack.c.l.b16 %v245
    %v1014 = vunpack.c.h.b16 %v245
    %v1015 = vunpack.c.l.b16 %v246
    %v1016 = vunpack.c.h.b16 %v246
    %v1017 = vunpack.c.l.b16 %v247
    %v1018 = vunpack.c.h.b16 %v247
    %v1019 = vunpack.c.l.b16 %v248
    %v1020 = vunpack.c.h.b16 %v248
    %v1021 = vunpack.c.l.b16 %v249
    %v1022 = vunpack.c.h.b16 %v249
    %v1023 = vunpack.c.l.b16 %v250
    %v1024 = vunpack.c.h.b16 %v250
    %v1025 = vunpack.c.l.b16 %v251
    %v1026 = vunpack.c.h.b16 %v251
    %v1027 = vunpack.c.l.b16 %v252
    %v1028 = vunpack.c.h.b16 %v252
    %v1029 = vunpack.c.l.b16 %v253
    %v1030 = vunpack.c.h.b16 %v253
    %v1031 = vunpack.c.l.b16 %v254
    %v1032 = vunpack.c.h.b16 %v254
    %v1033 = vunpack.c.l.b16 %v255
    %v1034 = vunpack.c.h.b16 %v255
    %v1035 = vunpack.c.l.b16 %v256
    %v1036 = vunpack.c.h.b16 %v256
    %v1037 = vunpack.c.l.b16 %v257
    %v1038 = vunpack.c.h.b16 %v257
    %v1039 = vunpack.c.l.b16 %v258
    %v1040 = vunpack.c.h.b16 %v258
    %v1041 = vunpack.c.l.b16 %v259
    %v1042 = vunpack.c.h.b16 %v259
    %v1043 = vunpack.c.l.b16 %v260
    %v1044 = vunpack.c.h.b16 %v260
    %v1045 = vunpack.c.l.b16 %v261
    %v1046 = vunpack.c.h.b16 %v261
    %v1047 = vunpack.c.l.b16 %v262
    %v1048 = vunpack.c.h.b16 %v262
    %v1049 = vunpack.c.l.b16 %v263
    %v1050 = vunpack.c.h.b16 %v263
    %v1051 = vunpack.c.l.b16 %v264
    %v1052 = vunpack.c.h.b16 %v264
    %v1053 = vunpack.c.l.b16 %v265
    %v1054 = vunpack.c.h.b16 %v265
    %v1055 = vunpack.c.l.b16 %v266
    %v1056 = vunpack.c.h.b16 %v266
    %v1057 = vunpack.c.l.b16 %v267
    %v1058 = vunpack.c.h.b16 %v267
    %v1059 = vunpack.c.l.b16 %v268
    %v1060 = vunpack.c.h.b16 %v268
    %v1061 = vunpack.c.l.b16 %v269
    %v1062 = vunpack.c.h.b16 %v269
    %v1063 = vunpack.c.l.b16 %v270
    %v1064 = vunpack.c.h.b16 %v270
    %v1065 = vunpack.c.l.b16 %v271
    %v1066 = vunpack.c.h.b16 %v271
    %v1067 = vunpack.c.l.b16 %v272
    %v1068 = vunpack.c.h.b16 %v272
    %v1069 = vunpack.c.l.b16 %v273
    %v1070 = vunpack.c.h.b16 %v273
    %v1071 = vunpack.c.l.b16 %v274
    %v1072 = vunpack.c.h.b16 %v274
    %v1073 = vunpack.c.l.b16 %v275
    %v1074 = vunpack.c.h.b16 %v275
    %v1075 = vunpack.c.l.b16 %v276
    %v1076 = vunpack.c.h.b16 %v276
    %v1077 = vunpack.c.l.b16 %v277
    %v1078 = vunpack.c.h.b16 %v277
    %v1079 = vunpack.c.l.b16 %v278
    %v1080 = vunpack.c.h.b16 %v278
    %v1081 = vunpack.c.l.b16 %v279
    %v1082 = vunpack.c.h.b16 %v279
    %v1083 = vunpack.c.l.b16 %v280
    %v1084 = vunpack.c.h.b16 %v280
    %v1085 = vunpack.c.l.b16 %v281
    %v1086 = vunpack.c.h.b16 %v281
    %v1087 = vunpack.c.l.b16 %v282
    %v1088 = vunpack.c.h.b16 %v282
    %v1089 = vunpack.c.l.b16 %v283
    %v1090 = vunpack.c.h.b16 %v283
    %v1091 = vunpack.c.l.b16 %v284
    %v1092 = vunpack.c.h.b16 %v284
    %v1093 = vunpack.c.l.b16 %v285
    %v1094 = vunpack.c.h.b16 %v285
    %v1095 = vunpack.c.l.b16 %v286
    %v1096 = vunpack.c.h.b16 %v286
    %v1097 = vunpack.c.l.b16 %v287
    %v1098 = vunpack.c.h.b16 %v287
    %v1099 = vunpack.c.l.b16 %v288
    %v1100 = vunpack.c.h.b16 %v288
    %v1101 = vunpack.c.l.b16 %v289
    %v1102 = vunpack.c.h.b16 %v289
    %v1103 = vunpack.c.l.b16 %v290
    %v1104 = vunpack.c.h.b16 %v290
    %v1105 = vunpack.c.l.b16 %v291
    %v1106 = vunpack.c.h.b16 %v291
    %v1107 = vunpack.c.l.b16 %v292
    %v1108 = vunpack.c.h.b16 %v292
    %v1109 = vunpack.c.l.b16 %v293
    %v1110 = vunpack.c.h.b16 %v293
    %v1111 = vunpack.c.l.b16 %v294
    %v1112 = vunpack.c.h.b16 %v294
    %v1113 = vunpack.c.l.b16 %v295
    %v1114 = vunpack.c.h.b16 %v295
    %v1115 = vunpack.c.l.b16 %v296
    %v1116 = vunpack.c.h.b16 %v296
    %v1117 = vunpack.c.l.b16 %v297
    %v1118 = vunpack.c.h.b16 %v297
    %v1119 = vunpack.c.l.b16 %v298
    %v1120 = vunpack.c.h.b16 %v298
    %v1121 = vunpack.c.l.b16 %v299
    %v1122 = vunpack.c.h.b16 %v299
    %v1123 = vunpack.c.l.b16 %v300
    %v1124 = vunpack.c.h.b16 %v300
    %v1125 = vunpack.c.l.b16 %v301
    %v1126 = vunpack.c.h.b16 %v301
    %v1127 = vunpack.c.l.b16 %v302
    %v1128 = vunpack.c.h.b16 %v302
    %v1129 = vunpack.c.l.b16 %v303
    %v1130 = vunpack.c.h.b16 %v303
    %v1131 = vunpack.c.l.b16 %v304
    %v1132 = vunpack.c.h.b16 %v304
    %v1133 = vunpack.c.l.b16 %v305
    %v1134 = vunpack.c.h.b16 %v305
    %v1135 = vunpack.c.l.b16 %v306
    %v1136 = vunpack.c.h.b16 %v306
    %v1137 = vunpack.c.l.b16 %v307
    %v1138 = vunpack.c.h.b16 %v307
    %v1139 = vunpack.c.l.b16 %v308
    %v1140 = vunpack.c.h.b16 %v308
    %v1141 = vunpack.c.l.b16 %v309
    %v1142 = vunpack.c.h.b16 %v309
    %v1143 = vunpack.c.l.b16 %v310
    %v1144 = vunpack.c.h.b16 %v310
    %v1145 = vunpack.c.l.b16 %v311
    %v1146 = vunpack.c.h.b16 %v311
    %v1147 = vunpack.c.l.b16 %v312
    %v1148 = vunpack.c.h.b16 %v312
    %v1149 = vunpack.c.l.b16 %v313
    %v1150 = vunpack.c.h.b16 %v313
    %v1151 = vunpack.c.l.b16 %v314
    %v1152 = vunpack.c.h.b16 %v314
    %v1153 = vunpack.c.l.b16 %v315
    %v1154 = vunpack.c.h.b16 %v315
    %v1155 = vunpack.c.l.b16 %v316
    %v1156 = vunpack.c.h.b16 %v316
    %v1157 = vunpack.c.l.b16 %v317
    %v1158 = vunpack.c.h.b16 %v317
    %v1159 = vunpack.c.l.b16 %v318
    %v1160 = vunpack.c.h.b16 %v318
    %v1161 = vunpack.c.l.b16 %v319
    %v1162 = vunpack.c.h.b16 %v319
    %v1163 = vunpack.c.l.b16 %v320
    %v1164 = vunpack.c.h.b16 %v320
    %v1165 = vunpack.c.l.b16 %v321
    %v1166 = vunpack.c.h.b16 %v321
    %v1167 = vunpack.c.l.b16 %v322
    %v1168 = vunpack.c.h.b16 %v322
    %v1169 = vunpack.c.l.b16 %v323
    %v1170 = vunpack.c.h.b16 %v323
    %v1171 = vunpack.c.l.b16 %v324
    %v1172 = vunpack.c.h.b16 %v324
    %v1173 = vunpack.c.l.b16 %v325
    %v1174 = vunpack.c.h.b16 %v325
    %v1175 = vunpack.c.l.b16 %v326
    %v1176 = vunpack.c.h.b16 %v326
    %v1177 = vunpack.c.l.b16 %v327
    %v1178 = vunpack.c.h.b16 %v327
    %v1179 = vunpack.c.l.b16 %v328
    %v1180 = vunpack.c.h.b16 %v328
    %v1181 = vunpack.c.l.b16 %v329
    %v1182 = vunpack.c.h.b16 %v329
    %v1183 = vunpack.c.l.b16 %v330
    %v1184 = vunpack.c.h.b16 %v330
    %v1185 = vunpack.c.l.b16 %v331
    %v1186 = vunpack.c.h.b16 %v331
    %v1187 = vunpack.c.l.b16 %v332
    %v1188 = vunpack.c.h.b16 %v332
    %v1189 = vunpack.c.l.b16 %v333
    %v1190 = vunpack.c.h.b16 %v333
    %v1191 = vunpack.c.l.b16 %v334
    %v1192 = vunpack.c.h.b16 %v334
    %v1193 = vunpack.c.l.b16 %v335
    %v1194 = vunpack.c.h.b16 %v335
    %v1195 = vunpack.c.l.b16 %v336
    %v1196 = vunpack.c.h.b16 %v336
    %v1197 = vunpack.c.l.b16 %v337
    %v1198 = vunpack.c.h.b16 %v337
    %v1199 = vunpack.c.l.b16 %v338
    %v1200 = vunpack.c.h.b16 %v338
    %v1201 = vunpack.c.l.b16 %v339
    %v1202 = vunpack.c.h.b16 %v339
    %v1203 = vunpack.c.l.b16 %v340
    %v1204 = vunpack.c.h.b16 %v340
    %v1205 = vunpack.c.l.b16 %v341
    %v1206 = vunpack.c.h.b16 %v341
    %v1207 = vunpack.c.l.b16 %v342
    %v1208 = vunpack.c.h.b16 %v342
    %v1209 = vunpack.c.l.b16 %v343
    %v1210 = vunpack.c.h.b16 %v343
    %v1211 = vunpack.c.l.b16 %v344
    %v1212 = vunpack.c.h.b16 %v344
    %v1213 = vunpack.c.l.b16 %v345
    %v1214 = vunpack.c.h.b16 %v345
    %v1215 = vunpack.c.l.b16 %v346
    %v1216 = vunpack.c.h.b16 %v346
    %v1217 = vunpack.c.l.b16 %v347
    %v1218 = vunpack.c.h.b16 %v347
    %v1219 = vunpack.c.l.b16 %v348
    %v1220 = vunpack.c.h.b16 %v348
    %v1221 = vunpack.c.l.b16 %v349
    %v1222 = vunpack.c.h.b16 %v349
    %v1223 = vunpack.c.l.b16 %v350
    %v1224 = vunpack.c.h.b16 %v350
    %v1225 = vunpack.c.l.b16 %v351
    %v1226 = vunpack.c.h.b16 %v351
    %v1227 = vunpack.c.l.b16 %v352
    %v1228 = vunpack.c.h.b16 %v352
    %v1229 = vunpack.c.l.b16 %v353
    %v1230 = vunpack.c.h.b16 %v353
    %v1231 = vunpack.c.l.b16 %v354
    %v1232 = vunpack.c.h.b16 %v354
    %v1233 = vunpack.c.l.b16 %v355
    %v1234 = vunpack.c.h.b16 %v355
    %v1235 = vunpack.c.l.b16 %v356
    %v1236 = vunpack.c.h.b16 %v356
    %v1237 = vunpack.c.l.b16 %v357
    %v1238 = vunpack.c.h.b16 %v357
    %v1239 = vunpack.c.l.b16 %v358
    %v1240 = vunpack.c.h.b16 %v358
    %v1241 = vunpack.c.l.b16 %v359
    %v1242 = vunpack.c.h.b16 %v359
    %v1243 = vunpack.c.l.b16 %v360
    %v1244 = vunpack.c.h.b16 %v360
    %v1245 = vunpack.c.l.b16 %v361
    %v1246 = vunpack.c.h.b16 %v361
    %v1247 = vunpack.c.l.b16 %v362
    %v1248 = vunpack.c.h.b16 %v362
    %v1249 = vunpack.c.l.b16 %v363
    %v1250 = vunpack.c.h.b16 %v363
    %v1251 = vunpack.c.l.b16 %v364
    %v1252 = vunpack.c.h.b16 %v364
    %v1253 = vunpack.c.l.b16 %v365
    %v1254 = vunpack.c.h.b16 %v365
    %v1255 = vunpack.c.l.b16 %v366
    %v1256 = vunpack.c.h.b16 %v366
    %v1257 = vunpack.c.l.b16 %v367
    %v1258 = vunpack.c.h.b16 %v367
    %v1259 = vunpack.c.l.b16 %v368
    %v1260 = vunpack.c.h.b16 %v368
    %v1261 = vunpack.c.l.b16 %v369
    %v1262 = vunpack.c.h.b16 %v369
    %v1263 = vunpack.c.l.b16 %v370
    %v1264 = vunpack.c.h.b16 %v370
    %v1265 = vunpack.c.l.b16 %v371
    %v1266 = vunpack.c.h.b16 %v371
    %v1267 = vunpack.c.l.b16 %v372
    %v1268 = vunpack.c.h.b16 %v372
    %v1269 = vunpack.c.l.b16 %v373
    %v1270 = vunpack.c.h.b16 %v373
    %v1271 = vunpack.c.l.b16 %v374
    %v1272 = vunpack.c.h.b16 %v374
    %v1273 = vunpack.c.l.b16 %v375
    %v1274 = vunpack.c.h.b16 %v375
    %v1275 = vunpack.c.l.b16 %v376
    %v1276 = vunpack.c.h.b16 %v376
    %v1277 = vunpack.c.l.b16 %v377
    %v1278 = vunpack.c.h.b16 %v377
    %v1279 = vunpack.c.l.b16 %v378
    %v1280 = vunpack.c.h.b16 %v378
    %v1281 = vunpack.c.l.b16 %v379
    %v1282 = vunpack.c.h.b16 %v379
    %v1283 = vunpack.c.l.b16 %v380
    %v1284 = vunpack.c.h.b16 %v380
    %v1285 = vunpack.c.l.b16 %v381
    %v1286 = vunpack.c.h.b16 %v381
    %v1287 = vunpack.c.l.b16 %v382
    %v1288 = vunpack.c.h.b16 %v382
    %v1289 = vunpack.c.l.b16 %v383
    %v1290 = vunpack.c.h.b16 %v383
    %v1291 = vunpack.c.l.b16 %v384
    %v1292 = vunpack.c.h.b16 %v384
    %v1293 = vunpack.c.l.b16 %v385
    %v1294 = vunpack.c.h.b16 %v385
    %v1295 = vunpack.c.l.b16 %v386
    %v1296 = vunpack.c.h.b16 %v386
    %v1297 = vunpack.c.l.b16 %v387
    %v1298 = vunpack.c.h.b16 %v387
    %v1299 = vunpack.c.l.b16 %v388
    %v1300 = vunpack.c.h.b16 %v388
    %v1301 = vunpack.c.l.b16 %v389
    %v1302 = vunpack.c.h.b16 %v389
    %v1303 = vunpack.c.l.b16 %v390
    %v1304 = vunpack.c.h.b16 %v390
    %v1305 = vunpack.c.l.b16 %v391
    %v1306 = vunpack.c.h.b16 %v391
    %v1307 = vunpack.c.l.b16 %v392
    %v1308 = vunpack.c.h.b16 %v392
    %v1309 = vunpack.c.l.b16 %v393
    %v1310 = vunpack.c.h.b16 %v393
    %v1311 = vunpack.c.l.b16 %v394
    %v1312 = vunpack.c.h.b16 %v394
    %v1313 = vunpack.c.l.b16 %v395
    %v1314 = vunpack.c.h.b16 %v395
    %v1315 = vunpack.c.l.b16 %v396
    %v1316 = vunpack.c.h.b16 %v396
    %v1317 = vunpack.c.l.b16 %v397
    %v1318 = vunpack.c.h.b16 %v397
    %v1319 = vunpack.c.l.b16 %v398
    %v1320 = vunpack.c.h.b16 %v398
    %v1321 = vunpack.c.l.b16 %v399
    %v1322 = vunpack.c.h.b16 %v399
    %v1323 = vunpack.c.l.b16 %v400
    %v1324 = vunpack.c.h.b16 %v400
    %v1325 = vunpack.c.l.b16 %v401
    %v1326 = vunpack.c.h.b16 %v401
    %v1327 = vunpack.c.l.b16 %v402
    %v1328 = vunpack.c.h.b16 %v402
    %v1329 = vunpack.c.l.b16 %v403
    %v1330 = vunpack.c.h.b16 %v403
    %v1331 = vunpack.c.l.b16 %v404
    %v1332 = vunpack.c.h.b16 %v404
    %v1333 = vunpack.c.l.b16 %v405
    %v1334 = vunpack.c.h.b16 %v405
    %v1335 = vunpack.c.l.b16 %v406
    %v1336 = vunpack.c.h.b16 %v406
    %v1337 = vunpack.c.l.b16 %v407
    %v1338 = vunpack.c.h.b16 %v407
    %v1339 = vunpack.c.l.b16 %v408
    %v1340 = vunpack.c.h.b16 %v408
    %v1341 = vunpack.c.l.b16 %v409
    %v1342 = vunpack.c.h.b16 %v409
    %v1343 = vunpack.c.l.b16 %v410
    %v1344 = vunpack.c.h.b16 %v410
    %v1345 = vunpack.c.l.b16 %v411
    %v1346 = vunpack.c.h.b16 %v411
    %v1347 = vunpack.c.l.b16 %v412
    %v1348 = vunpack.c.h.b16 %v412
    %v1349 = vunpack.c.l.b16 %v413
    %v1350 = vunpack.c.h.b16 %v413
    %v1351 = vunpack.c.l.b16 %v414
    %v1352 = vunpack.c.h.b16 %v414
    %v1353 = vunpack.c.l.b16 %v415
    %v1354 = vunpack.c.h.b16 %v415
    %v1355 = vunpack.c.l.b16 %v416
    %v1356 = vunpack.c.h.b16 %v416
    %v1357 = vunpack.c.l.b16 %v417
    %v1358 = vunpack.c.h.b16 %v417
    %v1359 = vunpack.c.l.b16 %v418
    %v1360 = vunpack.c.h.b16 %v418
    %v1361 = vunpack.c.l.b16 %v419
    %v1362 = vunpack.c.h.b16 %v419
    %v1363 = vunpack.c.l.b16 %v420
    %v1364 = vunpack.c.h.b16 %v420
    %v1365 = vunpack.c.l.b16 %v421
    %v1366 = vunpack.c.h.b16 %v421
    %v1367 = vunpack.c.l.b16 %v422
    %v1368 = vunpack.c.h.b16 %v422
    %v1369 = vunpack.c.l.b16 %v423
    %v1370 = vunpack.c.h.b16 %v423
    %v1371 = vunpack.c.l.b16 %v424
    %v1372 = vunpack.c.h.b16 %v424
    %v1373 = vunpack.c.l.b16 %v425
    %v1374 = vunpack.c.h.b16 %v425
    %v1375 = vunpack.c.l.b16 %v426
    %v1376 = vunpack.c.h.b16 %v426
    %v1377 = vunpack.c.l.b16 %v427
    %v1378 = vunpack.c.h.b16 %v427
    %v1379 = vunpack.c.l.b16 %v428
    %v1380 = vunpack.c.h.b16 %v428
    %v1381 = vunpack.c.l.b16 %v429
    %v1382 = vunpack.c.h.b16 %v429
    %v1383 = vunpack.c.l.b16 %v430
    %v1384 = vunpack.c.h.b16 %v430
    %v1385 = vunpack.c.l.b16 %v431
    %v1386 = vunpack.c.h.b16 %v431
    %v1387 = vunpack.c.l.b16 %v432
    %v1388 = vunpack.c.h.b16 %v432
    %v1389 = vunpack.c.l.b16 %v433
    %v1390 = vunpack.c.h.b16 %v433
    %v1391 = vunpack.c.l.b16 %v434
    %v1392 = vunpack.c.h.b16 %v434
    %v1393 = vunpack.c.l.b16 %v435
    %v1394 = vunpack.c.h.b16 %v435
    %v1395 = vunpack.c.l.b16 %v436
    %v1396 = vunpack.c.h.b16 %v436
    %v1397 = vunpack.c.l.b16 %v437
    %v1398 = vunpack.c.h.b16 %v437
    %v1399 = vunpack.c.l.b16 %v438
    %v1400 = vunpack.c.h.b16 %v438
    %v1401 = vunpack.c.l.b16 %v439
    %v1402 = vunpack.c.h.b16 %v439
    %v1403 = vunpack.c.l.b16 %v440
    %v1404 = vunpack.c.h.b16 %v440
    %v1405 = vunpack.c.l.b16 %v441
    %v1406 = vunpack.c.h.b16 %v441
    %v1407 = vunpack.c.l.b16 %v442
    %v1408 = vunpack.c.h.b16 %v442
    %v1409 = vunpack.c.l.b16 %v443
    %v1410 = vunpack.c.h.b16 %v443
    %v1411 = vunpack.c.l.b16 %v444
    %v1412 = vunpack.c.h.b16 %v444
    %v1413 = vunpack.c.l.b16 %v445
    %v1414 = vunpack.c.h.b16 %v445
    %v1415 = vunpack.c.l.b16 %v446
    %v1416 = vunpack.c.h.b16 %v446
    %v1417 = vunpack.c.l.b16 %v447
    %v1418 = vunpack.c.h.b16 %v447
    %v1419 = vunpack.c.l.b16 %v448
    %v1420 = vunpack.c.h.b16 %v448
    %v1421 = vunpack.c.l.b16 %v449
    %v1422 = vunpack.c.h.b16 %v449
    %v1423 = vunpack.c.l.b16 %v450
    %v1424 = vunpack.c.h.b16 %v450
    %v1425 = vunpack.c.l.b16 %v451
    %v1426 = vunpack.c.h.b16 %v451
    %v1427 = vunpack.c.l.b16 %v452
    %v1428 = vunpack.c.h.b16 %v452
    %v1429 = vunpack.c.l.b16 %v453
    %v1430 = vunpack.c.h.b16 %v453
    %v1431 = vunpack.c.l.b16 %v454
    %v1432 = vunpack.c.h.b16 %v454
    %v1433 = vunpack.c.l.b16 %v455
    %v1434 = vunpack.c.h.b16 %v455
    %v1435 = vunpack.c.l.b16 %v456
    %v1436 = vunpack.c.h.b16 %v456
    %v1437 = vunpack.c.l.b16 %v457
    %v1438 = vunpack.c.h.b16 %v457
    %v1439 = vunpack.c.l.b16 %v458
    %v1440 = vunpack.c.h.b16 %v458
    %v1441 = vunpack.c.l.b16 %v459
    %v1442 = vunpack.c.h.b16 %v459
    %v1443 = vunpack.c.l.b16 %v460
    %v1444 = vunpack.c.h.b16 %v460
    %v1445 = vunpack.c.l.b16 %v461
    %v1446 = vunpack.c.h.b16 %v461
    %v1447 = vunpack.c.l.b16 %v462
    %v1448 = vunpack.c.h.b16 %v462
    %v1449 = vunpack.c.l.b16 %v463
    %v1450 = vunpack.c.h.b16 %v463
    %v1451 = vunpack.c.l.b16 %v464
    %v1452 = vunpack.c.h.b16 %v464
    %v1453 = vunpack.c.l.b16 %v465
    %v1454 = vunpack.c.h.b16 %v465
    %v1455 = vunpack.c.l.b16 %v466
    %v1456 = vunpack.c.h.b16 %v466
    %v1457 = vunpack.c.l.b16 %v467
    %v1458 = vunpack.c.h.b16 %v467
    %v1459 = vunpack.c.l.b16 %v468
    %v1460 = vunpack.c.h.b16 %v468
    %v1461 = vunpack.c.l.b16 %v469
    %v1462 = vunpack.c.h.b16 %v469
    %v1463 = vunpack.c.l.b16 %v470
    %v1464 = vunpack.c.h.b16 %v470
    %v1465 = vunpack.c.l.b16 %v471
    %v1466 = vunpack.c.h.b16 %v471
    %v1467 = vunpack.c.l.b16 %v472
    %v1468 = vunpack.c.h.b16 %v472
    %v1469 = vunpack.c.l.b16 %v473
    %v1470 = vunpack.c.h.b16 %v473
    %v1471 = vunpack.c.l.b16 %v474
    %v1472 = vunpack.c.h.b16 %v474
    %v1473 = vunpack.c.l.b16 %v475
    %v1474 = vunpack.c.h.b16 %v475
    %v1475 = vunpack.c.l.b16 %v476
    %v1476 = vunpack.c.h.b16 %v476
    %v1477 = vunpack.c.l.b16 %v477
    %v1478 = vunpack.c.h.b16 %v477
    %v1479 = vunpack.c.l.b16 %v478
    %v1480 = vunpack.c.h.b16 %v478
    %v1481 = vunpack.c.l.b16 %v479
    %v1482 = vunpack.c.h.b16 %v479
    %v1483 = vunpack.c.l.b16 %v480
    %v1484 = vunpack.c.h.b16 %v480
    %v1485 = vunpack.c.l.b16 %v481
    %v1486 = vunpack.c.h.b16 %v481
    %v1487 = vunpack.c.l.b16 %v482
    %v1488 = vunpack.c.h.b16 %v482
    %v1489 = vunpack.c.l.b16 %v483
    %v1490 = vunpack.c.h.b16 %v483
    %v1491 = vunpack.c.l.b16 %v484
    %v1492 = vunpack.c.h.b16 %v484
    %v1493 = vunpack.c.l.b16 %v485
    %v1494 = vunpack.c.h.b16 %v485
    %v1495 = vunpack.c.l.b16 %v486
    %v1496 = vunpack.c.h.b16 %v486
    %v1497 = vunpack.c.l.b16 %v487
    %v1498 = vunpack.c.h.b16 %v487
    %v1499 = vunpack.c.l.b16 %v488
    %v1500 = vunpack.c.h.b16 %v488
    %v1501 = vunpack.c.l.b16 %v489
    %v1502 = vunpack.c.h.b16 %v489
    %v1503 = vunpack.c.l.b16 %v490
    %v1504 = vunpack.c.h.b16 %v490
    %v1505 = vunpack.c.l.b16 %v491
    %v1506 = vunpack.c.h.b16 %v491
    %v1507 = vunpack.c.l.b16 %v492
    %v1508 = vunpack.c.h.b16 %v492
    %v1509 = vunpack.c.l.b16 %v493
    %v1510 = vunpack.c.h.b16 %v493
    %v1511 = vunpack.c.l.b16 %v494
    %v1512 = vunpack.c.h.b16 %v494
    %v1513 = vunpack.c.l.b16 %v495
    %v1514 = vunpack.c.h.b16 %v495
    %v1515 = vunpack.c.l.b16 %v496
    %v1516 = vunpack.c.h.b16 %v496
    %v1517 = vunpack.c.l.b16 %v497
    %v1518 = vunpack.c.h.b16 %v497
    %v1519 = vunpack.c.l.b16 %v498
    %v1520 = vunpack.c.h.b16 %v498
    %v1521 = vunpack.c.l.b16 %v499
    %v1522 = vunpack.c.h.b16 %v499
    %v1523 = vunpack.c.l.b16 %v500
    %v1524 = vunpack.c.h.b16 %v500
    %v1525 = vunpack.c.l.b16 %v501
    %v1526 = vunpack.c.h.b16 %v501
    %v1527 = vunpack.c.l.b16 %v502
    %v1528 = vunpack.c.h.b16 %v502
    %v1529 = vunpack.c.l.b16 %v503
    %v1530 = vunpack.c.h.b16 %v503
    %v1531 = vunpack.c.l.b16 %v504
    %v1532 = vunpack.c.h.b16 %v504
    %v1533 = vpack.c.b16 %v901, %v893
    %v1534 = vpack.c.b16 %v902, %v894
    %v1535 = vpack.c.b16 %v903, %v895
    %v1536 = vpack.c.b16 %v904, %v896
    %v1537 = vpack.c.b16 %v905, %v897
    %v1538 = vpack.c.b16 %v906, %v898
    %v1539 = vpack.c.b16 %v907, %v899
    %v1540 = vpack.c.b16 %v908, %v900
    %v1541 = vpack.c.b16 %v917, %v909
    %v1542 = vpack.c.b16 %v918, %v910
    %v1543 = vpack.c.b16 %v919, %v911
    %v1544 = vpack.c.b16 %v920, %v912
    %v1545 = vpack.c.b16 %v921, %v913
    %v1546 = vpack.c.b16 %v922, %v914
    %v1547 = vpack.c.b16 %v923, %v915
    %v1548 = vpack.c.b16 %v924, %v916
    %v1549 = vpack.c.b16 %v933, %v925
    %v1550 = vpack.c.b16 %v934, %v926
    %v1551 = vpack.c.b16 %v935, %v927
    %v1552 = vpack.c.b16 %v936, %v928
    %v1553 = vpack.c.b16 %v937, %v929
    %v1554 = vpack.c.b16 %v938, %v930
    %v1555 = vpack.c.b16 %v939, %v931
    %v1556 = vpack.c.b16 %v940, %v932
    %v1557 = vpack.c.b16 %v949, %v941
    %v1558 = vpack.c.b16 %v950, %v942
    %v1559 = vpack.c.b16 %v951, %v943
    %v1560 = vpack.c.b16 %v952, %v944
    %v1561 = vpack.c.b16 %v953, %v945
    %v1562 = vpack.c.b16 %v954, %v946
    %v1563 = vpack.c.b16 %v955, %v947
    %v1564 = vpack.c.b16 %v956, %v948
    %v1565 = vpack.c.b16 %v965, %v957
    %v1566 = vpack.c.b16 %v966, %v958
    %v1567 = vpack.c.b16 %v967, %v959
    %v1568 = vpack.c.b16 %v968, %v960
    %v1569 = vpack.c.b16 %v969, %v961
    %v1570 = vpack.c.b16 %v970, %v962
    %v1571 = vpack.c.b16 %v971, %v963
    %v1572 = vpack.c.b16 %v972, %v964
    %v1573 = vpack.c.b16 %v981, %v973
    %v1574 = vpack.c.b16 %v982, %v974
    %v1575 = vpack.c.b16 %v983, %v975
    %v1576 = vpack.c.b16 %v984, %v976
    %v1577 = vpack.c.b16 %v985, %v977
    %v1578 = vpack.c.b16 %v986, %v978
    %v1579 = vpack.c.b16 %v987, %v979
    %v1580 = vpack.c.b16 %v988, %v980
    %v1581 = vpack.c.b16 %v997, %v989
    %v1582 = vpack.c.b16 %v998, %v990
    %v1583 = vpack.c.b16 %v999, %v991
    %v1584 = vpack.c.b16 %v1000, %v992
    %v1585 = vpack.c.b16 %v1001, %v993
    %v1586 = vpack.c.b16 %v1002, %v994
    %v1587 = vpack.c.b16 %v1003, %v995
    %v1588 = vpack.c.b16 %v1004, %v996
    %v1589 = vpack.c.b16 %v1013, %v1005
    %v1590 = vpack.c.b16 %v1014, %v1006
    %v1591 = vpack.c.b16 %v1015, %v1007
    %v1592 = vpack.c.b16 %v1016, %v1008
    %v1593 = vpack.c.b16 %v1017, %v1009
    %v1594 = vpack.c.b16 %v1018, %v1010
    %v1595 = vpack.c.b16 %v1019, %v1011
    %v1596 = vpack.c.b16 %v1020, %v1012
    %v1597 = vpack.c.b16 %v1029, %v1021
    %v1598 = vpack.c.b16 %v1030, %v1022
    %v1599 = vpack.c.b16 %v1031, %v1023
    %v1600 = vpack.c.b16 %v1032, %v1024
    %v1601 = vpack.c.b16 %v1033, %v1025
    %v1602 = vpack.c.b16 %v1034, %v1026
    %v1603 = vpack.c.b16 %v1035, %v1027
    %v1604 = vpack.c.b16 %v1036, %v1028
    %v1605 = vpack.c.b16 %v1045, %v1037
    %v1606 = vpack.c.b16 %v1046, %v1038
    %v1607 = vpack.c.b16 %v1047, %v1039
    %v1608 = vpack.c.b16 %v1048, %v1040
    %v1609 = vpack.c.b16 %v1049, %v1041
    %v1610 = vpack.c.b16 %v1050, %v1042
    %v1611 = vpack.c.b16 %v1051, %v1043
    %v1612 = vpack.c.b16 %v1052, %v1044
    %v1613 = vpack.c.b16 %v1061, %v1053
    %v1614 = vpack.c.b16 %v1062, %v1054
    %v1615 = vpack.c.b16 %v1063, %v1055
    %v1616 = vpack.c.b16 %v1064, %v1056
    %v1617 = vpack.c.b16 %v1065, %v1057
    %v1618 = vpack.c.b16 %v1066, %v1058
    %v1619 = vpack.c.b16 %v1067, %v1059
    %v1620 = vpack.c.b16 %v1068, %v1060
    %v1621 = vpack.c.b16 %v1077, %v1069
    %v1622 = vpack.c.b16 %v1078, %v1070
    %v1623 = vpack.c.b16 %v1079, %v1071
    %v1624 = vpack.c.b16 %v1080, %v1072
    %v1625 = vpack.c.b16 %v1081, %v1073
    %v1626 = vpack.c.b16 %v1082, %v1074
    %v1627 = vpack.c.b16 %v1083, %v1075
    %v1628 = vpack.c.b16 %v1084, %v1076
    %v1629 = vpack.c.b16 %v1093, %v1085
    %v1630 = vpack.c.b16 %v1094, %v1086
    %v1631 = vpack.c.b16 %v1095, %v1087
    %v1632 = vpack.c.b16 %v1096, %v1088
    %v1633 = vpack.c.b16 %v1097, %v1089
    %v1634 = vpack.c.b16 %v1098, %v1090
    %v1635 = vpack.c.b16 %v1099, %v1091
    %v1636 = vpack.c.b16 %v1100, %v1092
    %v1637 = vpack.c.b16 %v1109, %v1101
    %v1638 = vpack.c.b16 %v1110, %v1102
    %v1639 = vpack.c.b16 %v1111, %v1103
    %v1640 = vpack.c.b16 %v1112, %v1104
    %v1641 = vpack.c.b16 %v1113, %v1105
    %v1642 = vpack.c.b16 %v1114, %v1106
    %v1643 = vpack.c.b16 %v1115, %v1107
    %v1644 = vpack.c.b16 %v1116, %v1108
    %v1645 = vpack.c.b16 %v1125, %v1117
    %v1646 = vpack.c.b16 %v1126, %v1118
    %v1647 = vpack.c.b16 %v1127, %v1119
    %v1648 = vpack.c.b16 %v1128, %v1120
    %v1649 = vpack.c.b16 %v1129, %v1121
    %v1650 = vpack.c.b16 %v1130, %v1122
    %v1651 = vpack.c.b16 %v1131, %v1123
    %v1652 = vpack.c.b16 %v1132, %v1124
    %v1653 = vpack.c.b16 %v1141, %v1133
    %v1654 = vpack.c.b16 %v1142, %v1134
    %v1655 = vpack.c.b16 %v1143, %v1135
    %v1656 = vpack.c.b16 %v1144, %v1136
    %v1657 = vpack.c.b16 %v1145, %v1137
    %v1658 = vpack.c.b16 %v1146, %v1138
    %v1659 = vpack.c.b16 %v1147, %v1139
    %v1660 = vpack.c.b16 %v1148, %v1140
    %v1661 = vpack.c.b16 %v1157, %v1149
    %v1662 = vpack.c.b16 %v1158, %v1150
    %v1663 = vpack.c.b16 %v1159, %v1151
    %v1664 = vpack.c.b16 %v1160, %v1152
    %v1665 = vpack.c.b16 %v1161, %v1153
    %v1666 = vpack.c.b16 %v1162, %v1154
    %v1667 = vpack.c.b16 %v1163, %v1155
    %v1668 = vpack.c.b16 %v1164, %v1156
    %v1669 = vpack.c.b16 %v1173, %v1165
    %v1670 = vpack.c.b16 %v1174, %v1166
    %v1671 = vpack.c.b16 %v1175, %v1167
    %v1672 = vpack.c.b16 %v1176, %v1168
    %v1673 = vpack.c.b16 %v1177, %v1169
    %v1674 = vpack.c.b16 %v1178, %v1170
    %v1675 = vpack.c.b16 %v1179, %v1171
    %v1676 = vpack.c.b16 %v1180, %v1172
    %v1677 = vpack.c.b16 %v1189, %v1181
    %v1678 = vpack.c.b16 %v1190, %v1182
    %v1679 = vpack.c.b16 %v1191, %v1183
    %v1680 = vpack.c.b16 %v1192, %v1184
    %v1681 = vpack.c.b16 %v1193, %v1185
    %v1682 = vpack.c.b16 %v1194, %v1186
    %v1683 = vpack.c.b16 %v1195, %v1187
    %v1684 = vpack.c.b16 %v1196, %v1188
    %v1685 = vpack.c.b16 %v1205, %v1197
    %v1686 = vpack.c.b16 %v1206, %v1198
    %v1687 = vpack.c.b16 %v1207, %v1199
    %v1688 = vpack.c.b16 %v1208, %v1200
    %v1689 = vpack.c.b16 %v1209, %v1201
    %v1690 = vpack.c.b16 %v1210, %v1202
    %v1691 = vpack.c.b16 %v1211, %v1203
    %v1692 = vpack.c.b16 %v1212, %v1204
    %v1693 = vpack.c.b16 %v1221, %v1213
    %v1694 = vpack.c.b16 %v1222, %v1214
    %v1695 = vpack.c.b16 %v1223, %v1215
    %v1696 = vpack.c.b16 %v1224, %v1216
    %v1697 = vpack.c.b16 %v1225, %v1217
    %v1698 = vpack.c.b16 %v1226, %v1218
    %v1699 = vpack.c.b16 %v1227, %v1219
    %v1700 = vpack.c.b16 %v1228, %v1220
    %v1701 = vpack.c.b16 %v1237, %v1229
    %v1702 = vpack.c.b16 %v1238, %v1230
    %v1703 = vpack.c.b16 %v1239, %v1231
    %v1704 = vpack.c.b16 %v1240, %v1232
    %v1705 = vpack.c.b16 %v1241, %v1233
    %v1706 = vpack.c.b16 %v1242, %v1234
    %v1707 = vpack.c.b16 %v1243, %v1235
    %v1708 = vpack.c.b16 %v1244, %v1236
    %v1709 = vpack.c.b16 %v1253, %v1245
    %v1710 = vpack.c.b16 %v1254, %v1246
    %v1711 = vpack.c.b16 %v1255, %v1247
    %v1712 = vpack.c.b16 %v1256, %v1248
    %v1713 = vpack.c.b16 %v1257, %v1249
    %v1714 = vpack.c.b16 %v1258, %v1250
    %v1715 = vpack.c.b16 %v1259, %v1251
    %v1716 = vpack.c.b16 %v1260, %v1252
    %v1717 = vpack.c.b16 %v1269, %v1261
    %v1718 = vpack.c.b16 %v1270, %v1262
    %v1719 = vpack.c.b16 %v1271, %v1263
    %v1720 = vpack.c.b16 %v1272, %v1264
    %v1721 = vpack.c.b16 %v1273, %v1265
    %v1722 = vpack.c.b16 %v1274, %v1266
    %v1723 = vpack.c.b16 %v1275, %v1267
    %v1724 = vpack.c.b16 %v1276, %v1268
    %v1725 = vpack.c.b16 %v1285, %v1277
    %v1726 = vpack.c.b16 %v1286, %v1278
    %v1727 = vpack.c.b16 %v1287, %v1279
    %v1728 = vpack.c.b16 %v1288, %v1280
    %v1729 = vpack.c.b16 %v1289, %v1281
    %v1730 = vpack.c.b16 %v1290, %v1282
    %v1731 = vpack.c.b16 %v1291, %v1283
    %v1732 = vpack.c.b16 %v1292, %v1284
    %v1733 = vpack.c.b16 %v1301, %v1293
    %v1734 = vpack.c.b16 %v1302, %v1294
    %v1735 = vpack.c.b16 %v1303, %v1295
    %v1736 = vpack.c.b16 %v1304, %v1296
    %v1737 = vpack.c.b16 %v1305, %v1297
    %v1738 = vpack.c.b16 %v1306, %v1298
    %v1739 = vpack.c.b16 %v1307, %v1299
    %v1740 = vpack.c.b16 %v1308, %v1300
    %v1741 = vpack.c.b16 %v1317, %v1309
    %v1742 = vpack.c.b16 %v1318, %v1310
    %v1743 = vpack.c.b16 %v1319, %v1311
    %v1744 = vpack.c.b16 %v1320, %v1312
    %v1745 = vpack.c.b16 %v1321, %v1313
    %v1746 = vpack.c.b16 %v1322, %v1314
    %v1747 = vpack.c.b16 %v1323, %v1315
    %v1748 = vpack.c.b16 %v1324, %v1316
    %v1749 = vpack.c.b16 %v1333, %v1325
    %v1750 = vpack.c.b16 %v1334, %v1326
    %v1751 = vpack.c.b16 %v1335, %v1327
    %v1752 = vpack.c.b16 %v1336, %v1328
    %v1753 = vpack.c.b16 %v1337, %v1329
    %v1754 = vpack.c.b16 %v1338, %v1330
    %v1755 = vpack.c.b16 %v1339, %v1331
    %v1756 = vpack.c.b16 %v1340, %v1332
    %v1757 = vpack.c.b16 %v1349, %v1341
    %v1758 = vpack.c.b16 %v1350, %v1342
    %v1759 = vpack.c.b16 %v1351, %v1343
    %v1760 = vpack.c.b16 %v1352, %v1344
    %v1761 = vpack.c.b16 %v1353, %v1345
    %v1762 = vpack.c.b16 %v1354, %v1346
    %v1763 = vpack.c.b16 %v1355, %v1347
    %v1764 = vpack.c.b16 %v1356, %v1348
    %v1765 = vpack.c.b16 %v1365, %v1357
    %v1766 = vpack.c.b16 %v1366, %v1358
    %v1767 = vpack.c.b16 %v1367, %v1359
    %v1768 = vpack.c.b16 %v1368, %v1360
    %v1769 = vpack.c.b16 %v1369, %v1361
    %v1770 = vpack.c.b16 %v1370, %v1362
    %v1771 = vpack.c.b16 %v1371, %v1363
    %v1772 = vpack.c.b16 %v1372, %v1364
    %v1773 = vpack.c.b16 %v1381, %v1373
    %v1774 = vpack.c.b16 %v1382, %v1374
    %v1775 = vpack.c.b16 %v1383, %v1375
    %v1776 = vpack.c.b16 %v1384, %v1376
    %v1777 = vpack.c.b16 %v1385, %v1377
    %v1778 = vpack.c.b16 %v1386, %v1378
    %v1779 = vpack.c.b16 %v1387, %v1379
    %v1780 = vpack.c.b16 %v1388, %v1380
    %v1781 = vpack.c.b16 %v1397, %v1389
    %v1782 = vpack.c.b16 %v1398, %v1390
    %v1783 = vpack.c.b16 %v1399, %v1391
    %v1784 = vpack.c.b16 %v1400, %v1392
    %v1785 = vpack.c.b16 %v1401, %v1393
    %v1786 = vpack.c.b16 %v1402, %v1394
    %v1787 = vpack.c.b16 %v1403, %v1395
    %v1788 = vpack.c.b16 %v1404, %v1396
    %v1789 = vpack.c.b16 %v1413, %v1405
    %v1790 = vpack.c.b16 %v1414, %v1406
    %v1791 = vpack.c.b16 %v1415, %v1407
    %v1792 = vpack.c.b16 %v1416, %v1408
    %v1793 = vpack.c.b16 %v1417, %v1409
    %v1794 = vpack.c.b16 %v1418, %v1410
    %v1795 = vpack.c.b16 %v1419, %v1411
    %v1796 = vpack.c.b16 %v1420, %v1412
    %v1797 = vpack.c.b16 %v1429, %v1421
    %v1798 = vpack.c.b16 %v1430, %v1422
    %v1799 = vpack.c.b16 %v1431, %v1423
    %v1800 = vpack.c.b16 %v1432, %v1424
    %v1801 = vpack.c.b16 %v1433, %v1425
    %v1802 = vpack.c.b16 %v1434, %v1426
    %v1803 = vpack.c.b16 %v1435, %v1427
    %v1804 = vpack.c.b16 %v1436, %v1428
    %v1805 = vpack.c.b16 %v1445, %v1437
    %v1806 = vpack.c.b16 %v1446, %v1438
    %v1807 = vpack.c.b16 %v1447, %v1439
    %v1808 = vpack.c.b16 %v1448, %v1440
    %v1809 = vpack.c.b16 %v1449, %v1441
    %v1810 = vpack.c.b16 %v1450, %v1442
    %v1811 = vpack.c.b16 %v1451, %v1443
    %v1812 = vpack.c.b16 %v1452, %v1444
    %v1813 = vpack.c.b16 %v1461, %v1453
    %v1814 = vpack.c.b16 %v1462, %v1454
    %v1815 = vpack.c.b16 %v1463, %v1455
    %v1816 = vpack.c.b16 %v1464, %v1456
    %v1817 = vpack.c.b16 %v1465, %v1457
    %v1818 = vpack.c.b16 %v1466, %v1458
    %v1819 = vpack.c.b16 %v1467, %v1459
    %v1820 = vpack.c.b16 %v1468, %v1460
    %v1821 = vpack.c.b16 %v1477, %v1469
    %v1822 = vpack.c.b16 %v1478, %v1470
    %v1823 = vpack.c.b16 %v1479, %v1471
    %v1824 = vpack.c.b16 %v1480, %v1472
    %v1825 = vpack.c.b16 %v1481, %v1473
    %v1826 = vpack.c.b16 %v1482, %v1474
    %v1827 = vpack.c.b16 %v1483, %v1475
    %v1828 = vpack.c.b16 %v1484, %v1476
    %v1829 = vpack.c.b16 %v1493, %v1485
    %v1830 = vpack.c.b16 %v1494, %v1486
    %v1831 = vpack.c.b16 %v1495, %v1487
    %v1832 = vpack.c.b16 %v1496, %v1488
    %v1833 = vpack.c.b16 %v1497, %v1489
    %v1834 = vpack.c.b16 %v1498, %v1490
    %v1835 = vpack.c.b16 %v1499, %v1491
    %v1836 = vpack.c.b16 %v1500, %v1492
    %v1837 = vpack.c.b16 %v1509, %v1501
    %v1838 = vpack.c.b16 %v1510, %v1502
    %v1839 = vpack.c.b16 %v1511, %v1503
    %v1840 = vpack.c.b16 %v1512, %v1504
    %v1841 = vpack.c.b16 %v1513, %v1505
    %v1842 = vpack.c.b16 %v1514, %v1506
    %v1843 = vpack.c.b16 %v1515, %v1507
    %v1844 = vpack.c.b16 %v1516, %v1508
    %v1845 = vpack.c.b16 %v1525, %v1517
    %v1846 = vpack.c.b16 %v1526, %v1518
    %v1847 = vpack.c.b16 %v1527, %v1519
    %v1848 = vpack.c.b16 %v1528, %v1520
    %v1849 = vpack.c.b16 %v1529, %v1521
    %v1850 = vpack.c.b16 %v1530, %v1522
    %v1851 = vpack.c.b16 %v1531, %v1523
    %v1852 = vpack.c.b16 %v1532, %v1524
    %2173 = vmatprep.subr.bf16.mxu0 %v1534
    %2174 = vmatpush1.bf16.msra.mxu0 %v1533
    %2175 = vmatprep.subr.bf16.mxu0 %v1542
    %2176 = vmatpush1.bf16.msra.mxu0 %v1541
    %2177 = vmatprep.subr.bf16.mxu0 %v1550
    %2178 = vmatpush1.bf16.msra.mxu0 %v1549
    %2179 = vmatprep.subr.bf16.mxu0 %v1558
    %2180 = vmatpush1.bf16.msra.mxu0 %v1557
    %2181 = vmatprep.subr.bf16.mxu0 %v1566
    %2182 = vmatpush1.bf16.msra.mxu0 %v1565
    %2183 = vmatprep.subr.bf16.mxu0 %v1574
    %2184 = vmatpush1.bf16.msra.mxu0 %v1573
    %2185 = vmatprep.subr.bf16.mxu0 %v1582
    %2186 = vmatpush1.bf16.msra.mxu0 %v1581
    %2187 = vmatprep.subr.bf16.mxu0 %v1590
    %2188 = vmatpush1.bf16.msra.mxu0 %v1589
    %2189 = vmatprep.subr.bf16.mxu0 %v1598
    %2190 = vmatpush1.bf16.msra.mxu0 %v1597
    %2191 = vmatprep.subr.bf16.mxu0 %v1606
    %2192 = vmatpush1.bf16.msra.mxu0 %v1605
    %2193 = vmatprep.subr.bf16.mxu0 %v1614
    %2194 = vmatpush1.bf16.msra.mxu0 %v1613
    %2195 = vmatprep.subr.bf16.mxu0 %v1622
    %2196 = vmatpush1.bf16.msra.mxu0 %v1621
    %2197 = vmatprep.subr.bf16.mxu0 %v1630
    %2198 = vmatpush1.bf16.msra.mxu0 %v1629
    %2199 = vmatprep.subr.bf16.mxu0 %v1638
    %2200 = vmatpush1.bf16.msra.mxu0 %v1637
    %2201 = vmatprep.subr.bf16.mxu0 %v1646
    %2202 = vmatpush1.bf16.msra.mxu0 %v1645
    %2203 = vmatprep.subr.bf16.mxu0 %v1654
    %2204 = vmatpush1.bf16.msra.mxu0 %v1653
    %2205 = vmatprep.mubr.bf16.mxu0 %v564
    %2206 = vmatmul.mubr.bf16.gmra.mrb[0].mxu0 %v563
    %v2207 = vpop.f32.mrb[0].mxu0
    %v2208 = vadd.f32 %v510, %v2207
    %v2209 = vpop.f32.mrb[0].mxu0
    %v2210 = vadd.f32 %v514, %v2209
    %v2211 = vpop.f32.mrb[0].mxu0
    %v2212 = vadd.f32 %v510, %v2211
    %v2213 = vpop.f32.mrb[0].mxu0
    %v2214 = vadd.f32 %v514, %v2213
    %2215 = vdwg.mxu0
    %2216 = vmatprep.subr.bf16.mxu0 %v1662
    %2217 = vmatpush1.bf16.msra.mxu0 %v1661
    %2218 = vmatprep.subr.bf16.mxu0 %v1670
    %2219 = vmatpush1.bf16.msra.mxu0 %v1669
    %2220 = vmatprep.subr.bf16.mxu0 %v1678
    %2221 = vmatpush1.bf16.msra.mxu0 %v1677
    %2222 = vmatprep.subr.bf16.mxu0 %v1686
    %2223 = vmatpush1.bf16.msra.mxu0 %v1685
    %2224 = vmatprep.subr.bf16.mxu0 %v1694
    %2225 = vmatpush1.bf16.msra.mxu0 %v1693
    %2226 = vmatprep.subr.bf16.mxu0 %v1702
    %2227 = vmatpush1.bf16.msra.mxu0 %v1701
    %2228 = vmatprep.subr.bf16.mxu0 %v1710
    %2229 = vmatpush1.bf16.msra.mxu0 %v1709
    %2230 = vmatprep.subr.bf16.mxu0 %v1718
    %2231 = vmatpush1.bf16.msra.mxu0 %v1717
    %2232 = vmatprep.subr.bf16.mxu0 %v1726
    %2233 = vmatpush1.bf16.msra.mxu0 %v1725
    %2234 = vmatprep.subr.bf16.mxu0 %v1734
    %2235 = vmatpush1.bf16.msra.mxu0 %v1733
    %2236 = vmatprep.subr.bf16.mxu0 %v1742
    %2237 = vmatpush1.bf16.msra.mxu0 %v1741
    %2238 = vmatprep.subr.bf16.mxu0 %v1750
    %2239 = vmatpush1.bf16.msra.mxu0 %v1749
    %2240 = vmatprep.subr.bf16.mxu0 %v1758
    %2241 = vmatpush1.bf16.msra.mxu0 %v1757
    %2242 = vmatprep.subr.bf16.mxu0 %v1766
    %2243 = vmatpush1.bf16.msra.mxu0 %v1765
    %2244 = vmatprep.subr.bf16.mxu0 %v1774
    %2245 = vmatpush1.bf16.msra.mxu0 %v1773
    %2246 = vmatprep.subr.bf16.mxu0 %v1782
    %2247 = vmatpush1.bf16.msra.mxu0 %v1781
    %2248 = vmatprep.mubr.bf16.mxu0 %v566
    %2249 = vmatmul.mubr.bf16.gmra.mrb[0].mxu0 %v565
    %v2250 = vpop.f32.mrb[0].mxu0
    %v2251 = vadd.f32 %v2208, %v2250
    %v2252 = vpop.f32.mrb[0].mxu0
    %v2253 = vadd.f32 %v2210, %v2252
    %v2254 = vpop.f32.mrb[0].mxu0
    %v2255 = vadd.f32 %v2212, %v2254
    %v2256 = vpop.f32.mrb[0].mxu0
    %v2257 = vadd.f32 %v2214, %v2256
    %2258 = vdwg.mxu0
    %2259 = vmatprep.subr.bf16.mxu0 %v1790
    %2260 = vmatpush1.bf16.msra.mxu0 %v1789
    %2261 = vmatprep.subr.bf16.mxu0 %v1798
    %2262 = vmatpush1.bf16.msra.mxu0 %v1797
    %2263 = vmatprep.subr.bf16.mxu0 %v1806
    %2264 = vmatpush1.bf16.msra.mxu0 %v1805
    %2265 = vmatprep.subr.bf16.mxu0 %v1814
    %2266 = vmatpush1.bf16.msra.mxu0 %v1813
    %2267 = vmatprep.subr.bf16.mxu0 %v1822
    %2268 = vmatpush1.bf16.msra.mxu0 %v1821
    %2269 = vmatprep.subr.bf16.mxu0 %v1830
    %2270 = vmatpush1.bf16.msra.mxu0 %v1829
    %2271 = vmatprep.subr.bf16.mxu0 %v1838
    %2272 = vmatpush1.bf16.msra.mxu0 %v1837
    %2273 = vmatprep.subr.bf16.mxu0 %v1846
    %2274 = vmatpush1.bf16.msra.mxu0 %v1845
    %2275 = vmatprep.subr.bf16.mxu0 0
    %2276 = vmatpush1.bf16.msra.mxu0 0
    %2277 = vmatprep.subr.bf16.mxu0 0
    %2278 = vmatpush1.bf16.msra.mxu0 0
    %2279 = vmatprep.subr.bf16.mxu0 0
    %2280 = vmatpush1.bf16.msra.mxu0 0
    %2281 = vmatprep.subr.bf16.mxu0 0
    %2282 = vmatpush1.bf16.msra.mxu0 0
    %2283 = vmatprep.subr.bf16.mxu0 0
    %2284 = vmatpush1.bf16.msra.mxu0 0
    %2285 = vmatprep.subr.bf16.mxu0 0
    %2286 = vmatpush1.bf16.msra.mxu0 0
    %2287 = vmatprep.subr.bf16.mxu0 0
    %2288 = vmatpush1.bf16.msra.mxu0 0
    %2289 = vmatprep.subr.bf16.mxu0 0
    %2290 = vmatpush1.bf16.msra.mxu0 0
    %2291 = vmatprep.mubr.bf16.mxu0 0
    %2292 = vmatmul.mubr.bf16.gmra.mrb[0].mxu0 %v567
    %v2293 = vpop.f32.mrb[0].mxu0
    %v2294 = vadd.f32 %v2251, %v2293
    %v2295 = vpop.f32.mrb[0].mxu0
    %v2296 = vadd.f32 %v2253, %v2295
    %v2297 = vpop.f32.mrb[0].mxu0
    %v2298 = vadd.f32 %v2255, %v2297
    %v2299 = vpop.f32.mrb[0].mxu0
    %v2300 = vadd.f32 %v2257, %v2299
    %2301 = vdwg.mxu0
    %2302 = vmatprep.subr.bf16.mxu0 %v1536
    %2303 = vmatpush1.bf16.msra.mxu0 %v1535
    %2304 = vmatprep.subr.bf16.mxu0 %v1544
    %2305 = vmatpush1.bf16.msra.mxu0 %v1543
    %2306 = vmatprep.subr.bf16.mxu0 %v1552
    %2307 = vmatpush1.bf16.msra.mxu0 %v1551
    %2308 = vmatprep.subr.bf16.mxu0 %v1560
    %2309 = vmatpush1.bf16.msra.mxu0 %v1559
    %2310 = vmatprep.subr.bf16.mxu0 %v1568
    %2311 = vmatpush1.bf16.msra.mxu0 %v1567
    %2312 = vmatprep.subr.bf16.mxu0 %v1576
    %2313 = vmatpush1.bf16.msra.mxu0 %v1575
    %2314 = vmatprep.subr.bf16.mxu0 %v1584
    %2315 = vmatpush1.bf16.msra.mxu0 %v1583
    %2316 = vmatprep.subr.bf16.mxu0 %v1592
    %2317 = vmatpush1.bf16.msra.mxu0 %v1591
    %2318 = vmatprep.subr.bf16.mxu0 %v1600
    %2319 = vmatpush1.bf16.msra.mxu0 %v1599
    %2320 = vmatprep.subr.bf16.mxu0 %v1608
    %2321 = vmatpush1.bf16.msra.mxu0 %v1607
    %2322 = vmatprep.subr.bf16.mxu0 %v1616
    %2323 = vmatpush1.bf16.msra.mxu0 %v1615
    %2324 = vmatprep.subr.bf16.mxu0 %v1624
    %2325 = vmatpush1.bf16.msra.mxu0 %v1623
    %2326 = vmatprep.subr.bf16.mxu0 %v1632
    %2327 = vmatpush1.bf16.msra.mxu0 %v1631
    %2328 = vmatprep.subr.bf16.mxu0 %v1640
    %2329 = vmatpush1.bf16.msra.mxu0 %v1639
    %2330 = vmatprep.subr.bf16.mxu0 %v1648
    %2331 = vmatpush1.bf16.msra.mxu0 %v1647
    %2332 = vmatprep.subr.bf16.mxu0 %v1656
    %2333 = vmatpush1.bf16.msra.mxu0 %v1655
    %2334 = vmatprep.mubr.bf16.mxu0 %v564
    %2335 = vmatmul.mubr.bf16.gmra.mrb[0].mxu0 %v563
    %v2336 = vpop.f32.mrb[0].mxu0
    %v2337 = vadd.f32 %v518, %v2336
    %v2338 = vpop.f32.mrb[0].mxu0
    %v2339 = vadd.f32 %v522, %v2338
    %v2340 = vpop.f32.mrb[0].mxu0
    %v2341 = vadd.f32 %v518, %v2340
    %v2342 = vpop.f32.mrb[0].mxu0
    %v2343 = vadd.f32 %v522, %v2342
    %2344 = vdwg.mxu0
    %2345 = vmatprep.subr.bf16.mxu0 %v1664
    %2346 = vmatpush1.bf16.msra.mxu0 %v1663
    %2347 = vmatprep.subr.bf16.mxu0 %v1672
    %2348 = vmatpush1.bf16.msra.mxu0 %v1671
    %2349 = vmatprep.subr.bf16.mxu0 %v1680
    %2350 = vmatpush1.bf16.msra.mxu0 %v1679
    %2351 = vmatprep.subr.bf16.mxu0 %v1688
    %2352 = vmatpush1.bf16.msra.mxu0 %v1687
    %2353 = vmatprep.subr.bf16.mxu0 %v1696
    %2354 = vmatpush1.bf16.msra.mxu0 %v1695
    %2355 = vmatprep.subr.bf16.mxu0 %v1704
    %2356 = vmatpush1.bf16.msra.mxu0 %v1703
    %2357 = vmatprep.subr.bf16.mxu0 %v1712
    %2358 = vmatpush1.bf16.msra.mxu0 %v1711
    %2359 = vmatprep.subr.bf16.mxu0 %v1720
    %2360 = vmatpush1.bf16.msra.mxu0 %v1719
    %2361 = vmatprep.subr.bf16.mxu0 %v1728
    %2362 = vmatpush1.bf16.msra.mxu0 %v1727
    %2363 = vmatprep.subr.bf16.mxu0 %v1736
    %2364 = vmatpush1.bf16.msra.mxu0 %v1735
    %2365 = vmatprep.subr.bf16.mxu0 %v1744
    %2366 = vmatpush1.bf16.msra.mxu0 %v1743
    %2367 = vmatprep.subr.bf16.mxu0 %v1752
    %2368 = vmatpush1.bf16.msra.mxu0 %v1751
    %2369 = vmatprep.subr.bf16.mxu0 %v1760
    %2370 = vmatpush1.bf16.msra.mxu0 %v1759
    %2371 = vmatprep.subr.bf16.mxu0 %v1768
    %2372 = vmatpush1.bf16.msra.mxu0 %v1767
    %2373 = vmatprep.subr.bf16.mxu0 %v1776
    %2374 = vmatpush1.bf16.msra.mxu0 %v1775
    %2375 = vmatprep.subr.bf16.mxu0 %v1784
    %2376 = vmatpush1.bf16.msra.mxu0 %v1783
    %2377 = vmatprep.mubr.bf16.mxu0 %v566
    %2378 = vmatmul.mubr.bf16.gmra.mrb[0].mxu0 %v565
    %v2379 = vpop.f32.mrb[0].mxu0
    %v2380 = vadd.f32 %v2337, %v2379
    %v2381 = vpop.f32.mrb[0].mxu0
    %v2382 = vadd.f32 %v2339, %v2381
    %v2383 = vpop.f32.mrb[0].mxu0
    %v2384 = vadd.f32 %v2341, %v2383
    %v2385 = vpop.f32.mrb[0].mxu0
    %v2386 = vadd.f32 %v2343, %v2385
    %2387 = vdwg.mxu0
    %2388 = vmatprep.subr.bf16.mxu0 %v1792
    %2389 = vmatpush1.bf16.msra.mxu0 %v1791
    %2390 = vmatprep.subr.bf16.mxu0 %v1800
    %2391 = vmatpush1.bf16.msra.mxu0 %v1799
    %2392 = vmatprep.subr.bf16.mxu0 %v1808
    %2393 = vmatpush1.bf16.msra.mxu0 %v1807
    %2394 = vmatprep.subr.bf16.mxu0 %v1816
    %2395 = vmatpush1.bf16.msra.mxu0 %v1815
    %2396 = vmatprep.subr.bf16.mxu0 %v1824
    %2397 = vmatpush1.bf16.msra.mxu0 %v1823
    %2398 = vmatprep.subr.bf16.mxu0 %v1832
    %2399 = vmatpush1.bf16.msra.mxu0 %v1831
    %2400 = vmatprep.subr.bf16.mxu0 %v1840
    %2401 = vmatpush1.bf16.msra.mxu0 %v1839
    %2402 = vmatprep.subr.bf16.mxu0 %v1848
    %2403 = vmatpush1.bf16.msra.mxu0 %v1847
    %2404 = vmatprep.subr.bf16.mxu0 0
    %2405 = vmatpush1.bf16.msra.mxu0 0
    %2406 = vmatprep.subr.bf16.mxu0 0
    %2407 = vmatpush1.bf16.msra.mxu0 0
    %2408 = vmatprep.subr.bf16.mxu0 0
    %2409 = vmatpush1.bf16.msra.mxu0 0
    %2410 = vmatprep.subr.bf16.mxu0 0
    %2411 = vmatpush1.bf16.msra.mxu0 0
    %2412 = vmatprep.subr.bf16.mxu0 0
    %2413 = vmatpush1.bf16.msra.mxu0 0
    %2414 = vmatprep.subr.bf16.mxu0 0
    %2415 = vmatpush1.bf16.msra.mxu0 0
    %2416 = vmatprep.subr.bf16.mxu0 0
    %2417 = vmatpush1.bf16.msra.mxu0 0
    %2418 = vmatprep.subr.bf16.mxu0 0
    %2419 = vmatpush1.bf16.msra.mxu0 0
    %2420 = vmatprep.mubr.bf16.mxu0 0
    %2421 = vmatmul.mubr.bf16.gmra.mrb[0].mxu0 %v567
    %v2422 = vpop.f32.mrb[0].mxu0
    %v2423 = vadd.f32 %v2380, %v2422
    %v2424 = vpop.f32.mrb[0].mxu0
    %v2425 = vadd.f32 %v2382, %v2424
    %v2426 = vpop.f32.mrb[0].mxu0
    %v2427 = vadd.f32 %v2384, %v2426
    %v2428 = vpop.f32.mrb[0].mxu0
    %v2429 = vadd.f32 %v2386, %v2428
    %2430 = vdwg.mxu0
    %2431 = vmatprep.subr.bf16.mxu0 %v1538
    %2432 = vmatpush1.bf16.msra.mxu0 %v1537
    %2433 = vmatprep.subr.bf16.mxu0 %v1546
    %2434 = vmatpush1.bf16.msra.mxu0 %v1545
    %2435 = vmatprep.subr.bf16.mxu0 %v1554
    %2436 = vmatpush1.bf16.msra.mxu0 %v1553
    %2437 = vmatprep.subr.bf16.mxu0 %v1562
    %2438 = vmatpush1.bf16.msra.mxu0 %v1561
    %2439 = vmatprep.subr.bf16.mxu0 %v1570
    %2440 = vmatpush1.bf16.msra.mxu0 %v1569
    %2441 = vmatprep.subr.bf16.mxu0 %v1578
    %2442 = vmatpush1.bf16.msra.mxu0 %v1577
    %2443 = vmatprep.subr.bf16.mxu0 %v1586
    %2444 = vmatpush1.bf16.msra.mxu0 %v1585
    %2445 = vmatprep.subr.bf16.mxu0 %v1594
    %2446 = vmatpush1.bf16.msra.mxu0 %v1593
    %2447 = vmatprep.subr.bf16.mxu0 %v1602
    %2448 = vmatpush1.bf16.msra.mxu0 %v1601
    %2449 = vmatprep.subr.bf16.mxu0 %v1610
    %2450 = vmatpush1.bf16.msra.mxu0 %v1609
    %2451 = vmatprep.subr.bf16.mxu0 %v1618
    %2452 = vmatpush1.bf16.msra.mxu0 %v1617
    %2453 = vmatprep.subr.bf16.mxu0 %v1626
    %2454 = vmatpush1.bf16.msra.mxu0 %v1625
    %2455 = vmatprep.subr.bf16.mxu0 %v1634
    %2456 = vmatpush1.bf16.msra.mxu0 %v1633
    %2457 = vmatprep.subr.bf16.mxu0 %v1642
    %2458 = vmatpush1.bf16.msra.mxu0 %v1641
    %2459 = vmatprep.subr.bf16.mxu0 %v1650
    %2460 = vmatpush1.bf16.msra.mxu0 %v1649
    %2461 = vmatprep.subr.bf16.mxu0 %v1658
    %2462 = vmatpush1.bf16.msra.mxu0 %v1657
    %2463 = vmatprep.mubr.bf16.mxu0 %v564
    %2464 = vmatmul.mubr.bf16.gmra.mrb[0].mxu0 %v563
    %v2465 = vpop.f32.mrb[0].mxu0
    %v2466 = vadd.f32 %v526, %v2465
    %v2467 = vpop.f32.mrb[0].mxu0
    %v2468 = vadd.f32 %v530, %v2467
    %v2469 = vpop.f32.mrb[0].mxu0
    %v2470 = vadd.f32 %v526, %v2469
    %v2471 = vpop.f32.mrb[0].mxu0
    %v2472 = vadd.f32 %v530, %v2471
    %2473 = vdwg.mxu0
    %2474 = vmatprep.subr.bf16.mxu0 %v1666
    %2475 = vmatpush1.bf16.msra.mxu0 %v1665
    %2476 = vmatprep.subr.bf16.mxu0 %v1674
    %2477 = vmatpush1.bf16.msra.mxu0 %v1673
    %2478 = vmatprep.subr.bf16.mxu0 %v1682
    %2479 = vmatpush1.bf16.msra.mxu0 %v1681
    %2480 = vmatprep.subr.bf16.mxu0 %v1690
    %2481 = vmatpush1.bf16.msra.mxu0 %v1689
    %2482 = vmatprep.subr.bf16.mxu0 %v1698
    %2483 = vmatpush1.bf16.msra.mxu0 %v1697
    %2484 = vmatprep.subr.bf16.mxu0 %v1706
    %2485 = vmatpush1.bf16.msra.mxu0 %v1705
    %2486 = vmatprep.subr.bf16.mxu0 %v1714
    %2487 = vmatpush1.bf16.msra.mxu0 %v1713
    %2488 = vmatprep.subr.bf16.mxu0 %v1722
    %2489 = vmatpush1.bf16.msra.mxu0 %v1721
    %2490 = vmatprep.subr.bf16.mxu0 %v1730
    %2491 = vmatpush1.bf16.msra.mxu0 %v1729
    %2492 = vmatprep.subr.bf16.mxu0 %v1738
    %2493 = vmatpush1.bf16.msra.mxu0 %v1737
    %2494 = vmatprep.subr.bf16.mxu0 %v1746
    %2495 = vmatpush1.bf16.msra.mxu0 %v1745
    %2496 = vmatprep.subr.bf16.mxu0 %v1754
    %2497 = vmatpush1.bf16.msra.mxu0 %v1753
    %2498 = vmatprep.subr.bf16.mxu0 %v1762
    %2499 = vmatpush1.bf16.msra.mxu0 %v1761
    %2500 = vmatprep.subr.bf16.mxu0 %v1770
    %2501 = vmatpush1.bf16.msra.mxu0 %v1769
    %2502 = vmatprep.subr.bf16.mxu0 %v1778
    %2503 = vmatpush1.bf16.msra.mxu0 %v1777
    %2504 = vmatprep.subr.bf16.mxu0 %v1786
    %2505 = vmatpush1.bf16.msra.mxu0 %v1785
    %2506 = vmatprep.mubr.bf16.mxu0 %v566
    %2507 = vmatmul.mubr.bf16.gmra.mrb[0].mxu0 %v565
    %v2508 = vpop.f32.mrb[0].mxu0
    %v2509 = vadd.f32 %v2466, %v2508
    %v2510 = vpop.f32.mrb[0].mxu0
    %v2511 = vadd.f32 %v2468, %v2510
    %v2512 = vpop.f32.mrb[0].mxu0
    %v2513 = vadd.f32 %v2470, %v2512
    %v2514 = vpop.f32.mrb[0].mxu0
    %v2515 = vadd.f32 %v2472, %v2514
    %2516 = vdwg.mxu0
    %2517 = vmatprep.subr.bf16.mxu0 %v1794
    %2518 = vmatpush1.bf16.msra.mxu0 %v1793
    %2519 = vmatprep.subr.bf16.mxu0 %v1802
    %2520 = vmatpush1.bf16.msra.mxu0 %v1801
    %2521 = vmatprep.subr.bf16.mxu0 %v1810
    %2522 = vmatpush1.bf16.msra.mxu0 %v1809
    %2523 = vmatprep.subr.bf16.mxu0 %v1818
    %2524 = vmatpush1.bf16.msra.mxu0 %v1817
    %2525 = vmatprep.subr.bf16.mxu0 %v1826
    %2526 = vmatpush1.bf16.msra.mxu0 %v1825
    %2527 = vmatprep.subr.bf16.mxu0 %v1834
    %2528 = vmatpush1.bf16.msra.mxu0 %v1833
    %2529 = vmatprep.subr.bf16.mxu0 %v1842
    %2530 = vmatpush1.bf16.msra.mxu0 %v1841
    %2531 = vmatprep.subr.bf16.mxu0 %v1850
    %2532 = vmatpush1.bf16.msra.mxu0 %v1849
    %2533 = vmatprep.subr.bf16.mxu0 0
    %2534 = vmatpush1.bf16.msra.mxu0 0
    %2535 = vmatprep.subr.bf16.mxu0 0
    %2536 = vmatpush1.bf16.msra.mxu0 0
    %2537 = vmatprep.subr.bf16.mxu0 0
    %2538 = vmatpush1.bf16.msra.mxu0 0
    %2539 = vmatprep.subr.bf16.mxu0 0
    %2540 = vmatpush1.bf16.msra.mxu0 0
    %2541 = vmatprep.subr.bf16.mxu0 0
    %2542 = vmatpush1.bf16.msra.mxu0 0
    %2543 = vmatprep.subr.bf16.mxu0 0
    %2544 = vmatpush1.bf16.msra.mxu0 0
    %2545 = vmatprep.subr.bf16.mxu0 0
    %2546 = vmatpush1.bf16.msra.mxu0 0
    %2547 = vmatprep.subr.bf16.mxu0 0
    %2548 = vmatpush1.bf16.msra.mxu0 0
    %2549 = vmatprep.mubr.bf16.mxu0 0
    %2550 = vmatmul.mubr.bf16.gmra.mrb[0].mxu0 %v567
    %v2551 = vpop.f32.mrb[0].mxu0
    %v2552 = vadd.f32 %v2509, %v2551
    %v2553 = vpop.f32.mrb[0].mxu0
    %v2554 = vadd.f32 %v2511, %v2553
    %v2555 = vpop.f32.mrb[0].mxu0
    %v2556 = vadd.f32 %v2513, %v2555
    %v2557 = vpop.f32.mrb[0].mxu0
    %v2558 = vadd.f32 %v2515, %v2557
    %2559 = vdwg.mxu0
    %2560 = vmatprep.subr.bf16.mxu0 %v1540
    %2561 = vmatpush1.bf16.msra.mxu0 %v1539
    %2562 = vmatprep.subr.bf16.mxu0 %v1548
    %2563 = vmatpush1.bf16.msra.mxu0 %v1547
    %2564 = vmatprep.subr.bf16.mxu0 %v1556
    %2565 = vmatpush1.bf16.msra.mxu0 %v1555
    %2566 = vmatprep.subr.bf16.mxu0 %v1564
    %2567 = vmatpush1.bf16.msra.mxu0 %v1563
    %2568 = vmatprep.subr.bf16.mxu0 %v1572
    %2569 = vmatpush1.bf16.msra.mxu0 %v1571
    %2570 = vmatprep.subr.bf16.mxu0 %v1580
    %2571 = vmatpush1.bf16.msra.mxu0 %v1579
    %2572 = vmatprep.subr.bf16.mxu0 %v1588
    %2573 = vmatpush1.bf16.msra.mxu0 %v1587
    %2574 = vmatprep.subr.bf16.mxu0 %v1596
    %2575 = vmatpush1.bf16.msra.mxu0 %v1595
    %2576 = vmatprep.subr.bf16.mxu0 %v1604
    %2577 = vmatpush1.bf16.msra.mxu0 %v1603
    %2578 = vmatprep.subr.bf16.mxu0 %v1612
    %2579 = vmatpush1.bf16.msra.mxu0 %v1611
    %2580 = vmatprep.subr.bf16.mxu0 %v1620
    %2581 = vmatpush1.bf16.msra.mxu0 %v1619
    %2582 = vmatprep.subr.bf16.mxu0 %v1628
    %2583 = vmatpush1.bf16.msra.mxu0 %v1627
    %2584 = vmatprep.subr.bf16.mxu0 %v1636
    %2585 = vmatpush1.bf16.msra.mxu0 %v1635
    %2586 = vmatprep.subr.bf16.mxu0 %v1644
    %2587 = vmatpush1.bf16.msra.mxu0 %v1643
    %2588 = vmatprep.subr.bf16.mxu0 %v1652
    %2589 = vmatpush1.bf16.msra.mxu0 %v1651
    %2590 = vmatprep.subr.bf16.mxu0 %v1660
    %2591 = vmatpush1.bf16.msra.mxu0 %v1659
    %2592 = vmatprep.mubr.bf16.mxu0 %v564
    %2593 = vmatmul.mubr.bf16.gmra.mrb[0].mxu0 %v563
    %v2594 = vpop.f32.mrb[0].mxu0
    %v2595 = vadd.f32 %v534, %v2594
    %v2596 = vpop.f32.mrb[0].mxu0
    %v2597 = vadd.f32 %v538, %v2596
    %v2598 = vpop.f32.mrb[0].mxu0
    %v2599 = vadd.f32 %v534, %v2598
    %v2600 = vpop.f32.mrb[0].mxu0
    %v2601 = vadd.f32 %v538, %v2600
    %2602 = vdwg.mxu0
    %2603 = vmatprep.subr.bf16.mxu0 %v1668
    %2604 = vmatpush1.bf16.msra.mxu0 %v1667
    %2605 = vmatprep.subr.bf16.mxu0 %v1676
    %2606 = vmatpush1.bf16.msra.mxu0 %v1675
    %2607 = vmatprep.subr.bf16.mxu0 %v1684
    %2608 = vmatpush1.bf16.msra.mxu0 %v1683
    %2609 = vmatprep.subr.bf16.mxu0 %v1692
    %2610 = vmatpush1.bf16.msra.mxu0 %v1691
    %2611 = vmatprep.subr.bf16.mxu0 %v1700
    %2612 = vmatpush1.bf16.msra.mxu0 %v1699
    %2613 = vmatprep.subr.bf16.mxu0 %v1708
    %2614 = vmatpush1.bf16.msra.mxu0 %v1707
    %2615 = vmatprep.subr.bf16.mxu0 %v1716
    %2616 = vmatpush1.bf16.msra.mxu0 %v1715
    %2617 = vmatprep.subr.bf16.mxu0 %v1724
    %2618 = vmatpush1.bf16.msra.mxu0 %v1723
    %2619 = vmatprep.subr.bf16.mxu0 %v1732
    %2620 = vmatpush1.bf16.msra.mxu0 %v1731
    %2621 = vmatprep.subr.bf16.mxu0 %v1740
    %2622 = vmatpush1.bf16.msra.mxu0 %v1739
    %2623 = vmatprep.subr.bf16.mxu0 %v1748
    %2624 = vmatpush1.bf16.msra.mxu0 %v1747
    %2625 = vmatprep.subr.bf16.mxu0 %v1756
    %2626 = vmatpush1.bf16.msra.mxu0 %v1755
    %2627 = vmatprep.subr.bf16.mxu0 %v1764
    %2628 = vmatpush1.bf16.msra.mxu0 %v1763
    %2629 = vmatprep.subr.bf16.mxu0 %v1772
    %2630 = vmatpush1.bf16.msra.mxu0 %v1771
    %2631 = vmatprep.subr.bf16.mxu0 %v1780
    %2632 = vmatpush1.bf16.msra.mxu0 %v1779
    %2633 = vmatprep.subr.bf16.mxu0 %v1788
    %2634 = vmatpush1.bf16.msra.mxu0 %v1787
    %2635 = vmatprep.mubr.bf16.mxu0 %v566
    %2636 = vmatmul.mubr.bf16.gmra.mrb[0].mxu0 %v565
    %v2637 = vpop.f32.mrb[0].mxu0
    %v2638 = vadd.f32 %v2595, %v2637
    %v2639 = vpop.f32.mrb[0].mxu0
    %v2640 = vadd.f32 %v2597, %v2639
    %v2641 = vpop.f32.mrb[0].mxu0
    %v2642 = vadd.f32 %v2599, %v2641
    %v2643 = vpop.f32.mrb[0].mxu0
    %v2644 = vadd.f32 %v2601, %v2643
    %2645 = vdwg.mxu0
    %2646 = vmatprep.subr.bf16.mxu0 %v1796
    %2647 = vmatpush1.bf16.msra.mxu0 %v1795
    %2648 = vmatprep.subr.bf16.mxu0 %v1804
    %2649 = vmatpush1.bf16.msra.mxu0 %v1803
    %2650 = vmatprep.subr.bf16.mxu0 %v1812
    %2651 = vmatpush1.bf16.msra.mxu0 %v1811
    %2652 = vmatprep.subr.bf16.mxu0 %v1820
    %2653 = vmatpush1.bf16.msra.mxu0 %v1819
    %2654 = vmatprep.subr.bf16.mxu0 %v1828
    %2655 = vmatpush1.bf16.msra.mxu0 %v1827
    %2656 = vmatprep.subr.bf16.mxu0 %v1836
    %2657 = vmatpush1.bf16.msra.mxu0 %v1835
    %2658 = vmatprep.subr.bf16.mxu0 %v1844
    %2659 = vmatpush1.bf16.msra.mxu0 %v1843
    %2660 = vmatprep.subr.bf16.mxu0 %v1852
    %2661 = vmatpush1.bf16.msra.mxu0 %v1851
    %2662 = vmatprep.subr.bf16.mxu0 0
    %2663 = vmatpush1.bf16.msra.mxu0 0
    %2664 = vmatprep.subr.bf16.mxu0 0
    %2665 = vmatpush1.bf16.msra.mxu0 0
    %2666 = vmatprep.subr.bf16.mxu0 0
    %2667 = vmatpush1.bf16.msra.mxu0 0
    %2668 = vmatprep.subr.bf16.mxu0 0
    %2669 = vmatpush1.bf16.msra.mxu0 0
    %2670 = vmatprep.subr.bf16.mxu0 0
    %2671 = vmatpush1.bf16.msra.mxu0 0
    %2672 = vmatprep.subr.bf16.mxu0 0
    %2673 = vmatpush1.bf16.msra.mxu0 0
    %2674 = vmatprep.subr.bf16.mxu0 0
    %2675 = vmatpush1.bf16.msra.mxu0 0
    %2676 = vmatprep.subr.bf16.mxu0 0
    %2677 = vmatpush1.bf16.msra.mxu0 0
    %2678 = vmatprep.mubr.bf16.mxu0 0
    %2679 = vmatmul.mubr.bf16.gmra.mrb[0].mxu0 %v567
    %v2680 = vpop.f32.mrb[0].mxu0
    %v2681 = vadd.f32 %v2638, %v2680
    %v2682 = vpop.f32.mrb[0].mxu0
    %v2683 = vadd.f32 %v2640, %v2682
    %v2684 = vpop.f32.mrb[0].mxu0
    %v2685 = vadd.f32 %v2642, %v2684
    %v2686 = vpop.f32.mrb[0].mxu0
    %v2687 = vadd.f32 %v2644, %v2686
    %2688 = vdwg.mxu0
    %v2689 = vmax.f32 %v2294, 0.0
    %v2690 = vmax.f32 %v2296, 0.0
    %v2691 = vmax.f32 %v2423, 0.0
    %v2692 = vmax.f32 %v2425, 0.0
    %v2693 = vmax.f32 %v2552, 0.0
    %v2694 = vmax.f32 %v2554, 0.0
    %v2695 = vmax.f32 %v2681, 0.0
    %v2696 = vmax.f32 %v2683, 0.0
    %v2697 = vmax.f32 %v2298, 0.0
    %v2698 = vmax.f32 %v2300, 0.0
    %v2699 = vmax.f32 %v2427, 0.0
    %v2700 = vmax.f32 %v2429, 0.0
    %v2701 = vmax.f32 %v2556, 0.0
    %v2702 = vmax.f32 %v2558, 0.0
    %v2703 = vmax.f32 %v2685, 0.0
    %v2704 = vmax.f32 %v2687, 0.0
    %v2705 = vpack.c.bf16 %v2697, %v2689
    %v2706 = vpack.c.bf16 %v2698, %v2690
    %v2707 = vpack.c.bf16 %v2699, %v2691
    %v2708 = vpack.c.bf16 %v2700, %v2692
    %v2709 = vpack.c.bf16 %v2701, %v2693
    %v2710 = vpack.c.bf16 %v2702, %v2694
    %v2711 = vpack.c.bf16 %v2703, %v2695
    %v2712 = vpack.c.bf16 %v2704, %v2696
    %v2713 = vld [vmem:[#allocation8] sm:$0xff]
    %v2714 = vld [vmem:[#allocation8 + $0x8] sm:$0xff]
    %v2715 = vld [vmem:[#allocation8 + $0x10] sm:$0xff]
    %v2716 = vld [vmem:[#allocation8 + $0x18] sm:$0xff]
    %v2717 = vld [vmem:[#allocation8 + $0x20] sm:$0xff]
    %v2718 = vld [vmem:[#allocation8 + $0x28] sm:$0xff]
    %v2719 = vld [vmem:[#allocation8 + $0x30] sm:$0xff]
    %v2720 = vld [vmem:[#allocation8 + $0x38] sm:$0xff]
    %v2721 = vld [vmem:[#allocation8 + $0x40] sm:$0xff]
    %v2722 = vld [vmem:[#allocation8 + $0x48] sm:$0xff]
    %v2723 = vld [vmem:[#allocation8 + $0x50] sm:$0xff]
    %v2724 = vld [vmem:[#allocation8 + $0x58] sm:$0xff]
    %v2725 = vld [vmem:[#allocation8 + $0x60] sm:$0xff]
    %v2726 = vld [vmem:[#allocation8 + $0x68] sm:$0xff]
    %v2727 = vld [vmem:[#allocation8 + $0x70] sm:$0xff]
    %v2728 = vld [vmem:[#allocation8 + $0x78] sm:$0xff]
    %v2729 = vld [vmem:[#allocation8 + $0x80] sm:$0xff]
    %v2730 = vld [vmem:[#allocation8 + $0x88] sm:$0xff]
    %v2731 = vld [vmem:[#allocation8 + $0x90] sm:$0xff]
    %v2732 = vld [vmem:[#allocation8 + $0x98] sm:$0xff]
    %v2733 = vld [vmem:[#allocation8 + $0xa0] sm:$0xff]
    %v2734 = vld [vmem:[#allocation8 + $0xa8] sm:$0xff]
    %v2735 = vld [vmem:[#allocation8 + $0xb0] sm:$0xff]
    %v2736 = vld [vmem:[#allocation8 + $0xb8] sm:$0xff]
    %v2737 = vld [vmem:[#allocation8 + $0xc0] sm:$0xff]
    %v2738 = vld [vmem:[#allocation8 + $0xc8] sm:$0xff]
    %v2739 = vld [vmem:[#allocation8 + $0xd0] sm:$0xff]
    %v2740 = vld [vmem:[#allocation8 + $0xd8] sm:$0xff]
    %v2741 = vld [vmem:[#allocation8 + $0xe0] sm:$0xff]
    %v2742 = vld [vmem:[#allocation8 + $0xe8] sm:$0xff]
    %v2743 = vld [vmem:[#allocation8 + $0xf0] sm:$0xff]
    %v2744 = vld [vmem:[#allocation8 + $0xf8] sm:$0xff]
    %v2745 = vld [vmem:[#allocation8 + $0x100] sm:$0xff]
    %v2746 = vld [vmem:[#allocation8 + $0x108] sm:$0xff]
    %v2747 = vld [vmem:[#allocation8 + $0x110] sm:$0xff]
    %v2748 = vld [vmem:[#allocation8 + $0x118] sm:$0xff]
    %v2749 = vld [vmem:[#allocation8 + $0x120] sm:$0xff]
    %v2750 = vld [vmem:[#allocation8 + $0x128] sm:$0xff]
    %v2751 = vld [vmem:[#allocation8 + $0x130] sm:$0xff]
    %v2752 = vld [vmem:[#allocation8 + $0x138] sm:$0xff]
    %v2753 = vld [vmem:[#allocation8 + $0x140] sm:$0xff]
    %v2754 = vld [vmem:[#allocation8 + $0x148] sm:$0xff]
    %v2755 = vld [vmem:[#allocation8 + $0x150] sm:$0xff]
    %v2756 = vld [vmem:[#allocation8 + $0x158] sm:$0xff]
    %v2757 = vld [vmem:[#allocation8 + $0x160] sm:$0xff]
    %v2758 = vld [vmem:[#allocation8 + $0x168] sm:$0xff]
    %v2759 = vld [vmem:[#allocation8 + $0x170] sm:$0xff]
    %v2760 = vld [vmem:[#allocation8 + $0x178] sm:$0xff]
    %v2761 = vld [vmem:[#allocation8 + $0x180] sm:$0xff]
    %v2762 = vld [vmem:[#allocation8 + $0x188] sm:$0xff]
    %v2763 = vld [vmem:[#allocation8 + $0x190] sm:$0xff]
    %v2764 = vld [vmem:[#allocation8 + $0x198] sm:$0xff]
    %v2765 = vld [vmem:[#allocation8 + $0x1a0] sm:$0xff]
    %v2766 = vld [vmem:[#allocation8 + $0x1a8] sm:$0xff]
    %v2767 = vld [vmem:[#allocation8 + $0x1b0] sm:$0xff]
    %v2768 = vld [vmem:[#allocation8 + $0x1b8] sm:$0xff]
    %v2769 = vld [vmem:[#allocation8 + $0x1c0] sm:$0xff]
    %v2770 = vld [vmem:[#allocation8 + $0x1c8] sm:$0xff]
    %v2771 = vld [vmem:[#allocation8 + $0x1d0] sm:$0xff]
    %v2772 = vld [vmem:[#allocation8 + $0x1d8] sm:$0xff]
    %v2773 = vld [vmem:[#allocation8 + $0x1e0] sm:$0xff]
    %v2774 = vld [vmem:[#allocation8 + $0x1e8] sm:$0xff]
    %v2775 = vld [vmem:[#allocation8 + $0x1f0] sm:$0xff]
    %v2776 = vld [vmem:[#allocation8 + $0x1f8] sm:$0xff]
    %v2777 = vld [vmem:[#allocation8 + $0x200] sm:$0xff]
    %v2778 = vld [vmem:[#allocation8 + $0x208] sm:$0xff]
    %v2779 = vld [vmem:[#allocation8 + $0x210] sm:$0xff]
    %v2780 = vld [vmem:[#allocation8 + $0x218] sm:$0xff]
    %v2781 = vld [vmem:[#allocation8 + $0x220] sm:$0xff]
    %v2782 = vld [vmem:[#allocation8 + $0x228] sm:$0xff]
    %v2783 = vld [vmem:[#allocation8 + $0x230] sm:$0xff]
    %v2784 = vld [vmem:[#allocation8 + $0x238] sm:$0xff]
    %v2785 = vld [vmem:[#allocation8 + $0x240] sm:$0xff]
    %v2786 = vld [vmem:[#allocation8 + $0x248] sm:$0xff]
    %v2787 = vld [vmem:[#allocation8 + $0x250] sm:$0xff]
    %v2788 = vld [vmem:[#allocation8 + $0x258] sm:$0xff]
    %v2789 = vld [vmem:[#allocation8 + $0x260] sm:$0xff]
    %v2790 = vld [vmem:[#allocation8 + $0x268] sm:$0xff]
    %v2791 = vld [vmem:[#allocation8 + $0x270] sm:$0xff]
    %v2792 = vld [vmem:[#allocation8 + $0x278] sm:$0xff]
    %v2793 = vld [vmem:[#allocation8 + $0x280] sm:$0xff]
    %v2794 = vld [vmem:[#allocation8 + $0x288] sm:$0xff]
    %v2795 = vld [vmem:[#allocation8 + $0x290] sm:$0xff]
    %v2796 = vld [vmem:[#allocation8 + $0x298] sm:$0xff]
    %v2797 = vld [vmem:[#allocation8 + $0x2a0] sm:$0xff]
    %v2798 = vld [vmem:[#allocation8 + $0x2a8] sm:$0xff]
    %v2799 = vld [vmem:[#allocation8 + $0x2b0] sm:$0xff]
    %v2800 = vld [vmem:[#allocation8 + $0x2b8] sm:$0xff]
    %v2801 = vld [vmem:[#allocation8 + $0x2c0] sm:$0xff]
    %v2802 = vld [vmem:[#allocation8 + $0x2c8] sm:$0xff]
    %v2803 = vld [vmem:[#allocation8 + $0x2d0] sm:$0xff]
    %v2804 = vld [vmem:[#allocation8 + $0x2d8] sm:$0xff]
    %v2805 = vld [vmem:[#allocation8 + $0x2e0] sm:$0xff]
    %v2806 = vld [vmem:[#allocation8 + $0x2e8] sm:$0xff]
    %v2807 = vld [vmem:[#allocation8 + $0x2f0] sm:$0xff]
    %v2808 = vld [vmem:[#allocation8 + $0x2f8] sm:$0xff]
    %v2809 = vld [vmem:[#allocation8 + $0x300] sm:$0xff]
    %v2810 = vld [vmem:[#allocation8 + $0x308] sm:$0xff]
    %v2811 = vld [vmem:[#allocation8 + $0x310] sm:$0xff]
    %v2812 = vld [vmem:[#allocation8 + $0x318] sm:$0xff]
    %v2813 = vld [vmem:[#allocation8 + $0x320] sm:$0xff]
    %v2814 = vld [vmem:[#allocation8 + $0x328] sm:$0xff]
    %v2815 = vld [vmem:[#allocation8 + $0x330] sm:$0xff]
    %v2816 = vld [vmem:[#allocation8 + $0x338] sm:$0xff]
    %v2817 = vld [vmem:[#allocation8 + $0x340] sm:$0xff]
    %v2818 = vld [vmem:[#allocation8 + $0x348] sm:$0xff]
    %v2819 = vld [vmem:[#allocation8 + $0x350] sm:$0xff]
    %v2820 = vld [vmem:[#allocation8 + $0x358] sm:$0xff]
    %v2821 = vld [vmem:[#allocation8 + $0x360] sm:$0xff]
    %v2822 = vld [vmem:[#allocation8 + $0x368] sm:$0xff]
    %v2823 = vld [vmem:[#allocation8 + $0x370] sm:$0xff]
    %v2824 = vld [vmem:[#allocation8 + $0x378] sm:$0xff]
    %v2825 = vld [vmem:[#allocation8 + $0x380] sm:$0xff]
    %v2826 = vld [vmem:[#allocation8 + $0x388] sm:$0xff]
    %v2827 = vld [vmem:[#allocation8 + $0x390] sm:$0xff]
    %v2828 = vld [vmem:[#allocation8 + $0x398] sm:$0xff]
    %v2829 = vld [vmem:[#allocation8 + $0x3a0] sm:$0xff]
    %v2830 = vld [vmem:[#allocation8 + $0x3a8] sm:$0xff]
    %v2831 = vld [vmem:[#allocation8 + $0x3b0] sm:$0xff]
    %v2832 = vld [vmem:[#allocation8 + $0x3b8] sm:$0xff]
    %v2833 = vld [vmem:[#allocation8 + $0x3c0] sm:$0xff]
    %v2834 = vld [vmem:[#allocation8 + $0x3c8] sm:$0xff]
    %v2835 = vld [vmem:[#allocation8 + $0x3d0] sm:$0xff]
    %v2836 = vld [vmem:[#allocation8 + $0x3d8] sm:$0xff]
    %v2837 = vld [vmem:[#allocation8 + $0x3e0] sm:$0xff]
    %v2838 = vld [vmem:[#allocation8 + $0x3e8] sm:$0xff]
    %v2839 = vld [vmem:[#allocation8 + $0x3f0] sm:$0xff]
    %v2840 = vld [vmem:[#allocation8 + $0x3f8] sm:$0xff]
    %v2841 = vld [vmem:[#allocation8 + $0x400] sm:$0xff]
    %v2842 = vld [vmem:[#allocation8 + $0x408] sm:$0xff]
    %v2843 = vld [vmem:[#allocation8 + $0x410] sm:$0xff]
    %v2844 = vld [vmem:[#allocation8 + $0x418] sm:$0xff]
    %v2845 = vld [vmem:[#allocation8 + $0x420] sm:$0xff]
    %v2846 = vld [vmem:[#allocation8 + $0x428] sm:$0xff]
    %v2847 = vld [vmem:[#allocation8 + $0x430] sm:$0xff]
    %v2848 = vld [vmem:[#allocation8 + $0x438] sm:$0xff]
    %v2849 = vld [vmem:[#allocation8 + $0x440] sm:$0xff]
    %v2850 = vld [vmem:[#allocation8 + $0x448] sm:$0xff]
    %v2851 = vld [vmem:[#allocation8 + $0x450] sm:$0xff]
    %v2852 = vld [vmem:[#allocation8 + $0x458] sm:$0xff]
    %v2853 = vld [vmem:[#allocation8 + $0x460] sm:$0xff]
    %v2854 = vld [vmem:[#allocation8 + $0x468] sm:$0xff]
    %v2855 = vld [vmem:[#allocation8 + $0x470] sm:$0xff]
    %v2856 = vld [vmem:[#allocation8 + $0x478] sm:$0xff]
    %v2857 = vld [vmem:[#allocation8 + $0x480] sm:$0xff]
    %v2858 = vld [vmem:[#allocation8 + $0x488] sm:$0xff]
    %v2859 = vld [vmem:[#allocation8 + $0x490] sm:$0xff]
    %v2860 = vld [vmem:[#allocation8 + $0x498] sm:$0xff]
    %v2861 = vld [vmem:[#allocation8 + $0x4a0] sm:$0xff]
    %v2862 = vld [vmem:[#allocation8 + $0x4a8] sm:$0xff]
    %v2863 = vld [vmem:[#allocation8 + $0x4b0] sm:$0xff]
    %v2864 = vld [vmem:[#allocation8 + $0x4b8] sm:$0xff]
    %v2865 = vld [vmem:[#allocation8 + $0x4c0] sm:$0xff]
    %v2866 = vld [vmem:[#allocation8 + $0x4c8] sm:$0xff]
    %v2867 = vld [vmem:[#allocation8 + $0x4d0] sm:$0xff]
    %v2868 = vld [vmem:[#allocation8 + $0x4d8] sm:$0xff]
    %v2869 = vld [vmem:[#allocation8 + $0x4e0] sm:$0xff]
    %v2870 = vld [vmem:[#allocation8 + $0x4e8] sm:$0xff]
    %v2871 = vld [vmem:[#allocation8 + $0x4f0] sm:$0xff]
    %v2872 = vld [vmem:[#allocation8 + $0x4f8] sm:$0xff]
    %v2873 = vld [vmem:[#allocation8 + $0x500] sm:$0xff]
    %v2874 = vld [vmem:[#allocation8 + $0x508] sm:$0xff]
    %v2875 = vld [vmem:[#allocation8 + $0x510] sm:$0xff]
    %v2876 = vld [vmem:[#allocation8 + $0x518] sm:$0xff]
    %v2877 = vld [vmem:[#allocation8 + $0x520] sm:$0xff]
    %v2878 = vld [vmem:[#allocation8 + $0x528] sm:$0xff]
    %v2879 = vld [vmem:[#allocation8 + $0x530] sm:$0xff]
    %v2880 = vld [vmem:[#allocation8 + $0x538] sm:$0xff]
    %v2881 = vld [vmem:[#allocation8 + $0x540] sm:$0xff]
    %v2882 = vld [vmem:[#allocation8 + $0x548] sm:$0xff]
    %v2883 = vld [vmem:[#allocation8 + $0x550] sm:$0xff]
    %v2884 = vld [vmem:[#allocation8 + $0x558] sm:$0xff]
    %v2885 = vld [vmem:[#allocation8 + $0x560] sm:$0xff]
    %v2886 = vld [vmem:[#allocation8 + $0x568] sm:$0xff]
    %v2887 = vld [vmem:[#allocation8 + $0x570] sm:$0xff]
    %v2888 = vld [vmem:[#allocation8 + $0x578] sm:$0xff]
    %v2889 = vld [vmem:[#allocation8 + $0x580] sm:$0xff]
    %v2890 = vld [vmem:[#allocation8 + $0x588] sm:$0xff]
    %v2891 = vld [vmem:[#allocation8 + $0x590] sm:$0xff]
    %v2892 = vld [vmem:[#allocation8 + $0x598] sm:$0xff]
    %v2893 = vld [vmem:[#allocation8 + $0x5a0] sm:$0xff]
    %v2894 = vld [vmem:[#allocation8 + $0x5a8] sm:$0xff]
    %v2895 = vld [vmem:[#allocation8 + $0x5b0] sm:$0xff]
    %v2896 = vld [vmem:[#allocation8 + $0x5b8] sm:$0xff]
    %v2897 = vld [vmem:[#allocation8 + $0x5c0] sm:$0xff]
    %v2898 = vld [vmem:[#allocation8 + $0x5c8] sm:$0xff]
    %v2899 = vld [vmem:[#allocation8 + $0x5d0] sm:$0xff]
    %v2900 = vld [vmem:[#allocation8 + $0x5d8] sm:$0xff]
    %v2901 = vld [vmem:[#allocation8 + $0x5e0] sm:$0xff]
    %v2902 = vld [vmem:[#allocation8 + $0x5e8] sm:$0xff]
    %v2903 = vld [vmem:[#allocation8 + $0x5f0] sm:$0xff]
    %v2904 = vld [vmem:[#allocation8 + $0x5f8] sm:$0xff]
    %v2905 = vld [vmem:[#allocation8 + $0x600] sm:$0xff]
    %v2906 = vld [vmem:[#allocation8 + $0x608] sm:$0xff]
    %v2907 = vld [vmem:[#allocation8 + $0x610] sm:$0xff]
    %v2908 = vld [vmem:[#allocation8 + $0x618] sm:$0xff]
    %v2909 = vld [vmem:[#allocation8 + $0x620] sm:$0xff]
    %v2910 = vld [vmem:[#allocation8 + $0x628] sm:$0xff]
    %v2911 = vld [vmem:[#allocation8 + $0x630] sm:$0xff]
    %v2912 = vld [vmem:[#allocation8 + $0x638] sm:$0xff]
    %v2913 = vld [vmem:[#allocation8 + $0x640] sm:$0xff]
    %v2914 = vld [vmem:[#allocation8 + $0x648] sm:$0xff]
    %v2915 = vld [vmem:[#allocation8 + $0x650] sm:$0xff]
    %v2916 = vld [vmem:[#allocation8 + $0x658] sm:$0xff]
    %v2917 = vld [vmem:[#allocation8 + $0x660] sm:$0xff]
    %v2918 = vld [vmem:[#allocation8 + $0x668] sm:$0xff]
    %v2919 = vld [vmem:[#allocation8 + $0x670] sm:$0xff]
    %v2920 = vld [vmem:[#allocation8 + $0x678] sm:$0xff]
    %v2921 = vld [vmem:[#allocation8 + $0x680] sm:$0xff]
    %v2922 = vld [vmem:[#allocation8 + $0x688] sm:$0xff]
    %v2923 = vld [vmem:[#allocation8 + $0x690] sm:$0xff]
    %v2924 = vld [vmem:[#allocation8 + $0x698] sm:$0xff]
    %v2925 = vld [vmem:[#allocation8 + $0x6a0] sm:$0xff]
    %v2926 = vld [vmem:[#allocation8 + $0x6a8] sm:$0xff]
    %v2927 = vld [vmem:[#allocation8 + $0x6b0] sm:$0xff]
    %v2928 = vld [vmem:[#allocation8 + $0x6b8] sm:$0xff]
    %v2929 = vld [vmem:[#allocation8 + $0x6c0] sm:$0xff]
    %v2930 = vld [vmem:[#allocation8 + $0x6c8] sm:$0xff]
    %v2931 = vld [vmem:[#allocation8 + $0x6d0] sm:$0xff]
    %v2932 = vld [vmem:[#allocation8 + $0x6d8] sm:$0xff]
    %v2933 = vld [vmem:[#allocation8 + $0x6e0] sm:$0xff]
    %v2934 = vld [vmem:[#allocation8 + $0x6e8] sm:$0xff]
    %v2935 = vld [vmem:[#allocation8 + $0x6f0] sm:$0xff]
    %v2936 = vld [vmem:[#allocation8 + $0x6f8] sm:$0xff]
    %v2937 = vld [vmem:[#allocation8 + $0x700] sm:$0xff]
    %v2938 = vld [vmem:[#allocation8 + $0x708] sm:$0xff]
    %v2939 = vld [vmem:[#allocation8 + $0x710] sm:$0xff]
    %v2940 = vld [vmem:[#allocation8 + $0x718] sm:$0xff]
    %v2941 = vld [vmem:[#allocation8 + $0x720] sm:$0xff]
    %v2942 = vld [vmem:[#allocation8 + $0x728] sm:$0xff]
    %v2943 = vld [vmem:[#allocation8 + $0x730] sm:$0xff]
    %v2944 = vld [vmem:[#allocation8 + $0x738] sm:$0xff]
    %v2945 = vld [vmem:[#allocation8 + $0x740] sm:$0xff]
    %v2946 = vld [vmem:[#allocation8 + $0x748] sm:$0xff]
    %v2947 = vld [vmem:[#allocation8 + $0x750] sm:$0xff]
    %v2948 = vld [vmem:[#allocation8 + $0x758] sm:$0xff]
    %v2949 = vld [vmem:[#allocation8 + $0x760] sm:$0xff]
    %v2950 = vld [vmem:[#allocation8 + $0x768] sm:$0xff]
    %v2951 = vld [vmem:[#allocation8 + $0x770] sm:$0xff]
    %v2952 = vld [vmem:[#allocation8 + $0x778] sm:$0xff]
    %v2953 = vld [vmem:[#allocation8 + $0x780] sm:$0xff]
    %v2954 = vld [vmem:[#allocation8 + $0x788] sm:$0xff]
    %v2955 = vld [vmem:[#allocation8 + $0x790] sm:$0xff]
    %v2956 = vld [vmem:[#allocation8 + $0x798] sm:$0xff]
    %v2957 = vld [vmem:[#allocation8 + $0x7a0] sm:$0xff]
    %v2958 = vld [vmem:[#allocation8 + $0x7a8] sm:$0xff]
    %v2959 = vld [vmem:[#allocation8 + $0x7b0] sm:$0xff]
    %v2960 = vld [vmem:[#allocation8 + $0x7b8] sm:$0xff]
    %v2961 = vld [vmem:[#allocation8 + $0x7c0] sm:$0xff]
    %v2962 = vld [vmem:[#allocation8 + $0x7c8] sm:$0xff]
    %v2963 = vld [vmem:[#allocation8 + $0x7d0] sm:$0xff]
    %v2964 = vld [vmem:[#allocation8 + $0x7d8] sm:$0xff]
    %v2965 = vld [vmem:[#allocation8 + $0x7e0] sm:$0xff]
    %v2966 = vld [vmem:[#allocation8 + $0x7e8] sm:$0xff]
    %v2967 = vld [vmem:[#allocation8 + $0x7f0] sm:$0xff]
    %v2968 = vld [vmem:[#allocation8 + $0x7f8] sm:$0xff]
    %v2969 = vld [vmem:[#allocation8 + $0x800] sm:$0xff]
    %v2970 = vld [vmem:[#allocation8 + $0x808] sm:$0xff]
    %v2971 = vld [vmem:[#allocation8 + $0x810] sm:$0xff]
    %v2972 = vld [vmem:[#allocation8 + $0x818] sm:$0xff]
    %v2973 = vld [vmem:[#allocation8 + $0x820] sm:$0xff]
    %v2974 = vld [vmem:[#allocation8 + $0x828] sm:$0xff]
    %v2975 = vld [vmem:[#allocation8 + $0x830] sm:$0xff]
    %v2976 = vld [vmem:[#allocation8 + $0x838] sm:$0xff]
    %v2977 = vld [vmem:[#allocation8 + $0x840] sm:$0xff]
    %v2978 = vld [vmem:[#allocation8 + $0x848] sm:$0xff]
    %v2979 = vld [vmem:[#allocation8 + $0x850] sm:$0xff]
    %v2980 = vld [vmem:[#allocation8 + $0x858] sm:$0xff]
    %v2981 = vld [vmem:[#allocation8 + $0x860] sm:$0xff]
    %v2982 = vld [vmem:[#allocation8 + $0x868] sm:$0xff]
    %v2983 = vld [vmem:[#allocation8 + $0x870] sm:$0xff]
    %v2984 = vld [vmem:[#allocation8 + $0x878] sm:$0xff]
    %v2985 = vld [vmem:[#allocation8 + $0x880] sm:$0xff]
    %v2986 = vld [vmem:[#allocation8 + $0x888] sm:$0xff]
    %v2987 = vld [vmem:[#allocation8 + $0x890] sm:$0xff]
    %v2988 = vld [vmem:[#allocation8 + $0x898] sm:$0xff]
    %v2989 = vld [vmem:[#allocation8 + $0x8a0] sm:$0xff]
    %v2990 = vld [vmem:[#allocation8 + $0x8a8] sm:$0xff]
    %v2991 = vld [vmem:[#allocation8 + $0x8b0] sm:$0xff]
    %v2992 = vld [vmem:[#allocation8 + $0x8b8] sm:$0xff]
    %v2993 = vld [vmem:[#allocation8 + $0x8c0] sm:$0xff]
    %v2994 = vld [vmem:[#allocation8 + $0x8c8] sm:$0xff]
    %v2995 = vld [vmem:[#allocation8 + $0x8d0] sm:$0xff]
    %v2996 = vld [vmem:[#allocation8 + $0x8d8] sm:$0xff]
    %v2997 = vld [vmem:[#allocation8 + $0x8e0] sm:$0xff]
    %v2998 = vld [vmem:[#allocation8 + $0x8e8] sm:$0xff]
    %v2999 = vld [vmem:[#allocation8 + $0x8f0] sm:$0xff]
    %v3000 = vld [vmem:[#allocation8 + $0x8f8] sm:$0xff]
    %v3001 = vld [vmem:[#allocation8 + $0x900] sm:$0xff]
    %v3002 = vld [vmem:[#allocation8 + $0x908] sm:$0xff]
    %v3003 = vld [vmem:[#allocation8 + $0x910] sm:$0xff]
    %v3004 = vld [vmem:[#allocation8 + $0x918] sm:$0xff]
    %v3005 = vld [vmem:[#allocation8 + $0x920] sm:$0xff]
    %v3006 = vld [vmem:[#allocation8 + $0x928] sm:$0xff]
    %v3007 = vld [vmem:[#allocation8 + $0x930] sm:$0xff]
    %v3008 = vld [vmem:[#allocation8 + $0x938] sm:$0xff]
    %v3009 = vld [vmem:[#allocation8 + $0x940] sm:$0xff]
    %v3010 = vld [vmem:[#allocation8 + $0x948] sm:$0xff]
    %v3011 = vld [vmem:[#allocation8 + $0x950] sm:$0xff]
    %v3012 = vld [vmem:[#allocation8 + $0x958] sm:$0xff]
    %v3013 = vld [vmem:[#allocation8 + $0x960] sm:$0xff]
    %v3014 = vld [vmem:[#allocation8 + $0x968] sm:$0xff]
    %v3015 = vld [vmem:[#allocation8 + $0x970] sm:$0xff]
    %v3016 = vld [vmem:[#allocation8 + $0x978] sm:$0xff]
    %v3017 = vld [vmem:[#allocation8 + $0x980] sm:$0xff]
    %v3018 = vld [vmem:[#allocation8 + $0x988] sm:$0xff]
    %v3019 = vld [vmem:[#allocation8 + $0x990] sm:$0xff]
    %v3020 = vld [vmem:[#allocation8 + $0x998] sm:$0xff]
    %v3021 = vld [vmem:[#allocation8 + $0x9a0] sm:$0xff]
    %v3022 = vld [vmem:[#allocation8 + $0x9a8] sm:$0xff]
    %v3023 = vld [vmem:[#allocation8 + $0x9b0] sm:$0xff]
    %v3024 = vld [vmem:[#allocation8 + $0x9b8] sm:$0xff]
    %v3025 = vld [vmem:[#allocation8 + $0x9c0] sm:$0xff]
    %v3026 = vld [vmem:[#allocation8 + $0x9c8] sm:$0xff]
    %v3027 = vld [vmem:[#allocation8 + $0x9d0] sm:$0xff]
    %v3028 = vld [vmem:[#allocation8 + $0x9d8] sm:$0xff]
    %v3029 = vld [vmem:[#allocation8 + $0x9e0] sm:$0xff]
    %v3030 = vld [vmem:[#allocation8 + $0x9e8] sm:$0xff]
    %v3031 = vld [vmem:[#allocation8 + $0x9f0] sm:$0xff]
    %v3032 = vld [vmem:[#allocation8 + $0x9f8] sm:$0xff]
    %v3033 = vld [vmem:[#allocation8 + $0xa00] sm:$0xff]
    %v3034 = vld [vmem:[#allocation8 + $0xa08] sm:$0xff]
    %v3035 = vld [vmem:[#allocation8 + $0xa10] sm:$0xff]
    %v3036 = vld [vmem:[#allocation8 + $0xa18] sm:$0xff]
    %v3037 = vld [vmem:[#allocation8 + $0xa20] sm:$0xff]
    %v3038 = vld [vmem:[#allocation8 + $0xa28] sm:$0xff]
    %v3039 = vld [vmem:[#allocation8 + $0xa30] sm:$0xff]
    %v3040 = vld [vmem:[#allocation8 + $0xa38] sm:$0xff]
    %v3041 = vld [vmem:[#allocation8 + $0xa40] sm:$0xff]
    %v3042 = vld [vmem:[#allocation8 + $0xa48] sm:$0xff]
    %v3043 = vld [vmem:[#allocation8 + $0xa50] sm:$0xff]
    %v3044 = vld [vmem:[#allocation8 + $0xa58] sm:$0xff]
    %v3045 = vld [vmem:[#allocation8 + $0xa60] sm:$0xff]
    %v3046 = vld [vmem:[#allocation8 + $0xa68] sm:$0xff]
    %v3047 = vld [vmem:[#allocation8 + $0xa70] sm:$0xff]
    %v3048 = vld [vmem:[#allocation8 + $0xa78] sm:$0xff]
    %v3049 = vld [vmem:[#allocation8 + $0xa80] sm:$0xff]
    %v3050 = vld [vmem:[#allocation8 + $0xa88] sm:$0xff]
    %v3051 = vld [vmem:[#allocation8 + $0xa90] sm:$0xff]
    %v3052 = vld [vmem:[#allocation8 + $0xa98] sm:$0xff]
    %v3053 = vld [vmem:[#allocation8 + $0xaa0] sm:$0xff]
    %v3054 = vld [vmem:[#allocation8 + $0xaa8] sm:$0xff]
    %v3055 = vld [vmem:[#allocation8 + $0xab0] sm:$0xff]
    %v3056 = vld [vmem:[#allocation8 + $0xab8] sm:$0xff]
    %v3057 = vld [vmem:[#allocation8 + $0xac0] sm:$0xff]
    %v3058 = vld [vmem:[#allocation8 + $0xac8] sm:$0xff]
    %v3059 = vld [vmem:[#allocation8 + $0xad0] sm:$0xff]
    %v3060 = vld [vmem:[#allocation8 + $0xad8] sm:$0xff]
    %v3061 = vld [vmem:[#allocation8 + $0xae0] sm:$0xff]
    %v3062 = vld [vmem:[#allocation8 + $0xae8] sm:$0xff]
    %v3063 = vld [vmem:[#allocation8 + $0xaf0] sm:$0xff]
    %v3064 = vld [vmem:[#allocation8 + $0xaf8] sm:$0xff]
    %v3065 = vld [vmem:[#allocation8 + $0xb00] sm:$0xff]
    %v3066 = vld [vmem:[#allocation8 + $0xb08] sm:$0xff]
    %v3067 = vld [vmem:[#allocation8 + $0xb10] sm:$0xff]
    %v3068 = vld [vmem:[#allocation8 + $0xb18] sm:$0xff]
    %v3069 = vld [vmem:[#allocation8 + $0xb20] sm:$0xff]
    %v3070 = vld [vmem:[#allocation8 + $0xb28] sm:$0xff]
    %v3071 = vld [vmem:[#allocation8 + $0xb30] sm:$0xff]
    %v3072 = vld [vmem:[#allocation8 + $0xb38] sm:$0xff]
    %v3073 = vld [vmem:[#allocation8 + $0xb40] sm:$0xff]
    %v3074 = vld [vmem:[#allocation8 + $0xb48] sm:$0xff]
    %v3075 = vld [vmem:[#allocation8 + $0xb50] sm:$0xff]
    %v3076 = vld [vmem:[#allocation8 + $0xb58] sm:$0xff]
    %v3077 = vld [vmem:[#allocation8 + $0xb60] sm:$0xff]
    %v3078 = vld [vmem:[#allocation8 + $0xb68] sm:$0xff]
    %v3079 = vld [vmem:[#allocation8 + $0xb70] sm:$0xff]
    %v3080 = vld [vmem:[#allocation8 + $0xb78] sm:$0xff]
    %v3081 = vld [vmem:[#allocation8 + $0xb80] sm:$0xff]
    %v3082 = vld [vmem:[#allocation8 + $0xb88] sm:$0xff]
    %v3083 = vld [vmem:[#allocation8 + $0xb90] sm:$0xff]
    %v3084 = vld [vmem:[#allocation8 + $0xb98] sm:$0xff]
    %v3085 = vld [vmem:[#allocation8 + $0xba0] sm:$0xff]
    %v3086 = vld [vmem:[#allocation8 + $0xba8] sm:$0xff]
    %v3087 = vld [vmem:[#allocation8 + $0xbb0] sm:$0xff]
    %v3088 = vld [vmem:[#allocation8 + $0xbb8] sm:$0xff]
    %v3089 = vld [vmem:[#allocation8 + $0xbc0] sm:$0xff]
    %v3090 = vld [vmem:[#allocation8 + $0xbc8] sm:$0xff]
    %v3091 = vld [vmem:[#allocation8 + $0xbd0] sm:$0xff]
    %v3092 = vld [vmem:[#allocation8 + $0xbd8] sm:$0xff]
    %v3093 = vld [vmem:[#allocation8 + $0xbe0] sm:$0xff]
    %v3094 = vld [vmem:[#allocation8 + $0xbe8] sm:$0xff]
    %v3095 = vld [vmem:[#allocation8 + $0xbf0] sm:$0xff]
    %v3096 = vld [vmem:[#allocation8 + $0xbf8] sm:$0xff]
    %v3097 = vld [vmem:[#allocation8 + $0xc00] sm:$0xff]
    %v3098 = vld [vmem:[#allocation8 + $0xc08] sm:$0xff]
    %v3099 = vld [vmem:[#allocation8 + $0xc10] sm:$0xff]
    %v3100 = vld [vmem:[#allocation8 + $0xc18] sm:$0xff]
    %v3101 = vld [vmem:[#allocation8 + $0xc20] sm:$0xff]
    %v3102 = vld [vmem:[#allocation8 + $0xc28] sm:$0xff]
    %v3103 = vld [vmem:[#allocation8 + $0xc30] sm:$0xff]
    %v3104 = vld [vmem:[#allocation8 + $0xc38] sm:$0xff]
    %v3105 = vld [vmem:[#allocation8 + $0xc40] sm:$0xff]
    %v3106 = vld [vmem:[#allocation8 + $0xc48] sm:$0xff]
    %v3107 = vld [vmem:[#allocation8 + $0xc50] sm:$0xff]
    %v3108 = vld [vmem:[#allocation8 + $0xc58] sm:$0xff]
    %v3109 = vld [vmem:[#allocation8 + $0xc60] sm:$0xff]
    %v3110 = vld [vmem:[#allocation8 + $0xc68] sm:$0xff]
    %v3111 = vld [vmem:[#allocation8 + $0xc70] sm:$0xff]
    %v3112 = vld [vmem:[#allocation8 + $0xc78] sm:$0xff]
    %v3113 = vld [vmem:[#allocation8 + $0xc80] sm:$0xff]
    %v3114 = vld [vmem:[#allocation8 + $0xc88] sm:$0xff]
    %v3115 = vld [vmem:[#allocation8 + $0xc90] sm:$0xff]
    %v3116 = vld [vmem:[#allocation8 + $0xc98] sm:$0xff]
    %v3117 = vld [vmem:[#allocation8 + $0xca0] sm:$0xff]
    %v3118 = vld [vmem:[#allocation8 + $0xca8] sm:$0xff]
    %v3119 = vld [vmem:[#allocation8 + $0xcb0] sm:$0xff]
    %v3120 = vld [vmem:[#allocation8 + $0xcb8] sm:$0xff]
    %v3121 = vld [vmem:[#allocation8 + $0xcc0] sm:$0xff]
    %v3122 = vld [vmem:[#allocation8 + $0xcc8] sm:$0xff]
    %v3123 = vld [vmem:[#allocation8 + $0xcd0] sm:$0xff]
    %v3124 = vld [vmem:[#allocation8 + $0xcd8] sm:$0xff]
    %v3125 = vld [vmem:[#allocation8 + $0xce0] sm:$0xff]
    %v3126 = vld [vmem:[#allocation8 + $0xce8] sm:$0xff]
    %v3127 = vld [vmem:[#allocation8 + $0xcf0] sm:$0xff]
    %v3128 = vld [vmem:[#allocation8 + $0xcf8] sm:$0xff]
    %v3129 = vld [vmem:[#allocation8 + $0xd00] sm:$0xff]
    %v3130 = vld [vmem:[#allocation8 + $0xd08] sm:$0xff]
    %v3131 = vld [vmem:[#allocation8 + $0xd10] sm:$0xff]
    %v3132 = vld [vmem:[#allocation8 + $0xd18] sm:$0xff]
    %v3133 = vld [vmem:[#allocation8 + $0xd20] sm:$0xff]
    %v3134 = vld [vmem:[#allocation8 + $0xd28] sm:$0xff]
    %v3135 = vld [vmem:[#allocation8 + $0xd30] sm:$0xff]
    %v3136 = vld [vmem:[#allocation8 + $0xd38] sm:$0xff]
    %v3137 = vld [vmem:[#allocation8 + $0xd40] sm:$0xff]
    %v3138 = vld [vmem:[#allocation8 + $0xd48] sm:$0xff]
    %v3139 = vld [vmem:[#allocation8 + $0xd50] sm:$0xff]
    %v3140 = vld [vmem:[#allocation8 + $0xd58] sm:$0xff]
    %v3141 = vld [vmem:[#allocation8 + $0xd60] sm:$0xff]
    %v3142 = vld [vmem:[#allocation8 + $0xd68] sm:$0xff]
    %v3143 = vld [vmem:[#allocation8 + $0xd70] sm:$0xff]
    %v3144 = vld [vmem:[#allocation8 + $0xd78] sm:$0xff]
    %v3145 = vld [vmem:[#allocation8 + $0xd80] sm:$0xff]
    %v3146 = vld [vmem:[#allocation8 + $0xd88] sm:$0xff]
    %v3147 = vld [vmem:[#allocation8 + $0xd90] sm:$0xff]
    %v3148 = vld [vmem:[#allocation8 + $0xd98] sm:$0xff]
    %v3149 = vld [vmem:[#allocation8 + $0xda0] sm:$0xff]
    %v3150 = vld [vmem:[#allocation8 + $0xda8] sm:$0xff]
    %v3151 = vld [vmem:[#allocation8 + $0xdb0] sm:$0xff]
    %v3152 = vld [vmem:[#allocation8 + $0xdb8] sm:$0xff]
    %v3153 = vld [vmem:[#allocation8 + $0xdc0] sm:$0xff]
    %v3154 = vld [vmem:[#allocation8 + $0xdc8] sm:$0xff]
    %v3155 = vld [vmem:[#allocation8 + $0xdd0] sm:$0xff]
    %v3156 = vld [vmem:[#allocation8 + $0xdd8] sm:$0xff]
    %v3157 = vld [vmem:[#allocation8 + $0xde0] sm:$0xff]
    %v3158 = vld [vmem:[#allocation8 + $0xde8] sm:$0xff]
    %v3159 = vld [vmem:[#allocation8 + $0xdf0] sm:$0xff]
    %v3160 = vld [vmem:[#allocation8 + $0xdf8] sm:$0xff]
    %v3161 = vld [vmem:[#allocation8 + $0xe00] sm:$0xff]
    %v3162 = vld [vmem:[#allocation8 + $0xe08] sm:$0xff]
    %v3163 = vld [vmem:[#allocation8 + $0xe10] sm:$0xff]
    %v3164 = vld [vmem:[#allocation8 + $0xe18] sm:$0xff]
    %v3165 = vld [vmem:[#allocation8 + $0xe20] sm:$0xff]
    %v3166 = vld [vmem:[#allocation8 + $0xe28] sm:$0xff]
    %v3167 = vld [vmem:[#allocation8 + $0xe30] sm:$0xff]
    %v3168 = vld [vmem:[#allocation8 + $0xe38] sm:$0xff]
    %v3169 = vld [vmem:[#allocation8 + $0xe40] sm:$0xff]
    %v3170 = vld [vmem:[#allocation8 + $0xe48] sm:$0xff]
    %v3171 = vld [vmem:[#allocation8 + $0xe50] sm:$0xff]
    %v3172 = vld [vmem:[#allocation8 + $0xe58] sm:$0xff]
    %v3173 = vld [vmem:[#allocation8 + $0xe60] sm:$0xff]
    %v3174 = vld [vmem:[#allocation8 + $0xe68] sm:$0xff]
    %v3175 = vld [vmem:[#allocation8 + $0xe70] sm:$0xff]
    %v3176 = vld [vmem:[#allocation8 + $0xe78] sm:$0xff]
    %v3177 = vld [vmem:[#allocation8 + $0xe80] sm:$0xff]
    %v3178 = vld [vmem:[#allocation8 + $0xe88] sm:$0xff]
    %v3179 = vld [vmem:[#allocation8 + $0xe90] sm:$0xff]
    %v3180 = vld [vmem:[#allocation8 + $0xe98] sm:$0xff]
    %v3181 = vld [vmem:[#allocation8 + $0xea0] sm:$0xff]
    %v3182 = vld [vmem:[#allocation8 + $0xea8] sm:$0xff]
    %v3183 = vld [vmem:[#allocation8 + $0xeb0] sm:$0xff]
    %v3184 = vld [vmem:[#allocation8 + $0xeb8] sm:$0xff]
    %v3185 = vld [vmem:[#allocation8 + $0xec0] sm:$0xff]
    %v3186 = vld [vmem:[#allocation8 + $0xec8] sm:$0xff]
    %v3187 = vld [vmem:[#allocation8 + $0xed0] sm:$0xff]
    %v3188 = vld [vmem:[#allocation8 + $0xed8] sm:$0xff]
    %v3189 = vld [vmem:[#allocation8 + $0xee0] sm:$0xff]
    %v3190 = vld [vmem:[#allocation8 + $0xee8] sm:$0xff]
    %v3191 = vld [vmem:[#allocation8 + $0xef0] sm:$0xff]
    %v3192 = vld [vmem:[#allocation8 + $0xef8] sm:$0xff]
    %v3193 = vld [vmem:[#allocation8 + $0xf00] sm:$0xff]
    %v3194 = vld [vmem:[#allocation8 + $0xf08] sm:$0xff]
    %v3195 = vld [vmem:[#allocation8 + $0xf10] sm:$0xff]
    %v3196 = vld [vmem:[#allocation8 + $0xf18] sm:$0xff]
    %v3197 = vld [vmem:[#allocation8 + $0xf20] sm:$0xff]
    %v3198 = vld [vmem:[#allocation8 + $0xf28] sm:$0xff]
    %v3199 = vld [vmem:[#allocation8 + $0xf30] sm:$0xff]
    %v3200 = vld [vmem:[#allocation8 + $0xf38] sm:$0xff]
    %v3201 = vld [vmem:[#allocation8 + $0xf40] sm:$0xff]
    %v3202 = vld [vmem:[#allocation8 + $0xf48] sm:$0xff]
    %v3203 = vld [vmem:[#allocation8 + $0xf50] sm:$0xff]
    %v3204 = vld [vmem:[#allocation8 + $0xf58] sm:$0xff]
    %v3205 = vld [vmem:[#allocation8 + $0xf60] sm:$0xff]
    %v3206 = vld [vmem:[#allocation8 + $0xf68] sm:$0xff]
    %v3207 = vld [vmem:[#allocation8 + $0xf70] sm:$0xff]
    %v3208 = vld [vmem:[#allocation8 + $0xf78] sm:$0xff]
    %v3209 = vld [vmem:[#allocation8 + $0xf80] sm:$0xff]
    %v3210 = vld [vmem:[#allocation8 + $0xf88] sm:$0xff]
    %v3211 = vld [vmem:[#allocation8 + $0xf90] sm:$0xff]
    %v3212 = vld [vmem:[#allocation8 + $0xf98] sm:$0xff]
    %v3213 = vld [vmem:[#allocation8 + $0xfa0] sm:$0xff]
    %v3214 = vld [vmem:[#allocation8 + $0xfa8] sm:$0xff]
    %v3215 = vld [vmem:[#allocation8 + $0xfb0] sm:$0xff]
    %v3216 = vld [vmem:[#allocation8 + $0xfb8] sm:$0xff]
    %v3217 = vld [vmem:[#allocation8 + $0xfc0] sm:$0xff]
    %v3218 = vld [vmem:[#allocation8 + $0xfc8] sm:$0xff]
    %v3219 = vld [vmem:[#allocation8 + $0xfd0] sm:$0xff]
    %v3220 = vld [vmem:[#allocation8 + $0xfd8] sm:$0xff]
    %v3221 = vld [vmem:[#allocation8 + $0xfe0] sm:$0xff]
    %v3222 = vld [vmem:[#allocation8 + $0xfe8] sm:$0xff]
    %v3223 = vld [vmem:[#allocation8 + $0xff0] sm:$0xff]
    %v3224 = vld [vmem:[#allocation8 + $0xff8] sm:$0xff]
    %v3225 = vld [vmem:[#allocation10] sm:$0xff]
    %v3227 = vlaneseq
    %v3228 = vshrl.u32 %v3227, 7
    %v3229 = vsub.s32 0, %v3228
    %v3230 = vrot.slane %v3225, %v3229
    %v3231 = vlaneseq
    %v3232 = vshrl.u32 %v3231, 7
    %v3233 = vsub.s32 1, %v3232
    %v3234 = vrot.slane %v3225, %v3233
    %v3235 = vlaneseq
    %v3236 = vshrl.u32 %v3235, 7
    %v3237 = vsub.s32 2, %v3236
    %v3238 = vrot.slane %v3225, %v3237
    %v3239 = vlaneseq
    %v3240 = vshrl.u32 %v3239, 7
    %v3241 = vsub.s32 3, %v3240
    %v3242 = vrot.slane %v3225, %v3241
    %v3243 = vlaneseq
    %v3244 = vshrl.u32 %v3243, 7
    %v3245 = vsub.s32 4, %v3244
    %v3246 = vrot.slane %v3225, %v3245
    %v3247 = vlaneseq
    %v3248 = vshrl.u32 %v3247, 7
    %v3249 = vsub.s32 5, %v3248
    %v3250 = vrot.slane %v3225, %v3249
    %v3251 = vlaneseq
    %v3252 = vshrl.u32 %v3251, 7
    %v3253 = vsub.s32 6, %v3252
    %v3254 = vrot.slane %v3225, %v3253
    %v3255 = vlaneseq
    %v3256 = vshrl.u32 %v3255, 7
    %v3257 = vsub.s32 7, %v3256
    %v3258 = vrot.slane %v3225, %v3257
    %v3779 = vunpack.c.l.b16 %v2713
    %v3780 = vunpack.c.h.b16 %v2713
    %v3781 = vunpack.c.l.b16 %v2714
    %v3782 = vunpack.c.h.b16 %v2714
    %v3783 = vunpack.c.l.b16 %v2715
    %v3784 = vunpack.c.h.b16 %v2715
    %v3785 = vunpack.c.l.b16 %v2716
    %v3786 = vunpack.c.h.b16 %v2716
    %v3787 = vunpack.c.l.b16 %v2717
    %v3788 = vunpack.c.h.b16 %v2717
    %v3789 = vunpack.c.l.b16 %v2718
    %v3790 = vunpack.c.h.b16 %v2718
    %v3791 = vunpack.c.l.b16 %v2719
    %v3792 = vunpack.c.h.b16 %v2719
    %v3793 = vunpack.c.l.b16 %v2720
    %v3794 = vunpack.c.h.b16 %v2720
    %v3795 = vunpack.c.l.b16 %v2721
    %v3796 = vunpack.c.h.b16 %v2721
    %v3797 = vunpack.c.l.b16 %v2722
    %v3798 = vunpack.c.h.b16 %v2722
    %v3799 = vunpack.c.l.b16 %v2723
    %v3800 = vunpack.c.h.b16 %v2723
    %v3801 = vunpack.c.l.b16 %v2724
    %v3802 = vunpack.c.h.b16 %v2724
    %v3803 = vunpack.c.l.b16 %v2725
    %v3804 = vunpack.c.h.b16 %v2725
    %v3805 = vunpack.c.l.b16 %v2726
    %v3806 = vunpack.c.h.b16 %v2726
    %v3807 = vunpack.c.l.b16 %v2727
    %v3808 = vunpack.c.h.b16 %v2727
    %v3809 = vunpack.c.l.b16 %v2728
    %v3810 = vunpack.c.h.b16 %v2728
    %v3811 = vunpack.c.l.b16 %v2729
    %v3812 = vunpack.c.h.b16 %v2729
    %v3813 = vunpack.c.l.b16 %v2730
    %v3814 = vunpack.c.h.b16 %v2730
    %v3815 = vunpack.c.l.b16 %v2731
    %v3816 = vunpack.c.h.b16 %v2731
    %v3817 = vunpack.c.l.b16 %v2732
    %v3818 = vunpack.c.h.b16 %v2732
    %v3819 = vunpack.c.l.b16 %v2733
    %v3820 = vunpack.c.h.b16 %v2733
    %v3821 = vunpack.c.l.b16 %v2734
    %v3822 = vunpack.c.h.b16 %v2734
    %v3823 = vunpack.c.l.b16 %v2735
    %v3824 = vunpack.c.h.b16 %v2735
    %v3825 = vunpack.c.l.b16 %v2736
    %v3826 = vunpack.c.h.b16 %v2736
    %v3827 = vunpack.c.l.b16 %v2737
    %v3828 = vunpack.c.h.b16 %v2737
    %v3829 = vunpack.c.l.b16 %v2738
    %v3830 = vunpack.c.h.b16 %v2738
    %v3831 = vunpack.c.l.b16 %v2739
    %v3832 = vunpack.c.h.b16 %v2739
    %v3833 = vunpack.c.l.b16 %v2740
    %v3834 = vunpack.c.h.b16 %v2740
    %v3835 = vunpack.c.l.b16 %v2741
    %v3836 = vunpack.c.h.b16 %v2741
    %v3837 = vunpack.c.l.b16 %v2742
    %v3838 = vunpack.c.h.b16 %v2742
    %v3839 = vunpack.c.l.b16 %v2743
    %v3840 = vunpack.c.h.b16 %v2743
    %v3841 = vunpack.c.l.b16 %v2744
    %v3842 = vunpack.c.h.b16 %v2744
    %v3843 = vunpack.c.l.b16 %v2745
    %v3844 = vunpack.c.h.b16 %v2745
    %v3845 = vunpack.c.l.b16 %v2746
    %v3846 = vunpack.c.h.b16 %v2746
    %v3847 = vunpack.c.l.b16 %v2747
    %v3848 = vunpack.c.h.b16 %v2747
    %v3849 = vunpack.c.l.b16 %v2748
    %v3850 = vunpack.c.h.b16 %v2748
    %v3851 = vunpack.c.l.b16 %v2749
    %v3852 = vunpack.c.h.b16 %v2749
    %v3853 = vunpack.c.l.b16 %v2750
    %v3854 = vunpack.c.h.b16 %v2750
    %v3855 = vunpack.c.l.b16 %v2751
    %v3856 = vunpack.c.h.b16 %v2751
    %v3857 = vunpack.c.l.b16 %v2752
    %v3858 = vunpack.c.h.b16 %v2752
    %v3859 = vunpack.c.l.b16 %v2753
    %v3860 = vunpack.c.h.b16 %v2753
    %v3861 = vunpack.c.l.b16 %v2754
    %v3862 = vunpack.c.h.b16 %v2754
    %v3863 = vunpack.c.l.b16 %v2755
    %v3864 = vunpack.c.h.b16 %v2755
    %v3865 = vunpack.c.l.b16 %v2756
    %v3866 = vunpack.c.h.b16 %v2756
    %v3867 = vunpack.c.l.b16 %v2757
    %v3868 = vunpack.c.h.b16 %v2757
    %v3869 = vunpack.c.l.b16 %v2758
    %v3870 = vunpack.c.h.b16 %v2758
    %v3871 = vunpack.c.l.b16 %v2759
    %v3872 = vunpack.c.h.b16 %v2759
    %v3873 = vunpack.c.l.b16 %v2760
    %v3874 = vunpack.c.h.b16 %v2760
    %v3875 = vunpack.c.l.b16 %v2761
    %v3876 = vunpack.c.h.b16 %v2761
    %v3877 = vunpack.c.l.b16 %v2762
    %v3878 = vunpack.c.h.b16 %v2762
    %v3879 = vunpack.c.l.b16 %v2763
    %v3880 = vunpack.c.h.b16 %v2763
    %v3881 = vunpack.c.l.b16 %v2764
    %v3882 = vunpack.c.h.b16 %v2764
    %v3883 = vunpack.c.l.b16 %v2765
    %v3884 = vunpack.c.h.b16 %v2765
    %v3885 = vunpack.c.l.b16 %v2766
    %v3886 = vunpack.c.h.b16 %v2766
    %v3887 = vunpack.c.l.b16 %v2767
    %v3888 = vunpack.c.h.b16 %v2767
    %v3889 = vunpack.c.l.b16 %v2768
    %v3890 = vunpack.c.h.b16 %v2768
    %v3891 = vunpack.c.l.b16 %v2769
    %v3892 = vunpack.c.h.b16 %v2769
    %v3893 = vunpack.c.l.b16 %v2770
    %v3894 = vunpack.c.h.b16 %v2770
    %v3895 = vunpack.c.l.b16 %v2771
    %v3896 = vunpack.c.h.b16 %v2771
    %v3897 = vunpack.c.l.b16 %v2772
    %v3898 = vunpack.c.h.b16 %v2772
    %v3899 = vunpack.c.l.b16 %v2773
    %v3900 = vunpack.c.h.b16 %v2773
    %v3901 = vunpack.c.l.b16 %v2774
    %v3902 = vunpack.c.h.b16 %v2774
    %v3903 = vunpack.c.l.b16 %v2775
    %v3904 = vunpack.c.h.b16 %v2775
    %v3905 = vunpack.c.l.b16 %v2776
    %v3906 = vunpack.c.h.b16 %v2776
    %v3907 = vunpack.c.l.b16 %v2777
    %v3908 = vunpack.c.h.b16 %v2777
    %v3909 = vunpack.c.l.b16 %v2778
    %v3910 = vunpack.c.h.b16 %v2778
    %v3911 = vunpack.c.l.b16 %v2779
    %v3912 = vunpack.c.h.b16 %v2779
    %v3913 = vunpack.c.l.b16 %v2780
    %v3914 = vunpack.c.h.b16 %v2780
    %v3915 = vunpack.c.l.b16 %v2781
    %v3916 = vunpack.c.h.b16 %v2781
    %v3917 = vunpack.c.l.b16 %v2782
    %v3918 = vunpack.c.h.b16 %v2782
    %v3919 = vunpack.c.l.b16 %v2783
    %v3920 = vunpack.c.h.b16 %v2783
    %v3921 = vunpack.c.l.b16 %v2784
    %v3922 = vunpack.c.h.b16 %v2784
    %v3923 = vunpack.c.l.b16 %v2785
    %v3924 = vunpack.c.h.b16 %v2785
    %v3925 = vunpack.c.l.b16 %v2786
    %v3926 = vunpack.c.h.b16 %v2786
    %v3927 = vunpack.c.l.b16 %v2787
    %v3928 = vunpack.c.h.b16 %v2787
    %v3929 = vunpack.c.l.b16 %v2788
    %v3930 = vunpack.c.h.b16 %v2788
    %v3931 = vunpack.c.l.b16 %v2789
    %v3932 = vunpack.c.h.b16 %v2789
    %v3933 = vunpack.c.l.b16 %v2790
    %v3934 = vunpack.c.h.b16 %v2790
    %v3935 = vunpack.c.l.b16 %v2791
    %v3936 = vunpack.c.h.b16 %v2791
    %v3937 = vunpack.c.l.b16 %v2792
    %v3938 = vunpack.c.h.b16 %v2792
    %v3939 = vunpack.c.l.b16 %v2793
    %v3940 = vunpack.c.h.b16 %v2793
    %v3941 = vunpack.c.l.b16 %v2794
    %v3942 = vunpack.c.h.b16 %v2794
    %v3943 = vunpack.c.l.b16 %v2795
    %v3944 = vunpack.c.h.b16 %v2795
    %v3945 = vunpack.c.l.b16 %v2796
    %v3946 = vunpack.c.h.b16 %v2796
    %v3947 = vunpack.c.l.b16 %v2797
    %v3948 = vunpack.c.h.b16 %v2797
    %v3949 = vunpack.c.l.b16 %v2798
    %v3950 = vunpack.c.h.b16 %v2798
    %v3951 = vunpack.c.l.b16 %v2799
    %v3952 = vunpack.c.h.b16 %v2799
    %v3953 = vunpack.c.l.b16 %v2800
    %v3954 = vunpack.c.h.b16 %v2800
    %v3955 = vunpack.c.l.b16 %v2801
    %v3956 = vunpack.c.h.b16 %v2801
    %v3957 = vunpack.c.l.b16 %v2802
    %v3958 = vunpack.c.h.b16 %v2802
    %v3959 = vunpack.c.l.b16 %v2803
    %v3960 = vunpack.c.h.b16 %v2803
    %v3961 = vunpack.c.l.b16 %v2804
    %v3962 = vunpack.c.h.b16 %v2804
    %v3963 = vunpack.c.l.b16 %v2805
    %v3964 = vunpack.c.h.b16 %v2805
    %v3965 = vunpack.c.l.b16 %v2806
    %v3966 = vunpack.c.h.b16 %v2806
    %v3967 = vunpack.c.l.b16 %v2807
    %v3968 = vunpack.c.h.b16 %v2807
    %v3969 = vunpack.c.l.b16 %v2808
    %v3970 = vunpack.c.h.b16 %v2808
    %v3971 = vunpack.c.l.b16 %v2809
    %v3972 = vunpack.c.h.b16 %v2809
    %v3973 = vunpack.c.l.b16 %v2810
    %v3974 = vunpack.c.h.b16 %v2810
    %v3975 = vunpack.c.l.b16 %v2811
    %v3976 = vunpack.c.h.b16 %v2811
    %v3977 = vunpack.c.l.b16 %v2812
    %v3978 = vunpack.c.h.b16 %v2812
    %v3979 = vunpack.c.l.b16 %v2813
    %v3980 = vunpack.c.h.b16 %v2813
    %v3981 = vunpack.c.l.b16 %v2814
    %v3982 = vunpack.c.h.b16 %v2814
    %v3983 = vunpack.c.l.b16 %v2815
    %v3984 = vunpack.c.h.b16 %v2815
    %v3985 = vunpack.c.l.b16 %v2816
    %v3986 = vunpack.c.h.b16 %v2816
    %v3987 = vunpack.c.l.b16 %v2817
    %v3988 = vunpack.c.h.b16 %v2817
    %v3989 = vunpack.c.l.b16 %v2818
    %v3990 = vunpack.c.h.b16 %v2818
    %v3991 = vunpack.c.l.b16 %v2819
    %v3992 = vunpack.c.h.b16 %v2819
    %v3993 = vunpack.c.l.b16 %v2820
    %v3994 = vunpack.c.h.b16 %v2820
    %v3995 = vunpack.c.l.b16 %v2821
    %v3996 = vunpack.c.h.b16 %v2821
    %v3997 = vunpack.c.l.b16 %v2822
    %v3998 = vunpack.c.h.b16 %v2822
    %v3999 = vunpack.c.l.b16 %v2823
    %v4000 = vunpack.c.h.b16 %v2823
    %v4001 = vunpack.c.l.b16 %v2824
    %v4002 = vunpack.c.h.b16 %v2824
    %v4003 = vunpack.c.l.b16 %v2825
    %v4004 = vunpack.c.h.b16 %v2825
    %v4005 = vunpack.c.l.b16 %v2826
    %v4006 = vunpack.c.h.b16 %v2826
    %v4007 = vunpack.c.l.b16 %v2827
    %v4008 = vunpack.c.h.b16 %v2827
    %v4009 = vunpack.c.l.b16 %v2828
    %v4010 = vunpack.c.h.b16 %v2828
    %v4011 = vunpack.c.l.b16 %v2829
    %v4012 = vunpack.c.h.b16 %v2829
    %v4013 = vunpack.c.l.b16 %v2830
    %v4014 = vunpack.c.h.b16 %v2830
    %v4015 = vunpack.c.l.b16 %v2831
    %v4016 = vunpack.c.h.b16 %v2831
    %v4017 = vunpack.c.l.b16 %v2832
    %v4018 = vunpack.c.h.b16 %v2832
    %v4019 = vunpack.c.l.b16 %v2833
    %v4020 = vunpack.c.h.b16 %v2833
    %v4021 = vunpack.c.l.b16 %v2834
    %v4022 = vunpack.c.h.b16 %v2834
    %v4023 = vunpack.c.l.b16 %v2835
    %v4024 = vunpack.c.h.b16 %v2835
    %v4025 = vunpack.c.l.b16 %v2836
    %v4026 = vunpack.c.h.b16 %v2836
    %v4027 = vunpack.c.l.b16 %v2837
    %v4028 = vunpack.c.h.b16 %v2837
    %v4029 = vunpack.c.l.b16 %v2838
    %v4030 = vunpack.c.h.b16 %v2838
    %v4031 = vunpack.c.l.b16 %v2839
    %v4032 = vunpack.c.h.b16 %v2839
    %v4033 = vunpack.c.l.b16 %v2840
    %v4034 = vunpack.c.h.b16 %v2840
    %v4035 = vunpack.c.l.b16 %v2841
    %v4036 = vunpack.c.h.b16 %v2841
    %v4037 = vunpack.c.l.b16 %v2842
    %v4038 = vunpack.c.h.b16 %v2842
    %v4039 = vunpack.c.l.b16 %v2843
    %v4040 = vunpack.c.h.b16 %v2843
    %v4041 = vunpack.c.l.b16 %v2844
    %v4042 = vunpack.c.h.b16 %v2844
    %v4043 = vunpack.c.l.b16 %v2845
    %v4044 = vunpack.c.h.b16 %v2845
    %v4045 = vunpack.c.l.b16 %v2846
    %v4046 = vunpack.c.h.b16 %v2846
    %v4047 = vunpack.c.l.b16 %v2847
    %v4048 = vunpack.c.h.b16 %v2847
    %v4049 = vunpack.c.l.b16 %v2848
    %v4050 = vunpack.c.h.b16 %v2848
    %v4051 = vunpack.c.l.b16 %v2849
    %v4052 = vunpack.c.h.b16 %v2849
    %v4053 = vunpack.c.l.b16 %v2850
    %v4054 = vunpack.c.h.b16 %v2850
    %v4055 = vunpack.c.l.b16 %v2851
    %v4056 = vunpack.c.h.b16 %v2851
    %v4057 = vunpack.c.l.b16 %v2852
    %v4058 = vunpack.c.h.b16 %v2852
    %v4059 = vunpack.c.l.b16 %v2853
    %v4060 = vunpack.c.h.b16 %v2853
    %v4061 = vunpack.c.l.b16 %v2854
    %v4062 = vunpack.c.h.b16 %v2854
    %v4063 = vunpack.c.l.b16 %v2855
    %v4064 = vunpack.c.h.b16 %v2855
    %v4065 = vunpack.c.l.b16 %v2856
    %v4066 = vunpack.c.h.b16 %v2856
    %v4067 = vunpack.c.l.b16 %v2857
    %v4068 = vunpack.c.h.b16 %v2857
    %v4069 = vunpack.c.l.b16 %v2858
    %v4070 = vunpack.c.h.b16 %v2858
    %v4071 = vunpack.c.l.b16 %v2859
    %v4072 = vunpack.c.h.b16 %v2859
    %v4073 = vunpack.c.l.b16 %v2860
    %v4074 = vunpack.c.h.b16 %v2860
    %v4075 = vunpack.c.l.b16 %v2861
    %v4076 = vunpack.c.h.b16 %v2861
    %v4077 = vunpack.c.l.b16 %v2862
    %v4078 = vunpack.c.h.b16 %v2862
    %v4079 = vunpack.c.l.b16 %v2863
    %v4080 = vunpack.c.h.b16 %v2863
    %v4081 = vunpack.c.l.b16 %v2864
    %v4082 = vunpack.c.h.b16 %v2864
    %v4083 = vunpack.c.l.b16 %v2865
    %v4084 = vunpack.c.h.b16 %v2865
    %v4085 = vunpack.c.l.b16 %v2866
    %v4086 = vunpack.c.h.b16 %v2866
    %v4087 = vunpack.c.l.b16 %v2867
    %v4088 = vunpack.c.h.b16 %v2867
    %v4089 = vunpack.c.l.b16 %v2868
    %v4090 = vunpack.c.h.b16 %v2868
    %v4091 = vunpack.c.l.b16 %v2869
    %v4092 = vunpack.c.h.b16 %v2869
    %v4093 = vunpack.c.l.b16 %v2870
    %v4094 = vunpack.c.h.b16 %v2870
    %v4095 = vunpack.c.l.b16 %v2871
    %v4096 = vunpack.c.h.b16 %v2871
    %v4097 = vunpack.c.l.b16 %v2872
    %v4098 = vunpack.c.h.b16 %v2872
    %v4099 = vunpack.c.l.b16 %v2873
    %v4100 = vunpack.c.h.b16 %v2873
    %v4101 = vunpack.c.l.b16 %v2874
    %v4102 = vunpack.c.h.b16 %v2874
    %v4103 = vunpack.c.l.b16 %v2875
    %v4104 = vunpack.c.h.b16 %v2875
    %v4105 = vunpack.c.l.b16 %v2876
    %v4106 = vunpack.c.h.b16 %v2876
    %v4107 = vunpack.c.l.b16 %v2877
    %v4108 = vunpack.c.h.b16 %v2877
    %v4109 = vunpack.c.l.b16 %v2878
    %v4110 = vunpack.c.h.b16 %v2878
    %v4111 = vunpack.c.l.b16 %v2879
    %v4112 = vunpack.c.h.b16 %v2879
    %v4113 = vunpack.c.l.b16 %v2880
    %v4114 = vunpack.c.h.b16 %v2880
    %v4115 = vunpack.c.l.b16 %v2881
    %v4116 = vunpack.c.h.b16 %v2881
    %v4117 = vunpack.c.l.b16 %v2882
    %v4118 = vunpack.c.h.b16 %v2882
    %v4119 = vunpack.c.l.b16 %v2883
    %v4120 = vunpack.c.h.b16 %v2883
    %v4121 = vunpack.c.l.b16 %v2884
    %v4122 = vunpack.c.h.b16 %v2884
    %v4123 = vunpack.c.l.b16 %v2885
    %v4124 = vunpack.c.h.b16 %v2885
    %v4125 = vunpack.c.l.b16 %v2886
    %v4126 = vunpack.c.h.b16 %v2886
    %v4127 = vunpack.c.l.b16 %v2887
    %v4128 = vunpack.c.h.b16 %v2887
    %v4129 = vunpack.c.l.b16 %v2888
    %v4130 = vunpack.c.h.b16 %v2888
    %v4131 = vunpack.c.l.b16 %v2889
    %v4132 = vunpack.c.h.b16 %v2889
    %v4133 = vunpack.c.l.b16 %v2890
    %v4134 = vunpack.c.h.b16 %v2890
    %v4135 = vunpack.c.l.b16 %v2891
    %v4136 = vunpack.c.h.b16 %v2891
    %v4137 = vunpack.c.l.b16 %v2892
    %v4138 = vunpack.c.h.b16 %v2892
    %v4139 = vunpack.c.l.b16 %v2893
    %v4140 = vunpack.c.h.b16 %v2893
    %v4141 = vunpack.c.l.b16 %v2894
    %v4142 = vunpack.c.h.b16 %v2894
    %v4143 = vunpack.c.l.b16 %v2895
    %v4144 = vunpack.c.h.b16 %v2895
    %v4145 = vunpack.c.l.b16 %v2896
    %v4146 = vunpack.c.h.b16 %v2896
    %v4147 = vunpack.c.l.b16 %v2897
    %v4148 = vunpack.c.h.b16 %v2897
    %v4149 = vunpack.c.l.b16 %v2898
    %v4150 = vunpack.c.h.b16 %v2898
    %v4151 = vunpack.c.l.b16 %v2899
    %v4152 = vunpack.c.h.b16 %v2899
    %v4153 = vunpack.c.l.b16 %v2900
    %v4154 = vunpack.c.h.b16 %v2900
    %v4155 = vunpack.c.l.b16 %v2901
    %v4156 = vunpack.c.h.b16 %v2901
    %v4157 = vunpack.c.l.b16 %v2902
    %v4158 = vunpack.c.h.b16 %v2902
    %v4159 = vunpack.c.l.b16 %v2903
    %v4160 = vunpack.c.h.b16 %v2903
    %v4161 = vunpack.c.l.b16 %v2904
    %v4162 = vunpack.c.h.b16 %v2904
    %v4163 = vunpack.c.l.b16 %v2905
    %v4164 = vunpack.c.h.b16 %v2905
    %v4165 = vunpack.c.l.b16 %v2906
    %v4166 = vunpack.c.h.b16 %v2906
    %v4167 = vunpack.c.l.b16 %v2907
    %v4168 = vunpack.c.h.b16 %v2907
    %v4169 = vunpack.c.l.b16 %v2908
    %v4170 = vunpack.c.h.b16 %v2908
    %v4171 = vunpack.c.l.b16 %v2909
    %v4172 = vunpack.c.h.b16 %v2909
    %v4173 = vunpack.c.l.b16 %v2910
    %v4174 = vunpack.c.h.b16 %v2910
    %v4175 = vunpack.c.l.b16 %v2911
    %v4176 = vunpack.c.h.b16 %v2911
    %v4177 = vunpack.c.l.b16 %v2912
    %v4178 = vunpack.c.h.b16 %v2912
    %v4179 = vunpack.c.l.b16 %v2913
    %v4180 = vunpack.c.h.b16 %v2913
    %v4181 = vunpack.c.l.b16 %v2914
    %v4182 = vunpack.c.h.b16 %v2914
    %v4183 = vunpack.c.l.b16 %v2915
    %v4184 = vunpack.c.h.b16 %v2915
    %v4185 = vunpack.c.l.b16 %v2916
    %v4186 = vunpack.c.h.b16 %v2916
    %v4187 = vunpack.c.l.b16 %v2917
    %v4188 = vunpack.c.h.b16 %v2917
    %v4189 = vunpack.c.l.b16 %v2918
    %v4190 = vunpack.c.h.b16 %v2918
    %v4191 = vunpack.c.l.b16 %v2919
    %v4192 = vunpack.c.h.b16 %v2919
    %v4193 = vunpack.c.l.b16 %v2920
    %v4194 = vunpack.c.h.b16 %v2920
    %v4195 = vunpack.c.l.b16 %v2921
    %v4196 = vunpack.c.h.b16 %v2921
    %v4197 = vunpack.c.l.b16 %v2922
    %v4198 = vunpack.c.h.b16 %v2922
    %v4199 = vunpack.c.l.b16 %v2923
    %v4200 = vunpack.c.h.b16 %v2923
    %v4201 = vunpack.c.l.b16 %v2924
    %v4202 = vunpack.c.h.b16 %v2924
    %v4203 = vunpack.c.l.b16 %v2925
    %v4204 = vunpack.c.h.b16 %v2925
    %v4205 = vunpack.c.l.b16 %v2926
    %v4206 = vunpack.c.h.b16 %v2926
    %v4207 = vunpack.c.l.b16 %v2927
    %v4208 = vunpack.c.h.b16 %v2927
    %v4209 = vunpack.c.l.b16 %v2928
    %v4210 = vunpack.c.h.b16 %v2928
    %v4211 = vunpack.c.l.b16 %v2929
    %v4212 = vunpack.c.h.b16 %v2929
    %v4213 = vunpack.c.l.b16 %v2930
    %v4214 = vunpack.c.h.b16 %v2930
    %v4215 = vunpack.c.l.b16 %v2931
    %v4216 = vunpack.c.h.b16 %v2931
    %v4217 = vunpack.c.l.b16 %v2932
    %v4218 = vunpack.c.h.b16 %v2932
    %v4219 = vunpack.c.l.b16 %v2933
    %v4220 = vunpack.c.h.b16 %v2933
    %v4221 = vunpack.c.l.b16 %v2934
    %v4222 = vunpack.c.h.b16 %v2934
    %v4223 = vunpack.c.l.b16 %v2935
    %v4224 = vunpack.c.h.b16 %v2935
    %v4225 = vunpack.c.l.b16 %v2936
    %v4226 = vunpack.c.h.b16 %v2936
    %v4227 = vunpack.c.l.b16 %v2937
    %v4228 = vunpack.c.h.b16 %v2937
    %v4229 = vunpack.c.l.b16 %v2938
    %v4230 = vunpack.c.h.b16 %v2938
    %v4231 = vunpack.c.l.b16 %v2939
    %v4232 = vunpack.c.h.b16 %v2939
    %v4233 = vunpack.c.l.b16 %v2940
    %v4234 = vunpack.c.h.b16 %v2940
    %v4235 = vunpack.c.l.b16 %v2941
    %v4236 = vunpack.c.h.b16 %v2941
    %v4237 = vunpack.c.l.b16 %v2942
    %v4238 = vunpack.c.h.b16 %v2942
    %v4239 = vunpack.c.l.b16 %v2943
    %v4240 = vunpack.c.h.b16 %v2943
    %v4241 = vunpack.c.l.b16 %v2944
    %v4242 = vunpack.c.h.b16 %v2944
    %v4243 = vunpack.c.l.b16 %v2945
    %v4244 = vunpack.c.h.b16 %v2945
    %v4245 = vunpack.c.l.b16 %v2946
    %v4246 = vunpack.c.h.b16 %v2946
    %v4247 = vunpack.c.l.b16 %v2947
    %v4248 = vunpack.c.h.b16 %v2947
    %v4249 = vunpack.c.l.b16 %v2948
    %v4250 = vunpack.c.h.b16 %v2948
    %v4251 = vunpack.c.l.b16 %v2949
    %v4252 = vunpack.c.h.b16 %v2949
    %v4253 = vunpack.c.l.b16 %v2950
    %v4254 = vunpack.c.h.b16 %v2950
    %v4255 = vunpack.c.l.b16 %v2951
    %v4256 = vunpack.c.h.b16 %v2951
    %v4257 = vunpack.c.l.b16 %v2952
    %v4258 = vunpack.c.h.b16 %v2952
    %v4259 = vunpack.c.l.b16 %v2953
    %v4260 = vunpack.c.h.b16 %v2953
    %v4261 = vunpack.c.l.b16 %v2954
    %v4262 = vunpack.c.h.b16 %v2954
    %v4263 = vunpack.c.l.b16 %v2955
    %v4264 = vunpack.c.h.b16 %v2955
    %v4265 = vunpack.c.l.b16 %v2956
    %v4266 = vunpack.c.h.b16 %v2956
    %v4267 = vunpack.c.l.b16 %v2957
    %v4268 = vunpack.c.h.b16 %v2957
    %v4269 = vunpack.c.l.b16 %v2958
    %v4270 = vunpack.c.h.b16 %v2958
    %v4271 = vunpack.c.l.b16 %v2959
    %v4272 = vunpack.c.h.b16 %v2959
    %v4273 = vunpack.c.l.b16 %v2960
    %v4274 = vunpack.c.h.b16 %v2960
    %v4275 = vunpack.c.l.b16 %v2961
    %v4276 = vunpack.c.h.b16 %v2961
    %v4277 = vunpack.c.l.b16 %v2962
    %v4278 = vunpack.c.h.b16 %v2962
    %v4279 = vunpack.c.l.b16 %v2963
    %v4280 = vunpack.c.h.b16 %v2963
    %v4281 = vunpack.c.l.b16 %v2964
    %v4282 = vunpack.c.h.b16 %v2964
    %v4283 = vunpack.c.l.b16 %v2965
    %v4284 = vunpack.c.h.b16 %v2965
    %v4285 = vunpack.c.l.b16 %v2966
    %v4286 = vunpack.c.h.b16 %v2966
    %v4287 = vunpack.c.l.b16 %v2967
    %v4288 = vunpack.c.h.b16 %v2967
    %v4289 = vunpack.c.l.b16 %v2968
    %v4290 = vunpack.c.h.b16 %v2968
    %v4291 = vunpack.c.l.b16 %v2969
    %v4292 = vunpack.c.h.b16 %v2969
    %v4293 = vunpack.c.l.b16 %v2970
    %v4294 = vunpack.c.h.b16 %v2970
    %v4295 = vunpack.c.l.b16 %v2971
    %v4296 = vunpack.c.h.b16 %v2971
    %v4297 = vunpack.c.l.b16 %v2972
    %v4298 = vunpack.c.h.b16 %v2972
    %v4299 = vunpack.c.l.b16 %v2973
    %v4300 = vunpack.c.h.b16 %v2973
    %v4301 = vunpack.c.l.b16 %v2974
    %v4302 = vunpack.c.h.b16 %v2974
    %v4303 = vunpack.c.l.b16 %v2975
    %v4304 = vunpack.c.h.b16 %v2975
    %v4305 = vunpack.c.l.b16 %v2976
    %v4306 = vunpack.c.h.b16 %v2976
    %v4307 = vunpack.c.l.b16 %v2977
    %v4308 = vunpack.c.h.b16 %v2977
    %v4309 = vunpack.c.l.b16 %v2978
    %v4310 = vunpack.c.h.b16 %v2978
    %v4311 = vunpack.c.l.b16 %v2979
    %v4312 = vunpack.c.h.b16 %v2979
    %v4313 = vunpack.c.l.b16 %v2980
    %v4314 = vunpack.c.h.b16 %v2980
    %v4315 = vunpack.c.l.b16 %v2981
    %v4316 = vunpack.c.h.b16 %v2981
    %v4317 = vunpack.c.l.b16 %v2982
    %v4318 = vunpack.c.h.b16 %v2982
    %v4319 = vunpack.c.l.b16 %v2983
    %v4320 = vunpack.c.h.b16 %v2983
    %v4321 = vunpack.c.l.b16 %v2984
    %v4322 = vunpack.c.h.b16 %v2984
    %v4323 = vunpack.c.l.b16 %v2985
    %v4324 = vunpack.c.h.b16 %v2985
    %v4325 = vunpack.c.l.b16 %v2986
    %v4326 = vunpack.c.h.b16 %v2986
    %v4327 = vunpack.c.l.b16 %v2987
    %v4328 = vunpack.c.h.b16 %v2987
    %v4329 = vunpack.c.l.b16 %v2988
    %v4330 = vunpack.c.h.b16 %v2988
    %v4331 = vunpack.c.l.b16 %v2989
    %v4332 = vunpack.c.h.b16 %v2989
    %v4333 = vunpack.c.l.b16 %v2990
    %v4334 = vunpack.c.h.b16 %v2990
    %v4335 = vunpack.c.l.b16 %v2991
    %v4336 = vunpack.c.h.b16 %v2991
    %v4337 = vunpack.c.l.b16 %v2992
    %v4338 = vunpack.c.h.b16 %v2992
    %v4339 = vunpack.c.l.b16 %v2993
    %v4340 = vunpack.c.h.b16 %v2993
    %v4341 = vunpack.c.l.b16 %v2994
    %v4342 = vunpack.c.h.b16 %v2994
    %v4343 = vunpack.c.l.b16 %v2995
    %v4344 = vunpack.c.h.b16 %v2995
    %v4345 = vunpack.c.l.b16 %v2996
    %v4346 = vunpack.c.h.b16 %v2996
    %v4347 = vunpack.c.l.b16 %v2997
    %v4348 = vunpack.c.h.b16 %v2997
    %v4349 = vunpack.c.l.b16 %v2998
    %v4350 = vunpack.c.h.b16 %v2998
    %v4351 = vunpack.c.l.b16 %v2999
    %v4352 = vunpack.c.h.b16 %v2999
    %v4353 = vunpack.c.l.b16 %v3000
    %v4354 = vunpack.c.h.b16 %v3000
    %v4355 = vunpack.c.l.b16 %v3001
    %v4356 = vunpack.c.h.b16 %v3001
    %v4357 = vunpack.c.l.b16 %v3002
    %v4358 = vunpack.c.h.b16 %v3002
    %v4359 = vunpack.c.l.b16 %v3003
    %v4360 = vunpack.c.h.b16 %v3003
    %v4361 = vunpack.c.l.b16 %v3004
    %v4362 = vunpack.c.h.b16 %v3004
    %v4363 = vunpack.c.l.b16 %v3005
    %v4364 = vunpack.c.h.b16 %v3005
    %v4365 = vunpack.c.l.b16 %v3006
    %v4366 = vunpack.c.h.b16 %v3006
    %v4367 = vunpack.c.l.b16 %v3007
    %v4368 = vunpack.c.h.b16 %v3007
    %v4369 = vunpack.c.l.b16 %v3008
    %v4370 = vunpack.c.h.b16 %v3008
    %v4371 = vunpack.c.l.b16 %v3009
    %v4372 = vunpack.c.h.b16 %v3009
    %v4373 = vunpack.c.l.b16 %v3010
    %v4374 = vunpack.c.h.b16 %v3010
    %v4375 = vunpack.c.l.b16 %v3011
    %v4376 = vunpack.c.h.b16 %v3011
    %v4377 = vunpack.c.l.b16 %v3012
    %v4378 = vunpack.c.h.b16 %v3012
    %v4379 = vunpack.c.l.b16 %v3013
    %v4380 = vunpack.c.h.b16 %v3013
    %v4381 = vunpack.c.l.b16 %v3014
    %v4382 = vunpack.c.h.b16 %v3014
    %v4383 = vunpack.c.l.b16 %v3015
    %v4384 = vunpack.c.h.b16 %v3015
    %v4385 = vunpack.c.l.b16 %v3016
    %v4386 = vunpack.c.h.b16 %v3016
    %v4387 = vunpack.c.l.b16 %v3017
    %v4388 = vunpack.c.h.b16 %v3017
    %v4389 = vunpack.c.l.b16 %v3018
    %v4390 = vunpack.c.h.b16 %v3018
    %v4391 = vunpack.c.l.b16 %v3019
    %v4392 = vunpack.c.h.b16 %v3019
    %v4393 = vunpack.c.l.b16 %v3020
    %v4394 = vunpack.c.h.b16 %v3020
    %v4395 = vunpack.c.l.b16 %v3021
    %v4396 = vunpack.c.h.b16 %v3021
    %v4397 = vunpack.c.l.b16 %v3022
    %v4398 = vunpack.c.h.b16 %v3022
    %v4399 = vunpack.c.l.b16 %v3023
    %v4400 = vunpack.c.h.b16 %v3023
    %v4401 = vunpack.c.l.b16 %v3024
    %v4402 = vunpack.c.h.b16 %v3024
    %v4403 = vunpack.c.l.b16 %v3025
    %v4404 = vunpack.c.h.b16 %v3025
    %v4405 = vunpack.c.l.b16 %v3026
    %v4406 = vunpack.c.h.b16 %v3026
    %v4407 = vunpack.c.l.b16 %v3027
    %v4408 = vunpack.c.h.b16 %v3027
    %v4409 = vunpack.c.l.b16 %v3028
    %v4410 = vunpack.c.h.b16 %v3028
    %v4411 = vunpack.c.l.b16 %v3029
    %v4412 = vunpack.c.h.b16 %v3029
    %v4413 = vunpack.c.l.b16 %v3030
    %v4414 = vunpack.c.h.b16 %v3030
    %v4415 = vunpack.c.l.b16 %v3031
    %v4416 = vunpack.c.h.b16 %v3031
    %v4417 = vunpack.c.l.b16 %v3032
    %v4418 = vunpack.c.h.b16 %v3032
    %v4419 = vunpack.c.l.b16 %v3033
    %v4420 = vunpack.c.h.b16 %v3033
    %v4421 = vunpack.c.l.b16 %v3034
    %v4422 = vunpack.c.h.b16 %v3034
    %v4423 = vunpack.c.l.b16 %v3035
    %v4424 = vunpack.c.h.b16 %v3035
    %v4425 = vunpack.c.l.b16 %v3036
    %v4426 = vunpack.c.h.b16 %v3036
    %v4427 = vunpack.c.l.b16 %v3037
    %v4428 = vunpack.c.h.b16 %v3037
    %v4429 = vunpack.c.l.b16 %v3038
    %v4430 = vunpack.c.h.b16 %v3038
    %v4431 = vunpack.c.l.b16 %v3039
    %v4432 = vunpack.c.h.b16 %v3039
    %v4433 = vunpack.c.l.b16 %v3040
    %v4434 = vunpack.c.h.b16 %v3040
    %v4435 = vunpack.c.l.b16 %v3041
    %v4436 = vunpack.c.h.b16 %v3041
    %v4437 = vunpack.c.l.b16 %v3042
    %v4438 = vunpack.c.h.b16 %v3042
    %v4439 = vunpack.c.l.b16 %v3043
    %v4440 = vunpack.c.h.b16 %v3043
    %v4441 = vunpack.c.l.b16 %v3044
    %v4442 = vunpack.c.h.b16 %v3044
    %v4443 = vunpack.c.l.b16 %v3045
    %v4444 = vunpack.c.h.b16 %v3045
    %v4445 = vunpack.c.l.b16 %v3046
    %v4446 = vunpack.c.h.b16 %v3046
    %v4447 = vunpack.c.l.b16 %v3047
    %v4448 = vunpack.c.h.b16 %v3047
    %v4449 = vunpack.c.l.b16 %v3048
    %v4450 = vunpack.c.h.b16 %v3048
    %v4451 = vunpack.c.l.b16 %v3049
    %v4452 = vunpack.c.h.b16 %v3049
    %v4453 = vunpack.c.l.b16 %v3050
    %v4454 = vunpack.c.h.b16 %v3050
    %v4455 = vunpack.c.l.b16 %v3051
    %v4456 = vunpack.c.h.b16 %v3051
    %v4457 = vunpack.c.l.b16 %v3052
    %v4458 = vunpack.c.h.b16 %v3052
    %v4459 = vunpack.c.l.b16 %v3053
    %v4460 = vunpack.c.h.b16 %v3053
    %v4461 = vunpack.c.l.b16 %v3054
    %v4462 = vunpack.c.h.b16 %v3054
    %v4463 = vunpack.c.l.b16 %v3055
    %v4464 = vunpack.c.h.b16 %v3055
    %v4465 = vunpack.c.l.b16 %v3056
    %v4466 = vunpack.c.h.b16 %v3056
    %v4467 = vunpack.c.l.b16 %v3057
    %v4468 = vunpack.c.h.b16 %v3057
    %v4469 = vunpack.c.l.b16 %v3058
    %v4470 = vunpack.c.h.b16 %v3058
    %v4471 = vunpack.c.l.b16 %v3059
    %v4472 = vunpack.c.h.b16 %v3059
    %v4473 = vunpack.c.l.b16 %v3060
    %v4474 = vunpack.c.h.b16 %v3060
    %v4475 = vunpack.c.l.b16 %v3061
    %v4476 = vunpack.c.h.b16 %v3061
    %v4477 = vunpack.c.l.b16 %v3062
    %v4478 = vunpack.c.h.b16 %v3062
    %v4479 = vunpack.c.l.b16 %v3063
    %v4480 = vunpack.c.h.b16 %v3063
    %v4481 = vunpack.c.l.b16 %v3064
    %v4482 = vunpack.c.h.b16 %v3064
    %v4483 = vunpack.c.l.b16 %v3065
    %v4484 = vunpack.c.h.b16 %v3065
    %v4485 = vunpack.c.l.b16 %v3066
    %v4486 = vunpack.c.h.b16 %v3066
    %v4487 = vunpack.c.l.b16 %v3067
    %v4488 = vunpack.c.h.b16 %v3067
    %v4489 = vunpack.c.l.b16 %v3068
    %v4490 = vunpack.c.h.b16 %v3068
    %v4491 = vunpack.c.l.b16 %v3069
    %v4492 = vunpack.c.h.b16 %v3069
    %v4493 = vunpack.c.l.b16 %v3070
    %v4494 = vunpack.c.h.b16 %v3070
    %v4495 = vunpack.c.l.b16 %v3071
    %v4496 = vunpack.c.h.b16 %v3071
    %v4497 = vunpack.c.l.b16 %v3072
    %v4498 = vunpack.c.h.b16 %v3072
    %v4499 = vunpack.c.l.b16 %v3073
    %v4500 = vunpack.c.h.b16 %v3073
    %v4501 = vunpack.c.l.b16 %v3074
    %v4502 = vunpack.c.h.b16 %v3074
    %v4503 = vunpack.c.l.b16 %v3075
    %v4504 = vunpack.c.h.b16 %v3075
    %v4505 = vunpack.c.l.b16 %v3076
    %v4506 = vunpack.c.h.b16 %v3076
    %v4507 = vunpack.c.l.b16 %v3077
    %v4508 = vunpack.c.h.b16 %v3077
    %v4509 = vunpack.c.l.b16 %v3078
    %v4510 = vunpack.c.h.b16 %v3078
    %v4511 = vunpack.c.l.b16 %v3079
    %v4512 = vunpack.c.h.b16 %v3079
    %v4513 = vunpack.c.l.b16 %v3080
    %v4514 = vunpack.c.h.b16 %v3080
    %v4515 = vunpack.c.l.b16 %v3081
    %v4516 = vunpack.c.h.b16 %v3081
    %v4517 = vunpack.c.l.b16 %v3082
    %v4518 = vunpack.c.h.b16 %v3082
    %v4519 = vunpack.c.l.b16 %v3083
    %v4520 = vunpack.c.h.b16 %v3083
    %v4521 = vunpack.c.l.b16 %v3084
    %v4522 = vunpack.c.h.b16 %v3084
    %v4523 = vunpack.c.l.b16 %v3085
    %v4524 = vunpack.c.h.b16 %v3085
    %v4525 = vunpack.c.l.b16 %v3086
    %v4526 = vunpack.c.h.b16 %v3086
    %v4527 = vunpack.c.l.b16 %v3087
    %v4528 = vunpack.c.h.b16 %v3087
    %v4529 = vunpack.c.l.b16 %v3088
    %v4530 = vunpack.c.h.b16 %v3088
    %v4531 = vunpack.c.l.b16 %v3089
    %v4532 = vunpack.c.h.b16 %v3089
    %v4533 = vunpack.c.l.b16 %v3090
    %v4534 = vunpack.c.h.b16 %v3090
    %v4535 = vunpack.c.l.b16 %v3091
    %v4536 = vunpack.c.h.b16 %v3091
    %v4537 = vunpack.c.l.b16 %v3092
    %v4538 = vunpack.c.h.b16 %v3092
    %v4539 = vunpack.c.l.b16 %v3093
    %v4540 = vunpack.c.h.b16 %v3093
    %v4541 = vunpack.c.l.b16 %v3094
    %v4542 = vunpack.c.h.b16 %v3094
    %v4543 = vunpack.c.l.b16 %v3095
    %v4544 = vunpack.c.h.b16 %v3095
    %v4545 = vunpack.c.l.b16 %v3096
    %v4546 = vunpack.c.h.b16 %v3096
    %v4547 = vunpack.c.l.b16 %v3097
    %v4548 = vunpack.c.h.b16 %v3097
    %v4549 = vunpack.c.l.b16 %v3098
    %v4550 = vunpack.c.h.b16 %v3098
    %v4551 = vunpack.c.l.b16 %v3099
    %v4552 = vunpack.c.h.b16 %v3099
    %v4553 = vunpack.c.l.b16 %v3100
    %v4554 = vunpack.c.h.b16 %v3100
    %v4555 = vunpack.c.l.b16 %v3101
    %v4556 = vunpack.c.h.b16 %v3101
    %v4557 = vunpack.c.l.b16 %v3102
    %v4558 = vunpack.c.h.b16 %v3102
    %v4559 = vunpack.c.l.b16 %v3103
    %v4560 = vunpack.c.h.b16 %v3103
    %v4561 = vunpack.c.l.b16 %v3104
    %v4562 = vunpack.c.h.b16 %v3104
    %v4563 = vunpack.c.l.b16 %v3105
    %v4564 = vunpack.c.h.b16 %v3105
    %v4565 = vunpack.c.l.b16 %v3106
    %v4566 = vunpack.c.h.b16 %v3106
    %v4567 = vunpack.c.l.b16 %v3107
    %v4568 = vunpack.c.h.b16 %v3107
    %v4569 = vunpack.c.l.b16 %v3108
    %v4570 = vunpack.c.h.b16 %v3108
    %v4571 = vunpack.c.l.b16 %v3109
    %v4572 = vunpack.c.h.b16 %v3109
    %v4573 = vunpack.c.l.b16 %v3110
    %v4574 = vunpack.c.h.b16 %v3110
    %v4575 = vunpack.c.l.b16 %v3111
    %v4576 = vunpack.c.h.b16 %v3111
    %v4577 = vunpack.c.l.b16 %v3112
    %v4578 = vunpack.c.h.b16 %v3112
    %v4579 = vunpack.c.l.b16 %v3113
    %v4580 = vunpack.c.h.b16 %v3113
    %v4581 = vunpack.c.l.b16 %v3114
    %v4582 = vunpack.c.h.b16 %v3114
    %v4583 = vunpack.c.l.b16 %v3115
    %v4584 = vunpack.c.h.b16 %v3115
    %v4585 = vunpack.c.l.b16 %v3116
    %v4586 = vunpack.c.h.b16 %v3116
    %v4587 = vunpack.c.l.b16 %v3117
    %v4588 = vunpack.c.h.b16 %v3117
    %v4589 = vunpack.c.l.b16 %v3118
    %v4590 = vunpack.c.h.b16 %v3118
    %v4591 = vunpack.c.l.b16 %v3119
    %v4592 = vunpack.c.h.b16 %v3119
    %v4593 = vunpack.c.l.b16 %v3120
    %v4594 = vunpack.c.h.b16 %v3120
    %v4595 = vunpack.c.l.b16 %v3121
    %v4596 = vunpack.c.h.b16 %v3121
    %v4597 = vunpack.c.l.b16 %v3122
    %v4598 = vunpack.c.h.b16 %v3122
    %v4599 = vunpack.c.l.b16 %v3123
    %v4600 = vunpack.c.h.b16 %v3123
    %v4601 = vunpack.c.l.b16 %v3124
    %v4602 = vunpack.c.h.b16 %v3124
    %v4603 = vunpack.c.l.b16 %v3125
    %v4604 = vunpack.c.h.b16 %v3125
    %v4605 = vunpack.c.l.b16 %v3126
    %v4606 = vunpack.c.h.b16 %v3126
    %v4607 = vunpack.c.l.b16 %v3127
    %v4608 = vunpack.c.h.b16 %v3127
    %v4609 = vunpack.c.l.b16 %v3128
    %v4610 = vunpack.c.h.b16 %v3128
    %v4611 = vunpack.c.l.b16 %v3129
    %v4612 = vunpack.c.h.b16 %v3129
    %v4613 = vunpack.c.l.b16 %v3130
    %v4614 = vunpack.c.h.b16 %v3130
    %v4615 = vunpack.c.l.b16 %v3131
    %v4616 = vunpack.c.h.b16 %v3131
    %v4617 = vunpack.c.l.b16 %v3132
    %v4618 = vunpack.c.h.b16 %v3132
    %v4619 = vunpack.c.l.b16 %v3133
    %v4620 = vunpack.c.h.b16 %v3133
    %v4621 = vunpack.c.l.b16 %v3134
    %v4622 = vunpack.c.h.b16 %v3134
    %v4623 = vunpack.c.l.b16 %v3135
    %v4624 = vunpack.c.h.b16 %v3135
    %v4625 = vunpack.c.l.b16 %v3136
    %v4626 = vunpack.c.h.b16 %v3136
    %v4627 = vunpack.c.l.b16 %v3137
    %v4628 = vunpack.c.h.b16 %v3137
    %v4629 = vunpack.c.l.b16 %v3138
    %v4630 = vunpack.c.h.b16 %v3138
    %v4631 = vunpack.c.l.b16 %v3139
    %v4632 = vunpack.c.h.b16 %v3139
    %v4633 = vunpack.c.l.b16 %v3140
    %v4634 = vunpack.c.h.b16 %v3140
    %v4635 = vunpack.c.l.b16 %v3141
    %v4636 = vunpack.c.h.b16 %v3141
    %v4637 = vunpack.c.l.b16 %v3142
    %v4638 = vunpack.c.h.b16 %v3142
    %v4639 = vunpack.c.l.b16 %v3143
    %v4640 = vunpack.c.h.b16 %v3143
    %v4641 = vunpack.c.l.b16 %v3144
    %v4642 = vunpack.c.h.b16 %v3144
    %v4643 = vunpack.c.l.b16 %v3145
    %v4644 = vunpack.c.h.b16 %v3145
    %v4645 = vunpack.c.l.b16 %v3146
    %v4646 = vunpack.c.h.b16 %v3146
    %v4647 = vunpack.c.l.b16 %v3147
    %v4648 = vunpack.c.h.b16 %v3147
    %v4649 = vunpack.c.l.b16 %v3148
    %v4650 = vunpack.c.h.b16 %v3148
    %v4651 = vunpack.c.l.b16 %v3149
    %v4652 = vunpack.c.h.b16 %v3149
    %v4653 = vunpack.c.l.b16 %v3150
    %v4654 = vunpack.c.h.b16 %v3150
    %v4655 = vunpack.c.l.b16 %v3151
    %v4656 = vunpack.c.h.b16 %v3151
    %v4657 = vunpack.c.l.b16 %v3152
    %v4658 = vunpack.c.h.b16 %v3152
    %v4659 = vunpack.c.l.b16 %v3153
    %v4660 = vunpack.c.h.b16 %v3153
    %v4661 = vunpack.c.l.b16 %v3154
    %v4662 = vunpack.c.h.b16 %v3154
    %v4663 = vunpack.c.l.b16 %v3155
    %v4664 = vunpack.c.h.b16 %v3155
    %v4665 = vunpack.c.l.b16 %v3156
    %v4666 = vunpack.c.h.b16 %v3156
    %v4667 = vunpack.c.l.b16 %v3157
    %v4668 = vunpack.c.h.b16 %v3157
    %v4669 = vunpack.c.l.b16 %v3158
    %v4670 = vunpack.c.h.b16 %v3158
    %v4671 = vunpack.c.l.b16 %v3159
    %v4672 = vunpack.c.h.b16 %v3159
    %v4673 = vunpack.c.l.b16 %v3160
    %v4674 = vunpack.c.h.b16 %v3160
    %v4675 = vunpack.c.l.b16 %v3161
    %v4676 = vunpack.c.h.b16 %v3161
    %v4677 = vunpack.c.l.b16 %v3162
    %v4678 = vunpack.c.h.b16 %v3162
    %v4679 = vunpack.c.l.b16 %v3163
    %v4680 = vunpack.c.h.b16 %v3163
    %v4681 = vunpack.c.l.b16 %v3164
    %v4682 = vunpack.c.h.b16 %v3164
    %v4683 = vunpack.c.l.b16 %v3165
    %v4684 = vunpack.c.h.b16 %v3165
    %v4685 = vunpack.c.l.b16 %v3166
    %v4686 = vunpack.c.h.b16 %v3166
    %v4687 = vunpack.c.l.b16 %v3167
    %v4688 = vunpack.c.h.b16 %v3167
    %v4689 = vunpack.c.l.b16 %v3168
    %v4690 = vunpack.c.h.b16 %v3168
    %v4691 = vunpack.c.l.b16 %v3169
    %v4692 = vunpack.c.h.b16 %v3169
    %v4693 = vunpack.c.l.b16 %v3170
    %v4694 = vunpack.c.h.b16 %v3170
    %v4695 = vunpack.c.l.b16 %v3171
    %v4696 = vunpack.c.h.b16 %v3171
    %v4697 = vunpack.c.l.b16 %v3172
    %v4698 = vunpack.c.h.b16 %v3172
    %v4699 = vunpack.c.l.b16 %v3173
    %v4700 = vunpack.c.h.b16 %v3173
    %v4701 = vunpack.c.l.b16 %v3174
    %v4702 = vunpack.c.h.b16 %v3174
    %v4703 = vunpack.c.l.b16 %v3175
    %v4704 = vunpack.c.h.b16 %v3175
    %v4705 = vunpack.c.l.b16 %v3176
    %v4706 = vunpack.c.h.b16 %v3176
    %v4707 = vunpack.c.l.b16 %v3177
    %v4708 = vunpack.c.h.b16 %v3177
    %v4709 = vunpack.c.l.b16 %v3178
    %v4710 = vunpack.c.h.b16 %v3178
    %v4711 = vunpack.c.l.b16 %v3179
    %v4712 = vunpack.c.h.b16 %v3179
    %v4713 = vunpack.c.l.b16 %v3180
    %v4714 = vunpack.c.h.b16 %v3180
    %v4715 = vunpack.c.l.b16 %v3181
    %v4716 = vunpack.c.h.b16 %v3181
    %v4717 = vunpack.c.l.b16 %v3182
    %v4718 = vunpack.c.h.b16 %v3182
    %v4719 = vunpack.c.l.b16 %v3183
    %v4720 = vunpack.c.h.b16 %v3183
    %v4721 = vunpack.c.l.b16 %v3184
    %v4722 = vunpack.c.h.b16 %v3184
    %v4723 = vunpack.c.l.b16 %v3185
    %v4724 = vunpack.c.h.b16 %v3185
    %v4725 = vunpack.c.l.b16 %v3186
    %v4726 = vunpack.c.h.b16 %v3186
    %v4727 = vunpack.c.l.b16 %v3187
    %v4728 = vunpack.c.h.b16 %v3187
    %v4729 = vunpack.c.l.b16 %v3188
    %v4730 = vunpack.c.h.b16 %v3188
    %v4731 = vunpack.c.l.b16 %v3189
    %v4732 = vunpack.c.h.b16 %v3189
    %v4733 = vunpack.c.l.b16 %v3190
    %v4734 = vunpack.c.h.b16 %v3190
    %v4735 = vunpack.c.l.b16 %v3191
    %v4736 = vunpack.c.h.b16 %v3191
    %v4737 = vunpack.c.l.b16 %v3192
    %v4738 = vunpack.c.h.b16 %v3192
    %v4739 = vunpack.c.l.b16 %v3193
    %v4740 = vunpack.c.h.b16 %v3193
    %v4741 = vunpack.c.l.b16 %v3194
    %v4742 = vunpack.c.h.b16 %v3194
    %v4743 = vunpack.c.l.b16 %v3195
    %v4744 = vunpack.c.h.b16 %v3195
    %v4745 = vunpack.c.l.b16 %v3196
    %v4746 = vunpack.c.h.b16 %v3196
    %v4747 = vunpack.c.l.b16 %v3197
    %v4748 = vunpack.c.h.b16 %v3197
    %v4749 = vunpack.c.l.b16 %v3198
    %v4750 = vunpack.c.h.b16 %v3198
    %v4751 = vunpack.c.l.b16 %v3199
    %v4752 = vunpack.c.h.b16 %v3199
    %v4753 = vunpack.c.l.b16 %v3200
    %v4754 = vunpack.c.h.b16 %v3200
    %v4755 = vunpack.c.l.b16 %v3201
    %v4756 = vunpack.c.h.b16 %v3201
    %v4757 = vunpack.c.l.b16 %v3202
    %v4758 = vunpack.c.h.b16 %v3202
    %v4759 = vunpack.c.l.b16 %v3203
    %v4760 = vunpack.c.h.b16 %v3203
    %v4761 = vunpack.c.l.b16 %v3204
    %v4762 = vunpack.c.h.b16 %v3204
    %v4763 = vunpack.c.l.b16 %v3205
    %v4764 = vunpack.c.h.b16 %v3205
    %v4765 = vunpack.c.l.b16 %v3206
    %v4766 = vunpack.c.h.b16 %v3206
    %v4767 = vunpack.c.l.b16 %v3207
    %v4768 = vunpack.c.h.b16 %v3207
    %v4769 = vunpack.c.l.b16 %v3208
    %v4770 = vunpack.c.h.b16 %v3208
    %v4771 = vunpack.c.l.b16 %v3209
    %v4772 = vunpack.c.h.b16 %v3209
    %v4773 = vunpack.c.l.b16 %v3210
    %v4774 = vunpack.c.h.b16 %v3210
    %v4775 = vunpack.c.l.b16 %v3211
    %v4776 = vunpack.c.h.b16 %v3211
    %v4777 = vunpack.c.l.b16 %v3212
    %v4778 = vunpack.c.h.b16 %v3212
    %v4779 = vunpack.c.l.b16 %v3213
    %v4780 = vunpack.c.h.b16 %v3213
    %v4781 = vunpack.c.l.b16 %v3214
    %v4782 = vunpack.c.h.b16 %v3214
    %v4783 = vunpack.c.l.b16 %v3215
    %v4784 = vunpack.c.h.b16 %v3215
    %v4785 = vunpack.c.l.b16 %v3216
    %v4786 = vunpack.c.h.b16 %v3216
    %v4787 = vunpack.c.l.b16 %v3217
    %v4788 = vunpack.c.h.b16 %v3217
    %v4789 = vunpack.c.l.b16 %v3218
    %v4790 = vunpack.c.h.b16 %v3218
    %v4791 = vunpack.c.l.b16 %v3219
    %v4792 = vunpack.c.h.b16 %v3219
    %v4793 = vunpack.c.l.b16 %v3220
    %v4794 = vunpack.c.h.b16 %v3220
    %v4795 = vunpack.c.l.b16 %v3221
    %v4796 = vunpack.c.h.b16 %v3221
    %v4797 = vunpack.c.l.b16 %v3222
    %v4798 = vunpack.c.h.b16 %v3222
    %v4799 = vunpack.c.l.b16 %v3223
    %v4800 = vunpack.c.h.b16 %v3223
    %v4801 = vunpack.c.l.b16 %v3224
    %v4802 = vunpack.c.h.b16 %v3224
    %v4803 = vpack.c.b16 %v3787, %v3779
    %v4804 = vpack.c.b16 %v3788, %v3780
    %v4805 = vpack.c.b16 %v3789, %v3781
    %v4806 = vpack.c.b16 %v3790, %v3782
    %v4807 = vpack.c.b16 %v3791, %v3783
    %v4808 = vpack.c.b16 %v3792, %v3784
    %v4809 = vpack.c.b16 %v3793, %v3785
    %v4810 = vpack.c.b16 %v3794, %v3786
    %v4811 = vpack.c.b16 %v3803, %v3795
    %v4812 = vpack.c.b16 %v3804, %v3796
    %v4813 = vpack.c.b16 %v3805, %v3797
    %v4814 = vpack.c.b16 %v3806, %v3798
    %v4815 = vpack.c.b16 %v3807, %v3799
    %v4816 = vpack.c.b16 %v3808, %v3800
    %v4817 = vpack.c.b16 %v3809, %v3801
    %v4818 = vpack.c.b16 %v3810, %v3802
    %v4819 = vpack.c.b16 %v3819, %v3811
    %v4820 = vpack.c.b16 %v3820, %v3812
    %v4821 = vpack.c.b16 %v3821, %v3813
    %v4822 = vpack.c.b16 %v3822, %v3814
    %v4823 = vpack.c.b16 %v3823, %v3815
    %v4824 = vpack.c.b16 %v3824, %v3816
    %v4825 = vpack.c.b16 %v3825, %v3817
    %v4826 = vpack.c.b16 %v3826, %v3818
    %v4827 = vpack.c.b16 %v3835, %v3827
    %v4828 = vpack.c.b16 %v3836, %v3828
    %v4829 = vpack.c.b16 %v3837, %v3829
    %v4830 = vpack.c.b16 %v3838, %v3830
    %v4831 = vpack.c.b16 %v3839, %v3831
    %v4832 = vpack.c.b16 %v3840, %v3832
    %v4833 = vpack.c.b16 %v3841, %v3833
    %v4834 = vpack.c.b16 %v3842, %v3834
    %v4835 = vpack.c.b16 %v3851, %v3843
    %v4836 = vpack.c.b16 %v3852, %v3844
    %v4837 = vpack.c.b16 %v3853, %v3845
    %v4838 = vpack.c.b16 %v3854, %v3846
    %v4839 = vpack.c.b16 %v3855, %v3847
    %v4840 = vpack.c.b16 %v3856, %v3848
    %v4841 = vpack.c.b16 %v3857, %v3849
    %v4842 = vpack.c.b16 %v3858, %v3850
    %v4843 = vpack.c.b16 %v3867, %v3859
    %v4844 = vpack.c.b16 %v3868, %v3860
    %v4845 = vpack.c.b16 %v3869, %v3861
    %v4846 = vpack.c.b16 %v3870, %v3862
    %v4847 = vpack.c.b16 %v3871, %v3863
    %v4848 = vpack.c.b16 %v3872, %v3864
    %v4849 = vpack.c.b16 %v3873, %v3865
    %v4850 = vpack.c.b16 %v3874, %v3866
    %v4851 = vpack.c.b16 %v3883, %v3875
    %v4852 = vpack.c.b16 %v3884, %v3876
    %v4853 = vpack.c.b16 %v3885, %v3877
    %v4854 = vpack.c.b16 %v3886, %v3878
    %v4855 = vpack.c.b16 %v3887, %v3879
    %v4856 = vpack.c.b16 %v3888, %v3880
    %v4857 = vpack.c.b16 %v3889, %v3881
    %v4858 = vpack.c.b16 %v3890, %v3882
    %v4859 = vpack.c.b16 %v3899, %v3891
    %v4860 = vpack.c.b16 %v3900, %v3892
    %v4861 = vpack.c.b16 %v3901, %v3893
    %v4862 = vpack.c.b16 %v3902, %v3894
    %v4863 = vpack.c.b16 %v3903, %v3895
    %v4864 = vpack.c.b16 %v3904, %v3896
    %v4865 = vpack.c.b16 %v3905, %v3897
    %v4866 = vpack.c.b16 %v3906, %v3898
    %v4867 = vpack.c.b16 %v3915, %v3907
    %v4868 = vpack.c.b16 %v3916, %v3908
    %v4869 = vpack.c.b16 %v3917, %v3909
    %v4870 = vpack.c.b16 %v3918, %v3910
    %v4871 = vpack.c.b16 %v3919, %v3911
    %v4872 = vpack.c.b16 %v3920, %v3912
    %v4873 = vpack.c.b16 %v3921, %v3913
    %v4874 = vpack.c.b16 %v3922, %v3914
    %v4875 = vpack.c.b16 %v3931, %v3923
    %v4876 = vpack.c.b16 %v3932, %v3924
    %v4877 = vpack.c.b16 %v3933, %v3925
    %v4878 = vpack.c.b16 %v3934, %v3926
    %v4879 = vpack.c.b16 %v3935, %v3927
    %v4880 = vpack.c.b16 %v3936, %v3928
    %v4881 = vpack.c.b16 %v3937, %v3929
    %v4882 = vpack.c.b16 %v3938, %v3930
    %v4883 = vpack.c.b16 %v3947, %v3939
    %v4884 = vpack.c.b16 %v3948, %v3940
    %v4885 = vpack.c.b16 %v3949, %v3941
    %v4886 = vpack.c.b16 %v3950, %v3942
    %v4887 = vpack.c.b16 %v3951, %v3943
    %v4888 = vpack.c.b16 %v3952, %v3944
    %v4889 = vpack.c.b16 %v3953, %v3945
    %v4890 = vpack.c.b16 %v3954, %v3946
    %v4891 = vpack.c.b16 %v3963, %v3955
    %v4892 = vpack.c.b16 %v3964, %v3956
    %v4893 = vpack.c.b16 %v3965, %v3957
    %v4894 = vpack.c.b16 %v3966, %v3958
    %v4895 = vpack.c.b16 %v3967, %v3959
    %v4896 = vpack.c.b16 %v3968, %v3960
    %v4897 = vpack.c.b16 %v3969, %v3961
    %v4898 = vpack.c.b16 %v3970, %v3962
    %v4899 = vpack.c.b16 %v3979, %v3971
    %v4900 = vpack.c.b16 %v3980, %v3972
    %v4901 = vpack.c.b16 %v3981, %v3973
    %v4902 = vpack.c.b16 %v3982, %v3974
    %v4903 = vpack.c.b16 %v3983, %v3975
    %v4904 = vpack.c.b16 %v3984, %v3976
    %v4905 = vpack.c.b16 %v3985, %v3977
    %v4906 = vpack.c.b16 %v3986, %v3978
    %v4907 = vpack.c.b16 %v3995, %v3987
    %v4908 = vpack.c.b16 %v3996, %v3988
    %v4909 = vpack.c.b16 %v3997, %v3989
    %v4910 = vpack.c.b16 %v3998, %v3990
    %v4911 = vpack.c.b16 %v3999, %v3991
    %v4912 = vpack.c.b16 %v4000, %v3992
    %v4913 = vpack.c.b16 %v4001, %v3993
    %v4914 = vpack.c.b16 %v4002, %v3994
    %v4915 = vpack.c.b16 %v4011, %v4003
    %v4916 = vpack.c.b16 %v4012, %v4004
    %v4917 = vpack.c.b16 %v4013, %v4005
    %v4918 = vpack.c.b16 %v4014, %v4006
    %v4919 = vpack.c.b16 %v4015, %v4007
    %v4920 = vpack.c.b16 %v4016, %v4008
    %v4921 = vpack.c.b16 %v4017, %v4009
    %v4922 = vpack.c.b16 %v4018, %v4010
    %v4923 = vpack.c.b16 %v4027, %v4019
    %v4924 = vpack.c.b16 %v4028, %v4020
    %v4925 = vpack.c.b16 %v4029, %v4021
    %v4926 = vpack.c.b16 %v4030, %v4022
    %v4927 = vpack.c.b16 %v4031, %v4023
    %v4928 = vpack.c.b16 %v4032, %v4024
    %v4929 = vpack.c.b16 %v4033, %v4025
    %v4930 = vpack.c.b16 %v4034, %v4026
    %v4931 = vpack.c.b16 %v4043, %v4035
    %v4932 = vpack.c.b16 %v4044, %v4036
    %v4933 = vpack.c.b16 %v4045, %v4037
    %v4934 = vpack.c.b16 %v4046, %v4038
    %v4935 = vpack.c.b16 %v4047, %v4039
    %v4936 = vpack.c.b16 %v4048, %v4040
    %v4937 = vpack.c.b16 %v4049, %v4041
    %v4938 = vpack.c.b16 %v4050, %v4042
    %v4939 = vpack.c.b16 %v4059, %v4051
    %v4940 = vpack.c.b16 %v4060, %v4052
    %v4941 = vpack.c.b16 %v4061, %v4053
    %v4942 = vpack.c.b16 %v4062, %v4054
    %v4943 = vpack.c.b16 %v4063, %v4055
    %v4944 = vpack.c.b16 %v4064, %v4056
    %v4945 = vpack.c.b16 %v4065, %v4057
    %v4946 = vpack.c.b16 %v4066, %v4058
    %v4947 = vpack.c.b16 %v4075, %v4067
    %v4948 = vpack.c.b16 %v4076, %v4068
    %v4949 = vpack.c.b16 %v4077, %v4069
    %v4950 = vpack.c.b16 %v4078, %v4070
    %v4951 = vpack.c.b16 %v4079, %v4071
    %v4952 = vpack.c.b16 %v4080, %v4072
    %v4953 = vpack.c.b16 %v4081, %v4073
    %v4954 = vpack.c.b16 %v4082, %v4074
    %v4955 = vpack.c.b16 %v4091, %v4083
    %v4956 = vpack.c.b16 %v4092, %v4084
    %v4957 = vpack.c.b16 %v4093, %v4085
    %v4958 = vpack.c.b16 %v4094, %v4086
    %v4959 = vpack.c.b16 %v4095, %v4087
    %v4960 = vpack.c.b16 %v4096, %v4088
    %v4961 = vpack.c.b16 %v4097, %v4089
    %v4962 = vpack.c.b16 %v4098, %v4090
    %v4963 = vpack.c.b16 %v4107, %v4099
    %v4964 = vpack.c.b16 %v4108, %v4100
    %v4965 = vpack.c.b16 %v4109, %v4101
    %v4966 = vpack.c.b16 %v4110, %v4102
    %v4967 = vpack.c.b16 %v4111, %v4103
    %v4968 = vpack.c.b16 %v4112, %v4104
    %v4969 = vpack.c.b16 %v4113, %v4105
    %v4970 = vpack.c.b16 %v4114, %v4106
    %v4971 = vpack.c.b16 %v4123, %v4115
    %v4972 = vpack.c.b16 %v4124, %v4116
    %v4973 = vpack.c.b16 %v4125, %v4117
    %v4974 = vpack.c.b16 %v4126, %v4118
    %v4975 = vpack.c.b16 %v4127, %v4119
    %v4976 = vpack.c.b16 %v4128, %v4120
    %v4977 = vpack.c.b16 %v4129, %v4121
    %v4978 = vpack.c.b16 %v4130, %v4122
    %v4979 = vpack.c.b16 %v4139, %v4131
    %v4980 = vpack.c.b16 %v4140, %v4132
    %v4981 = vpack.c.b16 %v4141, %v4133
    %v4982 = vpack.c.b16 %v4142, %v4134
    %v4983 = vpack.c.b16 %v4143, %v4135
    %v4984 = vpack.c.b16 %v4144, %v4136
    %v4985 = vpack.c.b16 %v4145, %v4137
    %v4986 = vpack.c.b16 %v4146, %v4138
    %v4987 = vpack.c.b16 %v4155, %v4147
    %v4988 = vpack.c.b16 %v4156, %v4148
    %v4989 = vpack.c.b16 %v4157, %v4149
    %v4990 = vpack.c.b16 %v4158, %v4150
    %v4991 = vpack.c.b16 %v4159, %v4151
    %v4992 = vpack.c.b16 %v4160, %v4152
    %v4993 = vpack.c.b16 %v4161, %v4153
    %v4994 = vpack.c.b16 %v4162, %v4154
    %v4995 = vpack.c.b16 %v4171, %v4163
    %v4996 = vpack.c.b16 %v4172, %v4164
    %v4997 = vpack.c.b16 %v4173, %v4165
    %v4998 = vpack.c.b16 %v4174, %v4166
    %v4999 = vpack.c.b16 %v4175, %v4167
    %v5000 = vpack.c.b16 %v4176, %v4168
    %v5001 = vpack.c.b16 %v4177, %v4169
    %v5002 = vpack.c.b16 %v4178, %v4170
    %v5003 = vpack.c.b16 %v4187, %v4179
    %v5004 = vpack.c.b16 %v4188, %v4180
    %v5005 = vpack.c.b16 %v4189, %v4181
    %v5006 = vpack.c.b16 %v4190, %v4182
    %v5007 = vpack.c.b16 %v4191, %v4183
    %v5008 = vpack.c.b16 %v4192, %v4184
    %v5009 = vpack.c.b16 %v4193, %v4185
    %v5010 = vpack.c.b16 %v4194, %v4186
    %v5011 = vpack.c.b16 %v4203, %v4195
    %v5012 = vpack.c.b16 %v4204, %v4196
    %v5013 = vpack.c.b16 %v4205, %v4197
    %v5014 = vpack.c.b16 %v4206, %v4198
    %v5015 = vpack.c.b16 %v4207, %v4199
    %v5016 = vpack.c.b16 %v4208, %v4200
    %v5017 = vpack.c.b16 %v4209, %v4201
    %v5018 = vpack.c.b16 %v4210, %v4202
    %v5019 = vpack.c.b16 %v4219, %v4211
    %v5020 = vpack.c.b16 %v4220, %v4212
    %v5021 = vpack.c.b16 %v4221, %v4213
    %v5022 = vpack.c.b16 %v4222, %v4214
    %v5023 = vpack.c.b16 %v4223, %v4215
    %v5024 = vpack.c.b16 %v4224, %v4216
    %v5025 = vpack.c.b16 %v4225, %v4217
    %v5026 = vpack.c.b16 %v4226, %v4218
    %v5027 = vpack.c.b16 %v4235, %v4227
    %v5028 = vpack.c.b16 %v4236, %v4228
    %v5029 = vpack.c.b16 %v4237, %v4229
    %v5030 = vpack.c.b16 %v4238, %v4230
    %v5031 = vpack.c.b16 %v4239, %v4231
    %v5032 = vpack.c.b16 %v4240, %v4232
    %v5033 = vpack.c.b16 %v4241, %v4233
    %v5034 = vpack.c.b16 %v4242, %v4234
    %v5035 = vpack.c.b16 %v4251, %v4243
    %v5036 = vpack.c.b16 %v4252, %v4244
    %v5037 = vpack.c.b16 %v4253, %v4245
    %v5038 = vpack.c.b16 %v4254, %v4246
    %v5039 = vpack.c.b16 %v4255, %v4247
    %v5040 = vpack.c.b16 %v4256, %v4248
    %v5041 = vpack.c.b16 %v4257, %v4249
    %v5042 = vpack.c.b16 %v4258, %v4250
    %v5043 = vpack.c.b16 %v4267, %v4259
    %v5044 = vpack.c.b16 %v4268, %v4260
    %v5045 = vpack.c.b16 %v4269, %v4261
    %v5046 = vpack.c.b16 %v4270, %v4262
    %v5047 = vpack.c.b16 %v4271, %v4263
    %v5048 = vpack.c.b16 %v4272, %v4264
    %v5049 = vpack.c.b16 %v4273, %v4265
    %v5050 = vpack.c.b16 %v4274, %v4266
    %v5051 = vpack.c.b16 %v4283, %v4275
    %v5052 = vpack.c.b16 %v4284, %v4276
    %v5053 = vpack.c.b16 %v4285, %v4277
    %v5054 = vpack.c.b16 %v4286, %v4278
    %v5055 = vpack.c.b16 %v4287, %v4279
    %v5056 = vpack.c.b16 %v4288, %v4280
    %v5057 = vpack.c.b16 %v4289, %v4281
    %v5058 = vpack.c.b16 %v4290, %v4282
    %v5059 = vpack.c.b16 %v4299, %v4291
    %v5060 = vpack.c.b16 %v4300, %v4292
    %v5061 = vpack.c.b16 %v4301, %v4293
    %v5062 = vpack.c.b16 %v4302, %v4294
    %v5063 = vpack.c.b16 %v4303, %v4295
    %v5064 = vpack.c.b16 %v4304, %v4296
    %v5065 = vpack.c.b16 %v4305, %v4297
    %v5066 = vpack.c.b16 %v4306, %v4298
    %v5067 = vpack.c.b16 %v4315, %v4307
    %v5068 = vpack.c.b16 %v4316, %v4308
    %v5069 = vpack.c.b16 %v4317, %v4309
    %v5070 = vpack.c.b16 %v4318, %v4310
    %v5071 = vpack.c.b16 %v4319, %v4311
    %v5072 = vpack.c.b16 %v4320, %v4312
    %v5073 = vpack.c.b16 %v4321, %v4313
    %v5074 = vpack.c.b16 %v4322, %v4314
    %v5075 = vpack.c.b16 %v4331, %v4323
    %v5076 = vpack.c.b16 %v4332, %v4324
    %v5077 = vpack.c.b16 %v4333, %v4325
    %v5078 = vpack.c.b16 %v4334, %v4326
    %v5079 = vpack.c.b16 %v4335, %v4327
    %v5080 = vpack.c.b16 %v4336, %v4328
    %v5081 = vpack.c.b16 %v4337, %v4329
    %v5082 = vpack.c.b16 %v4338, %v4330
    %v5083 = vpack.c.b16 %v4347, %v4339
    %v5084 = vpack.c.b16 %v4348, %v4340
    %v5085 = vpack.c.b16 %v4349, %v4341
    %v5086 = vpack.c.b16 %v4350, %v4342
    %v5087 = vpack.c.b16 %v4351, %v4343
    %v5088 = vpack.c.b16 %v4352, %v4344
    %v5089 = vpack.c.b16 %v4353, %v4345
    %v5090 = vpack.c.b16 %v4354, %v4346
    %v5091 = vpack.c.b16 %v4363, %v4355
    %v5092 = vpack.c.b16 %v4364, %v4356
    %v5093 = vpack.c.b16 %v4365, %v4357
    %v5094 = vpack.c.b16 %v4366, %v4358
    %v5095 = vpack.c.b16 %v4367, %v4359
    %v5096 = vpack.c.b16 %v4368, %v4360
    %v5097 = vpack.c.b16 %v4369, %v4361
    %v5098 = vpack.c.b16 %v4370, %v4362
    %v5099 = vpack.c.b16 %v4379, %v4371
    %v5100 = vpack.c.b16 %v4380, %v4372
    %v5101 = vpack.c.b16 %v4381, %v4373
    %v5102 = vpack.c.b16 %v4382, %v4374
    %v5103 = vpack.c.b16 %v4383, %v4375
    %v5104 = vpack.c.b16 %v4384, %v4376
    %v5105 = vpack.c.b16 %v4385, %v4377
    %v5106 = vpack.c.b16 %v4386, %v4378
    %v5107 = vpack.c.b16 %v4395, %v4387
    %v5108 = vpack.c.b16 %v4396, %v4388
    %v5109 = vpack.c.b16 %v4397, %v4389
    %v5110 = vpack.c.b16 %v4398, %v4390
    %v5111 = vpack.c.b16 %v4399, %v4391
    %v5112 = vpack.c.b16 %v4400, %v4392
    %v5113 = vpack.c.b16 %v4401, %v4393
    %v5114 = vpack.c.b16 %v4402, %v4394
    %v5115 = vpack.c.b16 %v4411, %v4403
    %v5116 = vpack.c.b16 %v4412, %v4404
    %v5117 = vpack.c.b16 %v4413, %v4405
    %v5118 = vpack.c.b16 %v4414, %v4406
    %v5119 = vpack.c.b16 %v4415, %v4407
    %v5120 = vpack.c.b16 %v4416, %v4408
    %v5121 = vpack.c.b16 %v4417, %v4409
    %v5122 = vpack.c.b16 %v4418, %v4410
    %v5123 = vpack.c.b16 %v4427, %v4419
    %v5124 = vpack.c.b16 %v4428, %v4420
    %v5125 = vpack.c.b16 %v4429, %v4421
    %v5126 = vpack.c.b16 %v4430, %v4422
    %v5127 = vpack.c.b16 %v4431, %v4423
    %v5128 = vpack.c.b16 %v4432, %v4424
    %v5129 = vpack.c.b16 %v4433, %v4425
    %v5130 = vpack.c.b16 %v4434, %v4426
    %v5131 = vpack.c.b16 %v4443, %v4435
    %v5132 = vpack.c.b16 %v4444, %v4436
    %v5133 = vpack.c.b16 %v4445, %v4437
    %v5134 = vpack.c.b16 %v4446, %v4438
    %v5135 = vpack.c.b16 %v4447, %v4439
    %v5136 = vpack.c.b16 %v4448, %v4440
    %v5137 = vpack.c.b16 %v4449, %v4441
    %v5138 = vpack.c.b16 %v4450, %v4442
    %v5139 = vpack.c.b16 %v4459, %v4451
    %v5140 = vpack.c.b16 %v4460, %v4452
    %v5141 = vpack.c.b16 %v4461, %v4453
    %v5142 = vpack.c.b16 %v4462, %v4454
    %v5143 = vpack.c.b16 %v4463, %v4455
    %v5144 = vpack.c.b16 %v4464, %v4456
    %v5145 = vpack.c.b16 %v4465, %v4457
    %v5146 = vpack.c.b16 %v4466, %v4458
    %v5147 = vpack.c.b16 %v4475, %v4467
    %v5148 = vpack.c.b16 %v4476, %v4468
    %v5149 = vpack.c.b16 %v4477, %v4469
    %v5150 = vpack.c.b16 %v4478, %v4470
    %v5151 = vpack.c.b16 %v4479, %v4471
    %v5152 = vpack.c.b16 %v4480, %v4472
    %v5153 = vpack.c.b16 %v4481, %v4473
    %v5154 = vpack.c.b16 %v4482, %v4474
    %v5155 = vpack.c.b16 %v4491, %v4483
    %v5156 = vpack.c.b16 %v4492, %v4484
    %v5157 = vpack.c.b16 %v4493, %v4485
    %v5158 = vpack.c.b16 %v4494, %v4486
    %v5159 = vpack.c.b16 %v4495, %v4487
    %v5160 = vpack.c.b16 %v4496, %v4488
    %v5161 = vpack.c.b16 %v4497, %v4489
    %v5162 = vpack.c.b16 %v4498, %v4490
    %v5163 = vpack.c.b16 %v4507, %v4499
    %v5164 = vpack.c.b16 %v4508, %v4500
    %v5165 = vpack.c.b16 %v4509, %v4501
    %v5166 = vpack.c.b16 %v4510, %v4502
    %v5167 = vpack.c.b16 %v4511, %v4503
    %v5168 = vpack.c.b16 %v4512, %v4504
    %v5169 = vpack.c.b16 %v4513, %v4505
    %v5170 = vpack.c.b16 %v4514, %v4506
    %v5171 = vpack.c.b16 %v4523, %v4515
    %v5172 = vpack.c.b16 %v4524, %v4516
    %v5173 = vpack.c.b16 %v4525, %v4517
    %v5174 = vpack.c.b16 %v4526, %v4518
    %v5175 = vpack.c.b16 %v4527, %v4519
    %v5176 = vpack.c.b16 %v4528, %v4520
    %v5177 = vpack.c.b16 %v4529, %v4521
    %v5178 = vpack.c.b16 %v4530, %v4522
    %v5179 = vpack.c.b16 %v4539, %v4531
    %v5180 = vpack.c.b16 %v4540, %v4532
    %v5181 = vpack.c.b16 %v4541, %v4533
    %v5182 = vpack.c.b16 %v4542, %v4534
    %v5183 = vpack.c.b16 %v4543, %v4535
    %v5184 = vpack.c.b16 %v4544, %v4536
    %v5185 = vpack.c.b16 %v4545, %v4537
    %v5186 = vpack.c.b16 %v4546, %v4538
    %v5187 = vpack.c.b16 %v4555, %v4547
    %v5188 = vpack.c.b16 %v4556, %v4548
    %v5189 = vpack.c.b16 %v4557, %v4549
    %v5190 = vpack.c.b16 %v4558, %v4550
    %v5191 = vpack.c.b16 %v4559, %v4551
    %v5192 = vpack.c.b16 %v4560, %v4552
    %v5193 = vpack.c.b16 %v4561, %v4553
    %v5194 = vpack.c.b16 %v4562, %v4554
    %v5195 = vpack.c.b16 %v4571, %v4563
    %v5196 = vpack.c.b16 %v4572, %v4564
    %v5197 = vpack.c.b16 %v4573, %v4565
    %v5198 = vpack.c.b16 %v4574, %v4566
    %v5199 = vpack.c.b16 %v4575, %v4567
    %v5200 = vpack.c.b16 %v4576, %v4568
    %v5201 = vpack.c.b16 %v4577, %v4569
    %v5202 = vpack.c.b16 %v4578, %v4570
    %v5203 = vpack.c.b16 %v4587, %v4579
    %v5204 = vpack.c.b16 %v4588, %v4580
    %v5205 = vpack.c.b16 %v4589, %v4581
    %v5206 = vpack.c.b16 %v4590, %v4582
    %v5207 = vpack.c.b16 %v4591, %v4583
    %v5208 = vpack.c.b16 %v4592, %v4584
    %v5209 = vpack.c.b16 %v4593, %v4585
    %v5210 = vpack.c.b16 %v4594, %v4586
    %v5211 = vpack.c.b16 %v4603, %v4595
    %v5212 = vpack.c.b16 %v4604, %v4596
    %v5213 = vpack.c.b16 %v4605, %v4597
    %v5214 = vpack.c.b16 %v4606, %v4598
    %v5215 = vpack.c.b16 %v4607, %v4599
    %v5216 = vpack.c.b16 %v4608, %v4600
    %v5217 = vpack.c.b16 %v4609, %v4601
    %v5218 = vpack.c.b16 %v4610, %v4602
    %v5219 = vpack.c.b16 %v4619, %v4611
    %v5220 = vpack.c.b16 %v4620, %v4612
    %v5221 = vpack.c.b16 %v4621, %v4613
    %v5222 = vpack.c.b16 %v4622, %v4614
    %v5223 = vpack.c.b16 %v4623, %v4615
    %v5224 = vpack.c.b16 %v4624, %v4616
    %v5225 = vpack.c.b16 %v4625, %v4617
    %v5226 = vpack.c.b16 %v4626, %v4618
    %v5227 = vpack.c.b16 %v4635, %v4627
    %v5228 = vpack.c.b16 %v4636, %v4628
    %v5229 = vpack.c.b16 %v4637, %v4629
    %v5230 = vpack.c.b16 %v4638, %v4630
    %v5231 = vpack.c.b16 %v4639, %v4631
    %v5232 = vpack.c.b16 %v4640, %v4632
    %v5233 = vpack.c.b16 %v4641, %v4633
    %v5234 = vpack.c.b16 %v4642, %v4634
    %v5235 = vpack.c.b16 %v4651, %v4643
    %v5236 = vpack.c.b16 %v4652, %v4644
    %v5237 = vpack.c.b16 %v4653, %v4645
    %v5238 = vpack.c.b16 %v4654, %v4646
    %v5239 = vpack.c.b16 %v4655, %v4647
    %v5240 = vpack.c.b16 %v4656, %v4648
    %v5241 = vpack.c.b16 %v4657, %v4649
    %v5242 = vpack.c.b16 %v4658, %v4650
    %v5243 = vpack.c.b16 %v4667, %v4659
    %v5244 = vpack.c.b16 %v4668, %v4660
    %v5245 = vpack.c.b16 %v4669, %v4661
    %v5246 = vpack.c.b16 %v4670, %v4662
    %v5247 = vpack.c.b16 %v4671, %v4663
    %v5248 = vpack.c.b16 %v4672, %v4664
    %v5249 = vpack.c.b16 %v4673, %v4665
    %v5250 = vpack.c.b16 %v4674, %v4666
    %v5251 = vpack.c.b16 %v4683, %v4675
    %v5252 = vpack.c.b16 %v4684, %v4676
    %v5253 = vpack.c.b16 %v4685, %v4677
    %v5254 = vpack.c.b16 %v4686, %v4678
    %v5255 = vpack.c.b16 %v4687, %v4679
    %v5256 = vpack.c.b16 %v4688, %v4680
    %v5257 = vpack.c.b16 %v4689, %v4681
    %v5258 = vpack.c.b16 %v4690, %v4682
    %v5259 = vpack.c.b16 %v4699, %v4691
    %v5260 = vpack.c.b16 %v4700, %v4692
    %v5261 = vpack.c.b16 %v4701, %v4693
    %v5262 = vpack.c.b16 %v4702, %v4694
    %v5263 = vpack.c.b16 %v4703, %v4695
    %v5264 = vpack.c.b16 %v4704, %v4696
    %v5265 = vpack.c.b16 %v4705, %v4697
    %v5266 = vpack.c.b16 %v4706, %v4698
    %v5267 = vpack.c.b16 %v4715, %v4707
    %v5268 = vpack.c.b16 %v4716, %v4708
    %v5269 = vpack.c.b16 %v4717, %v4709
    %v5270 = vpack.c.b16 %v4718, %v4710
    %v5271 = vpack.c.b16 %v4719, %v4711
    %v5272 = vpack.c.b16 %v4720, %v4712
    %v5273 = vpack.c.b16 %v4721, %v4713
    %v5274 = vpack.c.b16 %v4722, %v4714
    %v5275 = vpack.c.b16 %v4731, %v4723
    %v5276 = vpack.c.b16 %v4732, %v4724
    %v5277 = vpack.c.b16 %v4733, %v4725
    %v5278 = vpack.c.b16 %v4734, %v4726
    %v5279 = vpack.c.b16 %v4735, %v4727
    %v5280 = vpack.c.b16 %v4736, %v4728
    %v5281 = vpack.c.b16 %v4737, %v4729
    %v5282 = vpack.c.b16 %v4738, %v4730
    %v5283 = vpack.c.b16 %v4747, %v4739
    %v5284 = vpack.c.b16 %v4748, %v4740
    %v5285 = vpack.c.b16 %v4749, %v4741
    %v5286 = vpack.c.b16 %v4750, %v4742
    %v5287 = vpack.c.b16 %v4751, %v4743
    %v5288 = vpack.c.b16 %v4752, %v4744
    %v5289 = vpack.c.b16 %v4753, %v4745
    %v5290 = vpack.c.b16 %v4754, %v4746
    %v5291 = vpack.c.b16 %v4763, %v4755
    %v5292 = vpack.c.b16 %v4764, %v4756
    %v5293 = vpack.c.b16 %v4765, %v4757
    %v5294 = vpack.c.b16 %v4766, %v4758
    %v5295 = vpack.c.b16 %v4767, %v4759
    %v5296 = vpack.c.b16 %v4768, %v4760
    %v5297 = vpack.c.b16 %v4769, %v4761
    %v5298 = vpack.c.b16 %v4770, %v4762
    %v5299 = vpack.c.b16 %v4779, %v4771
    %v5300 = vpack.c.b16 %v4780, %v4772
    %v5301 = vpack.c.b16 %v4781, %v4773
    %v5302 = vpack.c.b16 %v4782, %v4774
    %v5303 = vpack.c.b16 %v4783, %v4775
    %v5304 = vpack.c.b16 %v4784, %v4776
    %v5305 = vpack.c.b16 %v4785, %v4777
    %v5306 = vpack.c.b16 %v4786, %v4778
    %v5307 = vpack.c.b16 %v4795, %v4787
    %v5308 = vpack.c.b16 %v4796, %v4788
    %v5309 = vpack.c.b16 %v4797, %v4789
    %v5310 = vpack.c.b16 %v4798, %v4790
    %v5311 = vpack.c.b16 %v4799, %v4791
    %v5312 = vpack.c.b16 %v4800, %v4792
    %v5313 = vpack.c.b16 %v4801, %v4793
    %v5314 = vpack.c.b16 %v4802, %v4794
    %5827 = vmatprep.subr.bf16.mxu0 %v4804
    %5828 = vmatpush1.bf16.msra.mxu0 %v4803
    %5829 = vmatprep.subr.bf16.mxu0 %v4812
    %5830 = vmatpush1.bf16.msra.mxu0 %v4811
    %5831 = vmatprep.subr.bf16.mxu0 %v4820
    %5832 = vmatpush1.bf16.msra.mxu0 %v4819
    %5833 = vmatprep.subr.bf16.mxu0 %v4828
    %5834 = vmatpush1.bf16.msra.mxu0 %v4827
    %5835 = vmatprep.subr.bf16.mxu0 %v4836
    %5836 = vmatpush1.bf16.msra.mxu0 %v4835
    %5837 = vmatprep.subr.bf16.mxu0 %v4844
    %5838 = vmatpush1.bf16.msra.mxu0 %v4843
    %5839 = vmatprep.subr.bf16.mxu0 %v4852
    %5840 = vmatpush1.bf16.msra.mxu0 %v4851
    %5841 = vmatprep.subr.bf16.mxu0 %v4860
    %5842 = vmatpush1.bf16.msra.mxu0 %v4859
    %5843 = vmatprep.subr.bf16.mxu0 %v4868
    %5844 = vmatpush1.bf16.msra.mxu0 %v4867
    %5845 = vmatprep.subr.bf16.mxu0 %v4876
    %5846 = vmatpush1.bf16.msra.mxu0 %v4875
    %5847 = vmatprep.subr.bf16.mxu0 %v4884
    %5848 = vmatpush1.bf16.msra.mxu0 %v4883
    %5849 = vmatprep.subr.bf16.mxu0 %v4892
    %5850 = vmatpush1.bf16.msra.mxu0 %v4891
    %5851 = vmatprep.subr.bf16.mxu0 %v4900
    %5852 = vmatpush1.bf16.msra.mxu0 %v4899
    %5853 = vmatprep.subr.bf16.mxu0 %v4908
    %5854 = vmatpush1.bf16.msra.mxu0 %v4907
    %5855 = vmatprep.subr.bf16.mxu0 %v4916
    %5856 = vmatpush1.bf16.msra.mxu0 %v4915
    %5857 = vmatprep.subr.bf16.mxu0 %v4924
    %5858 = vmatpush1.bf16.msra.mxu0 %v4923
    %5859 = vmatprep.mubr.bf16.mxu0 %v2706
    %5860 = vmatmul.mubr.bf16.gmra.mrb[0].mxu0 %v2705
    %v5861 = vpop.f32.mrb[0].mxu0
    %v5862 = vadd.f32 %v3230, %v5861
    %v5863 = vpop.f32.mrb[0].mxu0
    %v5864 = vadd.f32 %v3234, %v5863
    %v5865 = vpop.f32.mrb[0].mxu0
    %v5866 = vadd.f32 %v3230, %v5865
    %v5867 = vpop.f32.mrb[0].mxu0
    %v5868 = vadd.f32 %v3234, %v5867
    %5869 = vdwg.mxu0
    %5870 = vmatprep.subr.bf16.mxu0 %v4932
    %5871 = vmatpush1.bf16.msra.mxu0 %v4931
    %5872 = vmatprep.subr.bf16.mxu0 %v4940
    %5873 = vmatpush1.bf16.msra.mxu0 %v4939
    %5874 = vmatprep.subr.bf16.mxu0 %v4948
    %5875 = vmatpush1.bf16.msra.mxu0 %v4947
    %5876 = vmatprep.subr.bf16.mxu0 %v4956
    %5877 = vmatpush1.bf16.msra.mxu0 %v4955
    %5878 = vmatprep.subr.bf16.mxu0 %v4964
    %5879 = vmatpush1.bf16.msra.mxu0 %v4963
    %5880 = vmatprep.subr.bf16.mxu0 %v4972
    %5881 = vmatpush1.bf16.msra.mxu0 %v4971
    %5882 = vmatprep.subr.bf16.mxu0 %v4980
    %5883 = vmatpush1.bf16.msra.mxu0 %v4979
    %5884 = vmatprep.subr.bf16.mxu0 %v4988
    %5885 = vmatpush1.bf16.msra.mxu0 %v4987
    %5886 = vmatprep.subr.bf16.mxu0 %v4996
    %5887 = vmatpush1.bf16.msra.mxu0 %v4995
    %5888 = vmatprep.subr.bf16.mxu0 %v5004
    %5889 = vmatpush1.bf16.msra.mxu0 %v5003
    %5890 = vmatprep.subr.bf16.mxu0 %v5012
    %5891 = vmatpush1.bf16.msra.mxu0 %v5011
    %5892 = vmatprep.subr.bf16.mxu0 %v5020
    %5893 = vmatpush1.bf16.msra.mxu0 %v5019
    %5894 = vmatprep.subr.bf16.mxu0 %v5028
    %5895 = vmatpush1.bf16.msra.mxu0 %v5027
    %5896 = vmatprep.subr.bf16.mxu0 %v5036
    %5897 = vmatpush1.bf16.msra.mxu0 %v5035
    %5898 = vmatprep.subr.bf16.mxu0 %v5044
    %5899 = vmatpush1.bf16.msra.mxu0 %v5043
    %5900 = vmatprep.subr.bf16.mxu0 %v5052
    %5901 = vmatpush1.bf16.msra.mxu0 %v5051
    %5902 = vmatprep.mubr.bf16.mxu0 %v2708
    %5903 = vmatmul.mubr.bf16.gmra.mrb[0].mxu0 %v2707
    %v5904 = vpop.f32.mrb[0].mxu0
    %v5905 = vadd.f32 %v5862, %v5904
    %v5906 = vpop.f32.mrb[0].mxu0
    %v5907 = vadd.f32 %v5864, %v5906
    %v5908 = vpop.f32.mrb[0].mxu0
    %v5909 = vadd.f32 %v5866, %v5908
    %v5910 = vpop.f32.mrb[0].mxu0
    %v5911 = vadd.f32 %v5868, %v5910
    %5912 = vdwg.mxu0
    %5913 = vmatprep.subr.bf16.mxu0 %v5060
    %5914 = vmatpush1.bf16.msra.mxu0 %v5059
    %5915 = vmatprep.subr.bf16.mxu0 %v5068
    %5916 = vmatpush1.bf16.msra.mxu0 %v5067
    %5917 = vmatprep.subr.bf16.mxu0 %v5076
    %5918 = vmatpush1.bf16.msra.mxu0 %v5075
    %5919 = vmatprep.subr.bf16.mxu0 %v5084
    %5920 = vmatpush1.bf16.msra.mxu0 %v5083
    %5921 = vmatprep.subr.bf16.mxu0 %v5092
    %5922 = vmatpush1.bf16.msra.mxu0 %v5091
    %5923 = vmatprep.subr.bf16.mxu0 %v5100
    %5924 = vmatpush1.bf16.msra.mxu0 %v5099
    %5925 = vmatprep.subr.bf16.mxu0 %v5108
    %5926 = vmatpush1.bf16.msra.mxu0 %v5107
    %5927 = vmatprep.subr.bf16.mxu0 %v5116
    %5928 = vmatpush1.bf16.msra.mxu0 %v5115
    %5929 = vmatprep.subr.bf16.mxu0 %v5124
    %5930 = vmatpush1.bf16.msra.mxu0 %v5123
    %5931 = vmatprep.subr.bf16.mxu0 %v5132
    %5932 = vmatpush1.bf16.msra.mxu0 %v5131
    %5933 = vmatprep.subr.bf16.mxu0 %v5140
    %5934 = vmatpush1.bf16.msra.mxu0 %v5139
    %5935 = vmatprep.subr.bf16.mxu0 %v5148
    %5936 = vmatpush1.bf16.msra.mxu0 %v5147
    %5937 = vmatprep.subr.bf16.mxu0 %v5156
    %5938 = vmatpush1.bf16.msra.mxu0 %v5155
    %5939 = vmatprep.subr.bf16.mxu0 %v5164
    %5940 = vmatpush1.bf16.msra.mxu0 %v5163
    %5941 = vmatprep.subr.bf16.mxu0 %v5172
    %5942 = vmatpush1.bf16.msra.mxu0 %v5171
    %5943 = vmatprep.subr.bf16.mxu0 %v5180
    %5944 = vmatpush1.bf16.msra.mxu0 %v5179
    %5945 = vmatprep.mubr.bf16.mxu0 %v2710
    %5946 = vmatmul.mubr.bf16.gmra.mrb[0].mxu0 %v2709
    %v5947 = vpop.f32.mrb[0].mxu0
    %v5948 = vadd.f32 %v5905, %v5947
    %v5949 = vpop.f32.mrb[0].mxu0
    %v5950 = vadd.f32 %v5907, %v5949
    %v5951 = vpop.f32.mrb[0].mxu0
    %v5952 = vadd.f32 %v5909, %v5951
    %v5953 = vpop.f32.mrb[0].mxu0
    %v5954 = vadd.f32 %v5911, %v5953
    %5955 = vdwg.mxu0
    %5956 = vmatprep.subr.bf16.mxu0 %v5188
    %5957 = vmatpush1.bf16.msra.mxu0 %v5187
    %5958 = vmatprep.subr.bf16.mxu0 %v5196
    %5959 = vmatpush1.bf16.msra.mxu0 %v5195
    %5960 = vmatprep.subr.bf16.mxu0 %v5204
    %5961 = vmatpush1.bf16.msra.mxu0 %v5203
    %5962 = vmatprep.subr.bf16.mxu0 %v5212
    %5963 = vmatpush1.bf16.msra.mxu0 %v5211
    %5964 = vmatprep.subr.bf16.mxu0 %v5220
    %5965 = vmatpush1.bf16.msra.mxu0 %v5219
    %5966 = vmatprep.subr.bf16.mxu0 %v5228
    %5967 = vmatpush1.bf16.msra.mxu0 %v5227
    %5968 = vmatprep.subr.bf16.mxu0 %v5236
    %5969 = vmatpush1.bf16.msra.mxu0 %v5235
    %5970 = vmatprep.subr.bf16.mxu0 %v5244
    %5971 = vmatpush1.bf16.msra.mxu0 %v5243
    %5972 = vmatprep.subr.bf16.mxu0 %v5252
    %5973 = vmatpush1.bf16.msra.mxu0 %v5251
    %5974 = vmatprep.subr.bf16.mxu0 %v5260
    %5975 = vmatpush1.bf16.msra.mxu0 %v5259
    %5976 = vmatprep.subr.bf16.mxu0 %v5268
    %5977 = vmatpush1.bf16.msra.mxu0 %v5267
    %5978 = vmatprep.subr.bf16.mxu0 %v5276
    %5979 = vmatpush1.bf16.msra.mxu0 %v5275
    %5980 = vmatprep.subr.bf16.mxu0 %v5284
    %5981 = vmatpush1.bf16.msra.mxu0 %v5283
    %5982 = vmatprep.subr.bf16.mxu0 %v5292
    %5983 = vmatpush1.bf16.msra.mxu0 %v5291
    %5984 = vmatprep.subr.bf16.mxu0 %v5300
    %5985 = vmatpush1.bf16.msra.mxu0 %v5299
    %5986 = vmatprep.subr.bf16.mxu0 %v5308
    %5987 = vmatpush1.bf16.msra.mxu0 %v5307
    %5988 = vmatprep.mubr.bf16.mxu0 %v2712
    %5989 = vmatmul.mubr.bf16.gmra.mrb[0].mxu0 %v2711
    %v5990 = vpop.f32.mrb[0].mxu0
    %v5991 = vadd.f32 %v5948, %v5990
    %v5992 = vpop.f32.mrb[0].mxu0
    %v5993 = vadd.f32 %v5950, %v5992
    %v5994 = vpop.f32.mrb[0].mxu0
    %v5995 = vadd.f32 %v5952, %v5994
    %v5996 = vpop.f32.mrb[0].mxu0
    %v5997 = vadd.f32 %v5954, %v5996
    %5998 = vdwg.mxu0
    %5999 = vmatprep.subr.bf16.mxu0 %v4806
    %6000 = vmatpush1.bf16.msra.mxu0 %v4805
    %6001 = vmatprep.subr.bf16.mxu0 %v4814
    %6002 = vmatpush1.bf16.msra.mxu0 %v4813
    %6003 = vmatprep.subr.bf16.mxu0 %v4822
    %6004 = vmatpush1.bf16.msra.mxu0 %v4821
    %6005 = vmatprep.subr.bf16.mxu0 %v4830
    %6006 = vmatpush1.bf16.msra.mxu0 %v4829
    %6007 = vmatprep.subr.bf16.mxu0 %v4838
    %6008 = vmatpush1.bf16.msra.mxu0 %v4837
    %6009 = vmatprep.subr.bf16.mxu0 %v4846
    %6010 = vmatpush1.bf16.msra.mxu0 %v4845
    %6011 = vmatprep.subr.bf16.mxu0 %v4854
    %6012 = vmatpush1.bf16.msra.mxu0 %v4853
    %6013 = vmatprep.subr.bf16.mxu0 %v4862
    %6014 = vmatpush1.bf16.msra.mxu0 %v4861
    %6015 = vmatprep.subr.bf16.mxu0 %v4870
    %6016 = vmatpush1.bf16.msra.mxu0 %v4869
    %6017 = vmatprep.subr.bf16.mxu0 %v4878
    %6018 = vmatpush1.bf16.msra.mxu0 %v4877
    %6019 = vmatprep.subr.bf16.mxu0 %v4886
    %6020 = vmatpush1.bf16.msra.mxu0 %v4885
    %6021 = vmatprep.subr.bf16.mxu0 %v4894
    %6022 = vmatpush1.bf16.msra.mxu0 %v4893
    %6023 = vmatprep.subr.bf16.mxu0 %v4902
    %6024 = vmatpush1.bf16.msra.mxu0 %v4901
    %6025 = vmatprep.subr.bf16.mxu0 %v4910
    %6026 = vmatpush1.bf16.msra.mxu0 %v4909
    %6027 = vmatprep.subr.bf16.mxu0 %v4918
    %6028 = vmatpush1.bf16.msra.mxu0 %v4917
    %6029 = vmatprep.subr.bf16.mxu0 %v4926
    %6030 = vmatpush1.bf16.msra.mxu0 %v4925
    %6031 = vmatprep.mubr.bf16.mxu0 %v2706
    %6032 = vmatmul.mubr.bf16.gmra.mrb[0].mxu0 %v2705
    %v6033 = vpop.f32.mrb[0].mxu0
    %v6034 = vadd.f32 %v3238, %v6033
    %v6035 = vpop.f32.mrb[0].mxu0
    %v6036 = vadd.f32 %v3242, %v6035
    %v6037 = vpop.f32.mrb[0].mxu0
    %v6038 = vadd.f32 %v3238, %v6037
    %v6039 = vpop.f32.mrb[0].mxu0
    %v6040 = vadd.f32 %v3242, %v6039
    %6041 = vdwg.mxu0
    %6042 = vmatprep.subr.bf16.mxu0 %v4934
    %6043 = vmatpush1.bf16.msra.mxu0 %v4933
    %6044 = vmatprep.subr.bf16.mxu0 %v4942
    %6045 = vmatpush1.bf16.msra.mxu0 %v4941
    %6046 = vmatprep.subr.bf16.mxu0 %v4950
    %6047 = vmatpush1.bf16.msra.mxu0 %v4949
    %6048 = vmatprep.subr.bf16.mxu0 %v4958
    %6049 = vmatpush1.bf16.msra.mxu0 %v4957
    %6050 = vmatprep.subr.bf16.mxu0 %v4966
    %6051 = vmatpush1.bf16.msra.mxu0 %v4965
    %6052 = vmatprep.subr.bf16.mxu0 %v4974
    %6053 = vmatpush1.bf16.msra.mxu0 %v4973
    %6054 = vmatprep.subr.bf16.mxu0 %v4982
    %6055 = vmatpush1.bf16.msra.mxu0 %v4981
    %6056 = vmatprep.subr.bf16.mxu0 %v4990
    %6057 = vmatpush1.bf16.msra.mxu0 %v4989
    %6058 = vmatprep.subr.bf16.mxu0 %v4998
    %6059 = vmatpush1.bf16.msra.mxu0 %v4997
    %6060 = vmatprep.subr.bf16.mxu0 %v5006
    %6061 = vmatpush1.bf16.msra.mxu0 %v5005
    %6062 = vmatprep.subr.bf16.mxu0 %v5014
    %6063 = vmatpush1.bf16.msra.mxu0 %v5013
    %6064 = vmatprep.subr.bf16.mxu0 %v5022
    %6065 = vmatpush1.bf16.msra.mxu0 %v5021
    %6066 = vmatprep.subr.bf16.mxu0 %v5030
    %6067 = vmatpush1.bf16.msra.mxu0 %v5029
    %6068 = vmatprep.subr.bf16.mxu0 %v5038
    %6069 = vmatpush1.bf16.msra.mxu0 %v5037
    %6070 = vmatprep.subr.bf16.mxu0 %v5046
    %6071 = vmatpush1.bf16.msra.mxu0 %v5045
    %6072 = vmatprep.subr.bf16.mxu0 %v5054
    %6073 = vmatpush1.bf16.msra.mxu0 %v5053
    %6074 = vmatprep.mubr.bf16.mxu0 %v2708
    %6075 = vmatmul.mubr.bf16.gmra.mrb[0].mxu0 %v2707
    %v6076 = vpop.f32.mrb[0].mxu0
    %v6077 = vadd.f32 %v6034, %v6076
    %v6078 = vpop.f32.mrb[0].mxu0
    %v6079 = vadd.f32 %v6036, %v6078
    %v6080 = vpop.f32.mrb[0].mxu0
    %v6081 = vadd.f32 %v6038, %v6080
    %v6082 = vpop.f32.mrb[0].mxu0
    %v6083 = vadd.f32 %v6040, %v6082
    %6084 = vdwg.mxu0
    %6085 = vmatprep.subr.bf16.mxu0 %v5062
    %6086 = vmatpush1.bf16.msra.mxu0 %v5061
    %6087 = vmatprep.subr.bf16.mxu0 %v5070
    %6088 = vmatpush1.bf16.msra.mxu0 %v5069
    %6089 = vmatprep.subr.bf16.mxu0 %v5078
    %6090 = vmatpush1.bf16.msra.mxu0 %v5077
    %6091 = vmatprep.subr.bf16.mxu0 %v5086
    %6092 = vmatpush1.bf16.msra.mxu0 %v5085
    %6093 = vmatprep.subr.bf16.mxu0 %v5094
    %6094 = vmatpush1.bf16.msra.mxu0 %v5093
    %6095 = vmatprep.subr.bf16.mxu0 %v5102
    %6096 = vmatpush1.bf16.msra.mxu0 %v5101
    %6097 = vmatprep.subr.bf16.mxu0 %v5110
    %6098 = vmatpush1.bf16.msra.mxu0 %v5109
    %6099 = vmatprep.subr.bf16.mxu0 %v5118
    %6100 = vmatpush1.bf16.msra.mxu0 %v5117
    %6101 = vmatprep.subr.bf16.mxu0 %v5126
    %6102 = vmatpush1.bf16.msra.mxu0 %v5125
    %6103 = vmatprep.subr.bf16.mxu0 %v5134
    %6104 = vmatpush1.bf16.msra.mxu0 %v5133
    %6105 = vmatprep.subr.bf16.mxu0 %v5142
    %6106 = vmatpush1.bf16.msra.mxu0 %v5141
    %6107 = vmatprep.subr.bf16.mxu0 %v5150
    %6108 = vmatpush1.bf16.msra.mxu0 %v5149
    %6109 = vmatprep.subr.bf16.mxu0 %v5158
    %6110 = vmatpush1.bf16.msra.mxu0 %v5157
    %6111 = vmatprep.subr.bf16.mxu0 %v5166
    %6112 = vmatpush1.bf16.msra.mxu0 %v5165
    %6113 = vmatprep.subr.bf16.mxu0 %v5174
    %6114 = vmatpush1.bf16.msra.mxu0 %v5173
    %6115 = vmatprep.subr.bf16.mxu0 %v5182
    %6116 = vmatpush1.bf16.msra.mxu0 %v5181
    %6117 = vmatprep.mubr.bf16.mxu0 %v2710
    %6118 = vmatmul.mubr.bf16.gmra.mrb[0].mxu0 %v2709
    %v6119 = vpop.f32.mrb[0].mxu0
    %v6120 = vadd.f32 %v6077, %v6119
    %v6121 = vpop.f32.mrb[0].mxu0
    %v6122 = vadd.f32 %v6079, %v6121
    %v6123 = vpop.f32.mrb[0].mxu0
    %v6124 = vadd.f32 %v6081, %v6123
    %v6125 = vpop.f32.mrb[0].mxu0
    %v6126 = vadd.f32 %v6083, %v6125
    %6127 = vdwg.mxu0
    %6128 = vmatprep.subr.bf16.mxu0 %v5190
    %6129 = vmatpush1.bf16.msra.mxu0 %v5189
    %6130 = vmatprep.subr.bf16.mxu0 %v5198
    %6131 = vmatpush1.bf16.msra.mxu0 %v5197
    %6132 = vmatprep.subr.bf16.mxu0 %v5206
    %6133 = vmatpush1.bf16.msra.mxu0 %v5205
    %6134 = vmatprep.subr.bf16.mxu0 %v5214
    %6135 = vmatpush1.bf16.msra.mxu0 %v5213
    %6136 = vmatprep.subr.bf16.mxu0 %v5222
    %6137 = vmatpush1.bf16.msra.mxu0 %v5221
    %6138 = vmatprep.subr.bf16.mxu0 %v5230
    %6139 = vmatpush1.bf16.msra.mxu0 %v5229
    %6140 = vmatprep.subr.bf16.mxu0 %v5238
    %6141 = vmatpush1.bf16.msra.mxu0 %v5237
    %6142 = vmatprep.subr.bf16.mxu0 %v5246
    %6143 = vmatpush1.bf16.msra.mxu0 %v5245
    %6144 = vmatprep.subr.bf16.mxu0 %v5254
    %6145 = vmatpush1.bf16.msra.mxu0 %v5253
    %6146 = vmatprep.subr.bf16.mxu0 %v5262
    %6147 = vmatpush1.bf16.msra.mxu0 %v5261
    %6148 = vmatprep.subr.bf16.mxu0 %v5270
    %6149 = vmatpush1.bf16.msra.mxu0 %v5269
    %6150 = vmatprep.subr.bf16.mxu0 %v5278
    %6151 = vmatpush1.bf16.msra.mxu0 %v5277
    %6152 = vmatprep.subr.bf16.mxu0 %v5286
    %6153 = vmatpush1.bf16.msra.mxu0 %v5285
    %6154 = vmatprep.subr.bf16.mxu0 %v5294
    %6155 = vmatpush1.bf16.msra.mxu0 %v5293
    %6156 = vmatprep.subr.bf16.mxu0 %v5302
    %6157 = vmatpush1.bf16.msra.mxu0 %v5301
    %6158 = vmatprep.subr.bf16.mxu0 %v5310
    %6159 = vmatpush1.bf16.msra.mxu0 %v5309
    %6160 = vmatprep.mubr.bf16.mxu0 %v2712
    %6161 = vmatmul.mubr.bf16.gmra.mrb[0].mxu0 %v2711
    %v6162 = vpop.f32.mrb[0].mxu0
    %v6163 = vadd.f32 %v6120, %v6162
    %v6164 = vpop.f32.mrb[0].mxu0
    %v6165 = vadd.f32 %v6122, %v6164
    %v6166 = vpop.f32.mrb[0].mxu0
    %v6167 = vadd.f32 %v6124, %v6166
    %v6168 = vpop.f32.mrb[0].mxu0
    %v6169 = vadd.f32 %v6126, %v6168
    %6170 = vdwg.mxu0
    %6171 = vmatprep.subr.bf16.mxu0 %v4808
    %6172 = vmatpush1.bf16.msra.mxu0 %v4807
    %6173 = vmatprep.subr.bf16.mxu0 %v4816
    %6174 = vmatpush1.bf16.msra.mxu0 %v4815
    %6175 = vmatprep.subr.bf16.mxu0 %v4824
    %6176 = vmatpush1.bf16.msra.mxu0 %v4823
    %6177 = vmatprep.subr.bf16.mxu0 %v4832
    %6178 = vmatpush1.bf16.msra.mxu0 %v4831
    %6179 = vmatprep.subr.bf16.mxu0 %v4840
    %6180 = vmatpush1.bf16.msra.mxu0 %v4839
    %6181 = vmatprep.subr.bf16.mxu0 %v4848
    %6182 = vmatpush1.bf16.msra.mxu0 %v4847
    %6183 = vmatprep.subr.bf16.mxu0 %v4856
    %6184 = vmatpush1.bf16.msra.mxu0 %v4855
    %6185 = vmatprep.subr.bf16.mxu0 %v4864
    %6186 = vmatpush1.bf16.msra.mxu0 %v4863
    %6187 = vmatprep.subr.bf16.mxu0 %v4872
    %6188 = vmatpush1.bf16.msra.mxu0 %v4871
    %6189 = vmatprep.subr.bf16.mxu0 %v4880
    %6190 = vmatpush1.bf16.msra.mxu0 %v4879
    %6191 = vmatprep.subr.bf16.mxu0 %v4888
    %6192 = vmatpush1.bf16.msra.mxu0 %v4887
    %6193 = vmatprep.subr.bf16.mxu0 %v4896
    %6194 = vmatpush1.bf16.msra.mxu0 %v4895
    %6195 = vmatprep.subr.bf16.mxu0 %v4904
    %6196 = vmatpush1.bf16.msra.mxu0 %v4903
    %6197 = vmatprep.subr.bf16.mxu0 %v4912
    %6198 = vmatpush1.bf16.msra.mxu0 %v4911
    %6199 = vmatprep.subr.bf16.mxu0 %v4920
    %6200 = vmatpush1.bf16.msra.mxu0 %v4919
    %6201 = vmatprep.subr.bf16.mxu0 %v4928
    %6202 = vmatpush1.bf16.msra.mxu0 %v4927
    %6203 = vmatprep.mubr.bf16.mxu0 %v2706
    %6204 = vmatmul.mubr.bf16.gmra.mrb[0].mxu0 %v2705
    %v6205 = vpop.f32.mrb[0].mxu0
    %v6206 = vadd.f32 %v3246, %v6205
    %v6207 = vpop.f32.mrb[0].mxu0
    %v6208 = vadd.f32 %v3250, %v6207
    %v6209 = vpop.f32.mrb[0].mxu0
    %v6210 = vadd.f32 %v3246, %v6209
    %v6211 = vpop.f32.mrb[0].mxu0
    %v6212 = vadd.f32 %v3250, %v6211
    %6213 = vdwg.mxu0
    %6214 = vmatprep.subr.bf16.mxu0 %v4936
    %6215 = vmatpush1.bf16.msra.mxu0 %v4935
    %6216 = vmatprep.subr.bf16.mxu0 %v4944
    %6217 = vmatpush1.bf16.msra.mxu0 %v4943
    %6218 = vmatprep.subr.bf16.mxu0 %v4952
    %6219 = vmatpush1.bf16.msra.mxu0 %v4951
    %6220 = vmatprep.subr.bf16.mxu0 %v4960
    %6221 = vmatpush1.bf16.msra.mxu0 %v4959
    %6222 = vmatprep.subr.bf16.mxu0 %v4968
    %6223 = vmatpush1.bf16.msra.mxu0 %v4967
    %6224 = vmatprep.subr.bf16.mxu0 %v4976
    %6225 = vmatpush1.bf16.msra.mxu0 %v4975
    %6226 = vmatprep.subr.bf16.mxu0 %v4984
    %6227 = vmatpush1.bf16.msra.mxu0 %v4983
    %6228 = vmatprep.subr.bf16.mxu0 %v4992
    %6229 = vmatpush1.bf16.msra.mxu0 %v4991
    %6230 = vmatprep.subr.bf16.mxu0 %v5000
    %6231 = vmatpush1.bf16.msra.mxu0 %v4999
    %6232 = vmatprep.subr.bf16.mxu0 %v5008
    %6233 = vmatpush1.bf16.msra.mxu0 %v5007
    %6234 = vmatprep.subr.bf16.mxu0 %v5016
    %6235 = vmatpush1.bf16.msra.mxu0 %v5015
    %6236 = vmatprep.subr.bf16.mxu0 %v5024
    %6237 = vmatpush1.bf16.msra.mxu0 %v5023
    %6238 = vmatprep.subr.bf16.mxu0 %v5032
    %6239 = vmatpush1.bf16.msra.mxu0 %v5031
    %6240 = vmatprep.subr.bf16.mxu0 %v5040
    %6241 = vmatpush1.bf16.msra.mxu0 %v5039
    %6242 = vmatprep.subr.bf16.mxu0 %v5048
    %6243 = vmatpush1.bf16.msra.mxu0 %v5047
    %6244 = vmatprep.subr.bf16.mxu0 %v5056
    %6245 = vmatpush1.bf16.msra.mxu0 %v5055
    %6246 = vmatprep.mubr.bf16.mxu0 %v2708
    %6247 = vmatmul.mubr.bf16.gmra.mrb[0].mxu0 %v2707
    %v6248 = vpop.f32.mrb[0].mxu0
    %v6249 = vadd.f32 %v6206, %v6248
    %v6250 = vpop.f32.mrb[0].mxu0
    %v6251 = vadd.f32 %v6208, %v6250
    %v6252 = vpop.f32.mrb[0].mxu0
    %v6253 = vadd.f32 %v6210, %v6252
    %v6254 = vpop.f32.mrb[0].mxu0
    %v6255 = vadd.f32 %v6212, %v6254
    %6256 = vdwg.mxu0
    %6257 = vmatprep.subr.bf16.mxu0 %v5064
    %6258 = vmatpush1.bf16.msra.mxu0 %v5063
    %6259 = vmatprep.subr.bf16.mxu0 %v5072
    %6260 = vmatpush1.bf16.msra.mxu0 %v5071
    %6261 = vmatprep.subr.bf16.mxu0 %v5080
    %6262 = vmatpush1.bf16.msra.mxu0 %v5079
    %6263 = vmatprep.subr.bf16.mxu0 %v5088
    %6264 = vmatpush1.bf16.msra.mxu0 %v5087
    %6265 = vmatprep.subr.bf16.mxu0 %v5096
    %6266 = vmatpush1.bf16.msra.mxu0 %v5095
    %6267 = vmatprep.subr.bf16.mxu0 %v5104
    %6268 = vmatpush1.bf16.msra.mxu0 %v5103
    %6269 = vmatprep.subr.bf16.mxu0 %v5112
    %6270 = vmatpush1.bf16.msra.mxu0 %v5111
    %6271 = vmatprep.subr.bf16.mxu0 %v5120
    %6272 = vmatpush1.bf16.msra.mxu0 %v5119
    %6273 = vmatprep.subr.bf16.mxu0 %v5128
    %6274 = vmatpush1.bf16.msra.mxu0 %v5127
    %6275 = vmatprep.subr.bf16.mxu0 %v5136
    %6276 = vmatpush1.bf16.msra.mxu0 %v5135
    %6277 = vmatprep.subr.bf16.mxu0 %v5144
    %6278 = vmatpush1.bf16.msra.mxu0 %v5143
    %6279 = vmatprep.subr.bf16.mxu0 %v5152
    %6280 = vmatpush1.bf16.msra.mxu0 %v5151
    %6281 = vmatprep.subr.bf16.mxu0 %v5160
    %6282 = vmatpush1.bf16.msra.mxu0 %v5159
    %6283 = vmatprep.subr.bf16.mxu0 %v5168
    %6284 = vmatpush1.bf16.msra.mxu0 %v5167
    %6285 = vmatprep.subr.bf16.mxu0 %v5176
    %6286 = vmatpush1.bf16.msra.mxu0 %v5175
    %6287 = vmatprep.subr.bf16.mxu0 %v5184
    %6288 = vmatpush1.bf16.msra.mxu0 %v5183
    %6289 = vmatprep.mubr.bf16.mxu0 %v2710
    %6290 = vmatmul.mubr.bf16.gmra.mrb[0].mxu0 %v2709
    %v6291 = vpop.f32.mrb[0].mxu0
    %v6292 = vadd.f32 %v6249, %v6291
    %v6293 = vpop.f32.mrb[0].mxu0
    %v6294 = vadd.f32 %v6251, %v6293
    %v6295 = vpop.f32.mrb[0].mxu0
    %v6296 = vadd.f32 %v6253, %v6295
    %v6297 = vpop.f32.mrb[0].mxu0
    %v6298 = vadd.f32 %v6255, %v6297
    %6299 = vdwg.mxu0
    %6300 = vmatprep.subr.bf16.mxu0 %v5192
    %6301 = vmatpush1.bf16.msra.mxu0 %v5191
    %6302 = vmatprep.subr.bf16.mxu0 %v5200
    %6303 = vmatpush1.bf16.msra.mxu0 %v5199
    %6304 = vmatprep.subr.bf16.mxu0 %v5208
    %6305 = vmatpush1.bf16.msra.mxu0 %v5207
    %6306 = vmatprep.subr.bf16.mxu0 %v5216
    %6307 = vmatpush1.bf16.msra.mxu0 %v5215
    %6308 = vmatprep.subr.bf16.mxu0 %v5224
    %6309 = vmatpush1.bf16.msra.mxu0 %v5223
    %6310 = vmatprep.subr.bf16.mxu0 %v5232
    %6311 = vmatpush1.bf16.msra.mxu0 %v5231
    %6312 = vmatprep.subr.bf16.mxu0 %v5240
    %6313 = vmatpush1.bf16.msra.mxu0 %v5239
    %6314 = vmatprep.subr.bf16.mxu0 %v5248
    %6315 = vmatpush1.bf16.msra.mxu0 %v5247
    %6316 = vmatprep.subr.bf16.mxu0 %v5256
    %6317 = vmatpush1.bf16.msra.mxu0 %v5255
    %6318 = vmatprep.subr.bf16.mxu0 %v5264
    %6319 = vmatpush1.bf16.msra.mxu0 %v5263
    %6320 = vmatprep.subr.bf16.mxu0 %v5272
    %6321 = vmatpush1.bf16.msra.mxu0 %v5271
    %6322 = vmatprep.subr.bf16.mxu0 %v5280
    %6323 = vmatpush1.bf16.msra.mxu0 %v5279
    %6324 = vmatprep.subr.bf16.mxu0 %v5288
    %6325 = vmatpush1.bf16.msra.mxu0 %v5287
    %6326 = vmatprep.subr.bf16.mxu0 %v5296
    %6327 = vmatpush1.bf16.msra.mxu0 %v5295
    %6328 = vmatprep.subr.bf16.mxu0 %v5304
    %6329 = vmatpush1.bf16.msra.mxu0 %v5303
    %6330 = vmatprep.subr.bf16.mxu0 %v5312
    %6331 = vmatpush1.bf16.msra.mxu0 %v5311
    %6332 = vmatprep.mubr.bf16.mxu0 %v2712
    %6333 = vmatmul.mubr.bf16.gmra.mrb[0].mxu0 %v2711
    %v6334 = vpop.f32.mrb[0].mxu0
    %v6335 = vadd.f32 %v6292, %v6334
    %v6336 = vpop.f32.mrb[0].mxu0
    %v6337 = vadd.f32 %v6294, %v6336
    %v6338 = vpop.f32.mrb[0].mxu0
    %v6339 = vadd.f32 %v6296, %v6338
    %v6340 = vpop.f32.mrb[0].mxu0
    %v6341 = vadd.f32 %v6298, %v6340
    %6342 = vdwg.mxu0
    %6343 = vmatprep.subr.bf16.mxu0 %v4810
    %6344 = vmatpush1.bf16.msra.mxu0 %v4809
    %6345 = vmatprep.subr.bf16.mxu0 %v4818
    %6346 = vmatpush1.bf16.msra.mxu0 %v4817
    %6347 = vmatprep.subr.bf16.mxu0 %v4826
    %6348 = vmatpush1.bf16.msra.mxu0 %v4825
    %6349 = vmatprep.subr.bf16.mxu0 %v4834
    %6350 = vmatpush1.bf16.msra.mxu0 %v4833
    %6351 = vmatprep.subr.bf16.mxu0 %v4842
    %6352 = vmatpush1.bf16.msra.mxu0 %v4841
    %6353 = vmatprep.subr.bf16.mxu0 %v4850
    %6354 = vmatpush1.bf16.msra.mxu0 %v4849
    %6355 = vmatprep.subr.bf16.mxu0 %v4858
    %6356 = vmatpush1.bf16.msra.mxu0 %v4857
    %6357 = vmatprep.subr.bf16.mxu0 %v4866
    %6358 = vmatpush1.bf16.msra.mxu0 %v4865
    %6359 = vmatprep.subr.bf16.mxu0 %v4874
    %6360 = vmatpush1.bf16.msra.mxu0 %v4873
    %6361 = vmatprep.subr.bf16.mxu0 %v4882
    %6362 = vmatpush1.bf16.msra.mxu0 %v4881
    %6363 = vmatprep.subr.bf16.mxu0 %v4890
    %6364 = vmatpush1.bf16.msra.mxu0 %v4889
    %6365 = vmatprep.subr.bf16.mxu0 %v4898
    %6366 = vmatpush1.bf16.msra.mxu0 %v4897
    %6367 = vmatprep.subr.bf16.mxu0 %v4906
    %6368 = vmatpush1.bf16.msra.mxu0 %v4905
    %6369 = vmatprep.subr.bf16.mxu0 %v4914
    %6370 = vmatpush1.bf16.msra.mxu0 %v4913
    %6371 = vmatprep.subr.bf16.mxu0 %v4922
    %6372 = vmatpush1.bf16.msra.mxu0 %v4921
    %6373 = vmatprep.subr.bf16.mxu0 %v4930
    %6374 = vmatpush1.bf16.msra.mxu0 %v4929
    %6375 = vmatprep.mubr.bf16.mxu0 %v2706
    %6376 = vmatmul.mubr.bf16.gmra.mrb[0].mxu0 %v2705
    %v6377 = vpop.f32.mrb[0].mxu0
    %v6378 = vadd.f32 %v3254, %v6377
    %v6379 = vpop.f32.mrb[0].mxu0
    %v6380 = vadd.f32 %v3258, %v6379
    %v6381 = vpop.f32.mrb[0].mxu0
    %v6382 = vadd.f32 %v3254, %v6381
    %v6383 = vpop.f32.mrb[0].mxu0
    %v6384 = vadd.f32 %v3258, %v6383
    %6385 = vdwg.mxu0
    %6386 = vmatprep.subr.bf16.mxu0 %v4938
    %6387 = vmatpush1.bf16.msra.mxu0 %v4937
    %6388 = vmatprep.subr.bf16.mxu0 %v4946
    %6389 = vmatpush1.bf16.msra.mxu0 %v4945
    %6390 = vmatprep.subr.bf16.mxu0 %v4954
    %6391 = vmatpush1.bf16.msra.mxu0 %v4953
    %6392 = vmatprep.subr.bf16.mxu0 %v4962
    %6393 = vmatpush1.bf16.msra.mxu0 %v4961
    %6394 = vmatprep.subr.bf16.mxu0 %v4970
    %6395 = vmatpush1.bf16.msra.mxu0 %v4969
    %6396 = vmatprep.subr.bf16.mxu0 %v4978
    %6397 = vmatpush1.bf16.msra.mxu0 %v4977
    %6398 = vmatprep.subr.bf16.mxu0 %v4986
    %6399 = vmatpush1.bf16.msra.mxu0 %v4985
    %6400 = vmatprep.subr.bf16.mxu0 %v4994
    %6401 = vmatpush1.bf16.msra.mxu0 %v4993
    %6402 = vmatprep.subr.bf16.mxu0 %v5002
    %6403 = vmatpush1.bf16.msra.mxu0 %v5001
    %6404 = vmatprep.subr.bf16.mxu0 %v5010
    %6405 = vmatpush1.bf16.msra.mxu0 %v5009
    %6406 = vmatprep.subr.bf16.mxu0 %v5018
    %6407 = vmatpush1.bf16.msra.mxu0 %v5017
    %6408 = vmatprep.subr.bf16.mxu0 %v5026
    %6409 = vmatpush1.bf16.msra.mxu0 %v5025
    %6410 = vmatprep.subr.bf16.mxu0 %v5034
    %6411 = vmatpush1.bf16.msra.mxu0 %v5033
    %6412 = vmatprep.subr.bf16.mxu0 %v5042
    %6413 = vmatpush1.bf16.msra.mxu0 %v5041
    %6414 = vmatprep.subr.bf16.mxu0 %v5050
    %6415 = vmatpush1.bf16.msra.mxu0 %v5049
    %6416 = vmatprep.subr.bf16.mxu0 %v5058
    %6417 = vmatpush1.bf16.msra.mxu0 %v5057
    %6418 = vmatprep.mubr.bf16.mxu0 %v2708
    %6419 = vmatmul.mubr.bf16.gmra.mrb[0].mxu0 %v2707
    %v6420 = vpop.f32.mrb[0].mxu0
    %v6421 = vadd.f32 %v6378, %v6420
    %v6422 = vpop.f32.mrb[0].mxu0
    %v6423 = vadd.f32 %v6380, %v6422
    %v6424 = vpop.f32.mrb[0].mxu0
    %v6425 = vadd.f32 %v6382, %v6424
    %v6426 = vpop.f32.mrb[0].mxu0
    %v6427 = vadd.f32 %v6384, %v6426
    %6428 = vdwg.mxu0
    %6429 = vmatprep.subr.bf16.mxu0 %v5066
    %6430 = vmatpush1.bf16.msra.mxu0 %v5065
    %6431 = vmatprep.subr.bf16.mxu0 %v5074
    %6432 = vmatpush1.bf16.msra.mxu0 %v5073
    %6433 = vmatprep.subr.bf16.mxu0 %v5082
    %6434 = vmatpush1.bf16.msra.mxu0 %v5081
    %6435 = vmatprep.subr.bf16.mxu0 %v5090
    %6436 = vmatpush1.bf16.msra.mxu0 %v5089
    %6437 = vmatprep.subr.bf16.mxu0 %v5098
    %6438 = vmatpush1.bf16.msra.mxu0 %v5097
    %6439 = vmatprep.subr.bf16.mxu0 %v5106
    %6440 = vmatpush1.bf16.msra.mxu0 %v5105
    %6441 = vmatprep.subr.bf16.mxu0 %v5114
    %6442 = vmatpush1.bf16.msra.mxu0 %v5113
    %6443 = vmatprep.subr.bf16.mxu0 %v5122
    %6444 = vmatpush1.bf16.msra.mxu0 %v5121
    %6445 = vmatprep.subr.bf16.mxu0 %v5130
    %6446 = vmatpush1.bf16.msra.mxu0 %v5129
    %6447 = vmatprep.subr.bf16.mxu0 %v5138
    %6448 = vmatpush1.bf16.msra.mxu0 %v5137
    %6449 = vmatprep.subr.bf16.mxu0 %v5146
    %6450 = vmatpush1.bf16.msra.mxu0 %v5145
    %6451 = vmatprep.subr.bf16.mxu0 %v5154
    %6452 = vmatpush1.bf16.msra.mxu0 %v5153
    %6453 = vmatprep.subr.bf16.mxu0 %v5162
    %6454 = vmatpush1.bf16.msra.mxu0 %v5161
    %6455 = vmatprep.subr.bf16.mxu0 %v5170
    %6456 = vmatpush1.bf16.msra.mxu0 %v5169
    %6457 = vmatprep.subr.bf16.mxu0 %v5178
    %6458 = vmatpush1.bf16.msra.mxu0 %v5177
    %6459 = vmatprep.subr.bf16.mxu0 %v5186
    %6460 = vmatpush1.bf16.msra.mxu0 %v5185
    %6461 = vmatprep.mubr.bf16.mxu0 %v2710
    %6462 = vmatmul.mubr.bf16.gmra.mrb[0].mxu0 %v2709
    %v6463 = vpop.f32.mrb[0].mxu0
    %v6464 = vadd.f32 %v6421, %v6463
    %v6465 = vpop.f32.mrb[0].mxu0
    %v6466 = vadd.f32 %v6423, %v6465
    %v6467 = vpop.f32.mrb[0].mxu0
    %v6468 = vadd.f32 %v6425, %v6467
    %v6469 = vpop.f32.mrb[0].mxu0
    %v6470 = vadd.f32 %v6427, %v6469
    %6471 = vdwg.mxu0
    %6472 = vmatprep.subr.bf16.mxu0 %v5194
    %6473 = vmatpush1.bf16.msra.mxu0 %v5193
    %6474 = vmatprep.subr.bf16.mxu0 %v5202
    %6475 = vmatpush1.bf16.msra.mxu0 %v5201
    %6476 = vmatprep.subr.bf16.mxu0 %v5210
    %6477 = vmatpush1.bf16.msra.mxu0 %v5209
    %6478 = vmatprep.subr.bf16.mxu0 %v5218
    %6479 = vmatpush1.bf16.msra.mxu0 %v5217
    %6480 = vmatprep.subr.bf16.mxu0 %v5226
    %6481 = vmatpush1.bf16.msra.mxu0 %v5225
    %6482 = vmatprep.subr.bf16.mxu0 %v5234
    %6483 = vmatpush1.bf16.msra.mxu0 %v5233
    %6484 = vmatprep.subr.bf16.mxu0 %v5242
    %6485 = vmatpush1.bf16.msra.mxu0 %v5241
    %6486 = vmatprep.subr.bf16.mxu0 %v5250
    %6487 = vmatpush1.bf16.msra.mxu0 %v5249
    %6488 = vmatprep.subr.bf16.mxu0 %v5258
    %6489 = vmatpush1.bf16.msra.mxu0 %v5257
    %6490 = vmatprep.subr.bf16.mxu0 %v5266
    %6491 = vmatpush1.bf16.msra.mxu0 %v5265
    %6492 = vmatprep.subr.bf16.mxu0 %v5274
    %6493 = vmatpush1.bf16.msra.mxu0 %v5273
    %6494 = vmatprep.subr.bf16.mxu0 %v5282
    %6495 = vmatpush1.bf16.msra.mxu0 %v5281
    %6496 = vmatprep.subr.bf16.mxu0 %v5290
    %6497 = vmatpush1.bf16.msra.mxu0 %v5289
    %6498 = vmatprep.subr.bf16.mxu0 %v5298
    %6499 = vmatpush1.bf16.msra.mxu0 %v5297
    %6500 = vmatprep.subr.bf16.mxu0 %v5306
    %6501 = vmatpush1.bf16.msra.mxu0 %v5305
    %6502 = vmatprep.subr.bf16.mxu0 %v5314
    %6503 = vmatpush1.bf16.msra.mxu0 %v5313
    %6504 = vmatprep.mubr.bf16.mxu0 %v2712
    %6505 = vmatmul.mubr.bf16.gmra.mrb[0].mxu0 %v2711
    %v6506 = vpop.f32.mrb[0].mxu0
    %v6507 = vadd.f32 %v6464, %v6506
    %v6508 = vpop.f32.mrb[0].mxu0
    %v6509 = vadd.f32 %v6466, %v6508
    %v6510 = vpop.f32.mrb[0].mxu0
    %v6511 = vadd.f32 %v6468, %v6510
    %v6512 = vpop.f32.mrb[0].mxu0
    %v6513 = vadd.f32 %v6470, %v6512
    %6514 = vdwg.mxu0
    %v6515 = vmax.f32 %v5991, 0.0
    %v6516 = vmax.f32 %v5993, 0.0
    %v6517 = vmax.f32 %v6163, 0.0
    %v6518 = vmax.f32 %v6165, 0.0
    %v6519 = vmax.f32 %v6335, 0.0
    %v6520 = vmax.f32 %v6337, 0.0
    %v6521 = vmax.f32 %v6507, 0.0
    %v6522 = vmax.f32 %v6509, 0.0
    %v6523 = vmax.f32 %v5995, 0.0
    %v6524 = vmax.f32 %v5997, 0.0
    %v6525 = vmax.f32 %v6167, 0.0
    %v6526 = vmax.f32 %v6169, 0.0
    %v6527 = vmax.f32 %v6339, 0.0
    %v6528 = vmax.f32 %v6341, 0.0
    %v6529 = vmax.f32 %v6511, 0.0
    %v6530 = vmax.f32 %v6513, 0.0
    %v6531 = vpack.c.bf16 %v6523, %v6515
    %v6532 = vpack.c.bf16 %v6524, %v6516
    %v6533 = vpack.c.bf16 %v6525, %v6517
    %v6534 = vpack.c.bf16 %v6526, %v6518
    %v6535 = vpack.c.bf16 %v6527, %v6519
    %v6536 = vpack.c.bf16 %v6528, %v6520
    %v6537 = vpack.c.bf16 %v6529, %v6521
    %v6538 = vpack.c.bf16 %v6530, %v6522
    %v6539 = vld [vmem:[#allocation11] sm:$0xff]
    %v6540 = vld [vmem:[#allocation11 + $0x8] sm:$0xff]
    %v6541 = vld [vmem:[#allocation11 + $0x10] sm:$0xff]
    %v6542 = vld [vmem:[#allocation11 + $0x18] sm:$0xff]
    %v6543 = vld [vmem:[#allocation11 + $0x20] sm:$0xff]
    %v6544 = vld [vmem:[#allocation11 + $0x28] sm:$0xff]
    %v6545 = vld [vmem:[#allocation11 + $0x30] sm:$0xff]
    %v6546 = vld [vmem:[#allocation11 + $0x38] sm:$0xff]
    %v6547 = vld [vmem:[#allocation11 + $0x40] sm:$0xff]
    %v6548 = vld [vmem:[#allocation11 + $0x48] sm:$0xff]
    %v6549 = vld [vmem:[#allocation11 + $0x50] sm:$0xff]
    %v6550 = vld [vmem:[#allocation11 + $0x58] sm:$0xff]
    %v6551 = vld [vmem:[#allocation11 + $0x60] sm:$0xff]
    %v6552 = vld [vmem:[#allocation11 + $0x68] sm:$0xff]
    %v6553 = vld [vmem:[#allocation11 + $0x70] sm:$0xff]
    %v6554 = vld [vmem:[#allocation11 + $0x78] sm:$0xff]
    %v6555 = vld [vmem:[#allocation11 + $0x80] sm:$0xff]
    %v6556 = vld [vmem:[#allocation11 + $0x88] sm:$0xff]
    %v6557 = vld [vmem:[#allocation11 + $0x90] sm:$0xff]
    %v6558 = vld [vmem:[#allocation11 + $0x98] sm:$0xff]
    %v6559 = vld [vmem:[#allocation11 + $0xa0] sm:$0xff]
    %v6560 = vld [vmem:[#allocation11 + $0xa8] sm:$0xff]
    %v6561 = vld [vmem:[#allocation11 + $0xb0] sm:$0xff]
    %v6562 = vld [vmem:[#allocation11 + $0xb8] sm:$0xff]
    %v6563 = vld [vmem:[#allocation11 + $0xc0] sm:$0xff]
    %v6564 = vld [vmem:[#allocation11 + $0xc8] sm:$0xff]
    %v6565 = vld [vmem:[#allocation11 + $0xd0] sm:$0xff]
    %v6566 = vld [vmem:[#allocation11 + $0xd8] sm:$0xff]
    %v6567 = vld [vmem:[#allocation11 + $0xe0] sm:$0xff]
    %v6568 = vld [vmem:[#allocation11 + $0xe8] sm:$0xff]
    %v6569 = vld [vmem:[#allocation11 + $0xf0] sm:$0xff]
    %v6570 = vld [vmem:[#allocation11 + $0xf8] sm:$0xff]
    %v6571 = vld [vmem:[#allocation11 + $0x100] sm:$0xff]
    %v6572 = vld [vmem:[#allocation11 + $0x108] sm:$0xff]
    %v6573 = vld [vmem:[#allocation11 + $0x110] sm:$0xff]
    %v6574 = vld [vmem:[#allocation11 + $0x118] sm:$0xff]
    %v6575 = vld [vmem:[#allocation11 + $0x120] sm:$0xff]
    %v6576 = vld [vmem:[#allocation11 + $0x128] sm:$0xff]
    %v6577 = vld [vmem:[#allocation11 + $0x130] sm:$0xff]
    %v6578 = vld [vmem:[#allocation11 + $0x138] sm:$0xff]
    %v6579 = vld [vmem:[#allocation11 + $0x140] sm:$0xff]
    %v6580 = vld [vmem:[#allocation11 + $0x148] sm:$0xff]
    %v6581 = vld [vmem:[#allocation11 + $0x150] sm:$0xff]
    %v6582 = vld [vmem:[#allocation11 + $0x158] sm:$0xff]
    %v6583 = vld [vmem:[#allocation11 + $0x160] sm:$0xff]
    %v6584 = vld [vmem:[#allocation11 + $0x168] sm:$0xff]
    %v6585 = vld [vmem:[#allocation11 + $0x170] sm:$0xff]
    %v6586 = vld [vmem:[#allocation11 + $0x178] sm:$0xff]
    %v6587 = vld [vmem:[#allocation11 + $0x180] sm:$0xff]
    %v6588 = vld [vmem:[#allocation11 + $0x188] sm:$0xff]
    %v6589 = vld [vmem:[#allocation11 + $0x190] sm:$0xff]
    %v6590 = vld [vmem:[#allocation11 + $0x198] sm:$0xff]
    %v6591 = vld [vmem:[#allocation11 + $0x1a0] sm:$0xff]
    %v6592 = vld [vmem:[#allocation11 + $0x1a8] sm:$0xff]
    %v6593 = vld [vmem:[#allocation11 + $0x1b0] sm:$0xff]
    %v6594 = vld [vmem:[#allocation11 + $0x1b8] sm:$0xff]
    %v6595 = vld [vmem:[#allocation11 + $0x1c0] sm:$0xff]
    %v6596 = vld [vmem:[#allocation11 + $0x1c8] sm:$0xff]
    %v6597 = vld [vmem:[#allocation11 + $0x1d0] sm:$0xff]
    %v6598 = vld [vmem:[#allocation11 + $0x1d8] sm:$0xff]
    %v6599 = vld [vmem:[#allocation11 + $0x1e0] sm:$0xff]
    %v6600 = vld [vmem:[#allocation11 + $0x1e8] sm:$0xff]
    %v6601 = vld [vmem:[#allocation11 + $0x1f0] sm:$0xff]
    %v6602 = vld [vmem:[#allocation11 + $0x1f8] sm:$0xff]
    %v6603 = vld [vmem:[#allocation11 + $0x200] sm:$0xff]
    %v6604 = vld [vmem:[#allocation11 + $0x208] sm:$0xff]
    %v6605 = vld [vmem:[#allocation11 + $0x210] sm:$0xff]
    %v6606 = vld [vmem:[#allocation11 + $0x218] sm:$0xff]
    %v6607 = vld [vmem:[#allocation11 + $0x220] sm:$0xff]
    %v6608 = vld [vmem:[#allocation11 + $0x228] sm:$0xff]
    %v6609 = vld [vmem:[#allocation11 + $0x230] sm:$0xff]
    %v6610 = vld [vmem:[#allocation11 + $0x238] sm:$0xff]
    %v6611 = vld [vmem:[#allocation11 + $0x240] sm:$0xff]
    %v6612 = vld [vmem:[#allocation11 + $0x248] sm:$0xff]
    %v6613 = vld [vmem:[#allocation11 + $0x250] sm:$0xff]
    %v6614 = vld [vmem:[#allocation11 + $0x258] sm:$0xff]
    %v6615 = vld [vmem:[#allocation11 + $0x260] sm:$0xff]
    %v6616 = vld [vmem:[#allocation11 + $0x268] sm:$0xff]
    %v6617 = vld [vmem:[#allocation11 + $0x270] sm:$0xff]
    %v6618 = vld [vmem:[#allocation11 + $0x278] sm:$0xff]
    %v6619 = vld [vmem:[#allocation11 + $0x280] sm:$0xff]
    %v6620 = vld [vmem:[#allocation11 + $0x288] sm:$0xff]
    %v6621 = vld [vmem:[#allocation11 + $0x290] sm:$0xff]
    %v6622 = vld [vmem:[#allocation11 + $0x298] sm:$0xff]
    %v6623 = vld [vmem:[#allocation11 + $0x2a0] sm:$0xff]
    %v6624 = vld [vmem:[#allocation11 + $0x2a8] sm:$0xff]
    %v6625 = vld [vmem:[#allocation11 + $0x2b0] sm:$0xff]
    %v6626 = vld [vmem:[#allocation11 + $0x2b8] sm:$0xff]
    %v6627 = vld [vmem:[#allocation11 + $0x2c0] sm:$0xff]
    %v6628 = vld [vmem:[#allocation11 + $0x2c8] sm:$0xff]
    %v6629 = vld [vmem:[#allocation11 + $0x2d0] sm:$0xff]
    %v6630 = vld [vmem:[#allocation11 + $0x2d8] sm:$0xff]
    %v6631 = vld [vmem:[#allocation11 + $0x2e0] sm:$0xff]
    %v6632 = vld [vmem:[#allocation11 + $0x2e8] sm:$0xff]
    %v6633 = vld [vmem:[#allocation11 + $0x2f0] sm:$0xff]
    %v6634 = vld [vmem:[#allocation11 + $0x2f8] sm:$0xff]
    %v6635 = vld [vmem:[#allocation11 + $0x300] sm:$0xff]
    %v6636 = vld [vmem:[#allocation11 + $0x308] sm:$0xff]
    %v6637 = vld [vmem:[#allocation11 + $0x310] sm:$0xff]
    %v6638 = vld [vmem:[#allocation11 + $0x318] sm:$0xff]
    %v6639 = vld [vmem:[#allocation11 + $0x320] sm:$0xff]
    %v6640 = vld [vmem:[#allocation11 + $0x328] sm:$0xff]
    %v6641 = vld [vmem:[#allocation11 + $0x330] sm:$0xff]
    %v6642 = vld [vmem:[#allocation11 + $0x338] sm:$0xff]
    %v6643 = vld [vmem:[#allocation11 + $0x340] sm:$0xff]
    %v6644 = vld [vmem:[#allocation11 + $0x348] sm:$0xff]
    %v6645 = vld [vmem:[#allocation11 + $0x350] sm:$0xff]
    %v6646 = vld [vmem:[#allocation11 + $0x358] sm:$0xff]
    %v6647 = vld [vmem:[#allocation11 + $0x360] sm:$0xff]
    %v6648 = vld [vmem:[#allocation11 + $0x368] sm:$0xff]
    %v6649 = vld [vmem:[#allocation11 + $0x370] sm:$0xff]
    %v6650 = vld [vmem:[#allocation11 + $0x378] sm:$0xff]
    %v6651 = vld [vmem:[#allocation11 + $0x380] sm:$0xff]
    %v6652 = vld [vmem:[#allocation11 + $0x388] sm:$0xff]
    %v6653 = vld [vmem:[#allocation11 + $0x390] sm:$0xff]
    %v6654 = vld [vmem:[#allocation11 + $0x398] sm:$0xff]
    %v6655 = vld [vmem:[#allocation11 + $0x3a0] sm:$0xff]
    %v6656 = vld [vmem:[#allocation11 + $0x3a8] sm:$0xff]
    %v6657 = vld [vmem:[#allocation11 + $0x3b0] sm:$0xff]
    %v6658 = vld [vmem:[#allocation11 + $0x3b8] sm:$0xff]
    %v6659 = vld [vmem:[#allocation11 + $0x3c0] sm:$0xff]
    %v6660 = vld [vmem:[#allocation11 + $0x3c8] sm:$0xff]
    %v6661 = vld [vmem:[#allocation11 + $0x3d0] sm:$0xff]
    %v6662 = vld [vmem:[#allocation11 + $0x3d8] sm:$0xff]
    %v6663 = vld [vmem:[#allocation11 + $0x3e0] sm:$0xff]
    %v6664 = vld [vmem:[#allocation11 + $0x3e8] sm:$0xff]
    %v6665 = vld [vmem:[#allocation11 + $0x3f0] sm:$0xff]
    %v6666 = vld [vmem:[#allocation11 + $0x3f8] sm:$0xff]
    %v6667 = vld [vmem:[#allocation11 + $0x400] sm:$0xff]
    %v6668 = vld [vmem:[#allocation11 + $0x408] sm:$0xff]
    %v6669 = vld [vmem:[#allocation11 + $0x410] sm:$0xff]
    %v6670 = vld [vmem:[#allocation11 + $0x418] sm:$0xff]
    %v6671 = vld [vmem:[#allocation11 + $0x420] sm:$0xff]
    %v6672 = vld [vmem:[#allocation11 + $0x428] sm:$0xff]
    %v6673 = vld [vmem:[#allocation11 + $0x430] sm:$0xff]
    %v6674 = vld [vmem:[#allocation11 + $0x438] sm:$0xff]
    %v6675 = vld [vmem:[#allocation11 + $0x440] sm:$0xff]
    %v6676 = vld [vmem:[#allocation11 + $0x448] sm:$0xff]
    %v6677 = vld [vmem:[#allocation11 + $0x450] sm:$0xff]
    %v6678 = vld [vmem:[#allocation11 + $0x458] sm:$0xff]
    %v6679 = vld [vmem:[#allocation11 + $0x460] sm:$0xff]
    %v6680 = vld [vmem:[#allocation11 + $0x468] sm:$0xff]
    %v6681 = vld [vmem:[#allocation11 + $0x470] sm:$0xff]
    %v6682 = vld [vmem:[#allocation11 + $0x478] sm:$0xff]
    %v6683 = vld [vmem:[#allocation11 + $0x480] sm:$0xff]
    %v6684 = vld [vmem:[#allocation11 + $0x488] sm:$0xff]
    %v6685 = vld [vmem:[#allocation11 + $0x490] sm:$0xff]
    %v6686 = vld [vmem:[#allocation11 + $0x498] sm:$0xff]
    %v6687 = vld [vmem:[#allocation11 + $0x4a0] sm:$0xff]
    %v6688 = vld [vmem:[#allocation11 + $0x4a8] sm:$0xff]
    %v6689 = vld [vmem:[#allocation11 + $0x4b0] sm:$0xff]
    %v6690 = vld [vmem:[#allocation11 + $0x4b8] sm:$0xff]
    %v6691 = vld [vmem:[#allocation11 + $0x4c0] sm:$0xff]
    %v6692 = vld [vmem:[#allocation11 + $0x4c8] sm:$0xff]
    %v6693 = vld [vmem:[#allocation11 + $0x4d0] sm:$0xff]
    %v6694 = vld [vmem:[#allocation11 + $0x4d8] sm:$0xff]
    %v6695 = vld [vmem:[#allocation11 + $0x4e0] sm:$0xff]
    %v6696 = vld [vmem:[#allocation11 + $0x4e8] sm:$0xff]
    %v6697 = vld [vmem:[#allocation11 + $0x4f0] sm:$0xff]
    %v6698 = vld [vmem:[#allocation11 + $0x4f8] sm:$0xff]
    %v6699 = vld [vmem:[#allocation11 + $0x500] sm:$0xff]
    %v6700 = vld [vmem:[#allocation11 + $0x508] sm:$0xff]
    %v6701 = vld [vmem:[#allocation11 + $0x510] sm:$0xff]
    %v6702 = vld [vmem:[#allocation11 + $0x518] sm:$0xff]
    %v6703 = vld [vmem:[#allocation11 + $0x520] sm:$0xff]
    %v6704 = vld [vmem:[#allocation11 + $0x528] sm:$0xff]
    %v6705 = vld [vmem:[#allocation11 + $0x530] sm:$0xff]
    %v6706 = vld [vmem:[#allocation11 + $0x538] sm:$0xff]
    %v6707 = vld [vmem:[#allocation11 + $0x540] sm:$0xff]
    %v6708 = vld [vmem:[#allocation11 + $0x548] sm:$0xff]
    %v6709 = vld [vmem:[#allocation11 + $0x550] sm:$0xff]
    %v6710 = vld [vmem:[#allocation11 + $0x558] sm:$0xff]
    %v6711 = vld [vmem:[#allocation11 + $0x560] sm:$0xff]
    %v6712 = vld [vmem:[#allocation11 + $0x568] sm:$0xff]
    %v6713 = vld [vmem:[#allocation11 + $0x570] sm:$0xff]
    %v6714 = vld [vmem:[#allocation11 + $0x578] sm:$0xff]
    %v6715 = vld [vmem:[#allocation11 + $0x580] sm:$0xff]
    %v6716 = vld [vmem:[#allocation11 + $0x588] sm:$0xff]
    %v6717 = vld [vmem:[#allocation11 + $0x590] sm:$0xff]
    %v6718 = vld [vmem:[#allocation11 + $0x598] sm:$0xff]
    %v6719 = vld [vmem:[#allocation11 + $0x5a0] sm:$0xff]
    %v6720 = vld [vmem:[#allocation11 + $0x5a8] sm:$0xff]
    %v6721 = vld [vmem:[#allocation11 + $0x5b0] sm:$0xff]
    %v6722 = vld [vmem:[#allocation11 + $0x5b8] sm:$0xff]
    %v6723 = vld [vmem:[#allocation11 + $0x5c0] sm:$0xff]
    %v6724 = vld [vmem:[#allocation11 + $0x5c8] sm:$0xff]
    %v6725 = vld [vmem:[#allocation11 + $0x5d0] sm:$0xff]
    %v6726 = vld [vmem:[#allocation11 + $0x5d8] sm:$0xff]
    %v6727 = vld [vmem:[#allocation11 + $0x5e0] sm:$0xff]
    %v6728 = vld [vmem:[#allocation11 + $0x5e8] sm:$0xff]
    %v6729 = vld [vmem:[#allocation11 + $0x5f0] sm:$0xff]
    %v6730 = vld [vmem:[#allocation11 + $0x5f8] sm:$0xff]
    %v6731 = vld [vmem:[#allocation11 + $0x600] sm:$0xff]
    %v6732 = vld [vmem:[#allocation11 + $0x608] sm:$0xff]
    %v6733 = vld [vmem:[#allocation11 + $0x610] sm:$0xff]
    %v6734 = vld [vmem:[#allocation11 + $0x618] sm:$0xff]
    %v6735 = vld [vmem:[#allocation11 + $0x620] sm:$0xff]
    %v6736 = vld [vmem:[#allocation11 + $0x628] sm:$0xff]
    %v6737 = vld [vmem:[#allocation11 + $0x630] sm:$0xff]
    %v6738 = vld [vmem:[#allocation11 + $0x638] sm:$0xff]
    %v6739 = vld [vmem:[#allocation11 + $0x640] sm:$0xff]
    %v6740 = vld [vmem:[#allocation11 + $0x648] sm:$0xff]
    %v6741 = vld [vmem:[#allocation11 + $0x650] sm:$0xff]
    %v6742 = vld [vmem:[#allocation11 + $0x658] sm:$0xff]
    %v6743 = vld [vmem:[#allocation11 + $0x660] sm:$0xff]
    %v6744 = vld [vmem:[#allocation11 + $0x668] sm:$0xff]
    %v6745 = vld [vmem:[#allocation11 + $0x670] sm:$0xff]
    %v6746 = vld [vmem:[#allocation11 + $0x678] sm:$0xff]
    %v6747 = vld [vmem:[#allocation11 + $0x680] sm:$0xff]
    %v6748 = vld [vmem:[#allocation11 + $0x688] sm:$0xff]
    %v6749 = vld [vmem:[#allocation11 + $0x690] sm:$0xff]
    %v6750 = vld [vmem:[#allocation11 + $0x698] sm:$0xff]
    %v6751 = vld [vmem:[#allocation11 + $0x6a0] sm:$0xff]
    %v6752 = vld [vmem:[#allocation11 + $0x6a8] sm:$0xff]
    %v6753 = vld [vmem:[#allocation11 + $0x6b0] sm:$0xff]
    %v6754 = vld [vmem:[#allocation11 + $0x6b8] sm:$0xff]
    %v6755 = vld [vmem:[#allocation11 + $0x6c0] sm:$0xff]
    %v6756 = vld [vmem:[#allocation11 + $0x6c8] sm:$0xff]
    %v6757 = vld [vmem:[#allocation11 + $0x6d0] sm:$0xff]
    %v6758 = vld [vmem:[#allocation11 + $0x6d8] sm:$0xff]
    %v6759 = vld [vmem:[#allocation11 + $0x6e0] sm:$0xff]
    %v6760 = vld [vmem:[#allocation11 + $0x6e8] sm:$0xff]
    %v6761 = vld [vmem:[#allocation11 + $0x6f0] sm:$0xff]
    %v6762 = vld [vmem:[#allocation11 + $0x6f8] sm:$0xff]
    %v6763 = vld [vmem:[#allocation11 + $0x700] sm:$0xff]
    %v6764 = vld [vmem:[#allocation11 + $0x708] sm:$0xff]
    %v6765 = vld [vmem:[#allocation11 + $0x710] sm:$0xff]
    %v6766 = vld [vmem:[#allocation11 + $0x718] sm:$0xff]
    %v6767 = vld [vmem:[#allocation11 + $0x720] sm:$0xff]
    %v6768 = vld [vmem:[#allocation11 + $0x728] sm:$0xff]
    %v6769 = vld [vmem:[#allocation11 + $0x730] sm:$0xff]
    %v6770 = vld [vmem:[#allocation11 + $0x738] sm:$0xff]
    %v6771 = vld [vmem:[#allocation11 + $0x740] sm:$0xff]
    %v6772 = vld [vmem:[#allocation11 + $0x748] sm:$0xff]
    %v6773 = vld [vmem:[#allocation11 + $0x750] sm:$0xff]
    %v6774 = vld [vmem:[#allocation11 + $0x758] sm:$0xff]
    %v6775 = vld [vmem:[#allocation11 + $0x760] sm:$0xff]
    %v6776 = vld [vmem:[#allocation11 + $0x768] sm:$0xff]
    %v6777 = vld [vmem:[#allocation11 + $0x770] sm:$0xff]
    %v6778 = vld [vmem:[#allocation11 + $0x778] sm:$0xff]
    %v6779 = vld [vmem:[#allocation11 + $0x780] sm:$0xff]
    %v6780 = vld [vmem:[#allocation11 + $0x788] sm:$0xff]
    %v6781 = vld [vmem:[#allocation11 + $0x790] sm:$0xff]
    %v6782 = vld [vmem:[#allocation11 + $0x798] sm:$0xff]
    %v6783 = vld [vmem:[#allocation11 + $0x7a0] sm:$0xff]
    %v6784 = vld [vmem:[#allocation11 + $0x7a8] sm:$0xff]
    %v6785 = vld [vmem:[#allocation11 + $0x7b0] sm:$0xff]
    %v6786 = vld [vmem:[#allocation11 + $0x7b8] sm:$0xff]
    %v6787 = vld [vmem:[#allocation11 + $0x7c0] sm:$0xff]
    %v6788 = vld [vmem:[#allocation11 + $0x7c8] sm:$0xff]
    %v6789 = vld [vmem:[#allocation11 + $0x7d0] sm:$0xff]
    %v6790 = vld [vmem:[#allocation11 + $0x7d8] sm:$0xff]
    %v6791 = vld [vmem:[#allocation11 + $0x7e0] sm:$0xff]
    %v6792 = vld [vmem:[#allocation11 + $0x7e8] sm:$0xff]
    %v6793 = vld [vmem:[#allocation11 + $0x7f0] sm:$0xff]
    %v6794 = vld [vmem:[#allocation11 + $0x7f8] sm:$0xff]
    %v6795 = vld [vmem:[#allocation13] sm:$0xf]
    %v6797 = vlaneseq
    %v6798 = vshrl.u32 %v6797, 7
    %v6799 = vsub.s32 0, %v6798
    %v6800 = vrot.slane %v6795, %v6799
    %v6801 = vlaneseq
    %v6802 = vshrl.u32 %v6801, 7
    %v6803 = vsub.s32 1, %v6802
    %v6804 = vrot.slane %v6795, %v6803
    %v6805 = vlaneseq
    %v6806 = vshrl.u32 %v6805, 7
    %v6807 = vsub.s32 2, %v6806
    %v6808 = vrot.slane %v6795, %v6807
    %v6809 = vlaneseq
    %v6810 = vshrl.u32 %v6809, 7
    %v6811 = vsub.s32 3, %v6810
    %v6812 = vrot.slane %v6795, %v6811
    %v7073 = vunpack.c.l.b16 %v6539
    %v7074 = vunpack.c.h.b16 %v6539
    %v7075 = vunpack.c.l.b16 %v6540
    %v7076 = vunpack.c.h.b16 %v6540
    %v7077 = vunpack.c.l.b16 %v6541
    %v7078 = vunpack.c.h.b16 %v6541
    %v7079 = vunpack.c.l.b16 %v6542
    %v7080 = vunpack.c.h.b16 %v6542
    %v7081 = vunpack.c.l.b16 %v6543
    %v7082 = vunpack.c.h.b16 %v6543
    %v7083 = vunpack.c.l.b16 %v6544
    %v7084 = vunpack.c.h.b16 %v6544
    %v7085 = vunpack.c.l.b16 %v6545
    %v7086 = vunpack.c.h.b16 %v6545
    %v7087 = vunpack.c.l.b16 %v6546
    %v7088 = vunpack.c.h.b16 %v6546
    %v7089 = vunpack.c.l.b16 %v6547
    %v7090 = vunpack.c.h.b16 %v6547
    %v7091 = vunpack.c.l.b16 %v6548
    %v7092 = vunpack.c.h.b16 %v6548
    %v7093 = vunpack.c.l.b16 %v6549
    %v7094 = vunpack.c.h.b16 %v6549
    %v7095 = vunpack.c.l.b16 %v6550
    %v7096 = vunpack.c.h.b16 %v6550
    %v7097 = vunpack.c.l.b16 %v6551
    %v7098 = vunpack.c.h.b16 %v6551
    %v7099 = vunpack.c.l.b16 %v6552
    %v7100 = vunpack.c.h.b16 %v6552
    %v7101 = vunpack.c.l.b16 %v6553
    %v7102 = vunpack.c.h.b16 %v6553
    %v7103 = vunpack.c.l.b16 %v6554
    %v7104 = vunpack.c.h.b16 %v6554
    %v7105 = vunpack.c.l.b16 %v6555
    %v7106 = vunpack.c.h.b16 %v6555
    %v7107 = vunpack.c.l.b16 %v6556
    %v7108 = vunpack.c.h.b16 %v6556
    %v7109 = vunpack.c.l.b16 %v6557
    %v7110 = vunpack.c.h.b16 %v6557
    %v7111 = vunpack.c.l.b16 %v6558
    %v7112 = vunpack.c.h.b16 %v6558
    %v7113 = vunpack.c.l.b16 %v6559
    %v7114 = vunpack.c.h.b16 %v6559
    %v7115 = vunpack.c.l.b16 %v6560
    %v7116 = vunpack.c.h.b16 %v6560
    %v7117 = vunpack.c.l.b16 %v6561
    %v7118 = vunpack.c.h.b16 %v6561
    %v7119 = vunpack.c.l.b16 %v6562
    %v7120 = vunpack.c.h.b16 %v6562
    %v7121 = vunpack.c.l.b16 %v6563
    %v7122 = vunpack.c.h.b16 %v6563
    %v7123 = vunpack.c.l.b16 %v6564
    %v7124 = vunpack.c.h.b16 %v6564
    %v7125 = vunpack.c.l.b16 %v6565
    %v7126 = vunpack.c.h.b16 %v6565
    %v7127 = vunpack.c.l.b16 %v6566
    %v7128 = vunpack.c.h.b16 %v6566
    %v7129 = vunpack.c.l.b16 %v6567
    %v7130 = vunpack.c.h.b16 %v6567
    %v7131 = vunpack.c.l.b16 %v6568
    %v7132 = vunpack.c.h.b16 %v6568
    %v7133 = vunpack.c.l.b16 %v6569
    %v7134 = vunpack.c.h.b16 %v6569
    %v7135 = vunpack.c.l.b16 %v6570
    %v7136 = vunpack.c.h.b16 %v6570
    %v7137 = vunpack.c.l.b16 %v6571
    %v7138 = vunpack.c.h.b16 %v6571
    %v7139 = vunpack.c.l.b16 %v6572
    %v7140 = vunpack.c.h.b16 %v6572
    %v7141 = vunpack.c.l.b16 %v6573
    %v7142 = vunpack.c.h.b16 %v6573
    %v7143 = vunpack.c.l.b16 %v6574
    %v7144 = vunpack.c.h.b16 %v6574
    %v7145 = vunpack.c.l.b16 %v6575
    %v7146 = vunpack.c.h.b16 %v6575
    %v7147 = vunpack.c.l.b16 %v6576
    %v7148 = vunpack.c.h.b16 %v6576
    %v7149 = vunpack.c.l.b16 %v6577
    %v7150 = vunpack.c.h.b16 %v6577
    %v7151 = vunpack.c.l.b16 %v6578
    %v7152 = vunpack.c.h.b16 %v6578
    %v7153 = vunpack.c.l.b16 %v6579
    %v7154 = vunpack.c.h.b16 %v6579
    %v7155 = vunpack.c.l.b16 %v6580
    %v7156 = vunpack.c.h.b16 %v6580
    %v7157 = vunpack.c.l.b16 %v6581
    %v7158 = vunpack.c.h.b16 %v6581
    %v7159 = vunpack.c.l.b16 %v6582
    %v7160 = vunpack.c.h.b16 %v6582
    %v7161 = vunpack.c.l.b16 %v6583
    %v7162 = vunpack.c.h.b16 %v6583
    %v7163 = vunpack.c.l.b16 %v6584
    %v7164 = vunpack.c.h.b16 %v6584
    %v7165 = vunpack.c.l.b16 %v6585
    %v7166 = vunpack.c.h.b16 %v6585
    %v7167 = vunpack.c.l.b16 %v6586
    %v7168 = vunpack.c.h.b16 %v6586
    %v7169 = vunpack.c.l.b16 %v6587
    %v7170 = vunpack.c.h.b16 %v6587
    %v7171 = vunpack.c.l.b16 %v6588
    %v7172 = vunpack.c.h.b16 %v6588
    %v7173 = vunpack.c.l.b16 %v6589
    %v7174 = vunpack.c.h.b16 %v6589
    %v7175 = vunpack.c.l.b16 %v6590
    %v7176 = vunpack.c.h.b16 %v6590
    %v7177 = vunpack.c.l.b16 %v6591
    %v7178 = vunpack.c.h.b16 %v6591
    %v7179 = vunpack.c.l.b16 %v6592
    %v7180 = vunpack.c.h.b16 %v6592
    %v7181 = vunpack.c.l.b16 %v6593
    %v7182 = vunpack.c.h.b16 %v6593
    %v7183 = vunpack.c.l.b16 %v6594
    %v7184 = vunpack.c.h.b16 %v6594
    %v7185 = vunpack.c.l.b16 %v6595
    %v7186 = vunpack.c.h.b16 %v6595
    %v7187 = vunpack.c.l.b16 %v6596
    %v7188 = vunpack.c.h.b16 %v6596
    %v7189 = vunpack.c.l.b16 %v6597
    %v7190 = vunpack.c.h.b16 %v6597
    %v7191 = vunpack.c.l.b16 %v6598
    %v7192 = vunpack.c.h.b16 %v6598
    %v7193 = vunpack.c.l.b16 %v6599
    %v7194 = vunpack.c.h.b16 %v6599
    %v7195 = vunpack.c.l.b16 %v6600
    %v7196 = vunpack.c.h.b16 %v6600
    %v7197 = vunpack.c.l.b16 %v6601
    %v7198 = vunpack.c.h.b16 %v6601
    %v7199 = vunpack.c.l.b16 %v6602
    %v7200 = vunpack.c.h.b16 %v6602
    %v7201 = vunpack.c.l.b16 %v6603
    %v7202 = vunpack.c.h.b16 %v6603
    %v7203 = vunpack.c.l.b16 %v6604
    %v7204 = vunpack.c.h.b16 %v6604
    %v7205 = vunpack.c.l.b16 %v6605
    %v7206 = vunpack.c.h.b16 %v6605
    %v7207 = vunpack.c.l.b16 %v6606
    %v7208 = vunpack.c.h.b16 %v6606
    %v7209 = vunpack.c.l.b16 %v6607
    %v7210 = vunpack.c.h.b16 %v6607
    %v7211 = vunpack.c.l.b16 %v6608
    %v7212 = vunpack.c.h.b16 %v6608
    %v7213 = vunpack.c.l.b16 %v6609
    %v7214 = vunpack.c.h.b16 %v6609
    %v7215 = vunpack.c.l.b16 %v6610
    %v7216 = vunpack.c.h.b16 %v6610
    %v7217 = vunpack.c.l.b16 %v6611
    %v7218 = vunpack.c.h.b16 %v6611
    %v7219 = vunpack.c.l.b16 %v6612
    %v7220 = vunpack.c.h.b16 %v6612
    %v7221 = vunpack.c.l.b16 %v6613
    %v7222 = vunpack.c.h.b16 %v6613
    %v7223 = vunpack.c.l.b16 %v6614
    %v7224 = vunpack.c.h.b16 %v6614
    %v7225 = vunpack.c.l.b16 %v6615
    %v7226 = vunpack.c.h.b16 %v6615
    %v7227 = vunpack.c.l.b16 %v6616
    %v7228 = vunpack.c.h.b16 %v6616
    %v7229 = vunpack.c.l.b16 %v6617
    %v7230 = vunpack.c.h.b16 %v6617
    %v7231 = vunpack.c.l.b16 %v6618
    %v7232 = vunpack.c.h.b16 %v6618
    %v7233 = vunpack.c.l.b16 %v6619
    %v7234 = vunpack.c.h.b16 %v6619
    %v7235 = vunpack.c.l.b16 %v6620
    %v7236 = vunpack.c.h.b16 %v6620
    %v7237 = vunpack.c.l.b16 %v6621
    %v7238 = vunpack.c.h.b16 %v6621
    %v7239 = vunpack.c.l.b16 %v6622
    %v7240 = vunpack.c.h.b16 %v6622
    %v7241 = vunpack.c.l.b16 %v6623
    %v7242 = vunpack.c.h.b16 %v6623
    %v7243 = vunpack.c.l.b16 %v6624
    %v7244 = vunpack.c.h.b16 %v6624
    %v7245 = vunpack.c.l.b16 %v6625
    %v7246 = vunpack.c.h.b16 %v6625
    %v7247 = vunpack.c.l.b16 %v6626
    %v7248 = vunpack.c.h.b16 %v6626
    %v7249 = vunpack.c.l.b16 %v6627
    %v7250 = vunpack.c.h.b16 %v6627
    %v7251 = vunpack.c.l.b16 %v6628
    %v7252 = vunpack.c.h.b16 %v6628
    %v7253 = vunpack.c.l.b16 %v6629
    %v7254 = vunpack.c.h.b16 %v6629
    %v7255 = vunpack.c.l.b16 %v6630
    %v7256 = vunpack.c.h.b16 %v6630
    %v7257 = vunpack.c.l.b16 %v6631
    %v7258 = vunpack.c.h.b16 %v6631
    %v7259 = vunpack.c.l.b16 %v6632
    %v7260 = vunpack.c.h.b16 %v6632
    %v7261 = vunpack.c.l.b16 %v6633
    %v7262 = vunpack.c.h.b16 %v6633
    %v7263 = vunpack.c.l.b16 %v6634
    %v7264 = vunpack.c.h.b16 %v6634
    %v7265 = vunpack.c.l.b16 %v6635
    %v7266 = vunpack.c.h.b16 %v6635
    %v7267 = vunpack.c.l.b16 %v6636
    %v7268 = vunpack.c.h.b16 %v6636
    %v7269 = vunpack.c.l.b16 %v6637
    %v7270 = vunpack.c.h.b16 %v6637
    %v7271 = vunpack.c.l.b16 %v6638
    %v7272 = vunpack.c.h.b16 %v6638
    %v7273 = vunpack.c.l.b16 %v6639
    %v7274 = vunpack.c.h.b16 %v6639
    %v7275 = vunpack.c.l.b16 %v6640
    %v7276 = vunpack.c.h.b16 %v6640
    %v7277 = vunpack.c.l.b16 %v6641
    %v7278 = vunpack.c.h.b16 %v6641
    %v7279 = vunpack.c.l.b16 %v6642
    %v7280 = vunpack.c.h.b16 %v6642
    %v7281 = vunpack.c.l.b16 %v6643
    %v7282 = vunpack.c.h.b16 %v6643
    %v7283 = vunpack.c.l.b16 %v6644
    %v7284 = vunpack.c.h.b16 %v6644
    %v7285 = vunpack.c.l.b16 %v6645
    %v7286 = vunpack.c.h.b16 %v6645
    %v7287 = vunpack.c.l.b16 %v6646
    %v7288 = vunpack.c.h.b16 %v6646
    %v7289 = vunpack.c.l.b16 %v6647
    %v7290 = vunpack.c.h.b16 %v6647
    %v7291 = vunpack.c.l.b16 %v6648
    %v7292 = vunpack.c.h.b16 %v6648
    %v7293 = vunpack.c.l.b16 %v6649
    %v7294 = vunpack.c.h.b16 %v6649
    %v7295 = vunpack.c.l.b16 %v6650
    %v7296 = vunpack.c.h.b16 %v6650
    %v7297 = vunpack.c.l.b16 %v6651
    %v7298 = vunpack.c.h.b16 %v6651
    %v7299 = vunpack.c.l.b16 %v6652
    %v7300 = vunpack.c.h.b16 %v6652
    %v7301 = vunpack.c.l.b16 %v6653
    %v7302 = vunpack.c.h.b16 %v6653
    %v7303 = vunpack.c.l.b16 %v6654
    %v7304 = vunpack.c.h.b16 %v6654
    %v7305 = vunpack.c.l.b16 %v6655
    %v7306 = vunpack.c.h.b16 %v6655
    %v7307 = vunpack.c.l.b16 %v6656
    %v7308 = vunpack.c.h.b16 %v6656
    %v7309 = vunpack.c.l.b16 %v6657
    %v7310 = vunpack.c.h.b16 %v6657
    %v7311 = vunpack.c.l.b16 %v6658
    %v7312 = vunpack.c.h.b16 %v6658
    %v7313 = vunpack.c.l.b16 %v6659
    %v7314 = vunpack.c.h.b16 %v6659
    %v7315 = vunpack.c.l.b16 %v6660
    %v7316 = vunpack.c.h.b16 %v6660
    %v7317 = vunpack.c.l.b16 %v6661
    %v7318 = vunpack.c.h.b16 %v6661
    %v7319 = vunpack.c.l.b16 %v6662
    %v7320 = vunpack.c.h.b16 %v6662
    %v7321 = vunpack.c.l.b16 %v6663
    %v7322 = vunpack.c.h.b16 %v6663
    %v7323 = vunpack.c.l.b16 %v6664
    %v7324 = vunpack.c.h.b16 %v6664
    %v7325 = vunpack.c.l.b16 %v6665
    %v7326 = vunpack.c.h.b16 %v6665
    %v7327 = vunpack.c.l.b16 %v6666
    %v7328 = vunpack.c.h.b16 %v6666
    %v7329 = vunpack.c.l.b16 %v6667
    %v7330 = vunpack.c.h.b16 %v6667
    %v7331 = vunpack.c.l.b16 %v6668
    %v7332 = vunpack.c.h.b16 %v6668
    %v7333 = vunpack.c.l.b16 %v6669
    %v7334 = vunpack.c.h.b16 %v6669
    %v7335 = vunpack.c.l.b16 %v6670
    %v7336 = vunpack.c.h.b16 %v6670
    %v7337 = vunpack.c.l.b16 %v6671
    %v7338 = vunpack.c.h.b16 %v6671
    %v7339 = vunpack.c.l.b16 %v6672
    %v7340 = vunpack.c.h.b16 %v6672
    %v7341 = vunpack.c.l.b16 %v6673
    %v7342 = vunpack.c.h.b16 %v6673
    %v7343 = vunpack.c.l.b16 %v6674
    %v7344 = vunpack.c.h.b16 %v6674
    %v7345 = vunpack.c.l.b16 %v6675
    %v7346 = vunpack.c.h.b16 %v6675
    %v7347 = vunpack.c.l.b16 %v6676
    %v7348 = vunpack.c.h.b16 %v6676
    %v7349 = vunpack.c.l.b16 %v6677
    %v7350 = vunpack.c.h.b16 %v6677
    %v7351 = vunpack.c.l.b16 %v6678
    %v7352 = vunpack.c.h.b16 %v6678
    %v7353 = vunpack.c.l.b16 %v6679
    %v7354 = vunpack.c.h.b16 %v6679
    %v7355 = vunpack.c.l.b16 %v6680
    %v7356 = vunpack.c.h.b16 %v6680
    %v7357 = vunpack.c.l.b16 %v6681
    %v7358 = vunpack.c.h.b16 %v6681
    %v7359 = vunpack.c.l.b16 %v6682
    %v7360 = vunpack.c.h.b16 %v6682
    %v7361 = vunpack.c.l.b16 %v6683
    %v7362 = vunpack.c.h.b16 %v6683
    %v7363 = vunpack.c.l.b16 %v6684
    %v7364 = vunpack.c.h.b16 %v6684
    %v7365 = vunpack.c.l.b16 %v6685
    %v7366 = vunpack.c.h.b16 %v6685
    %v7367 = vunpack.c.l.b16 %v6686
    %v7368 = vunpack.c.h.b16 %v6686
    %v7369 = vunpack.c.l.b16 %v6687
    %v7370 = vunpack.c.h.b16 %v6687
    %v7371 = vunpack.c.l.b16 %v6688
    %v7372 = vunpack.c.h.b16 %v6688
    %v7373 = vunpack.c.l.b16 %v6689
    %v7374 = vunpack.c.h.b16 %v6689
    %v7375 = vunpack.c.l.b16 %v6690
    %v7376 = vunpack.c.h.b16 %v6690
    %v7377 = vunpack.c.l.b16 %v6691
    %v7378 = vunpack.c.h.b16 %v6691
    %v7379 = vunpack.c.l.b16 %v6692
    %v7380 = vunpack.c.h.b16 %v6692
    %v7381 = vunpack.c.l.b16 %v6693
    %v7382 = vunpack.c.h.b16 %v6693
    %v7383 = vunpack.c.l.b16 %v6694
    %v7384 = vunpack.c.h.b16 %v6694
    %v7385 = vunpack.c.l.b16 %v6695
    %v7386 = vunpack.c.h.b16 %v6695
    %v7387 = vunpack.c.l.b16 %v6696
    %v7388 = vunpack.c.h.b16 %v6696
    %v7389 = vunpack.c.l.b16 %v6697
    %v7390 = vunpack.c.h.b16 %v6697
    %v7391 = vunpack.c.l.b16 %v6698
    %v7392 = vunpack.c.h.b16 %v6698
    %v7393 = vunpack.c.l.b16 %v6699
    %v7394 = vunpack.c.h.b16 %v6699
    %v7395 = vunpack.c.l.b16 %v6700
    %v7396 = vunpack.c.h.b16 %v6700
    %v7397 = vunpack.c.l.b16 %v6701
    %v7398 = vunpack.c.h.b16 %v6701
    %v7399 = vunpack.c.l.b16 %v6702
    %v7400 = vunpack.c.h.b16 %v6702
    %v7401 = vunpack.c.l.b16 %v6703
    %v7402 = vunpack.c.h.b16 %v6703
    %v7403 = vunpack.c.l.b16 %v6704
    %v7404 = vunpack.c.h.b16 %v6704
    %v7405 = vunpack.c.l.b16 %v6705
    %v7406 = vunpack.c.h.b16 %v6705
    %v7407 = vunpack.c.l.b16 %v6706
    %v7408 = vunpack.c.h.b16 %v6706
    %v7409 = vunpack.c.l.b16 %v6707
    %v7410 = vunpack.c.h.b16 %v6707
    %v7411 = vunpack.c.l.b16 %v6708
    %v7412 = vunpack.c.h.b16 %v6708
    %v7413 = vunpack.c.l.b16 %v6709
    %v7414 = vunpack.c.h.b16 %v6709
    %v7415 = vunpack.c.l.b16 %v6710
    %v7416 = vunpack.c.h.b16 %v6710
    %v7417 = vunpack.c.l.b16 %v6711
    %v7418 = vunpack.c.h.b16 %v6711
    %v7419 = vunpack.c.l.b16 %v6712
    %v7420 = vunpack.c.h.b16 %v6712
    %v7421 = vunpack.c.l.b16 %v6713
    %v7422 = vunpack.c.h.b16 %v6713
    %v7423 = vunpack.c.l.b16 %v6714
    %v7424 = vunpack.c.h.b16 %v6714
    %v7425 = vunpack.c.l.b16 %v6715
    %v7426 = vunpack.c.h.b16 %v6715
    %v7427 = vunpack.c.l.b16 %v6716
    %v7428 = vunpack.c.h.b16 %v6716
    %v7429 = vunpack.c.l.b16 %v6717
    %v7430 = vunpack.c.h.b16 %v6717
    %v7431 = vunpack.c.l.b16 %v6718
    %v7432 = vunpack.c.h.b16 %v6718
    %v7433 = vunpack.c.l.b16 %v6719
    %v7434 = vunpack.c.h.b16 %v6719
    %v7435 = vunpack.c.l.b16 %v6720
    %v7436 = vunpack.c.h.b16 %v6720
    %v7437 = vunpack.c.l.b16 %v6721
    %v7438 = vunpack.c.h.b16 %v6721
    %v7439 = vunpack.c.l.b16 %v6722
    %v7440 = vunpack.c.h.b16 %v6722
    %v7441 = vunpack.c.l.b16 %v6723
    %v7442 = vunpack.c.h.b16 %v6723
    %v7443 = vunpack.c.l.b16 %v6724
    %v7444 = vunpack.c.h.b16 %v6724
    %v7445 = vunpack.c.l.b16 %v6725
    %v7446 = vunpack.c.h.b16 %v6725
    %v7447 = vunpack.c.l.b16 %v6726
    %v7448 = vunpack.c.h.b16 %v6726
    %v7449 = vunpack.c.l.b16 %v6727
    %v7450 = vunpack.c.h.b16 %v6727
    %v7451 = vunpack.c.l.b16 %v6728
    %v7452 = vunpack.c.h.b16 %v6728
    %v7453 = vunpack.c.l.b16 %v6729
    %v7454 = vunpack.c.h.b16 %v6729
    %v7455 = vunpack.c.l.b16 %v6730
    %v7456 = vunpack.c.h.b16 %v6730
    %v7457 = vunpack.c.l.b16 %v6731
    %v7458 = vunpack.c.h.b16 %v6731
    %v7459 = vunpack.c.l.b16 %v6732
    %v7460 = vunpack.c.h.b16 %v6732
    %v7461 = vunpack.c.l.b16 %v6733
    %v7462 = vunpack.c.h.b16 %v6733
    %v7463 = vunpack.c.l.b16 %v6734
    %v7464 = vunpack.c.h.b16 %v6734
    %v7465 = vunpack.c.l.b16 %v6735
    %v7466 = vunpack.c.h.b16 %v6735
    %v7467 = vunpack.c.l.b16 %v6736
    %v7468 = vunpack.c.h.b16 %v6736
    %v7469 = vunpack.c.l.b16 %v6737
    %v7470 = vunpack.c.h.b16 %v6737
    %v7471 = vunpack.c.l.b16 %v6738
    %v7472 = vunpack.c.h.b16 %v6738
    %v7473 = vunpack.c.l.b16 %v6739
    %v7474 = vunpack.c.h.b16 %v6739
    %v7475 = vunpack.c.l.b16 %v6740
    %v7476 = vunpack.c.h.b16 %v6740
    %v7477 = vunpack.c.l.b16 %v6741
    %v7478 = vunpack.c.h.b16 %v6741
    %v7479 = vunpack.c.l.b16 %v6742
    %v7480 = vunpack.c.h.b16 %v6742
    %v7481 = vunpack.c.l.b16 %v6743
    %v7482 = vunpack.c.h.b16 %v6743
    %v7483 = vunpack.c.l.b16 %v6744
    %v7484 = vunpack.c.h.b16 %v6744
    %v7485 = vunpack.c.l.b16 %v6745
    %v7486 = vunpack.c.h.b16 %v6745
    %v7487 = vunpack.c.l.b16 %v6746
    %v7488 = vunpack.c.h.b16 %v6746
    %v7489 = vunpack.c.l.b16 %v6747
    %v7490 = vunpack.c.h.b16 %v6747
    %v7491 = vunpack.c.l.b16 %v6748
    %v7492 = vunpack.c.h.b16 %v6748
    %v7493 = vunpack.c.l.b16 %v6749
    %v7494 = vunpack.c.h.b16 %v6749
    %v7495 = vunpack.c.l.b16 %v6750
    %v7496 = vunpack.c.h.b16 %v6750
    %v7497 = vunpack.c.l.b16 %v6751
    %v7498 = vunpack.c.h.b16 %v6751
    %v7499 = vunpack.c.l.b16 %v6752
    %v7500 = vunpack.c.h.b16 %v6752
    %v7501 = vunpack.c.l.b16 %v6753
    %v7502 = vunpack.c.h.b16 %v6753
    %v7503 = vunpack.c.l.b16 %v6754
    %v7504 = vunpack.c.h.b16 %v6754
    %v7505 = vunpack.c.l.b16 %v6755
    %v7506 = vunpack.c.h.b16 %v6755
    %v7507 = vunpack.c.l.b16 %v6756
    %v7508 = vunpack.c.h.b16 %v6756
    %v7509 = vunpack.c.l.b16 %v6757
    %v7510 = vunpack.c.h.b16 %v6757
    %v7511 = vunpack.c.l.b16 %v6758
    %v7512 = vunpack.c.h.b16 %v6758
    %v7513 = vunpack.c.l.b16 %v6759
    %v7514 = vunpack.c.h.b16 %v6759
    %v7515 = vunpack.c.l.b16 %v6760
    %v7516 = vunpack.c.h.b16 %v6760
    %v7517 = vunpack.c.l.b16 %v6761
    %v7518 = vunpack.c.h.b16 %v6761
    %v7519 = vunpack.c.l.b16 %v6762
    %v7520 = vunpack.c.h.b16 %v6762
    %v7521 = vunpack.c.l.b16 %v6763
    %v7522 = vunpack.c.h.b16 %v6763
    %v7523 = vunpack.c.l.b16 %v6764
    %v7524 = vunpack.c.h.b16 %v6764
    %v7525 = vunpack.c.l.b16 %v6765
    %v7526 = vunpack.c.h.b16 %v6765
    %v7527 = vunpack.c.l.b16 %v6766
    %v7528 = vunpack.c.h.b16 %v6766
    %v7529 = vunpack.c.l.b16 %v6767
    %v7530 = vunpack.c.h.b16 %v6767
    %v7531 = vunpack.c.l.b16 %v6768
    %v7532 = vunpack.c.h.b16 %v6768
    %v7533 = vunpack.c.l.b16 %v6769
    %v7534 = vunpack.c.h.b16 %v6769
    %v7535 = vunpack.c.l.b16 %v6770
    %v7536 = vunpack.c.h.b16 %v6770
    %v7537 = vunpack.c.l.b16 %v6771
    %v7538 = vunpack.c.h.b16 %v6771
    %v7539 = vunpack.c.l.b16 %v6772
    %v7540 = vunpack.c.h.b16 %v6772
    %v7541 = vunpack.c.l.b16 %v6773
    %v7542 = vunpack.c.h.b16 %v6773
    %v7543 = vunpack.c.l.b16 %v6774
    %v7544 = vunpack.c.h.b16 %v6774
    %v7545 = vunpack.c.l.b16 %v6775
    %v7546 = vunpack.c.h.b16 %v6775
    %v7547 = vunpack.c.l.b16 %v6776
    %v7548 = vunpack.c.h.b16 %v6776
    %v7549 = vunpack.c.l.b16 %v6777
    %v7550 = vunpack.c.h.b16 %v6777
    %v7551 = vunpack.c.l.b16 %v6778
    %v7552 = vunpack.c.h.b16 %v6778
    %v7553 = vunpack.c.l.b16 %v6779
    %v7554 = vunpack.c.h.b16 %v6779
    %v7555 = vunpack.c.l.b16 %v6780
    %v7556 = vunpack.c.h.b16 %v6780
    %v7557 = vunpack.c.l.b16 %v6781
    %v7558 = vunpack.c.h.b16 %v6781
    %v7559 = vunpack.c.l.b16 %v6782
    %v7560 = vunpack.c.h.b16 %v6782
    %v7561 = vunpack.c.l.b16 %v6783
    %v7562 = vunpack.c.h.b16 %v6783
    %v7563 = vunpack.c.l.b16 %v6784
    %v7564 = vunpack.c.h.b16 %v6784
    %v7565 = vunpack.c.l.b16 %v6785
    %v7566 = vunpack.c.h.b16 %v6785
    %v7567 = vunpack.c.l.b16 %v6786
    %v7568 = vunpack.c.h.b16 %v6786
    %v7569 = vunpack.c.l.b16 %v6787
    %v7570 = vunpack.c.h.b16 %v6787
    %v7571 = vunpack.c.l.b16 %v6788
    %v7572 = vunpack.c.h.b16 %v6788
    %v7573 = vunpack.c.l.b16 %v6789
    %v7574 = vunpack.c.h.b16 %v6789
    %v7575 = vunpack.c.l.b16 %v6790
    %v7576 = vunpack.c.h.b16 %v6790
    %v7577 = vunpack.c.l.b16 %v6791
    %v7578 = vunpack.c.h.b16 %v6791
    %v7579 = vunpack.c.l.b16 %v6792
    %v7580 = vunpack.c.h.b16 %v6792
    %v7581 = vunpack.c.l.b16 %v6793
    %v7582 = vunpack.c.h.b16 %v6793
    %v7583 = vunpack.c.l.b16 %v6794
    %v7584 = vunpack.c.h.b16 %v6794
    %v7585 = vpack.c.b16 %v7077, %v7073
    %v7586 = vpack.c.b16 %v7078, %v7074
    %v7587 = vpack.c.b16 %v7079, %v7075
    %v7588 = vpack.c.b16 %v7080, %v7076
    %v7589 = vpack.c.b16 %v7085, %v7081
    %v7590 = vpack.c.b16 %v7086, %v7082
    %v7591 = vpack.c.b16 %v7087, %v7083
    %v7592 = vpack.c.b16 %v7088, %v7084
    %v7593 = vpack.c.b16 %v7093, %v7089
    %v7594 = vpack.c.b16 %v7094, %v7090
    %v7595 = vpack.c.b16 %v7095, %v7091
    %v7596 = vpack.c.b16 %v7096, %v7092
    %v7597 = vpack.c.b16 %v7101, %v7097
    %v7598 = vpack.c.b16 %v7102, %v7098
    %v7599 = vpack.c.b16 %v7103, %v7099
    %v7600 = vpack.c.b16 %v7104, %v7100
    %v7601 = vpack.c.b16 %v7109, %v7105
    %v7602 = vpack.c.b16 %v7110, %v7106
    %v7603 = vpack.c.b16 %v7111, %v7107
    %v7604 = vpack.c.b16 %v7112, %v7108
    %v7605 = vpack.c.b16 %v7117, %v7113
    %v7606 = vpack.c.b16 %v7118, %v7114
    %v7607 = vpack.c.b16 %v7119, %v7115
    %v7608 = vpack.c.b16 %v7120, %v7116
    %v7609 = vpack.c.b16 %v7125, %v7121
    %v7610 = vpack.c.b16 %v7126, %v7122
    %v7611 = vpack.c.b16 %v7127, %v7123
    %v7612 = vpack.c.b16 %v7128, %v7124
    %v7613 = vpack.c.b16 %v7133, %v7129
    %v7614 = vpack.c.b16 %v7134, %v7130
    %v7615 = vpack.c.b16 %v7135, %v7131
    %v7616 = vpack.c.b16 %v7136, %v7132
    %v7617 = vpack.c.b16 %v7141, %v7137
    %v7618 = vpack.c.b16 %v7142, %v7138
    %v7619 = vpack.c.b16 %v7143, %v7139
    %v7620 = vpack.c.b16 %v7144, %v7140
    %v7621 = vpack.c.b16 %v7149, %v7145
    %v7622 = vpack.c.b16 %v7150, %v7146
    %v7623 = vpack.c.b16 %v7151, %v7147
    %v7624 = vpack.c.b16 %v7152, %v7148
    %v7625 = vpack.c.b16 %v7157, %v7153
    %v7626 = vpack.c.b16 %v7158, %v7154
    %v7627 = vpack.c.b16 %v7159, %v7155
    %v7628 = vpack.c.b16 %v7160, %v7156
    %v7629 = vpack.c.b16 %v7165, %v7161
    %v7630 = vpack.c.b16 %v7166, %v7162
    %v7631 = vpack.c.b16 %v7167, %v7163
    %v7632 = vpack.c.b16 %v7168, %v7164
    %v7633 = vpack.c.b16 %v7173, %v7169
    %v7634 = vpack.c.b16 %v7174, %v7170
    %v7635 = vpack.c.b16 %v7175, %v7171
    %v7636 = vpack.c.b16 %v7176, %v7172
    %v7637 = vpack.c.b16 %v7181, %v7177
    %v7638 = vpack.c.b16 %v7182, %v7178
    %v7639 = vpack.c.b16 %v7183, %v7179
    %v7640 = vpack.c.b16 %v7184, %v7180
    %v7641 = vpack.c.b16 %v7189, %v7185
    %v7642 = vpack.c.b16 %v7190, %v7186
    %v7643 = vpack.c.b16 %v7191, %v7187
    %v7644 = vpack.c.b16 %v7192, %v7188
    %v7645 = vpack.c.b16 %v7197, %v7193
    %v7646 = vpack.c.b16 %v7198, %v7194
    %v7647 = vpack.c.b16 %v7199, %v7195
    %v7648 = vpack.c.b16 %v7200, %v7196
    %v7649 = vpack.c.b16 %v7205, %v7201
    %v7650 = vpack.c.b16 %v7206, %v7202
    %v7651 = vpack.c.b16 %v7207, %v7203
    %v7652 = vpack.c.b16 %v7208, %v7204
    %v7653 = vpack.c.b16 %v7213, %v7209
    %v7654 = vpack.c.b16 %v7214, %v7210
    %v7655 = vpack.c.b16 %v7215, %v7211
    %v7656 = vpack.c.b16 %v7216, %v7212
    %v7657 = vpack.c.b16 %v7221, %v7217
    %v7658 = vpack.c.b16 %v7222, %v7218
    %v7659 = vpack.c.b16 %v7223, %v7219
    %v7660 = vpack.c.b16 %v7224, %v7220
    %v7661 = vpack.c.b16 %v7229, %v7225
    %v7662 = vpack.c.b16 %v7230, %v7226
    %v7663 = vpack.c.b16 %v7231, %v7227
    %v7664 = vpack.c.b16 %v7232, %v7228
    %v7665 = vpack.c.b16 %v7237, %v7233
    %v7666 = vpack.c.b16 %v7238, %v7234
    %v7667 = vpack.c.b16 %v7239, %v7235
    %v7668 = vpack.c.b16 %v7240, %v7236
    %v7669 = vpack.c.b16 %v7245, %v7241
    %v7670 = vpack.c.b16 %v7246, %v7242
    %v7671 = vpack.c.b16 %v7247, %v7243
    %v7672 = vpack.c.b16 %v7248, %v7244
    %v7673 = vpack.c.b16 %v7253, %v7249
    %v7674 = vpack.c.b16 %v7254, %v7250
    %v7675 = vpack.c.b16 %v7255, %v7251
    %v7676 = vpack.c.b16 %v7256, %v7252
    %v7677 = vpack.c.b16 %v7261, %v7257
    %v7678 = vpack.c.b16 %v7262, %v7258
    %v7679 = vpack.c.b16 %v7263, %v7259
    %v7680 = vpack.c.b16 %v7264, %v7260
    %v7681 = vpack.c.b16 %v7269, %v7265
    %v7682 = vpack.c.b16 %v7270, %v7266
    %v7683 = vpack.c.b16 %v7271, %v7267
    %v7684 = vpack.c.b16 %v7272, %v7268
    %v7685 = vpack.c.b16 %v7277, %v7273
    %v7686 = vpack.c.b16 %v7278, %v7274
    %v7687 = vpack.c.b16 %v7279, %v7275
    %v7688 = vpack.c.b16 %v7280, %v7276
    %v7689 = vpack.c.b16 %v7285, %v7281
    %v7690 = vpack.c.b16 %v7286, %v7282
    %v7691 = vpack.c.b16 %v7287, %v7283
    %v7692 = vpack.c.b16 %v7288, %v7284
    %v7693 = vpack.c.b16 %v7293, %v7289
    %v7694 = vpack.c.b16 %v7294, %v7290
    %v7695 = vpack.c.b16 %v7295, %v7291
    %v7696 = vpack.c.b16 %v7296, %v7292
    %v7697 = vpack.c.b16 %v7301, %v7297
    %v7698 = vpack.c.b16 %v7302, %v7298
    %v7699 = vpack.c.b16 %v7303, %v7299
    %v7700 = vpack.c.b16 %v7304, %v7300
    %v7701 = vpack.c.b16 %v7309, %v7305
    %v7702 = vpack.c.b16 %v7310, %v7306
    %v7703 = vpack.c.b16 %v7311, %v7307
    %v7704 = vpack.c.b16 %v7312, %v7308
    %v7705 = vpack.c.b16 %v7317, %v7313
    %v7706 = vpack.c.b16 %v7318, %v7314
    %v7707 = vpack.c.b16 %v7319, %v7315
    %v7708 = vpack.c.b16 %v7320, %v7316
    %v7709 = vpack.c.b16 %v7325, %v7321
    %v7710 = vpack.c.b16 %v7326, %v7322
    %v7711 = vpack.c.b16 %v7327, %v7323
    %v7712 = vpack.c.b16 %v7328, %v7324
    %v7713 = vpack.c.b16 %v7333, %v7329
    %v7714 = vpack.c.b16 %v7334, %v7330
    %v7715 = vpack.c.b16 %v7335, %v7331
    %v7716 = vpack.c.b16 %v7336, %v7332
    %v7717 = vpack.c.b16 %v7341, %v7337
    %v7718 = vpack.c.b16 %v7342, %v7338
    %v7719 = vpack.c.b16 %v7343, %v7339
    %v7720 = vpack.c.b16 %v7344, %v7340
    %v7721 = vpack.c.b16 %v7349, %v7345
    %v7722 = vpack.c.b16 %v7350, %v7346
    %v7723 = vpack.c.b16 %v7351, %v7347
    %v7724 = vpack.c.b16 %v7352, %v7348
    %v7725 = vpack.c.b16 %v7357, %v7353
    %v7726 = vpack.c.b16 %v7358, %v7354
    %v7727 = vpack.c.b16 %v7359, %v7355
    %v7728 = vpack.c.b16 %v7360, %v7356
    %v7729 = vpack.c.b16 %v7365, %v7361
    %v7730 = vpack.c.b16 %v7366, %v7362
    %v7731 = vpack.c.b16 %v7367, %v7363
    %v7732 = vpack.c.b16 %v7368, %v7364
    %v7733 = vpack.c.b16 %v7373, %v7369
    %v7734 = vpack.c.b16 %v7374, %v7370
    %v7735 = vpack.c.b16 %v7375, %v7371
    %v7736 = vpack.c.b16 %v7376, %v7372
    %v7737 = vpack.c.b16 %v7381, %v7377
    %v7738 = vpack.c.b16 %v7382, %v7378
    %v7739 = vpack.c.b16 %v7383, %v7379
    %v7740 = vpack.c.b16 %v7384, %v7380
    %v7741 = vpack.c.b16 %v7389, %v7385
    %v7742 = vpack.c.b16 %v7390, %v7386
    %v7743 = vpack.c.b16 %v7391, %v7387
    %v7744 = vpack.c.b16 %v7392, %v7388
    %v7745 = vpack.c.b16 %v7397, %v7393
    %v7746 = vpack.c.b16 %v7398, %v7394
    %v7747 = vpack.c.b16 %v7399, %v7395
    %v7748 = vpack.c.b16 %v7400, %v7396
    %v7749 = vpack.c.b16 %v7405, %v7401
    %v7750 = vpack.c.b16 %v7406, %v7402
    %v7751 = vpack.c.b16 %v7407, %v7403
    %v7752 = vpack.c.b16 %v7408, %v7404
    %v7753 = vpack.c.b16 %v7413, %v7409
    %v7754 = vpack.c.b16 %v7414, %v7410
    %v7755 = vpack.c.b16 %v7415, %v7411
    %v7756 = vpack.c.b16 %v7416, %v7412
    %v7757 = vpack.c.b16 %v7421, %v7417
    %v7758 = vpack.c.b16 %v7422, %v7418
    %v7759 = vpack.c.b16 %v7423, %v7419
    %v7760 = vpack.c.b16 %v7424, %v7420
    %v7761 = vpack.c.b16 %v7429, %v7425
    %v7762 = vpack.c.b16 %v7430, %v7426
    %v7763 = vpack.c.b16 %v7431, %v7427
    %v7764 = vpack.c.b16 %v7432, %v7428
    %v7765 = vpack.c.b16 %v7437, %v7433
    %v7766 = vpack.c.b16 %v7438, %v7434
    %v7767 = vpack.c.b16 %v7439, %v7435
    %v7768 = vpack.c.b16 %v7440, %v7436
    %v7769 = vpack.c.b16 %v7445, %v7441
    %v7770 = vpack.c.b16 %v7446, %v7442
    %v7771 = vpack.c.b16 %v7447, %v7443
    %v7772 = vpack.c.b16 %v7448, %v7444
    %v7773 = vpack.c.b16 %v7453, %v7449
    %v7774 = vpack.c.b16 %v7454, %v7450
    %v7775 = vpack.c.b16 %v7455, %v7451
    %v7776 = vpack.c.b16 %v7456, %v7452
    %v7777 = vpack.c.b16 %v7461, %v7457
    %v7778 = vpack.c.b16 %v7462, %v7458
    %v7779 = vpack.c.b16 %v7463, %v7459
    %v7780 = vpack.c.b16 %v7464, %v7460
    %v7781 = vpack.c.b16 %v7469, %v7465
    %v7782 = vpack.c.b16 %v7470, %v7466
    %v7783 = vpack.c.b16 %v7471, %v7467
    %v7784 = vpack.c.b16 %v7472, %v7468
    %v7785 = vpack.c.b16 %v7477, %v7473
    %v7786 = vpack.c.b16 %v7478, %v7474
    %v7787 = vpack.c.b16 %v7479, %v7475
    %v7788 = vpack.c.b16 %v7480, %v7476
    %v7789 = vpack.c.b16 %v7485, %v7481
    %v7790 = vpack.c.b16 %v7486, %v7482
    %v7791 = vpack.c.b16 %v7487, %v7483
    %v7792 = vpack.c.b16 %v7488, %v7484
    %v7793 = vpack.c.b16 %v7493, %v7489
    %v7794 = vpack.c.b16 %v7494, %v7490
    %v7795 = vpack.c.b16 %v7495, %v7491
    %v7796 = vpack.c.b16 %v7496, %v7492
    %v7797 = vpack.c.b16 %v7501, %v7497
    %v7798 = vpack.c.b16 %v7502, %v7498
    %v7799 = vpack.c.b16 %v7503, %v7499
    %v7800 = vpack.c.b16 %v7504, %v7500
    %v7801 = vpack.c.b16 %v7509, %v7505
    %v7802 = vpack.c.b16 %v7510, %v7506
    %v7803 = vpack.c.b16 %v7511, %v7507
    %v7804 = vpack.c.b16 %v7512, %v7508
    %v7805 = vpack.c.b16 %v7517, %v7513
    %v7806 = vpack.c.b16 %v7518, %v7514
    %v7807 = vpack.c.b16 %v7519, %v7515
    %v7808 = vpack.c.b16 %v7520, %v7516
    %v7809 = vpack.c.b16 %v7525, %v7521
    %v7810 = vpack.c.b16 %v7526, %v7522
    %v7811 = vpack.c.b16 %v7527, %v7523
    %v7812 = vpack.c.b16 %v7528, %v7524
    %v7813 = vpack.c.b16 %v7533, %v7529
    %v7814 = vpack.c.b16 %v7534, %v7530
    %v7815 = vpack.c.b16 %v7535, %v7531
    %v7816 = vpack.c.b16 %v7536, %v7532
    %v7817 = vpack.c.b16 %v7541, %v7537
    %v7818 = vpack.c.b16 %v7542, %v7538
    %v7819 = vpack.c.b16 %v7543, %v7539
    %v7820 = vpack.c.b16 %v7544, %v7540
    %v7821 = vpack.c.b16 %v7549, %v7545
    %v7822 = vpack.c.b16 %v7550, %v7546
    %v7823 = vpack.c.b16 %v7551, %v7547
    %v7824 = vpack.c.b16 %v7552, %v7548
    %v7825 = vpack.c.b16 %v7557, %v7553
    %v7826 = vpack.c.b16 %v7558, %v7554
    %v7827 = vpack.c.b16 %v7559, %v7555
    %v7828 = vpack.c.b16 %v7560, %v7556
    %v7829 = vpack.c.b16 %v7565, %v7561
    %v7830 = vpack.c.b16 %v7566, %v7562
    %v7831 = vpack.c.b16 %v7567, %v7563
    %v7832 = vpack.c.b16 %v7568, %v7564
    %v7833 = vpack.c.b16 %v7573, %v7569
    %v7834 = vpack.c.b16 %v7574, %v7570
    %v7835 = vpack.c.b16 %v7575, %v7571
    %v7836 = vpack.c.b16 %v7576, %v7572
    %v7837 = vpack.c.b16 %v7581, %v7577
    %v7838 = vpack.c.b16 %v7582, %v7578
    %v7839 = vpack.c.b16 %v7583, %v7579
    %v7840 = vpack.c.b16 %v7584, %v7580
    %8097 = vmatprep.subr.bf16.mxu0 %v7586
    %8098 = vmatpush1.bf16.msra.mxu0 %v7585
    %8099 = vmatprep.subr.bf16.mxu0 %v7590
    %8100 = vmatpush1.bf16.msra.mxu0 %v7589
    %8101 = vmatprep.subr.bf16.mxu0 %v7594
    %8102 = vmatpush1.bf16.msra.mxu0 %v7593
    %8103 = vmatprep.subr.bf16.mxu0 %v7598
    %8104 = vmatpush1.bf16.msra.mxu0 %v7597
    %8105 = vmatprep.subr.bf16.mxu0 %v7602
    %8106 = vmatpush1.bf16.msra.mxu0 %v7601
    %8107 = vmatprep.subr.bf16.mxu0 %v7606
    %8108 = vmatpush1.bf16.msra.mxu0 %v7605
    %8109 = vmatprep.subr.bf16.mxu0 %v7610
    %8110 = vmatpush1.bf16.msra.mxu0 %v7609
    %8111 = vmatprep.subr.bf16.mxu0 %v7614
    %8112 = vmatpush1.bf16.msra.mxu0 %v7613
    %8113 = vmatprep.subr.bf16.mxu0 %v7618
    %8114 = vmatpush1.bf16.msra.mxu0 %v7617
    %8115 = vmatprep.subr.bf16.mxu0 %v7622
    %8116 = vmatpush1.bf16.msra.mxu0 %v7621
    %8117 = vmatprep.subr.bf16.mxu0 %v7626
    %8118 = vmatpush1.bf16.msra.mxu0 %v7625
    %8119 = vmatprep.subr.bf16.mxu0 %v7630
    %8120 = vmatpush1.bf16.msra.mxu0 %v7629
    %8121 = vmatprep.subr.bf16.mxu0 %v7634
    %8122 = vmatpush1.bf16.msra.mxu0 %v7633
    %8123 = vmatprep.subr.bf16.mxu0 %v7638
    %8124 = vmatpush1.bf16.msra.mxu0 %v7637
    %8125 = vmatprep.subr.bf16.mxu0 %v7642
    %8126 = vmatpush1.bf16.msra.mxu0 %v7641
    %8127 = vmatprep.subr.bf16.mxu0 %v7646
    %8128 = vmatpush1.bf16.msra.mxu0 %v7645
    %8129 = vmatprep.mubr.bf16.mxu0 %v6532
    %8130 = vmatmul.mubr.bf16.gmra.mrb[0].mxu0 %v6531
    %v8131 = vpop.f32.mrb[0].mxu0
    %v8132 = vadd.f32 %v6800, %v8131
    %v8133 = vpop.f32.mrb[0].mxu0
    %v8134 = vadd.f32 %v6804, %v8133
    %v8135 = vpop.f32.mrb[0].mxu0
    %v8136 = vadd.f32 %v6800, %v8135
    %v8137 = vpop.f32.mrb[0].mxu0
    %v8138 = vadd.f32 %v6804, %v8137
    %8139 = vdwg.mxu0
    %8140 = vmatprep.subr.bf16.mxu0 %v7650
    %8141 = vmatpush1.bf16.msra.mxu0 %v7649
    %8142 = vmatprep.subr.bf16.mxu0 %v7654
    %8143 = vmatpush1.bf16.msra.mxu0 %v7653
    %8144 = vmatprep.subr.bf16.mxu0 %v7658
    %8145 = vmatpush1.bf16.msra.mxu0 %v7657
    %8146 = vmatprep.subr.bf16.mxu0 %v7662
    %8147 = vmatpush1.bf16.msra.mxu0 %v7661
    %8148 = vmatprep.subr.bf16.mxu0 %v7666
    %8149 = vmatpush1.bf16.msra.mxu0 %v7665
    %8150 = vmatprep.subr.bf16.mxu0 %v7670
    %8151 = vmatpush1.bf16.msra.mxu0 %v7669
    %8152 = vmatprep.subr.bf16.mxu0 %v7674
    %8153 = vmatpush1.bf16.msra.mxu0 %v7673
    %8154 = vmatprep.subr.bf16.mxu0 %v7678
    %8155 = vmatpush1.bf16.msra.mxu0 %v7677
    %8156 = vmatprep.subr.bf16.mxu0 %v7682
    %8157 = vmatpush1.bf16.msra.mxu0 %v7681
    %8158 = vmatprep.subr.bf16.mxu0 %v7686
    %8159 = vmatpush1.bf16.msra.mxu0 %v7685
    %8160 = vmatprep.subr.bf16.mxu0 %v7690
    %8161 = vmatpush1.bf16.msra.mxu0 %v7689
    %8162 = vmatprep.subr.bf16.mxu0 %v7694
    %8163 = vmatpush1.bf16.msra.mxu0 %v7693
    %8164 = vmatprep.subr.bf16.mxu0 %v7698
    %8165 = vmatpush1.bf16.msra.mxu0 %v7697
    %8166 = vmatprep.subr.bf16.mxu0 %v7702
    %8167 = vmatpush1.bf16.msra.mxu0 %v7701
    %8168 = vmatprep.subr.bf16.mxu0 %v7706
    %8169 = vmatpush1.bf16.msra.mxu0 %v7705
    %8170 = vmatprep.subr.bf16.mxu0 %v7710
    %8171 = vmatpush1.bf16.msra.mxu0 %v7709
    %8172 = vmatprep.mubr.bf16.mxu0 %v6534
    %8173 = vmatmul.mubr.bf16.gmra.mrb[0].mxu0 %v6533
    %v8174 = vpop.f32.mrb[0].mxu0
    %v8175 = vadd.f32 %v8132, %v8174
    %v8176 = vpop.f32.mrb[0].mxu0
    %v8177 = vadd.f32 %v8134, %v8176
    %v8178 = vpop.f32.mrb[0].mxu0
    %v8179 = vadd.f32 %v8136, %v8178
    %v8180 = vpop.f32.mrb[0].mxu0
    %v8181 = vadd.f32 %v8138, %v8180
    %8182 = vdwg.mxu0
    %8183 = vmatprep.subr.bf16.mxu0 %v7714
    %8184 = vmatpush1.bf16.msra.mxu0 %v7713
    %8185 = vmatprep.subr.bf16.mxu0 %v7718
    %8186 = vmatpush1.bf16.msra.mxu0 %v7717
    %8187 = vmatprep.subr.bf16.mxu0 %v7722
    %8188 = vmatpush1.bf16.msra.mxu0 %v7721
    %8189 = vmatprep.subr.bf16.mxu0 %v7726
    %8190 = vmatpush1.bf16.msra.mxu0 %v7725
    %8191 = vmatprep.subr.bf16.mxu0 %v7730
    %8192 = vmatpush1.bf16.msra.mxu0 %v7729
    %8193 = vmatprep.subr.bf16.mxu0 %v7734
    %8194 = vmatpush1.bf16.msra.mxu0 %v7733
    %8195 = vmatprep.subr.bf16.mxu0 %v7738
    %8196 = vmatpush1.bf16.msra.mxu0 %v7737
    %8197 = vmatprep.subr.bf16.mxu0 %v7742
    %8198 = vmatpush1.bf16.msra.mxu0 %v7741
    %8199 = vmatprep.subr.bf16.mxu0 %v7746
    %8200 = vmatpush1.bf16.msra.mxu0 %v7745
    %8201 = vmatprep.subr.bf16.mxu0 %v7750
    %8202 = vmatpush1.bf16.msra.mxu0 %v7749
    %8203 = vmatprep.subr.bf16.mxu0 %v7754
    %8204 = vmatpush1.bf16.msra.mxu0 %v7753
    %8205 = vmatprep.subr.bf16.mxu0 %v7758
    %8206 = vmatpush1.bf16.msra.mxu0 %v7757
    %8207 = vmatprep.subr.bf16.mxu0 %v7762
    %8208 = vmatpush1.bf16.msra.mxu0 %v7761
    %8209 = vmatprep.subr.bf16.mxu0 %v7766
    %8210 = vmatpush1.bf16.msra.mxu0 %v7765
    %8211 = vmatprep.subr.bf16.mxu0 %v7770
    %8212 = vmatpush1.bf16.msra.mxu0 %v7769
    %8213 = vmatprep.subr.bf16.mxu0 %v7774
    %8214 = vmatpush1.bf16.msra.mxu0 %v7773
    %8215 = vmatprep.mubr.bf16.mxu0 %v6536
    %8216 = vmatmul.mubr.bf16.gmra.mrb[0].mxu0 %v6535
    %v8217 = vpop.f32.mrb[0].mxu0
    %v8218 = vadd.f32 %v8175, %v8217
    %v8219 = vpop.f32.mrb[0].mxu0
    %v8220 = vadd.f32 %v8177, %v8219
    %v8221 = vpop.f32.mrb[0].mxu0
    %v8222 = vadd.f32 %v8179, %v8221
    %v8223 = vpop.f32.mrb[0].mxu0
    %v8224 = vadd.f32 %v8181, %v8223
    %8225 = vdwg.mxu0
    %8226 = vmatprep.subr.bf16.mxu0 %v7778
    %8227 = vmatpush1.bf16.msra.mxu0 %v7777
    %8228 = vmatprep.subr.bf16.mxu0 %v7782
    %8229 = vmatpush1.bf16.msra.mxu0 %v7781
    %8230 = vmatprep.subr.bf16.mxu0 %v7786
    %8231 = vmatpush1.bf16.msra.mxu0 %v7785
    %8232 = vmatprep.subr.bf16.mxu0 %v7790
    %8233 = vmatpush1.bf16.msra.mxu0 %v7789
    %8234 = vmatprep.subr.bf16.mxu0 %v7794
    %8235 = vmatpush1.bf16.msra.mxu0 %v7793
    %8236 = vmatprep.subr.bf16.mxu0 %v7798
    %8237 = vmatpush1.bf16.msra.mxu0 %v7797
    %8238 = vmatprep.subr.bf16.mxu0 %v7802
    %8239 = vmatpush1.bf16.msra.mxu0 %v7801
    %8240 = vmatprep.subr.bf16.mxu0 %v7806
    %8241 = vmatpush1.bf16.msra.mxu0 %v7805
    %8242 = vmatprep.subr.bf16.mxu0 %v7810
    %8243 = vmatpush1.bf16.msra.mxu0 %v7809
    %8244 = vmatprep.subr.bf16.mxu0 %v7814
    %8245 = vmatpush1.bf16.msra.mxu0 %v7813
    %8246 = vmatprep.subr.bf16.mxu0 %v7818
    %8247 = vmatpush1.bf16.msra.mxu0 %v7817
    %8248 = vmatprep.subr.bf16.mxu0 %v7822
    %8249 = vmatpush1.bf16.msra.mxu0 %v7821
    %8250 = vmatprep.subr.bf16.mxu0 %v7826
    %8251 = vmatpush1.bf16.msra.mxu0 %v7825
    %8252 = vmatprep.subr.bf16.mxu0 %v7830
    %8253 = vmatpush1.bf16.msra.mxu0 %v7829
    %8254 = vmatprep.subr.bf16.mxu0 %v7834
    %8255 = vmatpush1.bf16.msra.mxu0 %v7833
    %8256 = vmatprep.subr.bf16.mxu0 %v7838
    %8257 = vmatpush1.bf16.msra.mxu0 %v7837
    %8258 = vmatprep.mubr.bf16.mxu0 %v6538
    %8259 = vmatmul.mubr.bf16.gmra.mrb[0].mxu0 %v6537
    %v8260 = vpop.f32.mrb[0].mxu0
    %v8261 = vadd.f32 %v8218, %v8260
    %v8262 = vpop.f32.mrb[0].mxu0
    %v8263 = vadd.f32 %v8220, %v8262
    %v8264 = vpop.f32.mrb[0].mxu0
    %v8265 = vadd.f32 %v8222, %v8264
    %v8266 = vpop.f32.mrb[0].mxu0
    %v8267 = vadd.f32 %v8224, %v8266
    %8268 = vdwg.mxu0
    %8269 = vmatprep.subr.bf16.mxu0 %v7588
    %8270 = vmatpush1.bf16.msra.mxu0 %v7587
    %8271 = vmatprep.subr.bf16.mxu0 %v7592
    %8272 = vmatpush1.bf16.msra.mxu0 %v7591
    %8273 = vmatprep.subr.bf16.mxu0 %v7596
    %8274 = vmatpush1.bf16.msra.mxu0 %v7595
    %8275 = vmatprep.subr.bf16.mxu0 %v7600
    %8276 = vmatpush1.bf16.msra.mxu0 %v7599
    %8277 = vmatprep.subr.bf16.mxu0 %v7604
    %8278 = vmatpush1.bf16.msra.mxu0 %v7603
    %8279 = vmatprep.subr.bf16.mxu0 %v7608
    %8280 = vmatpush1.bf16.msra.mxu0 %v7607
    %8281 = vmatprep.subr.bf16.mxu0 %v7612
    %8282 = vmatpush1.bf16.msra.mxu0 %v7611
    %8283 = vmatprep.subr.bf16.mxu0 %v7616
    %8284 = vmatpush1.bf16.msra.mxu0 %v7615
    %8285 = vmatprep.subr.bf16.mxu0 %v7620
    %8286 = vmatpush1.bf16.msra.mxu0 %v7619
    %8287 = vmatprep.subr.bf16.mxu0 %v7624
    %8288 = vmatpush1.bf16.msra.mxu0 %v7623
    %8289 = vmatprep.subr.bf16.mxu0 %v7628
    %8290 = vmatpush1.bf16.msra.mxu0 %v7627
    %8291 = vmatprep.subr.bf16.mxu0 %v7632
    %8292 = vmatpush1.bf16.msra.mxu0 %v7631
    %8293 = vmatprep.subr.bf16.mxu0 %v7636
    %8294 = vmatpush1.bf16.msra.mxu0 %v7635
    %8295 = vmatprep.subr.bf16.mxu0 %v7640
    %8296 = vmatpush1.bf16.msra.mxu0 %v7639
    %8297 = vmatprep.subr.bf16.mxu0 %v7644
    %8298 = vmatpush1.bf16.msra.mxu0 %v7643
    %8299 = vmatprep.subr.bf16.mxu0 %v7648
    %8300 = vmatpush1.bf16.msra.mxu0 %v7647
    %8301 = vmatprep.mubr.bf16.mxu0 %v6532
    %8302 = vmatmul.mubr.bf16.gmra.mrb[0].mxu0 %v6531
    %v8303 = vpop.f32.mrb[0].mxu0
    %v8304 = vadd.f32 %v6808, %v8303
    %v8305 = vpop.f32.mrb[0].mxu0
    %v8306 = vadd.f32 %v6812, %v8305
    %v8307 = vpop.f32.mrb[0].mxu0
    %v8308 = vadd.f32 %v6808, %v8307
    %v8309 = vpop.f32.mrb[0].mxu0
    %v8310 = vadd.f32 %v6812, %v8309
    %8311 = vdwg.mxu0
    %8312 = vmatprep.subr.bf16.mxu0 %v7652
    %8313 = vmatpush1.bf16.msra.mxu0 %v7651
    %8314 = vmatprep.subr.bf16.mxu0 %v7656
    %8315 = vmatpush1.bf16.msra.mxu0 %v7655
    %8316 = vmatprep.subr.bf16.mxu0 %v7660
    %8317 = vmatpush1.bf16.msra.mxu0 %v7659
    %8318 = vmatprep.subr.bf16.mxu0 %v7664
    %8319 = vmatpush1.bf16.msra.mxu0 %v7663
    %8320 = vmatprep.subr.bf16.mxu0 %v7668
    %8321 = vmatpush1.bf16.msra.mxu0 %v7667
    %8322 = vmatprep.subr.bf16.mxu0 %v7672
    %8323 = vmatpush1.bf16.msra.mxu0 %v7671
    %8324 = vmatprep.subr.bf16.mxu0 %v7676
    %8325 = vmatpush1.bf16.msra.mxu0 %v7675
    %8326 = vmatprep.subr.bf16.mxu0 %v7680
    %8327 = vmatpush1.bf16.msra.mxu0 %v7679
    %8328 = vmatprep.subr.bf16.mxu0 %v7684
    %8329 = vmatpush1.bf16.msra.mxu0 %v7683
    %8330 = vmatprep.subr.bf16.mxu0 %v7688
    %8331 = vmatpush1.bf16.msra.mxu0 %v7687
    %8332 = vmatprep.subr.bf16.mxu0 %v7692
    %8333 = vmatpush1.bf16.msra.mxu0 %v7691
    %8334 = vmatprep.subr.bf16.mxu0 %v7696
    %8335 = vmatpush1.bf16.msra.mxu0 %v7695
    %8336 = vmatprep.subr.bf16.mxu0 %v7700
    %8337 = vmatpush1.bf16.msra.mxu0 %v7699
    %8338 = vmatprep.subr.bf16.mxu0 %v7704
    %8339 = vmatpush1.bf16.msra.mxu0 %v7703
    %8340 = vmatprep.subr.bf16.mxu0 %v7708
    %8341 = vmatpush1.bf16.msra.mxu0 %v7707
    %8342 = vmatprep.subr.bf16.mxu0 %v7712
    %8343 = vmatpush1.bf16.msra.mxu0 %v7711
    %8344 = vmatprep.mubr.bf16.mxu0 %v6534
    %8345 = vmatmul.mubr.bf16.gmra.mrb[0].mxu0 %v6533
    %v8346 = vpop.f32.mrb[0].mxu0
    %v8347 = vadd.f32 %v8304, %v8346
    %v8348 = vpop.f32.mrb[0].mxu0
    %v8349 = vadd.f32 %v8306, %v8348
    %v8350 = vpop.f32.mrb[0].mxu0
    %v8351 = vadd.f32 %v8308, %v8350
    %v8352 = vpop.f32.mrb[0].mxu0
    %v8353 = vadd.f32 %v8310, %v8352
    %8354 = vdwg.mxu0
    %8355 = vmatprep.subr.bf16.mxu0 %v7716
    %8356 = vmatpush1.bf16.msra.mxu0 %v7715
    %8357 = vmatprep.subr.bf16.mxu0 %v7720
    %8358 = vmatpush1.bf16.msra.mxu0 %v7719
    %8359 = vmatprep.subr.bf16.mxu0 %v7724
    %8360 = vmatpush1.bf16.msra.mxu0 %v7723
    %8361 = vmatprep.subr.bf16.mxu0 %v7728
    %8362 = vmatpush1.bf16.msra.mxu0 %v7727
    %8363 = vmatprep.subr.bf16.mxu0 %v7732
    %8364 = vmatpush1.bf16.msra.mxu0 %v7731
    %8365 = vmatprep.subr.bf16.mxu0 %v7736
    %8366 = vmatpush1.bf16.msra.mxu0 %v7735
    %8367 = vmatprep.subr.bf16.mxu0 %v7740
    %8368 = vmatpush1.bf16.msra.mxu0 %v7739
    %8369 = vmatprep.subr.bf16.mxu0 %v7744
    %8370 = vmatpush1.bf16.msra.mxu0 %v7743
    %8371 = vmatprep.subr.bf16.mxu0 %v7748
    %8372 = vmatpush1.bf16.msra.mxu0 %v7747
    %8373 = vmatprep.subr.bf16.mxu0 %v7752
    %8374 = vmatpush1.bf16.msra.mxu0 %v7751
    %8375 = vmatprep.subr.bf16.mxu0 %v7756
    %8376 = vmatpush1.bf16.msra.mxu0 %v7755
    %8377 = vmatprep.subr.bf16.mxu0 %v7760
    %8378 = vmatpush1.bf16.msra.mxu0 %v7759
    %8379 = vmatprep.subr.bf16.mxu0 %v7764
    %8380 = vmatpush1.bf16.msra.mxu0 %v7763
    %8381 = vmatprep.subr.bf16.mxu0 %v7768
    %8382 = vmatpush1.bf16.msra.mxu0 %v7767
    %8383 = vmatprep.subr.bf16.mxu0 %v7772
    %8384 = vmatpush1.bf16.msra.mxu0 %v7771
    %8385 = vmatprep.subr.bf16.mxu0 %v7776
    %8386 = vmatpush1.bf16.msra.mxu0 %v7775
    %8387 = vmatprep.mubr.bf16.mxu0 %v6536
    %8388 = vmatmul.mubr.bf16.gmra.mrb[0].mxu0 %v6535
    %v8389 = vpop.f32.mrb[0].mxu0
    %v8390 = vadd.f32 %v8347, %v8389
    %v8391 = vpop.f32.mrb[0].mxu0
    %v8392 = vadd.f32 %v8349, %v8391
    %v8393 = vpop.f32.mrb[0].mxu0
    %v8394 = vadd.f32 %v8351, %v8393
    %v8395 = vpop.f32.mrb[0].mxu0
    %v8396 = vadd.f32 %v8353, %v8395
    %8397 = vdwg.mxu0
    %8398 = vmatprep.subr.bf16.mxu0 %v7780
    %8399 = vmatpush1.bf16.msra.mxu0 %v7779
    %8400 = vmatprep.subr.bf16.mxu0 %v7784
    %8401 = vmatpush1.bf16.msra.mxu0 %v7783
    %8402 = vmatprep.subr.bf16.mxu0 %v7788
    %8403 = vmatpush1.bf16.msra.mxu0 %v7787
    %8404 = vmatprep.subr.bf16.mxu0 %v7792
    %8405 = vmatpush1.bf16.msra.mxu0 %v7791
    %8406 = vmatprep.subr.bf16.mxu0 %v7796
    %8407 = vmatpush1.bf16.msra.mxu0 %v7795
    %8408 = vmatprep.subr.bf16.mxu0 %v7800
    %8409 = vmatpush1.bf16.msra.mxu0 %v7799
    %8410 = vmatprep.subr.bf16.mxu0 %v7804
    %8411 = vmatpush1.bf16.msra.mxu0 %v7803
    %8412 = vmatprep.subr.bf16.mxu0 %v7808
    %8413 = vmatpush1.bf16.msra.mxu0 %v7807
    %8414 = vmatprep.subr.bf16.mxu0 %v7812
    %8415 = vmatpush1.bf16.msra.mxu0 %v7811
    %8416 = vmatprep.subr.bf16.mxu0 %v7816
    %8417 = vmatpush1.bf16.msra.mxu0 %v7815
    %8418 = vmatprep.subr.bf16.mxu0 %v7820
    %8419 = vmatpush1.bf16.msra.mxu0 %v7819
    %8420 = vmatprep.subr.bf16.mxu0 %v7824
    %8421 = vmatpush1.bf16.msra.mxu0 %v7823
    %8422 = vmatprep.subr.bf16.mxu0 %v7828
    %8423 = vmatpush1.bf16.msra.mxu0 %v7827
    %8424 = vmatprep.subr.bf16.mxu0 %v7832
    %8425 = vmatpush1.bf16.msra.mxu0 %v7831
    %8426 = vmatprep.subr.bf16.mxu0 %v7836
    %8427 = vmatpush1.bf16.msra.mxu0 %v7835
    %8428 = vmatprep.subr.bf16.mxu0 %v7840
    %8429 = vmatpush1.bf16.msra.mxu0 %v7839
    %8430 = vmatprep.mubr.bf16.mxu0 %v6538
    %8431 = vmatmul.mubr.bf16.gmra.mrb[0].mxu0 %v6537
    %v8432 = vpop.f32.mrb[0].mxu0
    %v8433 = vadd.f32 %v8390, %v8432
    %v8434 = vpop.f32.mrb[0].mxu0
    %v8435 = vadd.f32 %v8392, %v8434
    %v8436 = vpop.f32.mrb[0].mxu0
    %v8437 = vadd.f32 %v8394, %v8436
    %v8438 = vpop.f32.mrb[0].mxu0
    %v8439 = vadd.f32 %v8396, %v8438
    %8440 = vdwg.mxu0
    %v8441 = vmax.f32 %v8261, 0.0
    %v8442 = vmax.f32 %v8263, 0.0
    %v8443 = vmax.f32 %v8433, 0.0
    %v8444 = vmax.f32 %v8435, 0.0
    %v8445 = vmax.f32 %v8265, 0.0
    %v8446 = vmax.f32 %v8267, 0.0
    %v8447 = vmax.f32 %v8437, 0.0
    %v8448 = vmax.f32 %v8439, 0.0
    %v8449 = vpack.c.bf16 %v8445, %v8441
    %v8450 = vpack.c.bf16 %v8446, %v8442
    %v8451 = vpack.c.bf16 %v8447, %v8443
    %v8452 = vpack.c.bf16 %v8448, %v8444
    %v8453 = vld [vmem:[#allocation14] sm:$0xff]
    %v8454 = vld [vmem:[#allocation14 + $0x8] sm:$0xff]
    %v8455 = vld [vmem:[#allocation14 + $0x10] sm:$0xff]
    %v8456 = vld [vmem:[#allocation14 + $0x18] sm:$0xff]
    %v8457 = vld [vmem:[#allocation14 + $0x20] sm:$0xff]
    %v8458 = vld [vmem:[#allocation14 + $0x28] sm:$0xff]
    %v8459 = vld [vmem:[#allocation14 + $0x30] sm:$0xff]
    %v8460 = vld [vmem:[#allocation14 + $0x38] sm:$0xff]
    %v8461 = vld [vmem:[#allocation14 + $0x40] sm:$0xff]
    %v8462 = vld [vmem:[#allocation14 + $0x48] sm:$0xff]
    %v8463 = vld [vmem:[#allocation14 + $0x50] sm:$0xff]
    %v8464 = vld [vmem:[#allocation14 + $0x58] sm:$0xff]
    %v8465 = vld [vmem:[#allocation14 + $0x60] sm:$0xff]
    %v8466 = vld [vmem:[#allocation14 + $0x68] sm:$0xff]
    %v8467 = vld [vmem:[#allocation14 + $0x70] sm:$0xff]
    %v8468 = vld [vmem:[#allocation14 + $0x78] sm:$0xff]
    %v8469 = vld [vmem:[#allocation14 + $0x80] sm:$0xff]
    %v8470 = vld [vmem:[#allocation14 + $0x88] sm:$0xff]
    %v8471 = vld [vmem:[#allocation14 + $0x90] sm:$0xff]
    %v8472 = vld [vmem:[#allocation14 + $0x98] sm:$0xff]
    %v8473 = vld [vmem:[#allocation14 + $0xa0] sm:$0xff]
    %v8474 = vld [vmem:[#allocation14 + $0xa8] sm:$0xff]
    %v8475 = vld [vmem:[#allocation14 + $0xb0] sm:$0xff]
    %v8476 = vld [vmem:[#allocation14 + $0xb8] sm:$0xff]
    %v8477 = vld [vmem:[#allocation14 + $0xc0] sm:$0xff]
    %v8478 = vld [vmem:[#allocation14 + $0xc8] sm:$0xff]
    %v8479 = vld [vmem:[#allocation14 + $0xd0] sm:$0xff]
    %v8480 = vld [vmem:[#allocation14 + $0xd8] sm:$0xff]
    %v8481 = vld [vmem:[#allocation14 + $0xe0] sm:$0xff]
    %v8482 = vld [vmem:[#allocation14 + $0xe8] sm:$0xff]
    %v8483 = vld [vmem:[#allocation14 + $0xf0] sm:$0xff]
    %v8484 = vld [vmem:[#allocation14 + $0xf8] sm:$0xff]
    %v8485 = vld [vmem:[#allocation14 + $0x100] sm:$0xff]
    %v8486 = vld [vmem:[#allocation14 + $0x108] sm:$0xff]
    %v8487 = vld [vmem:[#allocation14 + $0x110] sm:$0xff]
    %v8488 = vld [vmem:[#allocation14 + $0x118] sm:$0xff]
    %v8489 = vld [vmem:[#allocation14 + $0x120] sm:$0xff]
    %v8490 = vld [vmem:[#allocation14 + $0x128] sm:$0xff]
    %v8491 = vld [vmem:[#allocation14 + $0x130] sm:$0xff]
    %v8492 = vld [vmem:[#allocation14 + $0x138] sm:$0xff]
    %v8493 = vld [vmem:[#allocation14 + $0x140] sm:$0xff]
    %v8494 = vld [vmem:[#allocation14 + $0x148] sm:$0xff]
    %v8495 = vld [vmem:[#allocation14 + $0x150] sm:$0xff]
    %v8496 = vld [vmem:[#allocation14 + $0x158] sm:$0xff]
    %v8497 = vld [vmem:[#allocation14 + $0x160] sm:$0xff]
    %v8498 = vld [vmem:[#allocation14 + $0x168] sm:$0xff]
    %v8499 = vld [vmem:[#allocation14 + $0x170] sm:$0xff]
    %v8500 = vld [vmem:[#allocation14 + $0x178] sm:$0xff]
    %v8501 = vld [vmem:[#allocation14 + $0x180] sm:$0xff]
    %v8502 = vld [vmem:[#allocation14 + $0x188] sm:$0xff]
    %v8503 = vld [vmem:[#allocation14 + $0x190] sm:$0xff]
    %v8504 = vld [vmem:[#allocation14 + $0x198] sm:$0xff]
    %v8505 = vld [vmem:[#allocation14 + $0x1a0] sm:$0xff]
    %v8506 = vld [vmem:[#allocation14 + $0x1a8] sm:$0xff]
    %v8507 = vld [vmem:[#allocation14 + $0x1b0] sm:$0xff]
    %v8508 = vld [vmem:[#allocation14 + $0x1b8] sm:$0xff]
    %v8509 = vld [vmem:[#allocation14 + $0x1c0] sm:$0xff]
    %v8510 = vld [vmem:[#allocation14 + $0x1c8] sm:$0xff]
    %v8511 = vld [vmem:[#allocation14 + $0x1d0] sm:$0xff]
    %v8512 = vld [vmem:[#allocation14 + $0x1d8] sm:$0xff]
    %v8513 = vld [vmem:[#allocation14 + $0x1e0] sm:$0xff]
    %v8514 = vld [vmem:[#allocation14 + $0x1e8] sm:$0xff]
    %v8515 = vld [vmem:[#allocation14 + $0x1f0] sm:$0xff]
    %v8516 = vld [vmem:[#allocation14 + $0x1f8] sm:$0xff]
    %v8517 = vld [vmem:[#allocation16] sm:$0x3]
    %v8519 = vlaneseq
    %v8520 = vshrl.u32 %v8519, 7
    %v8521 = vsub.s32 0, %v8520
    %v8522 = vrot.slane %v8517, %v8521
    %v8523 = vlaneseq
    %v8524 = vshrl.u32 %v8523, 7
    %v8525 = vsub.s32 1, %v8524
    %v8526 = vrot.slane %v8517, %v8525
    %v8593 = vunpack.c.l.b16 %v8453
    %v8594 = vunpack.c.h.b16 %v8453
    %v8595 = vunpack.c.l.b16 %v8454
    %v8596 = vunpack.c.h.b16 %v8454
    %v8597 = vunpack.c.l.b16 %v8455
    %v8598 = vunpack.c.h.b16 %v8455
    %v8599 = vunpack.c.l.b16 %v8456
    %v8600 = vunpack.c.h.b16 %v8456
    %v8601 = vunpack.c.l.b16 %v8457
    %v8602 = vunpack.c.h.b16 %v8457
    %v8603 = vunpack.c.l.b16 %v8458
    %v8604 = vunpack.c.h.b16 %v8458
    %v8605 = vunpack.c.l.b16 %v8459
    %v8606 = vunpack.c.h.b16 %v8459
    %v8607 = vunpack.c.l.b16 %v8460
    %v8608 = vunpack.c.h.b16 %v8460
    %v8609 = vunpack.c.l.b16 %v8461
    %v8610 = vunpack.c.h.b16 %v8461
    %v8611 = vunpack.c.l.b16 %v8462
    %v8612 = vunpack.c.h.b16 %v8462
    %v8613 = vunpack.c.l.b16 %v8463
    %v8614 = vunpack.c.h.b16 %v8463
    %v8615 = vunpack.c.l.b16 %v8464
    %v8616 = vunpack.c.h.b16 %v8464
    %v8617 = vunpack.c.l.b16 %v8465
    %v8618 = vunpack.c.h.b16 %v8465
    %v8619 = vunpack.c.l.b16 %v8466
    %v8620 = vunpack.c.h.b16 %v8466
    %v8621 = vunpack.c.l.b16 %v8467
    %v8622 = vunpack.c.h.b16 %v8467
    %v8623 = vunpack.c.l.b16 %v8468
    %v8624 = vunpack.c.h.b16 %v8468
    %v8625 = vunpack.c.l.b16 %v8469
    %v8626 = vunpack.c.h.b16 %v8469
    %v8627 = vunpack.c.l.b16 %v8470
    %v8628 = vunpack.c.h.b16 %v8470
    %v8629 = vunpack.c.l.b16 %v8471
    %v8630 = vunpack.c.h.b16 %v8471
    %v8631 = vunpack.c.l.b16 %v8472
    %v8632 = vunpack.c.h.b16 %v8472
    %v8633 = vunpack.c.l.b16 %v8473
    %v8634 = vunpack.c.h.b16 %v8473
    %v8635 = vunpack.c.l.b16 %v8474
    %v8636 = vunpack.c.h.b16 %v8474
    %v8637 = vunpack.c.l.b16 %v8475
    %v8638 = vunpack.c.h.b16 %v8475
    %v8639 = vunpack.c.l.b16 %v8476
    %v8640 = vunpack.c.h.b16 %v8476
    %v8641 = vunpack.c.l.b16 %v8477
    %v8642 = vunpack.c.h.b16 %v8477
    %v8643 = vunpack.c.l.b16 %v8478
    %v8644 = vunpack.c.h.b16 %v8478
    %v8645 = vunpack.c.l.b16 %v8479
    %v8646 = vunpack.c.h.b16 %v8479
    %v8647 = vunpack.c.l.b16 %v8480
    %v8648 = vunpack.c.h.b16 %v8480
    %v8649 = vunpack.c.l.b16 %v8481
    %v8650 = vunpack.c.h.b16 %v8481
    %v8651 = vunpack.c.l.b16 %v8482
    %v8652 = vunpack.c.h.b16 %v8482
    %v8653 = vunpack.c.l.b16 %v8483
    %v8654 = vunpack.c.h.b16 %v8483
    %v8655 = vunpack.c.l.b16 %v8484
    %v8656 = vunpack.c.h.b16 %v8484
    %v8657 = vunpack.c.l.b16 %v8485
    %v8658 = vunpack.c.h.b16 %v8485
    %v8659 = vunpack.c.l.b16 %v8486
    %v8660 = vunpack.c.h.b16 %v8486
    %v8661 = vunpack.c.l.b16 %v8487
    %v8662 = vunpack.c.h.b16 %v8487
    %v8663 = vunpack.c.l.b16 %v8488
    %v8664 = vunpack.c.h.b16 %v8488
    %v8665 = vunpack.c.l.b16 %v8489
    %v8666 = vunpack.c.h.b16 %v8489
    %v8667 = vunpack.c.l.b16 %v8490
    %v8668 = vunpack.c.h.b16 %v8490
    %v8669 = vunpack.c.l.b16 %v8491
    %v8670 = vunpack.c.h.b16 %v8491
    %v8671 = vunpack.c.l.b16 %v8492
    %v8672 = vunpack.c.h.b16 %v8492
    %v8673 = vunpack.c.l.b16 %v8493
    %v8674 = vunpack.c.h.b16 %v8493
    %v8675 = vunpack.c.l.b16 %v8494
    %v8676 = vunpack.c.h.b16 %v8494
    %v8677 = vunpack.c.l.b16 %v8495
    %v8678 = vunpack.c.h.b16 %v8495
    %v8679 = vunpack.c.l.b16 %v8496
    %v8680 = vunpack.c.h.b16 %v8496
    %v8681 = vunpack.c.l.b16 %v8497
    %v8682 = vunpack.c.h.b16 %v8497
    %v8683 = vunpack.c.l.b16 %v8498
    %v8684 = vunpack.c.h.b16 %v8498
    %v8685 = vunpack.c.l.b16 %v8499
    %v8686 = vunpack.c.h.b16 %v8499
    %v8687 = vunpack.c.l.b16 %v8500
    %v8688 = vunpack.c.h.b16 %v8500
    %v8689 = vunpack.c.l.b16 %v8501
    %v8690 = vunpack.c.h.b16 %v8501
    %v8691 = vunpack.c.l.b16 %v8502
    %v8692 = vunpack.c.h.b16 %v8502
    %v8693 = vunpack.c.l.b16 %v8503
    %v8694 = vunpack.c.h.b16 %v8503
    %v8695 = vunpack.c.l.b16 %v8504
    %v8696 = vunpack.c.h.b16 %v8504
    %v8697 = vunpack.c.l.b16 %v8505
    %v8698 = vunpack.c.h.b16 %v8505
    %v8699 = vunpack.c.l.b16 %v8506
    %v8700 = vunpack.c.h.b16 %v8506
    %v8701 = vunpack.c.l.b16 %v8507
    %v8702 = vunpack.c.h.b16 %v8507
    %v8703 = vunpack.c.l.b16 %v8508
    %v8704 = vunpack.c.h.b16 %v8508
    %v8705 = vunpack.c.l.b16 %v8509
    %v8706 = vunpack.c.h.b16 %v8509
    %v8707 = vunpack.c.l.b16 %v8510
    %v8708 = vunpack.c.h.b16 %v8510
    %v8709 = vunpack.c.l.b16 %v8511
    %v8710 = vunpack.c.h.b16 %v8511
    %v8711 = vunpack.c.l.b16 %v8512
    %v8712 = vunpack.c.h.b16 %v8512
    %v8713 = vunpack.c.l.b16 %v8513
    %v8714 = vunpack.c.h.b16 %v8513
    %v8715 = vunpack.c.l.b16 %v8514
    %v8716 = vunpack.c.h.b16 %v8514
    %v8717 = vunpack.c.l.b16 %v8515
    %v8718 = vunpack.c.h.b16 %v8515
    %v8719 = vunpack.c.l.b16 %v8516
    %v8720 = vunpack.c.h.b16 %v8516
    %v8721 = vpack.c.b16 %v8595, %v8593
    %v8722 = vpack.c.b16 %v8596, %v8594
    %v8723 = vpack.c.b16 %v8599, %v8597
    %v8724 = vpack.c.b16 %v8600, %v8598
    %v8725 = vpack.c.b16 %v8603, %v8601
    %v8726 = vpack.c.b16 %v8604, %v8602
    %v8727 = vpack.c.b16 %v8607, %v8605
    %v8728 = vpack.c.b16 %v8608, %v8606
    %v8729 = vpack.c.b16 %v8611, %v8609
    %v8730 = vpack.c.b16 %v8612, %v8610
    %v8731 = vpack.c.b16 %v8615, %v8613
    %v8732 = vpack.c.b16 %v8616, %v8614
    %v8733 = vpack.c.b16 %v8619, %v8617
    %v8734 = vpack.c.b16 %v8620, %v8618
    %v8735 = vpack.c.b16 %v8623, %v8621
    %v8736 = vpack.c.b16 %v8624, %v8622
    %v8737 = vpack.c.b16 %v8627, %v8625
    %v8738 = vpack.c.b16 %v8628, %v8626
    %v8739 = vpack.c.b16 %v8631, %v8629
    %v8740 = vpack.c.b16 %v8632, %v8630
    %v8741 = vpack.c.b16 %v8635, %v8633
    %v8742 = vpack.c.b16 %v8636, %v8634
    %v8743 = vpack.c.b16 %v8639, %v8637
    %v8744 = vpack.c.b16 %v8640, %v8638
    %v8745 = vpack.c.b16 %v8643, %v8641
    %v8746 = vpack.c.b16 %v8644, %v8642
    %v8747 = vpack.c.b16 %v8647, %v8645
    %v8748 = vpack.c.b16 %v8648, %v8646
    %v8749 = vpack.c.b16 %v8651, %v8649
    %v8750 = vpack.c.b16 %v8652, %v8650
    %v8751 = vpack.c.b16 %v8655, %v8653
    %v8752 = vpack.c.b16 %v8656, %v8654
    %v8753 = vpack.c.b16 %v8659, %v8657
    %v8754 = vpack.c.b16 %v8660, %v8658
    %v8755 = vpack.c.b16 %v8663, %v8661
    %v8756 = vpack.c.b16 %v8664, %v8662
    %v8757 = vpack.c.b16 %v8667, %v8665
    %v8758 = vpack.c.b16 %v8668, %v8666
    %v8759 = vpack.c.b16 %v8671, %v8669
    %v8760 = vpack.c.b16 %v8672, %v8670
    %v8761 = vpack.c.b16 %v8675, %v8673
    %v8762 = vpack.c.b16 %v8676, %v8674
    %v8763 = vpack.c.b16 %v8679, %v8677
    %v8764 = vpack.c.b16 %v8680, %v8678
    %v8765 = vpack.c.b16 %v8683, %v8681
    %v8766 = vpack.c.b16 %v8684, %v8682
    %v8767 = vpack.c.b16 %v8687, %v8685
    %v8768 = vpack.c.b16 %v8688, %v8686
    %v8769 = vpack.c.b16 %v8691, %v8689
    %v8770 = vpack.c.b16 %v8692, %v8690
    %v8771 = vpack.c.b16 %v8695, %v8693
    %v8772 = vpack.c.b16 %v8696, %v8694
    %v8773 = vpack.c.b16 %v8699, %v8697
    %v8774 = vpack.c.b16 %v8700, %v8698
    %v8775 = vpack.c.b16 %v8703, %v8701
    %v8776 = vpack.c.b16 %v8704, %v8702
    %v8777 = vpack.c.b16 %v8707, %v8705
    %v8778 = vpack.c.b16 %v8708, %v8706
    %v8779 = vpack.c.b16 %v8711, %v8709
    %v8780 = vpack.c.b16 %v8712, %v8710
    %v8781 = vpack.c.b16 %v8715, %v8713
    %v8782 = vpack.c.b16 %v8716, %v8714
    %v8783 = vpack.c.b16 %v8719, %v8717
    %v8784 = vpack.c.b16 %v8720, %v8718
    %8849 = vmatprep.subr.bf16.mxu0 %v8722
    %8850 = vmatpush1.bf16.msra.mxu0 %v8721
    %8851 = vmatprep.subr.bf16.mxu0 %v8724
    %8852 = vmatpush1.bf16.msra.mxu0 %v8723
    %8853 = vmatprep.subr.bf16.mxu0 %v8726
    %8854 = vmatpush1.bf16.msra.mxu0 %v8725
    %8855 = vmatprep.subr.bf16.mxu0 %v8728
    %8856 = vmatpush1.bf16.msra.mxu0 %v8727
    %8857 = vmatprep.subr.bf16.mxu0 %v8730
    %8858 = vmatpush1.bf16.msra.mxu0 %v8729
    %8859 = vmatprep.subr.bf16.mxu0 %v8732
    %8860 = vmatpush1.bf16.msra.mxu0 %v8731
    %8861 = vmatprep.subr.bf16.mxu0 %v8734
    %8862 = vmatpush1.bf16.msra.mxu0 %v8733
    %8863 = vmatprep.subr.bf16.mxu0 %v8736
    %8864 = vmatpush1.bf16.msra.mxu0 %v8735
    %8865 = vmatprep.subr.bf16.mxu0 %v8738
    %8866 = vmatpush1.bf16.msra.mxu0 %v8737
    %8867 = vmatprep.subr.bf16.mxu0 %v8740
    %8868 = vmatpush1.bf16.msra.mxu0 %v8739
    %8869 = vmatprep.subr.bf16.mxu0 %v8742
    %8870 = vmatpush1.bf16.msra.mxu0 %v8741
    %8871 = vmatprep.subr.bf16.mxu0 %v8744
    %8872 = vmatpush1.bf16.msra.mxu0 %v8743
    %8873 = vmatprep.subr.bf16.mxu0 %v8746
    %8874 = vmatpush1.bf16.msra.mxu0 %v8745
    %8875 = vmatprep.subr.bf16.mxu0 %v8748
    %8876 = vmatpush1.bf16.msra.mxu0 %v8747
    %8877 = vmatprep.subr.bf16.mxu0 %v8750
    %8878 = vmatpush1.bf16.msra.mxu0 %v8749
    %8879 = vmatprep.subr.bf16.mxu0 %v8752
    %8880 = vmatpush1.bf16.msra.mxu0 %v8751
    %8881 = vmatprep.mubr.bf16.mxu0 %v8450
    %8882 = vmatmul.mubr.bf16.gmra.mrb[0].mxu0 %v8449
    %v8883 = vpop.f32.mrb[0].mxu0
    %v8884 = vadd.f32 %v8522, %v8883
    %v8885 = vpop.f32.mrb[0].mxu0
    %v8886 = vadd.f32 %v8526, %v8885
    %v8887 = vpop.f32.mrb[0].mxu0
    %v8888 = vadd.f32 %v8522, %v8887
    %v8889 = vpop.f32.mrb[0].mxu0
    %v8890 = vadd.f32 %v8526, %v8889
    %8891 = vdwg.mxu0
    %8892 = vmatprep.subr.bf16.mxu0 %v8754
    %8893 = vmatpush1.bf16.msra.mxu0 %v8753
    %8894 = vmatprep.subr.bf16.mxu0 %v8756
    %8895 = vmatpush1.bf16.msra.mxu0 %v8755
    %8896 = vmatprep.subr.bf16.mxu0 %v8758
    %8897 = vmatpush1.bf16.msra.mxu0 %v8757
    %8898 = vmatprep.subr.bf16.mxu0 %v8760
    %8899 = vmatpush1.bf16.msra.mxu0 %v8759
    %8900 = vmatprep.subr.bf16.mxu0 %v8762
    %8901 = vmatpush1.bf16.msra.mxu0 %v8761
    %8902 = vmatprep.subr.bf16.mxu0 %v8764
    %8903 = vmatpush1.bf16.msra.mxu0 %v8763
    %8904 = vmatprep.subr.bf16.mxu0 %v8766
    %8905 = vmatpush1.bf16.msra.mxu0 %v8765
    %8906 = vmatprep.subr.bf16.mxu0 %v8768
    %8907 = vmatpush1.bf16.msra.mxu0 %v8767
    %8908 = vmatprep.subr.bf16.mxu0 %v8770
    %8909 = vmatpush1.bf16.msra.mxu0 %v8769
    %8910 = vmatprep.subr.bf16.mxu0 %v8772
    %8911 = vmatpush1.bf16.msra.mxu0 %v8771
    %8912 = vmatprep.subr.bf16.mxu0 %v8774
    %8913 = vmatpush1.bf16.msra.mxu0 %v8773
    %8914 = vmatprep.subr.bf16.mxu0 %v8776
    %8915 = vmatpush1.bf16.msra.mxu0 %v8775
    %8916 = vmatprep.subr.bf16.mxu0 %v8778
    %8917 = vmatpush1.bf16.msra.mxu0 %v8777
    %8918 = vmatprep.subr.bf16.mxu0 %v8780
    %8919 = vmatpush1.bf16.msra.mxu0 %v8779
    %8920 = vmatprep.subr.bf16.mxu0 %v8782
    %8921 = vmatpush1.bf16.msra.mxu0 %v8781
    %8922 = vmatprep.subr.bf16.mxu0 %v8784
    %8923 = vmatpush1.bf16.msra.mxu0 %v8783
    %8924 = vmatprep.mubr.bf16.mxu0 %v8452
    %8925 = vmatmul.mubr.bf16.gmra.mrb[0].mxu0 %v8451
    %v8926 = vpop.f32.mrb[0].mxu0
    %v8927 = vadd.f32 %v8884, %v8926
    %v8928 = vpop.f32.mrb[0].mxu0
    %v8929 = vadd.f32 %v8886, %v8928
    %v8930 = vpop.f32.mrb[0].mxu0
    %v8931 = vadd.f32 %v8888, %v8930
    %v8932 = vpop.f32.mrb[0].mxu0
    %v8933 = vadd.f32 %v8890, %v8932
    %8934 = vdwg.mxu0
    %v8935 = vmax.f32 %v8927, 0.0
    %v8936 = vmax.f32 %v8929, 0.0
    %v8937 = vmax.f32 %v8931, 0.0
    %v8938 = vmax.f32 %v8933, 0.0
    %v8939 = vpack.c.bf16 %v8937, %v8935
    %v8940 = vpack.c.bf16 %v8938, %v8936
    %v8941 = vld [vmem:[#allocation17] sm:$0xf]
    %v8942 = vld [vmem:[#allocation17 + $0x4] sm:$0xf]
    %v8943 = vld [vmem:[#allocation17 + $0x8] sm:$0xf]
    %v8944 = vld [vmem:[#allocation17 + $0xc] sm:$0xf]
    %v8945 = vld [vmem:[#allocation17 + $0x10] sm:$0xf]
    %v8946 = vld [vmem:[#allocation17 + $0x14] sm:$0xf]
    %v8947 = vld [vmem:[#allocation17 + $0x18] sm:$0xf]
    %v8948 = vld [vmem:[#allocation17 + $0x1c] sm:$0xf]
    %v8949 = vld [vmem:[#allocation17 + $0x20] sm:$0xf]
    %v8950 = vld [vmem:[#allocation17 + $0x24] sm:$0xf]
    %v8951 = vld [vmem:[#allocation17 + $0x28] sm:$0xf]
    %v8952 = vld [vmem:[#allocation17 + $0x2c] sm:$0xf]
    %v8953 = vld [vmem:[#allocation17 + $0x30] sm:$0xf]
    %v8954 = vld [vmem:[#allocation17 + $0x34] sm:$0xf]
    %v8955 = vld [vmem:[#allocation17 + $0x38] sm:$0xf]
    %v8956 = vld [vmem:[#allocation17 + $0x3c] sm:$0xf]
    %v8957 = vld [vmem:[#allocation17 + $0x40] sm:$0xf]
    %v8958 = vld [vmem:[#allocation17 + $0x44] sm:$0xf]
    %v8959 = vld [vmem:[#allocation17 + $0x48] sm:$0xf]
    %v8960 = vld [vmem:[#allocation17 + $0x4c] sm:$0xf]
    %v8961 = vld [vmem:[#allocation17 + $0x50] sm:$0xf]
    %v8962 = vld [vmem:[#allocation17 + $0x54] sm:$0xf]
    %v8963 = vld [vmem:[#allocation17 + $0x58] sm:$0xf]
    %v8964 = vld [vmem:[#allocation17 + $0x5c] sm:$0xf]
    %v8965 = vld [vmem:[#allocation17 + $0x60] sm:$0xf]
    %v8966 = vld [vmem:[#allocation17 + $0x64] sm:$0xf]
    %v8967 = vld [vmem:[#allocation17 + $0x68] sm:$0xf]
    %v8968 = vld [vmem:[#allocation17 + $0x6c] sm:$0xf]
    %v8969 = vld [vmem:[#allocation17 + $0x70] sm:$0xf]
    %v8970 = vld [vmem:[#allocation17 + $0x74] sm:$0xf]
    %v8971 = vld [vmem:[#allocation17 + $0x78] sm:$0xf]
    %v8972 = vld [vmem:[#allocation17 + $0x7c] sm:$0xf]
    %v8973 = vld [vmem:[#allocation19] sm:$0x1]
    %v8975 = vlaneseq
    %v8976 = vshrl.u32 %v8975, 7
    %v8977 = vsub.s32 0, %v8976
    %v8978 = vrot.slane %v8973, %v8977
    %v9012 = vunpack.c.l.b16 %v8941
    %v9013 = vunpack.c.l.b16 %v8942
    %v9014 = vunpack.c.l.b16 %v8943
    %v9015 = vunpack.c.l.b16 %v8944
    %v9016 = vunpack.c.l.b16 %v8945
    %v9017 = vunpack.c.l.b16 %v8946
    %v9018 = vunpack.c.l.b16 %v8947
    %v9019 = vunpack.c.l.b16 %v8948
    %v9020 = vunpack.c.l.b16 %v8949
    %v9021 = vunpack.c.l.b16 %v8950
    %v9022 = vunpack.c.l.b16 %v8951
    %v9023 = vunpack.c.l.b16 %v8952
    %v9024 = vunpack.c.l.b16 %v8953
    %v9025 = vunpack.c.l.b16 %v8954
    %v9026 = vunpack.c.l.b16 %v8955
    %v9027 = vunpack.c.l.b16 %v8956
    %v9028 = vunpack.c.l.b16 %v8957
    %v9029 = vunpack.c.l.b16 %v8958
    %v9030 = vunpack.c.l.b16 %v8959
    %v9031 = vunpack.c.l.b16 %v8960
    %v9032 = vunpack.c.l.b16 %v8961
    %v9033 = vunpack.c.l.b16 %v8962
    %v9034 = vunpack.c.l.b16 %v8963
    %v9035 = vunpack.c.l.b16 %v8964
    %v9036 = vunpack.c.l.b16 %v8965
    %v9037 = vunpack.c.l.b16 %v8966
    %v9038 = vunpack.c.l.b16 %v8967
    %v9039 = vunpack.c.l.b16 %v8968
    %v9040 = vunpack.c.l.b16 %v8969
    %v9041 = vunpack.c.l.b16 %v8970
    %v9042 = vunpack.c.l.b16 %v8971
    %v9043 = vunpack.c.l.b16 %v8972
    %v9044 = vpack.c.b16 %v9013, %v9012
    %v9045 = vpack.c.b16 %v9015, %v9014
    %v9046 = vpack.c.b16 %v9017, %v9016
    %v9047 = vpack.c.b16 %v9019, %v9018
    %v9048 = vpack.c.b16 %v9021, %v9020
    %v9049 = vpack.c.b16 %v9023, %v9022
    %v9050 = vpack.c.b16 %v9025, %v9024
    %v9051 = vpack.c.b16 %v9027, %v9026
    %v9052 = vpack.c.b16 %v9029, %v9028
    %v9053 = vpack.c.b16 %v9031, %v9030
    %v9054 = vpack.c.b16 %v9033, %v9032
    %v9055 = vpack.c.b16 %v9035, %v9034
    %v9056 = vpack.c.b16 %v9037, %v9036
    %v9057 = vpack.c.b16 %v9039, %v9038
    %v9058 = vpack.c.b16 %v9041, %v9040
    %v9059 = vpack.c.b16 %v9043, %v9042
    %9076 = vmatprep.subr.bf16.mxu0 0
    %9077 = vmatpush1.bf16.msra.mxu0 %v9044
    %9078 = vmatprep.subr.bf16.mxu0 0
    %9079 = vmatpush1.bf16.msra.mxu0 %v9045
    %9080 = vmatprep.subr.bf16.mxu0 0
    %9081 = vmatpush1.bf16.msra.mxu0 %v9046
    %9082 = vmatprep.subr.bf16.mxu0 0
    %9083 = vmatpush1.bf16.msra.mxu0 %v9047
    %9084 = vmatprep.subr.bf16.mxu0 0
    %9085 = vmatpush1.bf16.msra.mxu0 %v9048
    %9086 = vmatprep.subr.bf16.mxu0 0
    %9087 = vmatpush1.bf16.msra.mxu0 %v9049
    %9088 = vmatprep.subr.bf16.mxu0 0
    %9089 = vmatpush1.bf16.msra.mxu0 %v9050
    %9090 = vmatprep.subr.bf16.mxu0 0
    %9091 = vmatpush1.bf16.msra.mxu0 %v9051
    %9092 = vmatprep.subr.bf16.mxu0 0
    %9093 = vmatpush1.bf16.msra.mxu0 %v9052
    %9094 = vmatprep.subr.bf16.mxu0 0
    %9095 = vmatpush1.bf16.msra.mxu0 %v9053
    %9096 = vmatprep.subr.bf16.mxu0 0
    %9097 = vmatpush1.bf16.msra.mxu0 %v9054
    %9098 = vmatprep.subr.bf16.mxu0 0
    %9099 = vmatpush1.bf16.msra.mxu0 %v9055
    %9100 = vmatprep.subr.bf16.mxu0 0
    %9101 = vmatpush1.bf16.msra.mxu0 %v9056
    %9102 = vmatprep.subr.bf16.mxu0 0
    %9103 = vmatpush1.bf16.msra.mxu0 %v9057
    %9104 = vmatprep.subr.bf16.mxu0 0
    %9105 = vmatpush1.bf16.msra.mxu0 %v9058
    %9106 = vmatprep.subr.bf16.mxu0 0
    %9107 = vmatpush1.bf16.msra.mxu0 %v9059
    %9108 = vmatprep.mubr.bf16.mxu0 %v8940
    %9109 = vmatmul.mubr.bf16.gmra.mrb[0].mxu0 %v8939
    %v9110 = vpop.f32.mrb[0].mxu0
    %v9111 = vadd.f32 %v8978, %v9110
    %v9112 = vpop.f32.mrb[0].mxu0
    %v9113 = vpop.f32.mrb[0].mxu0
    %v9114 = vadd.f32 %v8978, %v9113
    %v9115 = vpop.f32.mrb[0].mxu0
    %9116 = vdwg.mxu0
    %9117 = vst [vmem:[#allocation20] sm:$0xff] %v9111
    %9118 = vst [vmem:[#allocation20 + $0x8] sm:$0xff] %v9114
    // Predicated region
    $region90: #{tpu_custom_call.1} parent=1 // pred_check
      _
    $region91: #{tpu_custom_call.1} parent=1 // pred_check_branch
      %9120 = sbr.rel (0) target = $region93
    $region92: #{tpu_custom_call.1} parent=1 // pred_region
      %s9122 = ssub.s32 256, 256
      %9123 = vsyncadd [#allocation4], %s9122
      %s9124 = sshll.u32 [#allocation20], 4
      %s9125 = int_to_ptr.vmem [resolvable:$true] %s9124
      %9130 = dma.vmem_to_hbm [thread:$0]  %s9125, 256, %s11, [#allocation4], 128, 128, 8
    $region93: #{tpu_custom_call.1} parent=1 // pred_fallthru
      _
    // Predicated region
    $region94: #{tpu_custom_call.1} parent=1 // pred_check
      _
    $region95: #{tpu_custom_call.1} parent=1 // pred_check_branch
      %9132 = sbr.rel (0) target = $region97
    $region96: #{tpu_custom_call.1} parent=1 // pred_region
      %9133 = dma.done [#allocation4], 256
    $region97: #{tpu_custom_call.1} parent=1 // pred_fallthru
      _
    %9134 = vsyncpa [#allocation3], 1
    %9135 = vsyncpa [#allocation6], 1
    %9136 = vsyncpa [#allocation9], 1
    %9137 = vsyncpa [#allocation12], 1
    %9138 = vsyncpa [#allocation15], 1
    %9139 = vsyncpa [#allocation18], 1
    %9140 = vsyncpa [#allocation4], 1

</llo_original>
